<compile_context>
chip_gen: v7x
topology: tpu7x:2x2x1
jax: 0.10.0
libtpu: 0.0.40
codegen_flags: <defaults>
</compile_context>

<pallas_src>
import functools
import math
import numpy as np
import jax
import jax.numpy as jnp
from jax import lax
from jax.experimental import pallas as pl
from jax.experimental.pallas import tpu as pltpu


# ---------------------------------------------------------------------------
# Config (the "args" of the PyTorch module).
# ---------------------------------------------------------------------------
N_HARMONIC_XYZ = 6
COORD_DIM = 2
LATENT_SIZE = 6                                   # args.latent_size
N_FREQ_FEAT = COORD_DIM * N_HARMONIC_XYZ          # 12
EMBED_DIM = 2 * N_FREQ_FEAT + COORD_DIM           # 26
D_IN = EMBED_DIM + LATENT_SIZE                    # 32  (= latent_size + 26)
CZ = COORD_DIM + LATENT_SIZE                      # 8   raw per-row kernel input
EMB_PAD = 16                                      # 12 freq feats padded to sublane mult
X40 = CZ + 2 * EMB_PAD                            # 40  fused input rows [cz|sin|cos]
DEPTH = 8                                         # args.depth
WIDTH = 32                                        # args.width
N_HIDDEN_DIR = 128                                # n_hidden_neurons_dir
SKIP_LAYER = 5                                    # append_xyz=(5,)
SKIPS = frozenset({SKIP_LAYER})

SUB_N = 512                                       # lane tile per matmul (keep at 512)
BLOCK_N = 4096                                    # default per-grid-step block width


# ---------------------------------------------------------------------------
# Kernel (transposed layout: features on sublanes, batch tile on lanes)
# ---------------------------------------------------------------------------
def latent_mlp_kernel(cz_ref, proj_ref, win_ref, wh_ref, b_ref, wt_ref, bt_ref,
                      out_ref, x40_ref, *, sub_n, n_sub):
    f32 = jnp.float32

    def sub_body(t, carry):
        start = pl.multiple_of(t * sub_n, sub_n)
        cz = cz_ref[:, pl.ds(start, sub_n)]                           # (CZ, sub)

        # Harmonic embedding (EUP sin/cos).  proj is (16, CZ) with pad rows zero,
        # so e rows 12..15 are 0 (sin->0, cos->1); the fused weight columns for
        # those rows are zero, so the padding contributes exactly 0.
        e = jnp.dot(proj_ref[...], cz, preferred_element_type=f32)    # (16, sub)

        # Sublane-aligned fused input x40 = [cz(8) | sin(16) | cos(16)].
        # All 40 rows are rewritten every sub-tile, so no zero-init is needed.
        x40_ref[0:CZ, :] = cz
        x40_ref[CZ:CZ + EMB_PAD, :] = jnp.sin(e)
        x40_ref[CZ + EMB_PAD:CZ + 2 * EMB_PAD, :] = jnp.cos(e)
        x40 = x40_ref[...]                                            # (40, sub)

        # Layer-0 projection and layer-5 skip projection, back-to-back, so the
        # fused input (and sin/cos) are dead before the hidden-layer loop.
        h0 = jnp.dot(win_ref[0], x40, preferred_element_type=f32)     # (W, sub)
        skip = jnp.dot(win_ref[1], x40, preferred_element_type=f32)   # (W, sub)

        y = jnp.maximum(h0 + b_ref[:, 0:1], 0.0)
        for li in range(1, DEPTH):
            acc = jnp.dot(wh_ref[li - 1], y, preferred_element_type=f32)
            if li in SKIPS:
                acc = acc + skip                                      # Linear(cat(y,x)) split
            y = jnp.maximum(acc + b_ref[:, li:li + 1], 0.0)

        # Folded tail: sigmoid((wl@wc)^T @ y + (bl@wc + bc)) -> lane-dense (3, sub)
        c = jnp.dot(wt_ref[...], y, preferred_element_type=f32) + bt_ref[...]
        out_ref[:, pl.ds(start, sub_n)] = jax.nn.sigmoid(c).astype(out_ref.dtype)
        return carry

    lax.fori_loop(0, n_sub, sub_body, 0, unroll=True)


# ---------------------------------------------------------------------------
# Parameter init (deterministic, xavier-uniform like the PyTorch module)
# ---------------------------------------------------------------------------
def _linear_params(key, fan_in, fan_out):
    kw, kb = jax.random.split(key)
    bound = math.sqrt(6.0 / (fan_in + fan_out))          # xavier_uniform
    w = jax.random.uniform(kw, (fan_in, fan_out), jnp.float32, -bound, bound)
    bb = 1.0 / math.sqrt(fan_in)                         # torch default bias init
    b = jax.random.uniform(kb, (fan_out,), jnp.float32, -bb, bb)
    return w, b


def init_params(key):
    """Canonical (torch-like, (in,out) weight) parameters."""
    keys = jax.random.split(key, DEPTH + 2)
    mlp = []
    for li in range(DEPTH):
        if li == 0:
            dimin = D_IN
        elif li in SKIPS:
            dimin = WIDTH + D_IN
        else:
            dimin = WIDTH
        mlp.append(_linear_params(keys[li], dimin, WIDTH))
    wl, bl = _linear_params(keys[DEPTH], WIDTH, N_HIDDEN_DIR)
    wc, bc = _linear_params(keys[DEPTH + 1], N_HIDDEN_DIR, 3)
    # NOTE: `intermediate_linear` exists in the torch __init__ but is unused in forward.
    return dict(mlp=mlp, wl=wl, bl=bl, wc=wc, bc=bc)


def pack_params(params):
    """Pack canonical params into the 6 arrays the kernel uses.

    Call ONCE at init time (hoisted out of the per-call path); pass the result
    to latent_mlp_forward.
    """
    freqs = 2.0 ** jnp.arange(N_HARMONIC_XYZ, dtype=jnp.float32)          # logspace
    # proj[i*6+j, i] = freqs[j]; rows 12..15 (pad) and z columns are zero, so
    # proj @ cz reproduces the harmonic-embedding frequencies (padded to 16 rows).
    proj = jnp.zeros((EMB_PAD, CZ), jnp.float32)
    proj = proj.at[:N_FREQ_FEAT, :COORD_DIM].set(
        jnp.kron(jnp.eye(COORD_DIM, dtype=jnp.float32), freqs[:, None]))

    def fuse_input_weight(w):
        # w: (D_IN, WIDTH) with torch row order [sin(12) | cos(12) | coord(2) | z(6)].
        # Fused column order matches the x40 scratch: [coord,z (8) | sin pad16 | cos pad16].
        wt = w.T                                                          # (WIDTH, D_IN)
        W = jnp.zeros((WIDTH, X40), jnp.float32)
        W = W.at[:, 0:COORD_DIM].set(wt[:, 2 * N_FREQ_FEAT:2 * N_FREQ_FEAT + COORD_DIM])
        W = W.at[:, COORD_DIM:CZ].set(wt[:, 2 * N_FREQ_FEAT + COORD_DIM:])
        W = W.at[:, CZ:CZ + N_FREQ_FEAT].set(wt[:, :N_FREQ_FEAT])
        W = W.at[:, CZ + EMB_PAD:CZ + EMB_PAD + N_FREQ_FEAT].set(
            wt[:, N_FREQ_FEAT:2 * N_FREQ_FEAT])
        return W

    w0, _ = params['mlp'][0]                      # (D_IN, WIDTH)
    w5, _ = params['mlp'][SKIP_LAYER]             # (WIDTH + D_IN, WIDTH)
    w_in = jnp.stack([fuse_input_weight(w0),
                      fuse_input_weight(w5[WIDTH:])])                 # (2, WIDTH, 40)

    hid = []
    for li in range(1, DEPTH):
        w, _ = params['mlp'][li]
        hid.append((w[:WIDTH] if li in SKIPS else w).T)
    w_hid = jnp.stack(hid)                                            # (DEPTH-1, W, W)

    b_stack = jnp.stack([b for _, b in params['mlp']], axis=1)        # (WIDTH, DEPTH)

    # Fold intermediate_last_linear + color_layer (no nonlinearity between them).
    w_tail = (params['wl'] @ params['wc']).T                          # (3, WIDTH)
    b_tail = (params['bl'] @ params['wc'] + params['bc']).reshape(3, 1)

    return (proj, w_in, w_hid, b_stack, w_tail, b_tail)


# ---------------------------------------------------------------------------
# Wrapper: pad/transpose plumbing + the Pallas call (jitted; params pre-packed)
# ---------------------------------------------------------------------------
@functools.partial(jax.jit, static_argnames=("block_n", "sub_n"))
def latent_mlp_forward(coord, z, packed, *, block_n=BLOCK_N, sub_n=SUB_N):
    assert block_n % sub_n == 0 and sub_n % 128 == 0
    proj, w_in, w_hid, b_stack, w_tail, b_tail = packed

    N = coord.shape[0]
    cz = jnp.concatenate([coord, z], axis=-1).astype(jnp.float32)     # (N, CZ)
    n_pad = pl.cdiv(N, block_n) * block_n
    if n_pad != N:
        cz = jnp.pad(cz, ((0, n_pad - N), (0, 0)))
    cz_t = cz.T                                                        # (CZ, n_pad)

    def full_spec(a):
        # Constant index_map: weight tiles are fetched once and stay VMEM-resident.
        nd = a.ndim
        return pl.BlockSpec(a.shape, lambda i, _nd=nd: (0,) * _nd)

    weights = (proj, w_in, w_hid, b_stack, w_tail, b_tail)
    kernel = functools.partial(latent_mlp_kernel, sub_n=sub_n,
                               n_sub=block_n // sub_n)

    out_t = pl.pallas_call(
        kernel,
        out_shape=jax.ShapeDtypeStruct((3, n_pad), jnp.float32),
        grid=(n_pad // block_n,),
        in_specs=[pl.BlockSpec((CZ, block_n), lambda i: (0, i))]
                 + [full_spec(w) for w in weights],
        out_specs=pl.BlockSpec((3, block_n), lambda i: (0, i)),
        scratch_shapes=[pltpu.VMEM((X40, sub_n), jnp.float32)],
        compiler_params=pltpu.CompilerParams(
            dimension_semantics=("parallel",)),
    )(cz_t, *weights)
    return out_t.T[:N]                                                 # (N, 3)


# ---------------------------------------------------------------------------
# Pure-JAX reference (mirrors the PyTorch forward exactly: concat, unfolded tail)
# ---------------------------------------------------------------------------
def harmonic_embedding(coord):
    freqs = 2.0 ** jnp.arange(N_HARMONIC_XYZ, dtype=jnp.float32)
    embed = (coord[..., None] * freqs).reshape(coord.shape[0], -1)
    return jnp.concatenate([jnp.sin(embed), jnp.cos(embed), coord], axis=-1)


def latent_mlp_reference(coord, z, params):
    x = jnp.concatenate([harmonic_embedding(coord), z], axis=-1)
    y = x
    for li, (w, b) in enumerate(params['mlp']):
        inp = jnp.concatenate([y, x], axis=-1) if li in SKIPS else y
        y = jnp.maximum(inp @ w + b, 0.0)
    h = y @ params['wl'] + params['bl']
    return jax.nn.sigmoid(h @ params['wc'] + params['bc'])


# ---------------------------------------------------------------------------
if __name__ == "__main__":
    key = jax.random.PRNGKey(0)
    k_coord, k_z, k_params = jax.random.split(key, 3)

    N = 8185                     # non-multiple of the block: exercises pad + slice-off
    coord = jax.random.uniform(k_coord, (N, COORD_DIM), jnp.float32, -1.0, 1.0)
    z = jax.random.normal(k_z, (N, LATENT_SIZE), jnp.float32)

    params = init_params(k_params)
    packed = pack_params(params)   # pre-packed once, outside the per-call path

    # block_n=1024 -> 8 even "parallel" grid steps at this N (>=4 per TensorCore on
    # v7x); each step runs 2 inner 512-lane sub-tiles.  For large production N use
    # the default block_n=4096 (8 sub-tiles/step) to amortize per-step overhead.
    out = jax.block_until_ready(
        latent_mlp_forward(coord, z, packed, block_n=1024, sub_n=512))
    ref = jax.block_until_ready(latent_mlp_reference(coord, z, params))

    assert out.shape == (N, 3) and out.dtype == jnp.float32
    # Tolerance covers the (exact-in-real-arithmetic) tail fold / fused-projection
    # summation-order differences and in-kernel EUP sin/cos vs. XLA sin/cos.
    np.testing.assert_allclose(np.asarray(out), np.asarray(ref),
                               rtol=2e-4, atol=2e-4)
    print("KERNEL_OK")
</pallas_src>

<mosaic_0001>
module attributes {stable_mosaic.version = 11 : i64} {
  func.func @latent_mlp_kernel(%arg0: i32, %arg1: memref<8x1024xf32, #tpu.memory_space<vmem>>, %arg2: memref<16x8xf32, #tpu.memory_space<vmem>>, %arg3: memref<2x32x40xf32, #tpu.memory_space<vmem>>, %arg4: memref<7x32x32xf32, #tpu.memory_space<vmem>>, %arg5: memref<32x8xf32, #tpu.memory_space<vmem>>, %arg6: memref<3x32xf32, #tpu.memory_space<vmem>>, %arg7: memref<3x1xf32, #tpu.memory_space<vmem>>, %arg8: memref<3x1024xf32, #tpu.memory_space<vmem>>, %arg9: memref<40x512xf32, #tpu.memory_space<vmem>>) attributes {dimension_semantics = [#tpu.dimension_semantics<parallel>], iteration_bounds = array<i64: 8>, scalar_prefetch = 0 : i64, scratch_operands = 1 : i64, tpu.core_type = #tpu.core_type<tc>, window_params = [{transform_indices = @transform_0, window_bounds = array<i64: 8, 1024>}, {pipeline_mode = #tpu.pipeline_mode<synchronous>, transform_indices = @transform_1, window_bounds = array<i64: 16, 8>}, {pipeline_mode = #tpu.pipeline_mode<synchronous>, transform_indices = @transform_2, window_bounds = array<i64: 2, 32, 40>}, {pipeline_mode = #tpu.pipeline_mode<synchronous>, transform_indices = @transform_3, window_bounds = array<i64: 7, 32, 32>}, {pipeline_mode = #tpu.pipeline_mode<synchronous>, transform_indices = @transform_4, window_bounds = array<i64: 32, 8>}, {pipeline_mode = #tpu.pipeline_mode<synchronous>, transform_indices = @transform_5, window_bounds = array<i64: 3, 32>}, {pipeline_mode = #tpu.pipeline_mode<synchronous>, transform_indices = @transform_6, window_bounds = array<i64: 3, 1>}, {transform_indices = @transform_7, window_bounds = array<i64: 3, 1024>}]} {
    %c0_i32 = arith.constant 0 : i32
    %c512_i32 = arith.constant 512 : i32
    %0 = arith.muli %c0_i32, %c512_i32 : i32
    %1 = tpu.assume_multiple %0, 512 : i32
    %c0 = arith.constant 0 : index
    %2 = arith.index_cast %1 : i32 to index
    %3 = vector.load %arg1[%c0, %2] : memref<8x1024xf32, #tpu.memory_space<vmem>>, vector<8x512xf32>
    %c0_0 = arith.constant 0 : index
    %c0_1 = arith.constant 0 : index
    %4 = vector.load %arg2[%c0_0, %c0_1] : memref<16x8xf32, #tpu.memory_space<vmem>>, vector<16x8xf32>
    %cst = arith.constant dense<0.000000e+00> : vector<16x512xf32>
    %5 = tpu.matmul %4, %3, %cst {dimension_numbers = #tpu.dot_dimension_numbers<[1], [0], [0], [1], [0, 0, 1, 1], [], []>} : vector<16x8xf32>, vector<8x512xf32>, vector<16x512xf32> -> vector<16x512xf32>
    %c0_2 = arith.constant 0 : index
    %c0_3 = arith.constant 0 : index
    %6 = vector.load %arg9[%c0_2, %c0_3] : memref<40x512xf32, #tpu.memory_space<vmem>>, vector<8x512xf32>
    tpu.vector_store %arg9[%c0_2, %c0_3], %3 {strides = array<i32>} : memref<40x512xf32, #tpu.memory_space<vmem>>, vector<8x512xf32>,
    %7 = math.sin %5 : vector<16x512xf32>
    %c8 = arith.constant 8 : index
    %c0_4 = arith.constant 0 : index
    %8 = vector.load %arg9[%c8, %c0_4] : memref<40x512xf32, #tpu.memory_space<vmem>>, vector<16x512xf32>
    tpu.vector_store %arg9[%c8, %c0_4], %7 {strides = array<i32>} : memref<40x512xf32, #tpu.memory_space<vmem>>, vector<16x512xf32>,
    %9 = math.cos %5 : vector<16x512xf32>
    %c24 = arith.constant 24 : index
    %c0_5 = arith.constant 0 : index
    %10 = vector.load %arg9[%c24, %c0_5] : memref<40x512xf32, #tpu.memory_space<vmem>>, vector<16x512xf32>
    tpu.vector_store %arg9[%c24, %c0_5], %9 {strides = array<i32>} : memref<40x512xf32, #tpu.memory_space<vmem>>, vector<16x512xf32>,
    %c0_6 = arith.constant 0 : index
    %c0_7 = arith.constant 0 : index
    %11 = vector.load %arg9[%c0_6, %c0_7] : memref<40x512xf32, #tpu.memory_space<vmem>>, vector<40x512xf32>
    %c0_8 = arith.constant 0 : index
    %c0_9 = arith.constant 0 : index
    %c0_10 = arith.constant 0 : index
    %12 = vector.load %arg3[%c0_8, %c0_9, %c0_10] : memref<2x32x40xf32, #tpu.memory_space<vmem>>, vector<1x32x40xf32>
    %13 = vector.shape_cast %12 : vector<1x32x40xf32> to vector<32x40xf32>
    %cst_11 = arith.constant dense<0.000000e+00> : vector<32x512xf32>
    %14 = tpu.matmul %13, %11, %cst_11 {dimension_numbers = #tpu.dot_dimension_numbers<[1], [0], [0], [1], [0, 0, 1, 1], [], []>} : vector<32x40xf32>, vector<40x512xf32>, vector<32x512xf32> -> vector<32x512xf32>
    %c1 = arith.constant 1 : index
    %c0_12 = arith.constant 0 : index
    %c0_13 = arith.constant 0 : index
    %15 = vector.load %arg3[%c1, %c0_12, %c0_13] : memref<2x32x40xf32, #tpu.memory_space<vmem>>, vector<1x32x40xf32>
    %16 = vector.shape_cast %15 : vector<1x32x40xf32> to vector<32x40xf32>
    %cst_14 = arith.constant dense<0.000000e+00> : vector<32x512xf32>
    %17 = tpu.matmul %16, %11, %cst_14 {dimension_numbers = #tpu.dot_dimension_numbers<[1], [0], [0], [1], [0, 0, 1, 1], [], []>} : vector<32x40xf32>, vector<40x512xf32>, vector<32x512xf32> -> vector<32x512xf32>
    %c0_15 = arith.constant 0 : index
    %c0_16 = arith.constant 0 : index
    %18 = vector.load %arg5[%c0_15, %c0_16] : memref<32x8xf32, #tpu.memory_space<vmem>>, vector<32x1xf32>
    %19 = vector.broadcast %18 : vector<32x1xf32> to vector<32x512xf32>
    %20 = arith.addf %14, %19 : vector<32x512xf32>
    %cst_17 = arith.constant 0.000000e+00 : f32
    %21 = vector.broadcast %cst_17 : f32 to vector<32x512xf32>
    %22 = arith.maximumf %20, %21 : vector<32x512xf32>
    %c0_18 = arith.constant 0 : index
    %c0_19 = arith.constant 0 : index
    %c0_20 = arith.constant 0 : index
    %23 = vector.load %arg4[%c0_18, %c0_19, %c0_20] : memref<7x32x32xf32, #tpu.memory_space<vmem>>, vector<1x32x32xf32>
    %24 = vector.shape_cast %23 : vector<1x32x32xf32> to vector<32x32xf32>
    %cst_21 = arith.constant dense<0.000000e+00> : vector<32x512xf32>
    %25 = tpu.matmul %24, %22, %cst_21 {dimension_numbers = #tpu.dot_dimension_numbers<[1], [0], [0], [1], [0, 0, 1, 1], [], []>} : vector<32x32xf32>, vector<32x512xf32>, vector<32x512xf32> -> vector<32x512xf32>
    %c0_22 = arith.constant 0 : index
    %c1_23 = arith.constant 1 : index
    %26 = vector.load %arg5[%c0_22, %c1_23] : memref<32x8xf32, #tpu.memory_space<vmem>>, vector<32x1xf32>
    %27 = vector.broadcast %26 : vector<32x1xf32> to vector<32x512xf32>
    %28 = arith.addf %25, %27 : vector<32x512xf32>
    %cst_24 = arith.constant 0.000000e+00 : f32
    %29 = vector.broadcast %cst_24 : f32 to vector<32x512xf32>
    %30 = arith.maximumf %28, %29 : vector<32x512xf32>
    %c1_25 = arith.constant 1 : index
    %c0_26 = arith.constant 0 : index
    %c0_27 = arith.constant 0 : index
    %31 = vector.load %arg4[%c1_25, %c0_26, %c0_27] : memref<7x32x32xf32, #tpu.memory_space<vmem>>, vector<1x32x32xf32>
    %32 = vector.shape_cast %31 : vector<1x32x32xf32> to vector<32x32xf32>
    %cst_28 = arith.constant dense<0.000000e+00> : vector<32x512xf32>
    %33 = tpu.matmul %32, %30, %cst_28 {dimension_numbers = #tpu.dot_dimension_numbers<[1], [0], [0], [1], [0, 0, 1, 1], [], []>} : vector<32x32xf32>, vector<32x512xf32>, vector<32x512xf32> -> vector<32x512xf32>
    %c0_29 = arith.constant 0 : index
    %c2 = arith.constant 2 : index
    %34 = vector.load %arg5[%c0_29, %c2] : memref<32x8xf32, #tpu.memory_space<vmem>>, vector<32x1xf32>
    %35 = vector.broadcast %34 : vector<32x1xf32> to vector<32x512xf32>
    %36 = arith.addf %33, %35 : vector<32x512xf32>
    %cst_30 = arith.constant 0.000000e+00 : f32
    %37 = vector.broadcast %cst_30 : f32 to vector<32x512xf32>
    %38 = arith.maximumf %36, %37 : vector<32x512xf32>
    %c2_31 = arith.constant 2 : index
    %c0_32 = arith.constant 0 : index
    %c0_33 = arith.constant 0 : index
    %39 = vector.load %arg4[%c2_31, %c0_32, %c0_33] : memref<7x32x32xf32, #tpu.memory_space<vmem>>, vector<1x32x32xf32>
    %40 = vector.shape_cast %39 : vector<1x32x32xf32> to vector<32x32xf32>
    %cst_34 = arith.constant dense<0.000000e+00> : vector<32x512xf32>
    %41 = tpu.matmul %40, %38, %cst_34 {dimension_numbers = #tpu.dot_dimension_numbers<[1], [0], [0], [1], [0, 0, 1, 1], [], []>} : vector<32x32xf32>, vector<32x512xf32>, vector<32x512xf32> -> vector<32x512xf32>
    %c0_35 = arith.constant 0 : index
    %c3 = arith.constant 3 : index
    %42 = vector.load %arg5[%c0_35, %c3] : memref<32x8xf32, #tpu.memory_space<vmem>>, vector<32x1xf32>
    %43 = vector.broadcast %42 : vector<32x1xf32> to vector<32x512xf32>
    %44 = arith.addf %41, %43 : vector<32x512xf32>
    %cst_36 = arith.constant 0.000000e+00 : f32
    %45 = vector.broadcast %cst_36 : f32 to vector<32x512xf32>
    %46 = arith.maximumf %44, %45 : vector<32x512xf32>
    %c3_37 = arith.constant 3 : index
    %c0_38 = arith.constant 0 : index
    %c0_39 = arith.constant 0 : index
    %47 = vector.load %arg4[%c3_37, %c0_38, %c0_39] : memref<7x32x32xf32, #tpu.memory_space<vmem>>, vector<1x32x32xf32>
    %48 = vector.shape_cast %47 : vector<1x32x32xf32> to vector<32x32xf32>
    %cst_40 = arith.constant dense<0.000000e+00> : vector<32x512xf32>
    %49 = tpu.matmul %48, %46, %cst_40 {dimension_numbers = #tpu.dot_dimension_numbers<[1], [0], [0], [1], [0, 0, 1, 1], [], []>} : vector<32x32xf32>, vector<32x512xf32>, vector<32x512xf32> -> vector<32x512xf32>
    %c0_41 = arith.constant 0 : index
    %c4 = arith.constant 4 : index
    %50 = vector.load %arg5[%c0_41, %c4] : memref<32x8xf32, #tpu.memory_space<vmem>>, vector<32x1xf32>
    %51 = vector.broadcast %50 : vector<32x1xf32> to vector<32x512xf32>
    %52 = arith.addf %49, %51 : vector<32x512xf32>
    %cst_42 = arith.constant 0.000000e+00 : f32
    %53 = vector.broadcast %cst_42 : f32 to vector<32x512xf32>
    %54 = arith.maximumf %52, %53 : vector<32x512xf32>
    %c4_43 = arith.constant 4 : index
    %c0_44 = arith.constant 0 : index
    %c0_45 = arith.constant 0 : index
    %55 = vector.load %arg4[%c4_43, %c0_44, %c0_45] : memref<7x32x32xf32, #tpu.memory_space<vmem>>, vector<1x32x32xf32>
    %56 = vector.shape_cast %55 : vector<1x32x32xf32> to vector<32x32xf32>
    %cst_46 = arith.constant dense<0.000000e+00> : vector<32x512xf32>
    %57 = tpu.matmul %56, %54, %cst_46 {dimension_numbers = #tpu.dot_dimension_numbers<[1], [0], [0], [1], [0, 0, 1, 1], [], []>} : vector<32x32xf32>, vector<32x512xf32>, vector<32x512xf32> -> vector<32x512xf32>
    %58 = arith.addf %57, %17 : vector<32x512xf32>
    %c0_47 = arith.constant 0 : index
    %c5 = arith.constant 5 : index
    %59 = vector.load %arg5[%c0_47, %c5] : memref<32x8xf32, #tpu.memory_space<vmem>>, vector<32x1xf32>
    %60 = vector.broadcast %59 : vector<32x1xf32> to vector<32x512xf32>
    %61 = arith.addf %58, %60 : vector<32x512xf32>
    %cst_48 = arith.constant 0.000000e+00 : f32
    %62 = vector.broadcast %cst_48 : f32 to vector<32x512xf32>
    %63 = arith.maximumf %61, %62 : vector<32x512xf32>
    %c5_49 = arith.constant 5 : index
    %c0_50 = arith.constant 0 : index
    %c0_51 = arith.constant 0 : index
    %64 = vector.load %arg4[%c5_49, %c0_50, %c0_51] : memref<7x32x32xf32, #tpu.memory_space<vmem>>, vector<1x32x32xf32>
    %65 = vector.shape_cast %64 : vector<1x32x32xf32> to vector<32x32xf32>
    %cst_52 = arith.constant dense<0.000000e+00> : vector<32x512xf32>
    %66 = tpu.matmul %65, %63, %cst_52 {dimension_numbers = #tpu.dot_dimension_numbers<[1], [0], [0], [1], [0, 0, 1, 1], [], []>} : vector<32x32xf32>, vector<32x512xf32>, vector<32x512xf32> -> vector<32x512xf32>
    %c0_53 = arith.constant 0 : index
    %c6 = arith.constant 6 : index
    %67 = vector.load %arg5[%c0_53, %c6] : memref<32x8xf32, #tpu.memory_space<vmem>>, vector<32x1xf32>
    %68 = vector.broadcast %67 : vector<32x1xf32> to vector<32x512xf32>
    %69 = arith.addf %66, %68 : vector<32x512xf32>
    %cst_54 = arith.constant 0.000000e+00 : f32
    %70 = vector.broadcast %cst_54 : f32 to vector<32x512xf32>
    %71 = arith.maximumf %69, %70 : vector<32x512xf32>
    %c6_55 = arith.constant 6 : index
    %c0_56 = arith.constant 0 : index
    %c0_57 = arith.constant 0 : index
    %72 = vector.load %arg4[%c6_55, %c0_56, %c0_57] : memref<7x32x32xf32, #tpu.memory_space<vmem>>, vector<1x32x32xf32>
    %73 = vector.shape_cast %72 : vector<1x32x32xf32> to vector<32x32xf32>
    %cst_58 = arith.constant dense<0.000000e+00> : vector<32x512xf32>
    %74 = tpu.matmul %73, %71, %cst_58 {dimension_numbers = #tpu.dot_dimension_numbers<[1], [0], [0], [1], [0, 0, 1, 1], [], []>} : vector<32x32xf32>, vector<32x512xf32>, vector<32x512xf32> -> vector<32x512xf32>
    %c0_59 = arith.constant 0 : index
    %c7 = arith.constant 7 : index
    %75 = vector.load %arg5[%c0_59, %c7] : memref<32x8xf32, #tpu.memory_space<vmem>>, vector<32x1xf32>
    %76 = vector.broadcast %75 : vector<32x1xf32> to vector<32x512xf32>
    %77 = arith.addf %74, %76 : vector<32x512xf32>
    %cst_60 = arith.constant 0.000000e+00 : f32
    %78 = vector.broadcast %cst_60 : f32 to vector<32x512xf32>
    %79 = arith.maximumf %77, %78 : vector<32x512xf32>
    %c0_61 = arith.constant 0 : index
    %c0_62 = arith.constant 0 : index
    %80 = vector.load %arg6[%c0_61, %c0_62] : memref<3x32xf32, #tpu.memory_space<vmem>>, vector<3x32xf32>
    %cst_63 = arith.constant dense<0.000000e+00> : vector<3x512xf32>
    %81 = tpu.matmul %80, %79, %cst_63 {dimension_numbers = #tpu.dot_dimension_numbers<[1], [0], [0], [1], [0, 0, 1, 1], [], []>} : vector<3x32xf32>, vector<32x512xf32>, vector<3x512xf32> -> vector<3x512xf32>
    %c0_64 = arith.constant 0 : index
    %c0_65 = arith.constant 0 : index
    %82 = vector.load %arg7[%c0_64, %c0_65] : memref<3x1xf32, #tpu.memory_space<vmem>>, vector<3x1xf32>
    %83 = vector.broadcast %82 : vector<3x1xf32> to vector<3x512xf32>
    %84 = arith.addf %81, %83 : vector<3x512xf32>
    %85 = arith.negf %84 : vector<3x512xf32>
    %86 = math.exp %85 : vector<3x512xf32>
    %cst_66 = arith.constant 1.000000e+00 : f32
    %87 = vector.broadcast %cst_66 : f32 to vector<3x512xf32>
    %88 = arith.addf %87, %86 : vector<3x512xf32>
    %89 = arith.divf %87, %88 : vector<3x512xf32>
    %c0_67 = arith.constant 0 : index
    %90 = arith.index_cast %1 : i32 to index
    %91 = vector.load %arg8[%c0_67, %90] : memref<3x1024xf32, #tpu.memory_space<vmem>>, vector<3x512xf32>
    tpu.vector_store %arg8[%c0_67, %90], %89 {strides = array<i32>} : memref<3x1024xf32, #tpu.memory_space<vmem>>, vector<3x512xf32>,
    %c1_i32 = arith.constant 1 : i32
    %c512_i32_68 = arith.constant 512 : i32
    %92 = arith.muli %c1_i32, %c512_i32_68 : i32
    %93 = tpu.assume_multiple %92, 512 : i32
    %c0_69 = arith.constant 0 : index
    %94 = arith.index_cast %93 : i32 to index
    %95 = vector.load %arg1[%c0_69, %94] : memref<8x1024xf32, #tpu.memory_space<vmem>>, vector<8x512xf32>
    %c0_70 = arith.constant 0 : index
    %c0_71 = arith.constant 0 : index
    %96 = vector.load %arg2[%c0_70, %c0_71] : memref<16x8xf32, #tpu.memory_space<vmem>>, vector<16x8xf32>
    %cst_72 = arith.constant dense<0.000000e+00> : vector<16x512xf32>
    %97 = tpu.matmul %96, %95, %cst_72 {dimension_numbers = #tpu.dot_dimension_numbers<[1], [0], [0], [1], [0, 0, 1, 1], [], []>} : vector<16x8xf32>, vector<8x512xf32>, vector<16x512xf32> -> vector<16x512xf32>
    %c0_73 = arith.constant 0 : index
    %c0_74 = arith.constant 0 : index
    %98 = vector.load %arg9[%c0_73, %c0_74] : memref<40x512xf32, #tpu.memory_space<vmem>>, vector<8x512xf32>
    tpu.vector_store %arg9[%c0_73, %c0_74], %95 {strides = array<i32>} : memref<40x512xf32, #tpu.memory_space<vmem>>, vector<8x512xf32>,
    %99 = math.sin %97 : vector<16x512xf32>
    %c8_75 = arith.constant 8 : index
    %c0_76 = arith.constant 0 : index
    %100 = vector.load %arg9[%c8_75, %c0_76] : memref<40x512xf32, #tpu.memory_space<vmem>>, vector<16x512xf32>
    tpu.vector_store %arg9[%c8_75, %c0_76], %99 {strides = array<i32>} : memref<40x512xf32, #tpu.memory_space<vmem>>, vector<16x512xf32>,
    %101 = math.cos %97 : vector<16x512xf32>
    %c24_77 = arith.constant 24 : index
    %c0_78 = arith.constant 0 : index
    %102 = vector.load %arg9[%c24_77, %c0_78] : memref<40x512xf32, #tpu.memory_space<vmem>>, vector<16x512xf32>
    tpu.vector_store %arg9[%c24_77, %c0_78], %101 {strides = array<i32>} : memref<40x512xf32, #tpu.memory_space<vmem>>, vector<16x512xf32>,
    %c0_79 = arith.constant 0 : index
    %c0_80 = arith.constant 0 : index
    %103 = vector.load %arg9[%c0_79, %c0_80] : memref<40x512xf32, #tpu.memory_space<vmem>>, vector<40x512xf32>
    %c0_81 = arith.constant 0 : index
    %c0_82 = arith.constant 0 : index
    %c0_83 = arith.constant 0 : index
    %104 = vector.load %arg3[%c0_81, %c0_82, %c0_83] : memref<2x32x40xf32, #tpu.memory_space<vmem>>, vector<1x32x40xf32>
    %105 = vector.shape_cast %104 : vector<1x32x40xf32> to vector<32x40xf32>
    %cst_84 = arith.constant dense<0.000000e+00> : vector<32x512xf32>
    %106 = tpu.matmul %105, %103, %cst_84 {dimension_numbers = #tpu.dot_dimension_numbers<[1], [0], [0], [1], [0, 0, 1, 1], [], []>} : vector<32x40xf32>, vector<40x512xf32>, vector<32x512xf32> -> vector<32x512xf32>
    %c1_85 = arith.constant 1 : index
    %c0_86 = arith.constant 0 : index
    %c0_87 = arith.constant 0 : index
    %107 = vector.load %arg3[%c1_85, %c0_86, %c0_87] : memref<2x32x40xf32, #tpu.memory_space<vmem>>, vector<1x32x40xf32>
    %108 = vector.shape_cast %107 : vector<1x32x40xf32> to vector<32x40xf32>
    %cst_88 = arith.constant dense<0.000000e+00> : vector<32x512xf32>
    %109 = tpu.matmul %108, %103, %cst_88 {dimension_numbers = #tpu.dot_dimension_numbers<[1], [0], [0], [1], [0, 0, 1, 1], [], []>} : vector<32x40xf32>, vector<40x512xf32>, vector<32x512xf32> -> vector<32x512xf32>
    %c0_89 = arith.constant 0 : index
    %c0_90 = arith.constant 0 : index
    %110 = vector.load %arg5[%c0_89, %c0_90] : memref<32x8xf32, #tpu.memory_space<vmem>>, vector<32x1xf32>
    %111 = vector.broadcast %110 : vector<32x1xf32> to vector<32x512xf32>
    %112 = arith.addf %106, %111 : vector<32x512xf32>
    %cst_91 = arith.constant 0.000000e+00 : f32
    %113 = vector.broadcast %cst_91 : f32 to vector<32x512xf32>
    %114 = arith.maximumf %112, %113 : vector<32x512xf32>
    %c0_92 = arith.constant 0 : index
    %c0_93 = arith.constant 0 : index
    %c0_94 = arith.constant 0 : index
    %115 = vector.load %arg4[%c0_92, %c0_93, %c0_94] : memref<7x32x32xf32, #tpu.memory_space<vmem>>, vector<1x32x32xf32>
    %116 = vector.shape_cast %115 : vector<1x32x32xf32> to vector<32x32xf32>
    %cst_95 = arith.constant dense<0.000000e+00> : vector<32x512xf32>
    %117 = tpu.matmul %116, %114, %cst_95 {dimension_numbers = #tpu.dot_dimension_numbers<[1], [0], [0], [1], [0, 0, 1, 1], [], []>} : vector<32x32xf32>, vector<32x512xf32>, vector<32x512xf32> -> vector<32x512xf32>
    %c0_96 = arith.constant 0 : index
    %c1_97 = arith.constant 1 : index
    %118 = vector.load %arg5[%c0_96, %c1_97] : memref<32x8xf32, #tpu.memory_space<vmem>>, vector<32x1xf32>
    %119 = vector.broadcast %118 : vector<32x1xf32> to vector<32x512xf32>
    %120 = arith.addf %117, %119 : vector<32x512xf32>
    %cst_98 = arith.constant 0.000000e+00 : f32
    %121 = vector.broadcast %cst_98 : f32 to vector<32x512xf32>
    %122 = arith.maximumf %120, %121 : vector<32x512xf32>
    %c1_99 = arith.constant 1 : index
    %c0_100 = arith.constant 0 : index
    %c0_101 = arith.constant 0 : index
    %123 = vector.load %arg4[%c1_99, %c0_100, %c0_101] : memref<7x32x32xf32, #tpu.memory_space<vmem>>, vector<1x32x32xf32>
    %124 = vector.shape_cast %123 : vector<1x32x32xf32> to vector<32x32xf32>
    %cst_102 = arith.constant dense<0.000000e+00> : vector<32x512xf32>
    %125 = tpu.matmul %124, %122, %cst_102 {dimension_numbers = #tpu.dot_dimension_numbers<[1], [0], [0], [1], [0, 0, 1, 1], [], []>} : vector<32x32xf32>, vector<32x512xf32>, vector<32x512xf32> -> vector<32x512xf32>
    %c0_103 = arith.constant 0 : index
    %c2_104 = arith.constant 2 : index
    %126 = vector.load %arg5[%c0_103, %c2_104] : memref<32x8xf32, #tpu.memory_space<vmem>>, vector<32x1xf32>
    %127 = vector.broadcast %126 : vector<32x1xf32> to vector<32x512xf32>
    %128 = arith.addf %125, %127 : vector<32x512xf32>
    %cst_105 = arith.constant 0.000000e+00 : f32
    %129 = vector.broadcast %cst_105 : f32 to vector<32x512xf32>
    %130 = arith.maximumf %128, %129 : vector<32x512xf32>
    %c2_106 = arith.constant 2 : index
    %c0_107 = arith.constant 0 : index
    %c0_108 = arith.constant 0 : index
    %131 = vector.load %arg4[%c2_106, %c0_107, %c0_108] : memref<7x32x32xf32, #tpu.memory_space<vmem>>, vector<1x32x32xf32>
    %132 = vector.shape_cast %131 : vector<1x32x32xf32> to vector<32x32xf32>
    %cst_109 = arith.constant dense<0.000000e+00> : vector<32x512xf32>
    %133 = tpu.matmul %132, %130, %cst_109 {dimension_numbers = #tpu.dot_dimension_numbers<[1], [0], [0], [1], [0, 0, 1, 1], [], []>} : vector<32x32xf32>, vector<32x512xf32>, vector<32x512xf32> -> vector<32x512xf32>
    %c0_110 = arith.constant 0 : index
    %c3_111 = arith.constant 3 : index
    %134 = vector.load %arg5[%c0_110, %c3_111] : memref<32x8xf32, #tpu.memory_space<vmem>>, vector<32x1xf32>
    %135 = vector.broadcast %134 : vector<32x1xf32> to vector<32x512xf32>
    %136 = arith.addf %133, %135 : vector<32x512xf32>
    %cst_112 = arith.constant 0.000000e+00 : f32
    %137 = vector.broadcast %cst_112 : f32 to vector<32x512xf32>
    %138 = arith.maximumf %136, %137 : vector<32x512xf32>
    %c3_113 = arith.constant 3 : index
    %c0_114 = arith.constant 0 : index
    %c0_115 = arith.constant 0 : index
    %139 = vector.load %arg4[%c3_113, %c0_114, %c0_115] : memref<7x32x32xf32, #tpu.memory_space<vmem>>, vector<1x32x32xf32>
    %140 = vector.shape_cast %139 : vector<1x32x32xf32> to vector<32x32xf32>
    %cst_116 = arith.constant dense<0.000000e+00> : vector<32x512xf32>
    %141 = tpu.matmul %140, %138, %cst_116 {dimension_numbers = #tpu.dot_dimension_numbers<[1], [0], [0], [1], [0, 0, 1, 1], [], []>} : vector<32x32xf32>, vector<32x512xf32>, vector<32x512xf32> -> vector<32x512xf32>
    %c0_117 = arith.constant 0 : index
    %c4_118 = arith.constant 4 : index
    %142 = vector.load %arg5[%c0_117, %c4_118] : memref<32x8xf32, #tpu.memory_space<vmem>>, vector<32x1xf32>
    %143 = vector.broadcast %142 : vector<32x1xf32> to vector<32x512xf32>
    %144 = arith.addf %141, %143 : vector<32x512xf32>
    %cst_119 = arith.constant 0.000000e+00 : f32
    %145 = vector.broadcast %cst_119 : f32 to vector<32x512xf32>
    %146 = arith.maximumf %144, %145 : vector<32x512xf32>
    %c4_120 = arith.constant 4 : index
    %c0_121 = arith.constant 0 : index
    %c0_122 = arith.constant 0 : index
    %147 = vector.load %arg4[%c4_120, %c0_121, %c0_122] : memref<7x32x32xf32, #tpu.memory_space<vmem>>, vector<1x32x32xf32>
    %148 = vector.shape_cast %147 : vector<1x32x32xf32> to vector<32x32xf32>
    %cst_123 = arith.constant dense<0.000000e+00> : vector<32x512xf32>
    %149 = tpu.matmul %148, %146, %cst_123 {dimension_numbers = #tpu.dot_dimension_numbers<[1], [0], [0], [1], [0, 0, 1, 1], [], []>} : vector<32x32xf32>, vector<32x512xf32>, vector<32x512xf32> -> vector<32x512xf32>
    %150 = arith.addf %149, %109 : vector<32x512xf32>
    %c0_124 = arith.constant 0 : index
    %c5_125 = arith.constant 5 : index
    %151 = vector.load %arg5[%c0_124, %c5_125] : memref<32x8xf32, #tpu.memory_space<vmem>>, vector<32x1xf32>
    %152 = vector.broadcast %151 : vector<32x1xf32> to vector<32x512xf32>
    %153 = arith.addf %150, %152 : vector<32x512xf32>
    %cst_126 = arith.constant 0.000000e+00 : f32
    %154 = vector.broadcast %cst_126 : f32 to vector<32x512xf32>
    %155 = arith.maximumf %153, %154 : vector<32x512xf32>
    %c5_127 = arith.constant 5 : index
    %c0_128 = arith.constant 0 : index
    %c0_129 = arith.constant 0 : index
    %156 = vector.load %arg4[%c5_127, %c0_128, %c0_129] : memref<7x32x32xf32, #tpu.memory_space<vmem>>, vector<1x32x32xf32>
    %157 = vector.shape_cast %156 : vector<1x32x32xf32> to vector<32x32xf32>
    %cst_130 = arith.constant dense<0.000000e+00> : vector<32x512xf32>
    %158 = tpu.matmul %157, %155, %cst_130 {dimension_numbers = #tpu.dot_dimension_numbers<[1], [0], [0], [1], [0, 0, 1, 1], [], []>} : vector<32x32xf32>, vector<32x512xf32>, vector<32x512xf32> -> vector<32x512xf32>
    %c0_131 = arith.constant 0 : index
    %c6_132 = arith.constant 6 : index
    %159 = vector.load %arg5[%c0_131, %c6_132] : memref<32x8xf32, #tpu.memory_space<vmem>>, vector<32x1xf32>
    %160 = vector.broadcast %159 : vector<32x1xf32> to vector<32x512xf32>
    %161 = arith.addf %158, %160 : vector<32x512xf32>
    %cst_133 = arith.constant 0.000000e+00 : f32
    %162 = vector.broadcast %cst_133 : f32 to vector<32x512xf32>
    %163 = arith.maximumf %161, %162 : vector<32x512xf32>
    %c6_134 = arith.constant 6 : index
    %c0_135 = arith.constant 0 : index
    %c0_136 = arith.constant 0 : index
    %164 = vector.load %arg4[%c6_134, %c0_135, %c0_136] : memref<7x32x32xf32, #tpu.memory_space<vmem>>, vector<1x32x32xf32>
    %165 = vector.shape_cast %164 : vector<1x32x32xf32> to vector<32x32xf32>
    %cst_137 = arith.constant dense<0.000000e+00> : vector<32x512xf32>
    %166 = tpu.matmul %165, %163, %cst_137 {dimension_numbers = #tpu.dot_dimension_numbers<[1], [0], [0], [1], [0, 0, 1, 1], [], []>} : vector<32x32xf32>, vector<32x512xf32>, vector<32x512xf32> -> vector<32x512xf32>
    %c0_138 = arith.constant 0 : index
    %c7_139 = arith.constant 7 : index
    %167 = vector.load %arg5[%c0_138, %c7_139] : memref<32x8xf32, #tpu.memory_space<vmem>>, vector<32x1xf32>
    %168 = vector.broadcast %167 : vector<32x1xf32> to vector<32x512xf32>
    %169 = arith.addf %166, %168 : vector<32x512xf32>
    %cst_140 = arith.constant 0.000000e+00 : f32
    %170 = vector.broadcast %cst_140 : f32 to vector<32x512xf32>
    %171 = arith.maximumf %169, %170 : vector<32x512xf32>
    %c0_141 = arith.constant 0 : index
    %c0_142 = arith.constant 0 : index
    %172 = vector.load %arg6[%c0_141, %c0_142] : memref<3x32xf32, #tpu.memory_space<vmem>>, vector<3x32xf32>
    %cst_143 = arith.constant dense<0.000000e+00> : vector<3x512xf32>
    %173 = tpu.matmul %172, %171, %cst_143 {dimension_numbers = #tpu.dot_dimension_numbers<[1], [0], [0], [1], [0, 0, 1, 1], [], []>} : vector<3x32xf32>, vector<32x512xf32>, vector<3x512xf32> -> vector<3x512xf32>
    %c0_144 = arith.constant 0 : index
    %c0_145 = arith.constant 0 : index
    %174 = vector.load %arg7[%c0_144, %c0_145] : memref<3x1xf32, #tpu.memory_space<vmem>>, vector<3x1xf32>
    %175 = vector.broadcast %174 : vector<3x1xf32> to vector<3x512xf32>
    %176 = arith.addf %173, %175 : vector<3x512xf32>
    %177 = arith.negf %176 : vector<3x512xf32>
    %178 = math.exp %177 : vector<3x512xf32>
    %cst_146 = arith.constant 1.000000e+00 : f32
    %179 = vector.broadcast %cst_146 : f32 to vector<3x512xf32>
    %180 = arith.addf %179, %178 : vector<3x512xf32>
    %181 = arith.divf %179, %180 : vector<3x512xf32>
    %c0_147 = arith.constant 0 : index
    %182 = arith.index_cast %93 : i32 to index
    %183 = vector.load %arg8[%c0_147, %182] : memref<3x1024xf32, #tpu.memory_space<vmem>>, vector<3x512xf32>
    tpu.vector_store %arg8[%c0_147, %182], %181 {strides = array<i32>} : memref<3x1024xf32, #tpu.memory_space<vmem>>, vector<3x512xf32>,
    %c2_i32 = arith.constant 2 : i32
    return
  }
  func.func @transform_0(%arg0: i32) -> (i32, i32) {
    %c0_i32 = arith.constant 0 : i32
    %c0_i32_0 = arith.constant 0 : i32
    return %c0_i32, %arg0 : i32, i32
  }
  func.func @transform_1(%arg0: i32) -> (i32, i32) {
    %c0_i32 = arith.constant 0 : i32
    %c0_i32_0 = arith.constant 0 : i32
    %c0_i32_1 = arith.constant 0 : i32
    return %c0_i32, %c0_i32_0 : i32, i32
  }
  func.func @transform_2(%arg0: i32) -> (i32, i32, i32) {
    %c0_i32 = arith.constant 0 : i32
    %c0_i32_0 = arith.constant 0 : i32
    %c0_i32_1 = arith.constant 0 : i32
    %c0_i32_2 = arith.constant 0 : i32
    return %c0_i32, %c0_i32_0, %c0_i32_1 : i32, i32, i32
  }
  func.func @transform_3(%arg0: i32) -> (i32, i32, i32) {
    %c0_i32 = arith.constant 0 : i32
    %c0_i32_0 = arith.constant 0 : i32
    %c0_i32_1 = arith.constant 0 : i32
    %c0_i32_2 = arith.constant 0 : i32
    return %c0_i32, %c0_i32_0, %c0_i32_1 : i32, i32, i32
  }
  func.func @transform_4(%arg0: i32) -> (i32, i32) {
    %c0_i32 = arith.constant 0 : i32
    %c0_i32_0 = arith.constant 0 : i32
    %c0_i32_1 = arith.constant 0 : i32
    return %c0_i32, %c0_i32_0 : i32, i32
  }
  func.func @transform_5(%arg0: i32) -> (i32, i32) {
    %c0_i32 = arith.constant 0 : i32
    %c0_i32_0 = arith.constant 0 : i32
    %c0_i32_1 = arith.constant 0 : i32
    return %c0_i32, %c0_i32_0 : i32, i32
  }
  func.func @transform_6(%arg0: i32) -> (i32, i32) {
    %c0_i32 = arith.constant 0 : i32
    %c0_i32_0 = arith.constant 0 : i32
    %c0_i32_1 = arith.constant 0 : i32
    return %c0_i32, %c0_i32_0 : i32, i32
  }
  func.func @transform_7(%arg0: i32) -> (i32, i32) {
    %c0_i32 = arith.constant 0 : i32
    %c0_i32_0 = arith.constant 0 : i32
    return %c0_i32, %arg0 : i32, i32
  }
}

</mosaic_0001>

<llo_original>
// kernel: latent_mlp_forward.1
$region0: #{latent_mlp_forward.1}
  #allocation0 [shape = 'u32[]', space=smem, size = 0x4, offset = 0x4, fixed_abs, tag = 'smem constant byte address 0x4 - core index']
  #allocation1 [shape = 'u32[144,128]{1,0:T(1,128)}', space=vmem, size = 0x12000, scoped, tag = 'internal scratch']
  #allocation2 [shape = 'f32[40,512]{1,0:T(8,128)}', space=vmem, size = 0x14000, scoped, tag = 'scratch operand']
  %s0 = inlined_call_operand.vmem [shape: f32[8,8192], index: 0, kind: input, shape index: {}]
  %s1 = inlined_call_operand.vmem [shape: f32[16,8], index: 1, kind: input, shape index: {}]
  %s2 = inlined_call_operand.vmem [shape: f32[2,32,40], index: 2, kind: input, shape index: {}]
  %s3 = inlined_call_operand.vmem [shape: f32[7,32,32], index: 3, kind: input, shape index: {}]
  %s4 = inlined_call_operand.vmem [shape: f32[32,8], index: 4, kind: input, shape index: {}]
  %s5 = inlined_call_operand.vmem [shape: f32[3,32], index: 5, kind: input, shape index: {}]
  %s6 = inlined_call_operand.vmem [shape: f32[3,1], index: 6, kind: input, shape index: {}]
  %s7 = inlined_call_operand.hbm [shape: f32[3,8192], index: 7, kind: output, shape index: {}]
  %s8 = sld [smem:[#allocation0]]
  $region61: #{latent_mlp_forward.1} parent=0
    _
  %s10 = ssub.s32 1, %s8
  %s11 = scalar_select 0, %s10, %s8
  $region1: #{latent_mlp_forward.1} parent=0
    #allocation3 [shape = 'u8[32768]{0}', space=vmem, size = 0x8000, scoped, tag = 'output window, operand 0']
    #allocation4 [shape = 's32[2]{0}', space=sflag, size = 0x8, scoped, tag = 'scoped memory for latent_mlp_forward.1']
    %12 = vsyncpa [#allocation4], 0
    %s13 = scalar_lea.sflag [#allocation4], 1
    %14 = vsyncpa %s13, 0
    loop: start=0, step=1, limit=10
    $region2: #{latent_mlp_forward.1} parent=1 // loop_pre_header
      _
    $region3: #{latent_mlp_forward.1} parent=1 // loop_header
      %s16 = sphi 0, %s20
      %p17 = scmp.ge.s32.totalorder %s16, 10
      %s26 = sphi 0, %s28
      %s29 = sphi 0, %s26
      %s30 = sphi 0, %s29
      %s46 = sphi 0, %s30
      %s50 = sphi 0, %s50
      %s52 = sphi 0, %s50
      %s53 = sphi 0, %s52
      %s67 = sphi 0, %s53
      %s71 = sphi 0, %s71
      %s73 = sphi 0, %s71
      %s74 = sphi 0, %s73
      %s88 = sphi 0, %s74
      %s92 = sphi 0, %s92
      %s94 = sphi 0, %s92
      %s95 = sphi 0, %s94
      %s109 = sphi 0, %s95
      %s113 = sphi 0, %s113
      %s115 = sphi 0, %s113
      %s116 = sphi 0, %s115
      %s130 = sphi 0, %s116
      %s134 = sphi 0, %s134
      %s136 = sphi 0, %s134
      %s137 = sphi 0, %s136
      %s151 = sphi 0, %s137
      %s155 = sphi 0, %s155
      %s157 = sphi 0, %s155
      %s158 = sphi 0, %s157
      %s172 = sphi 0, %s158
      %s178 = sphi 0, %s180
      %s181 = sphi 0, %s178
      %s182 = sphi 0, %s181
      %s198 = sphi 0, %s182
    $region4: #{latent_mlp_forward.1} parent=1 // loop_header_branch
      %19 = sbr.rel (%p17) target = $region8
    $region5: #{latent_mlp_forward.1} parent=1 // loop_body
      %s21 = ssub.s32 %s16, 1
      %s22 = ssub.s32 %s16, 2
      %s23 = sadd.s32 %s16, 1
      %s24 = ssub.s32 %s16, %s23
      %p25 = scmp.eq.s32.totalorder %s24, 0
      %s27 = sadd.s32 %s26, 1
      %s28 = scalar_select %p25, %s26, %s27
      %p31 = pneg %p25
      %p32 = scmp.eq.s32.totalorder %s16, 7
      %p33 = por %p31, %p32
      %p34 = scmp.ne.s32.totalorder %s26, %s29
      %p35 = scmp.eq.s32.totalorder %s16, 0
      %p36 = por %p34, %p35
      %p37 = scmp.ne.s32.totalorder %s26, %s29
      %p38 = scmp.eq.s32.totalorder %s21, 7
      %p39 = por %p37, %p38
      %p40 = scmp.ne.s32.totalorder %s29, %s30
      %p41 = scmp.eq.s32.totalorder %s21, 0
      %p42 = por %p40, %p41
      %p43 = scmp.ne.s32.totalorder %s29, %s30
      %p44 = scmp.eq.s32.totalorder %s22, 7
      %p45 = por %p43, %p44
      %p47 = scmp.ne.s32.totalorder %s30, %s46
      %p48 = scmp.eq.s32.totalorder %s22, 0
      %p49 = por %p47, %p48
      %s51 = sadd.s32 %s50, 1
      %p54 = scmp.eq.s32.totalorder %s16, 7
      %p55 = scmp.ne.s32.totalorder %s50, %s52
      %p56 = scmp.eq.s32.totalorder %s16, 0
      %p57 = por %p55, %p56
      %p58 = scmp.ne.s32.totalorder %s50, %s52
      %p59 = scmp.eq.s32.totalorder %s21, 7
      %p60 = por %p58, %p59
      %p61 = scmp.ne.s32.totalorder %s52, %s53
      %p62 = scmp.eq.s32.totalorder %s21, 0
      %p63 = por %p61, %p62
      %p64 = scmp.ne.s32.totalorder %s52, %s53
      %p65 = scmp.eq.s32.totalorder %s22, 7
      %p66 = por %p64, %p65
      %p68 = scmp.ne.s32.totalorder %s53, %s67
      %p69 = scmp.eq.s32.totalorder %s22, 0
      %p70 = por %p68, %p69
      %s72 = sadd.s32 %s71, 1
      %p75 = scmp.eq.s32.totalorder %s16, 7
      %p76 = scmp.ne.s32.totalorder %s71, %s73
      %p77 = scmp.eq.s32.totalorder %s16, 0
      %p78 = por %p76, %p77
      %p79 = scmp.ne.s32.totalorder %s71, %s73
      %p80 = scmp.eq.s32.totalorder %s21, 7
      %p81 = por %p79, %p80
      %p82 = scmp.ne.s32.totalorder %s73, %s74
      %p83 = scmp.eq.s32.totalorder %s21, 0
      %p84 = por %p82, %p83
      %p85 = scmp.ne.s32.totalorder %s73, %s74
      %p86 = scmp.eq.s32.totalorder %s22, 7
      %p87 = por %p85, %p86
      %p89 = scmp.ne.s32.totalorder %s74, %s88
      %p90 = scmp.eq.s32.totalorder %s22, 0
      %p91 = por %p89, %p90
      %s93 = sadd.s32 %s92, 1
      %p96 = scmp.eq.s32.totalorder %s16, 7
      %p97 = scmp.ne.s32.totalorder %s92, %s94
      %p98 = scmp.eq.s32.totalorder %s16, 0
      %p99 = por %p97, %p98
      %p100 = scmp.ne.s32.totalorder %s92, %s94
      %p101 = scmp.eq.s32.totalorder %s21, 7
      %p102 = por %p100, %p101
      %p103 = scmp.ne.s32.totalorder %s94, %s95
      %p104 = scmp.eq.s32.totalorder %s21, 0
      %p105 = por %p103, %p104
      %p106 = scmp.ne.s32.totalorder %s94, %s95
      %p107 = scmp.eq.s32.totalorder %s22, 7
      %p108 = por %p106, %p107
      %p110 = scmp.ne.s32.totalorder %s95, %s109
      %p111 = scmp.eq.s32.totalorder %s22, 0
      %p112 = por %p110, %p111
      %s114 = sadd.s32 %s113, 1
      %p117 = scmp.eq.s32.totalorder %s16, 7
      %p118 = scmp.ne.s32.totalorder %s113, %s115
      %p119 = scmp.eq.s32.totalorder %s16, 0
      %p120 = por %p118, %p119
      %p121 = scmp.ne.s32.totalorder %s113, %s115
      %p122 = scmp.eq.s32.totalorder %s21, 7
      %p123 = por %p121, %p122
      %p124 = scmp.ne.s32.totalorder %s115, %s116
      %p125 = scmp.eq.s32.totalorder %s21, 0
      %p126 = por %p124, %p125
      %p127 = scmp.ne.s32.totalorder %s115, %s116
      %p128 = scmp.eq.s32.totalorder %s22, 7
      %p129 = por %p127, %p128
      %p131 = scmp.ne.s32.totalorder %s116, %s130
      %p132 = scmp.eq.s32.totalorder %s22, 0
      %p133 = por %p131, %p132
      %s135 = sadd.s32 %s134, 1
      %p138 = scmp.eq.s32.totalorder %s16, 7
      %p139 = scmp.ne.s32.totalorder %s134, %s136
      %p140 = scmp.eq.s32.totalorder %s16, 0
      %p141 = por %p139, %p140
      %p142 = scmp.ne.s32.totalorder %s134, %s136
      %p143 = scmp.eq.s32.totalorder %s21, 7
      %p144 = por %p142, %p143
      %p145 = scmp.ne.s32.totalorder %s136, %s137
      %p146 = scmp.eq.s32.totalorder %s21, 0
      %p147 = por %p145, %p146
      %p148 = scmp.ne.s32.totalorder %s136, %s137
      %p149 = scmp.eq.s32.totalorder %s22, 7
      %p150 = por %p148, %p149
      %p152 = scmp.ne.s32.totalorder %s137, %s151
      %p153 = scmp.eq.s32.totalorder %s22, 0
      %p154 = por %p152, %p153
      %s156 = sadd.s32 %s155, 1
      %p159 = scmp.eq.s32.totalorder %s16, 7
      %p160 = scmp.ne.s32.totalorder %s155, %s157
      %p161 = scmp.eq.s32.totalorder %s16, 0
      %p162 = por %p160, %p161
      %p163 = scmp.ne.s32.totalorder %s155, %s157
      %p164 = scmp.eq.s32.totalorder %s21, 7
      %p165 = por %p163, %p164
      %p166 = scmp.ne.s32.totalorder %s157, %s158
      %p167 = scmp.eq.s32.totalorder %s21, 0
      %p168 = por %p166, %p167
      %p169 = scmp.ne.s32.totalorder %s157, %s158
      %p170 = scmp.eq.s32.totalorder %s22, 7
      %p171 = por %p169, %p170
      %p173 = scmp.ne.s32.totalorder %s158, %s172
      %p174 = scmp.eq.s32.totalorder %s22, 0
      %p175 = por %p173, %p174
      %s176 = ssub.s32 %s16, %s23
      %p177 = scmp.eq.s32.totalorder %s176, 0
      %s179 = sadd.s32 %s178, 1
      %s180 = scalar_select %p177, %s178, %s179
      %p183 = pneg %p177
      %p184 = scmp.eq.s32.totalorder %s16, 7
      %p185 = por %p183, %p184
      %p186 = scmp.ne.s32.totalorder %s178, %s181
      %p187 = scmp.eq.s32.totalorder %s16, 0
      %p188 = por %p186, %p187
      %p189 = scmp.ne.s32.totalorder %s178, %s181
      %p190 = scmp.eq.s32.totalorder %s21, 7
      %p191 = por %p189, %p190
      %p192 = scmp.ne.s32.totalorder %s181, %s182
      %p193 = scmp.eq.s32.totalorder %s21, 0
      %p194 = por %p192, %p193
      %p195 = scmp.ne.s32.totalorder %s181, %s182
      %p196 = scmp.eq.s32.totalorder %s22, 7
      %p197 = por %p195, %p196
      %p199 = scmp.ne.s32.totalorder %s182, %s198
      %p200 = scmp.eq.s32.totalorder %s22, 0
      %p201 = por %p199, %p200
      %p202 = scmp.le.s32.totalorder 1, %s16
      %p203 = scmp.lt.s32.totalorder %s16, 9
      %p204 = pnand %p202, %p203
      %p205 = pneg %p204
      // Predicated region
      $region9: #{latent_mlp_forward.1} parent=5 // pred_check
        _
      $region10: #{latent_mlp_forward.1} parent=5 // pred_check_branch
        %207 = sbr.rel (%p204) target = $region12
      $region11: #{latent_mlp_forward.1} parent=5 // pred_region
        %s208 = ssub.s32 %s16, 1
        // Predicated region
        $region13: #{latent_mlp_forward.1} parent=11 // pred_check
          %p209 = pneg %p63
        $region14: #{latent_mlp_forward.1} parent=11 // pred_check_branch
          %211 = sbr.rel (%p209) target = $region16
        $region15: #{latent_mlp_forward.1} parent=11 // pred_region
          _
        $region16: #{latent_mlp_forward.1} parent=11 // pred_fallthru
          _
        // Predicated region
        $region17: #{latent_mlp_forward.1} parent=11 // pred_check
          %p212 = pneg %p84
        $region18: #{latent_mlp_forward.1} parent=11 // pred_check_branch
          %214 = sbr.rel (%p212) target = $region20
        $region19: #{latent_mlp_forward.1} parent=11 // pred_region
          _
        $region20: #{latent_mlp_forward.1} parent=11 // pred_fallthru
          _
        // Predicated region
        $region21: #{latent_mlp_forward.1} parent=11 // pred_check
          %p215 = pneg %p105
        $region22: #{latent_mlp_forward.1} parent=11 // pred_check_branch
          %217 = sbr.rel (%p215) target = $region24
        $region23: #{latent_mlp_forward.1} parent=11 // pred_region
          _
        $region24: #{latent_mlp_forward.1} parent=11 // pred_fallthru
          _
        // Predicated region
        $region25: #{latent_mlp_forward.1} parent=11 // pred_check
          %p218 = pneg %p126
        $region26: #{latent_mlp_forward.1} parent=11 // pred_check_branch
          %220 = sbr.rel (%p218) target = $region28
        $region27: #{latent_mlp_forward.1} parent=11 // pred_region
          _
        $region28: #{latent_mlp_forward.1} parent=11 // pred_fallthru
          _
        // Predicated region
        $region29: #{latent_mlp_forward.1} parent=11 // pred_check
          %p221 = pneg %p147
        $region30: #{latent_mlp_forward.1} parent=11 // pred_check_branch
          %223 = sbr.rel (%p221) target = $region32
        $region31: #{latent_mlp_forward.1} parent=11 // pred_region
          _
        $region32: #{latent_mlp_forward.1} parent=11 // pred_fallthru
          _
        // Predicated region
        $region33: #{latent_mlp_forward.1} parent=11 // pred_check
          %p224 = pneg %p168
        $region34: #{latent_mlp_forward.1} parent=11 // pred_check_branch
          %226 = sbr.rel (%p224) target = $region36
        $region35: #{latent_mlp_forward.1} parent=11 // pred_region
          _
        $region36: #{latent_mlp_forward.1} parent=11 // pred_fallthru
          _
      $region12: #{latent_mlp_forward.1} parent=5 // pred_fallthru
        _
      %p227 = scmp.lt.s32.totalorder %s16, 8
      // Predicated region
      $region37: #{latent_mlp_forward.1} parent=5 // pred_check
        %p228 = pneg %p227
      $region38: #{latent_mlp_forward.1} parent=5 // pred_check_branch
        %230 = sbr.rel (%p228) target = $region40
      $region39: #{latent_mlp_forward.1} parent=5 // pred_region
        // Predicated region
        $region41: #{latent_mlp_forward.1} parent=39 // pred_check
          %p231 = pneg %p36
        $region42: #{latent_mlp_forward.1} parent=39 // pred_check_branch
          %233 = sbr.rel (%p231) target = $region44
        $region43: #{latent_mlp_forward.1} parent=39 // pred_region
          %s234 = smul.u32 8, %s16
          %p235 = scmp.lt.s32.totalorder %s234, 63
          %s236 = scalar_select %p235, %s234, 63
          %s237 = smul.addr %s236, 8
          %s238 = scalar_lea.vmem %s0, %s237
          %s239 = smul.u32 8, %s16
        $region44: #{latent_mlp_forward.1} parent=39 // pred_fallthru
          _
      $region40: #{latent_mlp_forward.1} parent=5 // pred_fallthru
        _
      %p240 = scmp.le.s32.totalorder 1, %s16
      %p241 = scmp.lt.s32.totalorder %s16, 9
      %p242 = pnand %p240, %p241
      %p243 = pneg %p242
      // Predicated region
      $region45: #{latent_mlp_forward.1} parent=5 // pred_check
        _
      $region46: #{latent_mlp_forward.1} parent=5 // pred_check_branch
        %245 = sbr.rel (%p242) target = $region48
      $region47: #{latent_mlp_forward.1} parent=5 // pred_region
        %s246 = ssub.s32 %s16, 1
        %s247 = smul.u32 8, %s21
        %p248 = scmp.lt.s32.totalorder %s247, 63
        %s249 = scalar_select %p248, %s247, 63
        %s250 = smul.addr %s249, 8
        %s251 = scalar_lea.vmem %s0, %s250
        %p252 = pneg %p42
        %p253 = pneg %p39
        %p254 = pneg %p63
        %p255 = pneg %p60
        %p256 = pneg %p84
        %p257 = pneg %p81
        %p258 = pneg %p105
        %p259 = pneg %p102
        %p260 = pneg %p126
        %p261 = pneg %p123
        %p262 = pneg %p147
        %p263 = pneg %p144
        %p264 = pneg %p168
        %p265 = pneg %p165
        %p266 = pneg %p194
        %p267 = pneg %p191
        %s268 = sand.u32 %s181, 1
        %s269 = scalar_lea.sflag [#allocation4], %s268
        %s270 = sand.u32 %s181, 1
        %s271 = smul.addr %s270, 32
        %s272 = scalar_lea.vmem [#allocation3], %s271
        %s273 = smul.u32 8, %s21
        %p274 = scmp.lt.s32.totalorder %s273, 63
        %s275 = scalar_select %p274, %s273, 63
        %s276 = smul.addr %s275, 8
        %s277 = scalar_lea.vmem %s0, %s276
        %s278 = smul.u32 8, %s21
        %s279 = smul.u32 8, %s21
        %v280 = vld [vmem:[%s277] sm:$0xff]
        %v281 = vld [vmem:[%s277 + $0x8] sm:$0xff]
        %v282 = vld [vmem:[%s277 + $0x10] sm:$0xff]
        %v283 = vld [vmem:[%s277 + $0x18] sm:$0xff]
        %v284 = vld [vmem:[%s1] sm:$0xff]
        %v285 = vld [vmem:[%s1 + $0x8] sm:$0xff]
        %vm286 = vcmask 64512
        %v288 = vsel %vm286, %v284, 0
        %v291 = vsel %vm286, %v285, 0
        %293 = vmatprep.subr.mxu0 %v281
        %294 = vmatpush1.msra.mxu0 %v280
        %295 = vmatprep.subr.mxu0 0.0
        %296 = vmatpush1.msra.mxu0 0.0
        %297 = vmatprep.subr.mxu0 0.0
        %298 = vmatpush1.msra.mxu0 0.0
        %299 = vmatprep.subr.mxu0 0.0
        %300 = vmatpush1.msra.mxu0 0.0
        %301 = vmatprep.subr.mxu0 0.0
        %302 = vmatpush1.msra.mxu0 0.0
        %303 = vmatprep.subr.mxu0 0.0
        %304 = vmatpush1.msra.mxu0 0.0
        %305 = vmatprep.subr.mxu0 0.0
        %306 = vmatpush1.msra.mxu0 0.0
        %307 = vmatprep.subr.mxu0 0.0
        %308 = vmatpush1.msra.mxu0 0.0
        %309 = vmatprep.subr.mxu0 0.0
        %310 = vmatpush1.msra.mxu0 0.0
        %311 = vmatprep.subr.mxu0 0.0
        %312 = vmatpush1.msra.mxu0 0.0
        %313 = vmatprep.subr.mxu0 0.0
        %314 = vmatpush1.msra.mxu0 0.0
        %315 = vmatprep.subr.mxu0 0.0
        %316 = vmatpush1.msra.mxu0 0.0
        %317 = vmatprep.subr.mxu0 0.0
        %318 = vmatpush1.msra.mxu0 0.0
        %319 = vmatprep.subr.mxu0 0.0
        %320 = vmatpush1.msra.mxu0 0.0
        %321 = vmatprep.subr.mxu0 0.0
        %322 = vmatpush1.msra.mxu0 0.0
        %323 = vmatprep.subr.mxu0 0.0
        %324 = vmatpush1.msra.mxu0 0.0
        %325 = vmatprep.subr.mxu0 0.0
        %326 = vmatpush1.msra.mxu0 0.0
        %327 = vmatprep.subr.mxu0 0.0
        %328 = vmatpush1.msra.mxu0 0.0
        %329 = vmatprep.subr.mxu0 0.0
        %330 = vmatpush1.msra.mxu0 0.0
        %331 = vmatprep.subr.mxu0 0.0
        %332 = vmatpush1.msra.mxu0 0.0
        %333 = vmatprep.subr.mxu0 0.0
        %334 = vmatpush1.msra.mxu0 0.0
        %335 = vmatprep.subr.mxu0 0.0
        %336 = vmatpush1.msra.mxu0 0.0
        %337 = vmatprep.subr.mxu0 0.0
        %338 = vmatpush1.msra.mxu0 0.0
        %339 = vmatprep.subr.mxu0 0.0
        %340 = vmatpush1.msra.mxu0 0.0
        %341 = vmatprep.subr.mxu0 0.0
        %342 = vmatpush1.msra.mxu0 0.0
        %343 = vmatprep.subr.mxu0 0.0
        %344 = vmatpush1.msra.mxu0 0.0
        %345 = vmatprep.subr.mxu0 0.0
        %346 = vmatpush1.msra.mxu0 0.0
        %347 = vmatprep.subr.mxu0 0.0
        %348 = vmatpush1.msra.mxu0 0.0
        %349 = vmatprep.subr.mxu0 0.0
        %350 = vmatpush1.msra.mxu0 0.0
        %351 = vmatprep.subr.mxu0 0.0
        %352 = vmatpush1.msra.mxu0 0.0
        %353 = vmatprep.subr.mxu0 0.0
        %354 = vmatpush1.msra.mxu0 0.0
        %355 = vmatprep.subr.mxu0 0.0
        %356 = vmatpush1.msra.mxu0 0.0
        %357 = vmatprep.mubr.f32.mxu0 0.0
        %358 = vmatmul.mubr.f32.gmra.mrb[0].mxu0 %v288
        %v359 = vpop.f32.mrb[0].mxu0
        %v360 = vadd.f32 0.0, %v359
        %v361 = vpop.f32.mrb[0].mxu0
        %v362 = vadd.f32 0.0, %v361
        %363 = vmatprep.mubr.f32.mxu0 0.0
        %364 = vmatmul.mubr.f32.gmra.mrb[0].mxu0 %v291
        %v365 = vpop.f32.mrb[0].mxu0
        %v366 = vadd.f32 0.0, %v365
        %v367 = vpop.f32.mrb[0].mxu0
        %v368 = vadd.f32 0.0, %v367
        %369 = vdwg.mxu0
        %370 = vmatprep.subr.mxu0 %v283
        %371 = vmatpush1.msra.mxu0 %v282
        %372 = vmatprep.subr.mxu0 0.0
        %373 = vmatpush1.msra.mxu0 0.0
        %374 = vmatprep.subr.mxu0 0.0
        %375 = vmatpush1.msra.mxu0 0.0
        %376 = vmatprep.subr.mxu0 0.0
        %377 = vmatpush1.msra.mxu0 0.0
        %378 = vmatprep.subr.mxu0 0.0
        %379 = vmatpush1.msra.mxu0 0.0
        %380 = vmatprep.subr.mxu0 0.0
        %381 = vmatpush1.msra.mxu0 0.0
        %382 = vmatprep.subr.mxu0 0.0
        %383 = vmatpush1.msra.mxu0 0.0
        %384 = vmatprep.subr.mxu0 0.0
        %385 = vmatpush1.msra.mxu0 0.0
        %386 = vmatprep.subr.mxu0 0.0
        %387 = vmatpush1.msra.mxu0 0.0
        %388 = vmatprep.subr.mxu0 0.0
        %389 = vmatpush1.msra.mxu0 0.0
        %390 = vmatprep.subr.mxu0 0.0
        %391 = vmatpush1.msra.mxu0 0.0
        %392 = vmatprep.subr.mxu0 0.0
        %393 = vmatpush1.msra.mxu0 0.0
        %394 = vmatprep.subr.mxu0 0.0
        %395 = vmatpush1.msra.mxu0 0.0
        %396 = vmatprep.subr.mxu0 0.0
        %397 = vmatpush1.msra.mxu0 0.0
        %398 = vmatprep.subr.mxu0 0.0
        %399 = vmatpush1.msra.mxu0 0.0
        %400 = vmatprep.subr.mxu0 0.0
        %401 = vmatpush1.msra.mxu0 0.0
        %402 = vmatprep.subr.mxu0 0.0
        %403 = vmatpush1.msra.mxu0 0.0
        %404 = vmatprep.subr.mxu0 0.0
        %405 = vmatpush1.msra.mxu0 0.0
        %406 = vmatprep.subr.mxu0 0.0
        %407 = vmatpush1.msra.mxu0 0.0
        %408 = vmatprep.subr.mxu0 0.0
        %409 = vmatpush1.msra.mxu0 0.0
        %410 = vmatprep.subr.mxu0 0.0
        %411 = vmatpush1.msra.mxu0 0.0
        %412 = vmatprep.subr.mxu0 0.0
        %413 = vmatpush1.msra.mxu0 0.0
        %414 = vmatprep.subr.mxu0 0.0
        %415 = vmatpush1.msra.mxu0 0.0
        %416 = vmatprep.subr.mxu0 0.0
        %417 = vmatpush1.msra.mxu0 0.0
        %418 = vmatprep.subr.mxu0 0.0
        %419 = vmatpush1.msra.mxu0 0.0
        %420 = vmatprep.subr.mxu0 0.0
        %421 = vmatpush1.msra.mxu0 0.0
        %422 = vmatprep.subr.mxu0 0.0
        %423 = vmatpush1.msra.mxu0 0.0
        %424 = vmatprep.subr.mxu0 0.0
        %425 = vmatpush1.msra.mxu0 0.0
        %426 = vmatprep.subr.mxu0 0.0
        %427 = vmatpush1.msra.mxu0 0.0
        %428 = vmatprep.subr.mxu0 0.0
        %429 = vmatpush1.msra.mxu0 0.0
        %430 = vmatprep.subr.mxu0 0.0
        %431 = vmatpush1.msra.mxu0 0.0
        %432 = vmatprep.subr.mxu0 0.0
        %433 = vmatpush1.msra.mxu0 0.0
        %434 = vmatprep.mubr.f32.mxu0 0.0
        %435 = vmatmul.mubr.f32.gmra.mrb[0].mxu0 %v288
        %v436 = vpop.f32.mrb[0].mxu0
        %v437 = vadd.f32 0.0, %v436
        %v438 = vpop.f32.mrb[0].mxu0
        %v439 = vadd.f32 0.0, %v438
        %440 = vmatprep.mubr.f32.mxu0 0.0
        %441 = vmatmul.mubr.f32.gmra.mrb[0].mxu0 %v291
        %v442 = vpop.f32.mrb[0].mxu0
        %v443 = vadd.f32 0.0, %v442
        %v444 = vpop.f32.mrb[0].mxu0
        %v445 = vadd.f32 0.0, %v444
        %446 = vdwg.mxu0
        %447 = vst [vmem:[#allocation2] sm:$0xff] %v280
        %448 = vst [vmem:[#allocation2 + $0x8] sm:$0xff] %v281
        %449 = vst [vmem:[#allocation2 + $0x10] sm:$0xff] %v282
        %450 = vst [vmem:[#allocation2 + $0x18] sm:$0xff] %v283
        %v451 = vand.u32 2147483647, %v360
        %vm452 = vcmp.le.f32.partialorder %v451, 0.7853982
        %vm453 = vcmp.lt.s32.totalorder %v360, 0
        %v454 = vand.u32 %v360, 2139095040
        %v455 = vshrl.u32 %v454, 23
        %v456 = vsub.s32 %v455, 127
        %v457 = vand.u32 2147483647, %v360
        %v458 = vand.u32 %v457, 8388607
        %v459 = vor.u32 %v458, 8388608
        %v460 = vsub.s32 0, %v459
        %v461 = vadd.s32 %v456, 1
        %vm462 = vcmp.gt.s32.totalorder %v461, 0
        %v463 = vsel %vm462, %v461, 0
        %v464 = vshrl.u32 %v463, 5
        %v465 = vand.u32 %v463, 31
        %v466 = vsub.s32 32, %v465
        %v467 = vshrl.u32 683565275, %v466
        %v468 = vshll.u32 683565275, %v465
        %v469 = vshrl.u32 2475754826, %v466
        %v470 = vor.u32 %v468, %v469
        %v471 = vshll.u32 2475754826, %v465
        %v472 = vshrl.u32 2131351028, %v466
        %v473 = vor.u32 %v471, %v472
        %v474 = vshll.u32 2131351028, %v465
        %v475 = vshrl.u32 2102212464, %v466
        %v476 = vor.u32 %v474, %v475
        %v477 = vshll.u32 2102212464, %v465
        %v478 = vshrl.u32 920167782, %v466
        %v479 = vor.u32 %v477, %v478
        %v480 = vshll.u32 920167782, %v465
        %v481 = vshrl.u32 1326507024, %v466
        %v482 = vor.u32 %v480, %v481
        %vm483 = vcmp.lt.s32.totalorder %v464, 1
        %vm484 = vcmp.lt.s32.totalorder %v464, 2
        %vm485 = vcmp.lt.s32.totalorder %v464, 3
        %vm486 = vcmp.lt.s32.totalorder %v464, 4
        %v487 = vsel %vm483, %v467, %v470
        %v488 = vsel %vm486, %v476, 2102212464
        %v489 = vsel %vm485, %v473, %v488
        %v490 = vsel %vm484, %v487, %v489
        %v491 = vsel %vm483, %v470, %v473
        %v492 = vsel %vm486, %v479, 920167782
        %v493 = vsel %vm485, %v476, %v492
        %v494 = vsel %vm484, %v491, %v493
        %v495 = vsel %vm483, %v473, %v476
        %v496 = vsel %vm486, %v482, 1326507024
        %v497 = vsel %vm485, %v479, %v496
        %v498 = vsel %vm484, %v495, %v497
        %v499 = vshll.u32 %v459, 8
        %v500 = vmul.u32.u64.compose %v499, %v498
        %v501 = vextract.low.u32 %v500
        %v502 = vextract.high.u32 %v500
        %v503 = vmul.u32.u64.compose %v499, %v494
        %v504 = vextract.low.u32 %v503
        %v505 = vextract.high.u32 %v503
        %v506 = vmul.u32 %v499, %v490
        %v507 = vadd.s32 %v502, %v504
        %vm508 = vc.u32 %v502, %v504
        %v509 = vadd.s32 %v505, 1
        %v510 = vsel %vm508, %v509, %v505
        %v511 = vadd.s32 %v506, %v510
        %v512 = vadd.s32 %v511, 536870912
        %v513 = vshrl.u32 %v512, 30
        %v514 = vshll.u32 %v513, 30
        %v515 = vsub.s32 %v511, %v514
        %vm516 = vcmp.lt.s32.totalorder %v515, 0
        %v517 = vsub.s32 0, %v515
        %v518 = vsel %vm516, %v517, %v515
        %v519 = vclz %v518
        %v520 = vsub.s32 %v519, 2
        %vm521 = vcmp.gt.s32.totalorder 0, %v520
        %v522 = vsel %vm521, 0, %v520
        %v523 = vsub.s32 32, %v522
        %v524 = vshll.u32 %v515, %v522
        %v525 = vshrl.u32 %v507, %v523
        %v526 = vor.u32 %v524, %v525
        %v527 = vsub.s32 4294967266, %v522
        %v528 = vadd.s32 %v527, 127
        %v529 = vshll.u32 %v528, 23
        %v530 = vor.u32 4788187, %v529
        %v531 = vand.u32 2147483647, %v530
        %v533 = vcvt.s32.f32 %v526
        %v534 = vmul.f32 %v533, %v531
        %v535 = vxor.u32 %v534, 2147483648
        %v536 = vsel %vm453, %v535, %v534
        %v537 = vsub.s32 4, %v513
        %v538 = vsel %vm453, %v537, %v513
        %v539 = vsel %vm452, %v360, %v536
        %v540 = vsel %vm452, 0, %v538
        %v541 = vcosq.f32.pop %v539
        %v542 = vsinq.f32.pop %v539
        %vm543 = vweird.f32 %v360
        %v544 = vadd.s32 %v540, 3
        %v545 = vand.u32 %v544, 3
        %vm546 = vcmp.lt.s32.totalorder %v545, 2
        %vm547 = vcmp.eq.s32.totalorder %v545, 0
        %v548 = vxor.u32 %v542, 2147483648
        %v549 = vsel %vm547, %v541, %v548
        %vm550 = vcmp.eq.s32.totalorder %v545, 2
        %v551 = vxor.u32 %v541, 2147483648
        %v552 = vsel %vm550, %v551, %v542
        %v553 = vsel %vm546, %v549, %v552
        %v554 = vsel %vm543, nan, %v553
        %v555 = vand.u32 2147483647, %v362
        %vm556 = vcmp.le.f32.partialorder %v555, 0.7853982
        %vm557 = vcmp.lt.s32.totalorder %v362, 0
        %v558 = vand.u32 %v362, 2139095040
        %v559 = vshrl.u32 %v558, 23
        %v560 = vsub.s32 %v559, 127
        %v561 = vand.u32 2147483647, %v362
        %v562 = vand.u32 %v561, 8388607
        %v563 = vor.u32 %v562, 8388608
        %v564 = vsub.s32 0, %v563
        %v565 = vadd.s32 %v560, 1
        %vm566 = vcmp.gt.s32.totalorder %v565, 0
        %v567 = vsel %vm566, %v565, 0
        %v568 = vshrl.u32 %v567, 5
        %v569 = vand.u32 %v567, 31
        %v570 = vsub.s32 32, %v569
        %v571 = vshrl.u32 683565275, %v570
        %v572 = vshll.u32 683565275, %v569
        %v573 = vshrl.u32 2475754826, %v570
        %v574 = vor.u32 %v572, %v573
        %v575 = vshll.u32 2475754826, %v569
        %v576 = vshrl.u32 2131351028, %v570
        %v577 = vor.u32 %v575, %v576
        %v578 = vshll.u32 2131351028, %v569
        %v579 = vshrl.u32 2102212464, %v570
        %v580 = vor.u32 %v578, %v579
        %v581 = vshll.u32 2102212464, %v569
        %v582 = vshrl.u32 920167782, %v570
        %v583 = vor.u32 %v581, %v582
        %v584 = vshll.u32 920167782, %v569
        %v585 = vshrl.u32 1326507024, %v570
        %v586 = vor.u32 %v584, %v585
        %vm587 = vcmp.lt.s32.totalorder %v568, 1
        %vm588 = vcmp.lt.s32.totalorder %v568, 2
        %vm589 = vcmp.lt.s32.totalorder %v568, 3
        %vm590 = vcmp.lt.s32.totalorder %v568, 4
        %v591 = vsel %vm587, %v571, %v574
        %v592 = vsel %vm590, %v580, 2102212464
        %v593 = vsel %vm589, %v577, %v592
        %v594 = vsel %vm588, %v591, %v593
        %v595 = vsel %vm587, %v574, %v577
        %v596 = vsel %vm590, %v583, 920167782
        %v597 = vsel %vm589, %v580, %v596
        %v598 = vsel %vm588, %v595, %v597
        %v599 = vsel %vm587, %v577, %v580
        %v600 = vsel %vm590, %v586, 1326507024
        %v601 = vsel %vm589, %v583, %v600
        %v602 = vsel %vm588, %v599, %v601
        %v603 = vshll.u32 %v563, 8
        %v604 = vmul.u32.u64.compose %v603, %v602
        %v605 = vextract.low.u32 %v604
        %v606 = vextract.high.u32 %v604
        %v607 = vmul.u32.u64.compose %v603, %v598
        %v608 = vextract.low.u32 %v607
        %v609 = vextract.high.u32 %v607
        %v610 = vmul.u32 %v603, %v594
        %v611 = vadd.s32 %v606, %v608
        %vm612 = vc.u32 %v606, %v608
        %v613 = vadd.s32 %v609, 1
        %v614 = vsel %vm612, %v613, %v609
        %v615 = vadd.s32 %v610, %v614
        %v616 = vadd.s32 %v615, 536870912
        %v617 = vshrl.u32 %v616, 30
        %v618 = vshll.u32 %v617, 30
        %v619 = vsub.s32 %v615, %v618
        %vm620 = vcmp.lt.s32.totalorder %v619, 0
        %v621 = vsub.s32 0, %v619
        %v622 = vsel %vm620, %v621, %v619
        %v623 = vclz %v622
        %v624 = vsub.s32 %v623, 2
        %vm625 = vcmp.gt.s32.totalorder 0, %v624
        %v626 = vsel %vm625, 0, %v624
        %v627 = vsub.s32 32, %v626
        %v628 = vshll.u32 %v619, %v626
        %v629 = vshrl.u32 %v611, %v627
        %v630 = vor.u32 %v628, %v629
        %v631 = vsub.s32 4294967266, %v626
        %v632 = vadd.s32 %v631, 127
        %v633 = vshll.u32 %v632, 23
        %v634 = vor.u32 4788187, %v633
        %v635 = vand.u32 2147483647, %v634
        %v637 = vcvt.s32.f32 %v630
        %v638 = vmul.f32 %v637, %v635
        %v639 = vxor.u32 %v638, 2147483648
        %v640 = vsel %vm557, %v639, %v638
        %v641 = vsub.s32 4, %v617
        %v642 = vsel %vm557, %v641, %v617
        %v643 = vsel %vm556, %v362, %v640
        %v644 = vsel %vm556, 0, %v642
        %v645 = vcosq.f32.pop %v643
        %v646 = vsinq.f32.pop %v643
        %vm647 = vweird.f32 %v362
        %v648 = vadd.s32 %v644, 3
        %v649 = vand.u32 %v648, 3
        %vm650 = vcmp.lt.s32.totalorder %v649, 2
        %vm651 = vcmp.eq.s32.totalorder %v649, 0
        %v652 = vxor.u32 %v646, 2147483648
        %v653 = vsel %vm651, %v645, %v652
        %vm654 = vcmp.eq.s32.totalorder %v649, 2
        %v655 = vxor.u32 %v645, 2147483648
        %v656 = vsel %vm654, %v655, %v646
        %v657 = vsel %vm650, %v653, %v656
        %v658 = vsel %vm647, nan, %v657
        %v659 = vand.u32 2147483647, %v437
        %vm660 = vcmp.le.f32.partialorder %v659, 0.7853982
        %vm661 = vcmp.lt.s32.totalorder %v437, 0
        %v662 = vand.u32 %v437, 2139095040
        %v663 = vshrl.u32 %v662, 23
        %v664 = vsub.s32 %v663, 127
        %v665 = vand.u32 2147483647, %v437
        %v666 = vand.u32 %v665, 8388607
        %v667 = vor.u32 %v666, 8388608
        %v668 = vsub.s32 0, %v667
        %v669 = vadd.s32 %v664, 1
        %vm670 = vcmp.gt.s32.totalorder %v669, 0
        %v671 = vsel %vm670, %v669, 0
        %v672 = vshrl.u32 %v671, 5
        %v673 = vand.u32 %v671, 31
        %v674 = vsub.s32 32, %v673
        %v675 = vshrl.u32 683565275, %v674
        %v676 = vshll.u32 683565275, %v673
        %v677 = vshrl.u32 2475754826, %v674
        %v678 = vor.u32 %v676, %v677
        %v679 = vshll.u32 2475754826, %v673
        %v680 = vshrl.u32 2131351028, %v674
        %v681 = vor.u32 %v679, %v680
        %v682 = vshll.u32 2131351028, %v673
        %v683 = vshrl.u32 2102212464, %v674
        %v684 = vor.u32 %v682, %v683
        %v685 = vshll.u32 2102212464, %v673
        %v686 = vshrl.u32 920167782, %v674
        %v687 = vor.u32 %v685, %v686
        %v688 = vshll.u32 920167782, %v673
        %v689 = vshrl.u32 1326507024, %v674
        %v690 = vor.u32 %v688, %v689
        %vm691 = vcmp.lt.s32.totalorder %v672, 1
        %vm692 = vcmp.lt.s32.totalorder %v672, 2
        %vm693 = vcmp.lt.s32.totalorder %v672, 3
        %vm694 = vcmp.lt.s32.totalorder %v672, 4
        %v695 = vsel %vm691, %v675, %v678
        %v696 = vsel %vm694, %v684, 2102212464
        %v697 = vsel %vm693, %v681, %v696
        %v698 = vsel %vm692, %v695, %v697
        %v699 = vsel %vm691, %v678, %v681
        %v700 = vsel %vm694, %v687, 920167782
        %v701 = vsel %vm693, %v684, %v700
        %v702 = vsel %vm692, %v699, %v701
        %v703 = vsel %vm691, %v681, %v684
        %v704 = vsel %vm694, %v690, 1326507024
        %v705 = vsel %vm693, %v687, %v704
        %v706 = vsel %vm692, %v703, %v705
        %v707 = vshll.u32 %v667, 8
        %v708 = vmul.u32.u64.compose %v707, %v706
        %v709 = vextract.low.u32 %v708
        %v710 = vextract.high.u32 %v708
        %v711 = vmul.u32.u64.compose %v707, %v702
        %v712 = vextract.low.u32 %v711
        %v713 = vextract.high.u32 %v711
        %v714 = vmul.u32 %v707, %v698
        %v715 = vadd.s32 %v710, %v712
        %vm716 = vc.u32 %v710, %v712
        %v717 = vadd.s32 %v713, 1
        %v718 = vsel %vm716, %v717, %v713
        %v719 = vadd.s32 %v714, %v718
        %v720 = vadd.s32 %v719, 536870912
        %v721 = vshrl.u32 %v720, 30
        %v722 = vshll.u32 %v721, 30
        %v723 = vsub.s32 %v719, %v722
        %vm724 = vcmp.lt.s32.totalorder %v723, 0
        %v725 = vsub.s32 0, %v723
        %v726 = vsel %vm724, %v725, %v723
        %v727 = vclz %v726
        %v728 = vsub.s32 %v727, 2
        %vm729 = vcmp.gt.s32.totalorder 0, %v728
        %v730 = vsel %vm729, 0, %v728
        %v731 = vsub.s32 32, %v730
        %v732 = vshll.u32 %v723, %v730
        %v733 = vshrl.u32 %v715, %v731
        %v734 = vor.u32 %v732, %v733
        %v735 = vsub.s32 4294967266, %v730
        %v736 = vadd.s32 %v735, 127
        %v737 = vshll.u32 %v736, 23
        %v738 = vor.u32 4788187, %v737
        %v739 = vand.u32 2147483647, %v738
        %v741 = vcvt.s32.f32 %v734
        %v742 = vmul.f32 %v741, %v739
        %v743 = vxor.u32 %v742, 2147483648
        %v744 = vsel %vm661, %v743, %v742
        %v745 = vsub.s32 4, %v721
        %v746 = vsel %vm661, %v745, %v721
        %v747 = vsel %vm660, %v437, %v744
        %v748 = vsel %vm660, 0, %v746
        %v749 = vcosq.f32.pop %v747
        %v750 = vsinq.f32.pop %v747
        %vm751 = vweird.f32 %v437
        %v752 = vadd.s32 %v748, 3
        %v753 = vand.u32 %v752, 3
        %vm754 = vcmp.lt.s32.totalorder %v753, 2
        %vm755 = vcmp.eq.s32.totalorder %v753, 0
        %v756 = vxor.u32 %v750, 2147483648
        %v757 = vsel %vm755, %v749, %v756
        %vm758 = vcmp.eq.s32.totalorder %v753, 2
        %v759 = vxor.u32 %v749, 2147483648
        %v760 = vsel %vm758, %v759, %v750
        %v761 = vsel %vm754, %v757, %v760
        %v762 = vsel %vm751, nan, %v761
        %v763 = vand.u32 2147483647, %v439
        %vm764 = vcmp.le.f32.partialorder %v763, 0.7853982
        %vm765 = vcmp.lt.s32.totalorder %v439, 0
        %v766 = vand.u32 %v439, 2139095040
        %v767 = vshrl.u32 %v766, 23
        %v768 = vsub.s32 %v767, 127
        %v769 = vand.u32 2147483647, %v439
        %v770 = vand.u32 %v769, 8388607
        %v771 = vor.u32 %v770, 8388608
        %v772 = vsub.s32 0, %v771
        %v773 = vadd.s32 %v768, 1
        %vm774 = vcmp.gt.s32.totalorder %v773, 0
        %v775 = vsel %vm774, %v773, 0
        %v776 = vshrl.u32 %v775, 5
        %v777 = vand.u32 %v775, 31
        %v778 = vsub.s32 32, %v777
        %v779 = vshrl.u32 683565275, %v778
        %v780 = vshll.u32 683565275, %v777
        %v781 = vshrl.u32 2475754826, %v778
        %v782 = vor.u32 %v780, %v781
        %v783 = vshll.u32 2475754826, %v777
        %v784 = vshrl.u32 2131351028, %v778
        %v785 = vor.u32 %v783, %v784
        %v786 = vshll.u32 2131351028, %v777
        %v787 = vshrl.u32 2102212464, %v778
        %v788 = vor.u32 %v786, %v787
        %v789 = vshll.u32 2102212464, %v777
        %v790 = vshrl.u32 920167782, %v778
        %v791 = vor.u32 %v789, %v790
        %v792 = vshll.u32 920167782, %v777
        %v793 = vshrl.u32 1326507024, %v778
        %v794 = vor.u32 %v792, %v793
        %vm795 = vcmp.lt.s32.totalorder %v776, 1
        %vm796 = vcmp.lt.s32.totalorder %v776, 2
        %vm797 = vcmp.lt.s32.totalorder %v776, 3
        %vm798 = vcmp.lt.s32.totalorder %v776, 4
        %v799 = vsel %vm795, %v779, %v782
        %v800 = vsel %vm798, %v788, 2102212464
        %v801 = vsel %vm797, %v785, %v800
        %v802 = vsel %vm796, %v799, %v801
        %v803 = vsel %vm795, %v782, %v785
        %v804 = vsel %vm798, %v791, 920167782
        %v805 = vsel %vm797, %v788, %v804
        %v806 = vsel %vm796, %v803, %v805
        %v807 = vsel %vm795, %v785, %v788
        %v808 = vsel %vm798, %v794, 1326507024
        %v809 = vsel %vm797, %v791, %v808
        %v810 = vsel %vm796, %v807, %v809
        %v811 = vshll.u32 %v771, 8
        %v812 = vmul.u32.u64.compose %v811, %v810
        %v813 = vextract.low.u32 %v812
        %v814 = vextract.high.u32 %v812
        %v815 = vmul.u32.u64.compose %v811, %v806
        %v816 = vextract.low.u32 %v815
        %v817 = vextract.high.u32 %v815
        %v818 = vmul.u32 %v811, %v802
        %v819 = vadd.s32 %v814, %v816
        %vm820 = vc.u32 %v814, %v816
        %v821 = vadd.s32 %v817, 1
        %v822 = vsel %vm820, %v821, %v817
        %v823 = vadd.s32 %v818, %v822
        %v824 = vadd.s32 %v823, 536870912
        %v825 = vshrl.u32 %v824, 30
        %v826 = vshll.u32 %v825, 30
        %v827 = vsub.s32 %v823, %v826
        %vm828 = vcmp.lt.s32.totalorder %v827, 0
        %v829 = vsub.s32 0, %v827
        %v830 = vsel %vm828, %v829, %v827
        %v831 = vclz %v830
        %v832 = vsub.s32 %v831, 2
        %vm833 = vcmp.gt.s32.totalorder 0, %v832
        %v834 = vsel %vm833, 0, %v832
        %v835 = vsub.s32 32, %v834
        %v836 = vshll.u32 %v827, %v834
        %v837 = vshrl.u32 %v819, %v835
        %v838 = vor.u32 %v836, %v837
        %v839 = vsub.s32 4294967266, %v834
        %v840 = vadd.s32 %v839, 127
        %v841 = vshll.u32 %v840, 23
        %v842 = vor.u32 4788187, %v841
        %v843 = vand.u32 2147483647, %v842
        %v845 = vcvt.s32.f32 %v838
        %v846 = vmul.f32 %v845, %v843
        %v847 = vxor.u32 %v846, 2147483648
        %v848 = vsel %vm765, %v847, %v846
        %v849 = vsub.s32 4, %v825
        %v850 = vsel %vm765, %v849, %v825
        %v851 = vsel %vm764, %v439, %v848
        %v852 = vsel %vm764, 0, %v850
        %v853 = vcosq.f32.pop %v851
        %v854 = vsinq.f32.pop %v851
        %vm855 = vweird.f32 %v439
        %v856 = vadd.s32 %v852, 3
        %v857 = vand.u32 %v856, 3
        %vm858 = vcmp.lt.s32.totalorder %v857, 2
        %vm859 = vcmp.eq.s32.totalorder %v857, 0
        %v860 = vxor.u32 %v854, 2147483648
        %v861 = vsel %vm859, %v853, %v860
        %vm862 = vcmp.eq.s32.totalorder %v857, 2
        %v863 = vxor.u32 %v853, 2147483648
        %v864 = vsel %vm862, %v863, %v854
        %v865 = vsel %vm858, %v861, %v864
        %v866 = vsel %vm855, nan, %v865
        %v867 = vand.u32 2147483647, %v366
        %vm868 = vcmp.le.f32.partialorder %v867, 0.7853982
        %vm869 = vcmp.lt.s32.totalorder %v366, 0
        %v870 = vand.u32 %v366, 2139095040
        %v871 = vshrl.u32 %v870, 23
        %v872 = vsub.s32 %v871, 127
        %v873 = vand.u32 2147483647, %v366
        %v874 = vand.u32 %v873, 8388607
        %v875 = vor.u32 %v874, 8388608
        %v876 = vsub.s32 0, %v875
        %v877 = vadd.s32 %v872, 1
        %vm878 = vcmp.gt.s32.totalorder %v877, 0
        %v879 = vsel %vm878, %v877, 0
        %v880 = vshrl.u32 %v879, 5
        %v881 = vand.u32 %v879, 31
        %v882 = vsub.s32 32, %v881
        %v883 = vshrl.u32 683565275, %v882
        %v884 = vshll.u32 683565275, %v881
        %v885 = vshrl.u32 2475754826, %v882
        %v886 = vor.u32 %v884, %v885
        %v887 = vshll.u32 2475754826, %v881
        %v888 = vshrl.u32 2131351028, %v882
        %v889 = vor.u32 %v887, %v888
        %v890 = vshll.u32 2131351028, %v881
        %v891 = vshrl.u32 2102212464, %v882
        %v892 = vor.u32 %v890, %v891
        %v893 = vshll.u32 2102212464, %v881
        %v894 = vshrl.u32 920167782, %v882
        %v895 = vor.u32 %v893, %v894
        %v896 = vshll.u32 920167782, %v881
        %v897 = vshrl.u32 1326507024, %v882
        %v898 = vor.u32 %v896, %v897
        %vm899 = vcmp.lt.s32.totalorder %v880, 1
        %vm900 = vcmp.lt.s32.totalorder %v880, 2
        %vm901 = vcmp.lt.s32.totalorder %v880, 3
        %vm902 = vcmp.lt.s32.totalorder %v880, 4
        %v903 = vsel %vm899, %v883, %v886
        %v904 = vsel %vm902, %v892, 2102212464
        %v905 = vsel %vm901, %v889, %v904
        %v906 = vsel %vm900, %v903, %v905
        %v907 = vsel %vm899, %v886, %v889
        %v908 = vsel %vm902, %v895, 920167782
        %v909 = vsel %vm901, %v892, %v908
        %v910 = vsel %vm900, %v907, %v909
        %v911 = vsel %vm899, %v889, %v892
        %v912 = vsel %vm902, %v898, 1326507024
        %v913 = vsel %vm901, %v895, %v912
        %v914 = vsel %vm900, %v911, %v913
        %v915 = vshll.u32 %v875, 8
        %v916 = vmul.u32.u64.compose %v915, %v914
        %v917 = vextract.low.u32 %v916
        %v918 = vextract.high.u32 %v916
        %v919 = vmul.u32.u64.compose %v915, %v910
        %v920 = vextract.low.u32 %v919
        %v921 = vextract.high.u32 %v919
        %v922 = vmul.u32 %v915, %v906
        %v923 = vadd.s32 %v918, %v920
        %vm924 = vc.u32 %v918, %v920
        %v925 = vadd.s32 %v921, 1
        %v926 = vsel %vm924, %v925, %v921
        %v927 = vadd.s32 %v922, %v926
        %v928 = vadd.s32 %v927, 536870912
        %v929 = vshrl.u32 %v928, 30
        %v930 = vshll.u32 %v929, 30
        %v931 = vsub.s32 %v927, %v930
        %vm932 = vcmp.lt.s32.totalorder %v931, 0
        %v933 = vsub.s32 0, %v931
        %v934 = vsel %vm932, %v933, %v931
        %v935 = vclz %v934
        %v936 = vsub.s32 %v935, 2
        %vm937 = vcmp.gt.s32.totalorder 0, %v936
        %v938 = vsel %vm937, 0, %v936
        %v939 = vsub.s32 32, %v938
        %v940 = vshll.u32 %v931, %v938
        %v941 = vshrl.u32 %v923, %v939
        %v942 = vor.u32 %v940, %v941
        %v943 = vsub.s32 4294967266, %v938
        %v944 = vadd.s32 %v943, 127
        %v945 = vshll.u32 %v944, 23
        %v946 = vor.u32 4788187, %v945
        %v947 = vand.u32 2147483647, %v946
        %v949 = vcvt.s32.f32 %v942
        %v950 = vmul.f32 %v949, %v947
        %v951 = vxor.u32 %v950, 2147483648
        %v952 = vsel %vm869, %v951, %v950
        %v953 = vsub.s32 4, %v929
        %v954 = vsel %vm869, %v953, %v929
        %v955 = vsel %vm868, %v366, %v952
        %v956 = vsel %vm868, 0, %v954
        %v957 = vcosq.f32.pop %v955
        %v958 = vsinq.f32.pop %v955
        %vm959 = vweird.f32 %v366
        %v960 = vadd.s32 %v956, 3
        %v961 = vand.u32 %v960, 3
        %vm962 = vcmp.lt.s32.totalorder %v961, 2
        %vm963 = vcmp.eq.s32.totalorder %v961, 0
        %v964 = vxor.u32 %v958, 2147483648
        %v965 = vsel %vm963, %v957, %v964
        %vm966 = vcmp.eq.s32.totalorder %v961, 2
        %v967 = vxor.u32 %v957, 2147483648
        %v968 = vsel %vm966, %v967, %v958
        %v969 = vsel %vm962, %v965, %v968
        %v970 = vsel %vm959, nan, %v969
        %v971 = vand.u32 2147483647, %v368
        %vm972 = vcmp.le.f32.partialorder %v971, 0.7853982
        %vm973 = vcmp.lt.s32.totalorder %v368, 0
        %v974 = vand.u32 %v368, 2139095040
        %v975 = vshrl.u32 %v974, 23
        %v976 = vsub.s32 %v975, 127
        %v977 = vand.u32 2147483647, %v368
        %v978 = vand.u32 %v977, 8388607
        %v979 = vor.u32 %v978, 8388608
        %v980 = vsub.s32 0, %v979
        %v981 = vadd.s32 %v976, 1
        %vm982 = vcmp.gt.s32.totalorder %v981, 0
        %v983 = vsel %vm982, %v981, 0
        %v984 = vshrl.u32 %v983, 5
        %v985 = vand.u32 %v983, 31
        %v986 = vsub.s32 32, %v985
        %v987 = vshrl.u32 683565275, %v986
        %v988 = vshll.u32 683565275, %v985
        %v989 = vshrl.u32 2475754826, %v986
        %v990 = vor.u32 %v988, %v989
        %v991 = vshll.u32 2475754826, %v985
        %v992 = vshrl.u32 2131351028, %v986
        %v993 = vor.u32 %v991, %v992
        %v994 = vshll.u32 2131351028, %v985
        %v995 = vshrl.u32 2102212464, %v986
        %v996 = vor.u32 %v994, %v995
        %v997 = vshll.u32 2102212464, %v985
        %v998 = vshrl.u32 920167782, %v986
        %v999 = vor.u32 %v997, %v998
        %v1000 = vshll.u32 920167782, %v985
        %v1001 = vshrl.u32 1326507024, %v986
        %v1002 = vor.u32 %v1000, %v1001
        %vm1003 = vcmp.lt.s32.totalorder %v984, 1
        %vm1004 = vcmp.lt.s32.totalorder %v984, 2
        %vm1005 = vcmp.lt.s32.totalorder %v984, 3
        %vm1006 = vcmp.lt.s32.totalorder %v984, 4
        %v1007 = vsel %vm1003, %v987, %v990
        %v1008 = vsel %vm1006, %v996, 2102212464
        %v1009 = vsel %vm1005, %v993, %v1008
        %v1010 = vsel %vm1004, %v1007, %v1009
        %v1011 = vsel %vm1003, %v990, %v993
        %v1012 = vsel %vm1006, %v999, 920167782
        %v1013 = vsel %vm1005, %v996, %v1012
        %v1014 = vsel %vm1004, %v1011, %v1013
        %v1015 = vsel %vm1003, %v993, %v996
        %v1016 = vsel %vm1006, %v1002, 1326507024
        %v1017 = vsel %vm1005, %v999, %v1016
        %v1018 = vsel %vm1004, %v1015, %v1017
        %v1019 = vshll.u32 %v979, 8
        %v1020 = vmul.u32.u64.compose %v1019, %v1018
        %v1021 = vextract.low.u32 %v1020
        %v1022 = vextract.high.u32 %v1020
        %v1023 = vmul.u32.u64.compose %v1019, %v1014
        %v1024 = vextract.low.u32 %v1023
        %v1025 = vextract.high.u32 %v1023
        %v1026 = vmul.u32 %v1019, %v1010
        %v1027 = vadd.s32 %v1022, %v1024
        %vm1028 = vc.u32 %v1022, %v1024
        %v1029 = vadd.s32 %v1025, 1
        %v1030 = vsel %vm1028, %v1029, %v1025
        %v1031 = vadd.s32 %v1026, %v1030
        %v1032 = vadd.s32 %v1031, 536870912
        %v1033 = vshrl.u32 %v1032, 30
        %v1034 = vshll.u32 %v1033, 30
        %v1035 = vsub.s32 %v1031, %v1034
        %vm1036 = vcmp.lt.s32.totalorder %v1035, 0
        %v1037 = vsub.s32 0, %v1035
        %v1038 = vsel %vm1036, %v1037, %v1035
        %v1039 = vclz %v1038
        %v1040 = vsub.s32 %v1039, 2
        %vm1041 = vcmp.gt.s32.totalorder 0, %v1040
        %v1042 = vsel %vm1041, 0, %v1040
        %v1043 = vsub.s32 32, %v1042
        %v1044 = vshll.u32 %v1035, %v1042
        %v1045 = vshrl.u32 %v1027, %v1043
        %v1046 = vor.u32 %v1044, %v1045
        %v1047 = vsub.s32 4294967266, %v1042
        %v1048 = vadd.s32 %v1047, 127
        %v1049 = vshll.u32 %v1048, 23
        %v1050 = vor.u32 4788187, %v1049
        %v1051 = vand.u32 2147483647, %v1050
        %v1053 = vcvt.s32.f32 %v1046
        %v1054 = vmul.f32 %v1053, %v1051
        %v1055 = vxor.u32 %v1054, 2147483648
        %v1056 = vsel %vm973, %v1055, %v1054
        %v1057 = vsub.s32 4, %v1033
        %v1058 = vsel %vm973, %v1057, %v1033
        %v1059 = vsel %vm972, %v368, %v1056
        %v1060 = vsel %vm972, 0, %v1058
        %v1061 = vcosq.f32.pop %v1059
        %v1062 = vsinq.f32.pop %v1059
        %vm1063 = vweird.f32 %v368
        %v1064 = vadd.s32 %v1060, 3
        %v1065 = vand.u32 %v1064, 3
        %vm1066 = vcmp.lt.s32.totalorder %v1065, 2
        %vm1067 = vcmp.eq.s32.totalorder %v1065, 0
        %v1068 = vxor.u32 %v1062, 2147483648
        %v1069 = vsel %vm1067, %v1061, %v1068
        %vm1070 = vcmp.eq.s32.totalorder %v1065, 2
        %v1071 = vxor.u32 %v1061, 2147483648
        %v1072 = vsel %vm1070, %v1071, %v1062
        %v1073 = vsel %vm1066, %v1069, %v1072
        %v1074 = vsel %vm1063, nan, %v1073
        %v1075 = vand.u32 2147483647, %v443
        %vm1076 = vcmp.le.f32.partialorder %v1075, 0.7853982
        %vm1077 = vcmp.lt.s32.totalorder %v443, 0
        %v1078 = vand.u32 %v443, 2139095040
        %v1079 = vshrl.u32 %v1078, 23
        %v1080 = vsub.s32 %v1079, 127
        %v1081 = vand.u32 2147483647, %v443
        %v1082 = vand.u32 %v1081, 8388607
        %v1083 = vor.u32 %v1082, 8388608
        %v1084 = vsub.s32 0, %v1083
        %v1085 = vadd.s32 %v1080, 1
        %vm1086 = vcmp.gt.s32.totalorder %v1085, 0
        %v1087 = vsel %vm1086, %v1085, 0
        %v1088 = vshrl.u32 %v1087, 5
        %v1089 = vand.u32 %v1087, 31
        %v1090 = vsub.s32 32, %v1089
        %v1091 = vshrl.u32 683565275, %v1090
        %v1092 = vshll.u32 683565275, %v1089
        %v1093 = vshrl.u32 2475754826, %v1090
        %v1094 = vor.u32 %v1092, %v1093
        %v1095 = vshll.u32 2475754826, %v1089
        %v1096 = vshrl.u32 2131351028, %v1090
        %v1097 = vor.u32 %v1095, %v1096
        %v1098 = vshll.u32 2131351028, %v1089
        %v1099 = vshrl.u32 2102212464, %v1090
        %v1100 = vor.u32 %v1098, %v1099
        %v1101 = vshll.u32 2102212464, %v1089
        %v1102 = vshrl.u32 920167782, %v1090
        %v1103 = vor.u32 %v1101, %v1102
        %v1104 = vshll.u32 920167782, %v1089
        %v1105 = vshrl.u32 1326507024, %v1090
        %v1106 = vor.u32 %v1104, %v1105
        %vm1107 = vcmp.lt.s32.totalorder %v1088, 1
        %vm1108 = vcmp.lt.s32.totalorder %v1088, 2
        %vm1109 = vcmp.lt.s32.totalorder %v1088, 3
        %vm1110 = vcmp.lt.s32.totalorder %v1088, 4
        %v1111 = vsel %vm1107, %v1091, %v1094
        %v1112 = vsel %vm1110, %v1100, 2102212464
        %v1113 = vsel %vm1109, %v1097, %v1112
        %v1114 = vsel %vm1108, %v1111, %v1113
        %v1115 = vsel %vm1107, %v1094, %v1097
        %v1116 = vsel %vm1110, %v1103, 920167782
        %v1117 = vsel %vm1109, %v1100, %v1116
        %v1118 = vsel %vm1108, %v1115, %v1117
        %v1119 = vsel %vm1107, %v1097, %v1100
        %v1120 = vsel %vm1110, %v1106, 1326507024
        %v1121 = vsel %vm1109, %v1103, %v1120
        %v1122 = vsel %vm1108, %v1119, %v1121
        %v1123 = vshll.u32 %v1083, 8
        %v1124 = vmul.u32.u64.compose %v1123, %v1122
        %v1125 = vextract.low.u32 %v1124
        %v1126 = vextract.high.u32 %v1124
        %v1127 = vmul.u32.u64.compose %v1123, %v1118
        %v1128 = vextract.low.u32 %v1127
        %v1129 = vextract.high.u32 %v1127
        %v1130 = vmul.u32 %v1123, %v1114
        %v1131 = vadd.s32 %v1126, %v1128
        %vm1132 = vc.u32 %v1126, %v1128
        %v1133 = vadd.s32 %v1129, 1
        %v1134 = vsel %vm1132, %v1133, %v1129
        %v1135 = vadd.s32 %v1130, %v1134
        %v1136 = vadd.s32 %v1135, 536870912
        %v1137 = vshrl.u32 %v1136, 30
        %v1138 = vshll.u32 %v1137, 30
        %v1139 = vsub.s32 %v1135, %v1138
        %vm1140 = vcmp.lt.s32.totalorder %v1139, 0
        %v1141 = vsub.s32 0, %v1139
        %v1142 = vsel %vm1140, %v1141, %v1139
        %v1143 = vclz %v1142
        %v1144 = vsub.s32 %v1143, 2
        %vm1145 = vcmp.gt.s32.totalorder 0, %v1144
        %v1146 = vsel %vm1145, 0, %v1144
        %v1147 = vsub.s32 32, %v1146
        %v1148 = vshll.u32 %v1139, %v1146
        %v1149 = vshrl.u32 %v1131, %v1147
        %v1150 = vor.u32 %v1148, %v1149
        %v1151 = vsub.s32 4294967266, %v1146
        %v1152 = vadd.s32 %v1151, 127
        %v1153 = vshll.u32 %v1152, 23
        %v1154 = vor.u32 4788187, %v1153
        %v1155 = vand.u32 2147483647, %v1154
        %v1157 = vcvt.s32.f32 %v1150
        %v1158 = vmul.f32 %v1157, %v1155
        %v1159 = vxor.u32 %v1158, 2147483648
        %v1160 = vsel %vm1077, %v1159, %v1158
        %v1161 = vsub.s32 4, %v1137
        %v1162 = vsel %vm1077, %v1161, %v1137
        %v1163 = vsel %vm1076, %v443, %v1160
        %v1164 = vsel %vm1076, 0, %v1162
        %v1165 = vcosq.f32.pop %v1163
        %v1166 = vsinq.f32.pop %v1163
        %vm1167 = vweird.f32 %v443
        %v1168 = vadd.s32 %v1164, 3
        %v1169 = vand.u32 %v1168, 3
        %vm1170 = vcmp.lt.s32.totalorder %v1169, 2
        %vm1171 = vcmp.eq.s32.totalorder %v1169, 0
        %v1172 = vxor.u32 %v1166, 2147483648
        %v1173 = vsel %vm1171, %v1165, %v1172
        %vm1174 = vcmp.eq.s32.totalorder %v1169, 2
        %v1175 = vxor.u32 %v1165, 2147483648
        %v1176 = vsel %vm1174, %v1175, %v1166
        %v1177 = vsel %vm1170, %v1173, %v1176
        %v1178 = vsel %vm1167, nan, %v1177
        %v1179 = vand.u32 2147483647, %v445
        %vm1180 = vcmp.le.f32.partialorder %v1179, 0.7853982
        %vm1181 = vcmp.lt.s32.totalorder %v445, 0
        %v1182 = vand.u32 %v445, 2139095040
        %v1183 = vshrl.u32 %v1182, 23
        %v1184 = vsub.s32 %v1183, 127
        %v1185 = vand.u32 2147483647, %v445
        %v1186 = vand.u32 %v1185, 8388607
        %v1187 = vor.u32 %v1186, 8388608
        %v1188 = vsub.s32 0, %v1187
        %v1189 = vadd.s32 %v1184, 1
        %vm1190 = vcmp.gt.s32.totalorder %v1189, 0
        %v1191 = vsel %vm1190, %v1189, 0
        %v1192 = vshrl.u32 %v1191, 5
        %v1193 = vand.u32 %v1191, 31
        %v1194 = vsub.s32 32, %v1193
        %v1195 = vshrl.u32 683565275, %v1194
        %v1196 = vshll.u32 683565275, %v1193
        %v1197 = vshrl.u32 2475754826, %v1194
        %v1198 = vor.u32 %v1196, %v1197
        %v1199 = vshll.u32 2475754826, %v1193
        %v1200 = vshrl.u32 2131351028, %v1194
        %v1201 = vor.u32 %v1199, %v1200
        %v1202 = vshll.u32 2131351028, %v1193
        %v1203 = vshrl.u32 2102212464, %v1194
        %v1204 = vor.u32 %v1202, %v1203
        %v1205 = vshll.u32 2102212464, %v1193
        %v1206 = vshrl.u32 920167782, %v1194
        %v1207 = vor.u32 %v1205, %v1206
        %v1208 = vshll.u32 920167782, %v1193
        %v1209 = vshrl.u32 1326507024, %v1194
        %v1210 = vor.u32 %v1208, %v1209
        %vm1211 = vcmp.lt.s32.totalorder %v1192, 1
        %vm1212 = vcmp.lt.s32.totalorder %v1192, 2
        %vm1213 = vcmp.lt.s32.totalorder %v1192, 3
        %vm1214 = vcmp.lt.s32.totalorder %v1192, 4
        %v1215 = vsel %vm1211, %v1195, %v1198
        %v1216 = vsel %vm1214, %v1204, 2102212464
        %v1217 = vsel %vm1213, %v1201, %v1216
        %v1218 = vsel %vm1212, %v1215, %v1217
        %v1219 = vsel %vm1211, %v1198, %v1201
        %v1220 = vsel %vm1214, %v1207, 920167782
        %v1221 = vsel %vm1213, %v1204, %v1220
        %v1222 = vsel %vm1212, %v1219, %v1221
        %v1223 = vsel %vm1211, %v1201, %v1204
        %v1224 = vsel %vm1214, %v1210, 1326507024
        %v1225 = vsel %vm1213, %v1207, %v1224
        %v1226 = vsel %vm1212, %v1223, %v1225
        %v1227 = vshll.u32 %v1187, 8
        %v1228 = vmul.u32.u64.compose %v1227, %v1226
        %v1229 = vextract.low.u32 %v1228
        %v1230 = vextract.high.u32 %v1228
        %v1231 = vmul.u32.u64.compose %v1227, %v1222
        %v1232 = vextract.low.u32 %v1231
        %v1233 = vextract.high.u32 %v1231
        %v1234 = vmul.u32 %v1227, %v1218
        %v1235 = vadd.s32 %v1230, %v1232
        %vm1236 = vc.u32 %v1230, %v1232
        %v1237 = vadd.s32 %v1233, 1
        %v1238 = vsel %vm1236, %v1237, %v1233
        %v1239 = vadd.s32 %v1234, %v1238
        %v1240 = vadd.s32 %v1239, 536870912
        %v1241 = vshrl.u32 %v1240, 30
        %v1242 = vshll.u32 %v1241, 30
        %v1243 = vsub.s32 %v1239, %v1242
        %vm1244 = vcmp.lt.s32.totalorder %v1243, 0
        %v1245 = vsub.s32 0, %v1243
        %v1246 = vsel %vm1244, %v1245, %v1243
        %v1247 = vclz %v1246
        %v1248 = vsub.s32 %v1247, 2
        %vm1249 = vcmp.gt.s32.totalorder 0, %v1248
        %v1250 = vsel %vm1249, 0, %v1248
        %v1251 = vsub.s32 32, %v1250
        %v1252 = vshll.u32 %v1243, %v1250
        %v1253 = vshrl.u32 %v1235, %v1251
        %v1254 = vor.u32 %v1252, %v1253
        %v1255 = vsub.s32 4294967266, %v1250
        %v1256 = vadd.s32 %v1255, 127
        %v1257 = vshll.u32 %v1256, 23
        %v1258 = vor.u32 4788187, %v1257
        %v1259 = vand.u32 2147483647, %v1258
        %v1261 = vcvt.s32.f32 %v1254
        %v1262 = vmul.f32 %v1261, %v1259
        %v1263 = vxor.u32 %v1262, 2147483648
        %v1264 = vsel %vm1181, %v1263, %v1262
        %v1265 = vsub.s32 4, %v1241
        %v1266 = vsel %vm1181, %v1265, %v1241
        %v1267 = vsel %vm1180, %v445, %v1264
        %v1268 = vsel %vm1180, 0, %v1266
        %v1269 = vcosq.f32.pop %v1267
        %v1270 = vsinq.f32.pop %v1267
        %vm1271 = vweird.f32 %v445
        %v1272 = vadd.s32 %v1268, 3
        %v1273 = vand.u32 %v1272, 3
        %vm1274 = vcmp.lt.s32.totalorder %v1273, 2
        %vm1275 = vcmp.eq.s32.totalorder %v1273, 0
        %v1276 = vxor.u32 %v1270, 2147483648
        %v1277 = vsel %vm1275, %v1269, %v1276
        %vm1278 = vcmp.eq.s32.totalorder %v1273, 2
        %v1279 = vxor.u32 %v1269, 2147483648
        %v1280 = vsel %vm1278, %v1279, %v1270
        %v1281 = vsel %vm1274, %v1277, %v1280
        %v1282 = vsel %vm1271, nan, %v1281
        %1283 = vst [vmem:[#allocation2 + $0x20] sm:$0xff] %v554
        %1284 = vst [vmem:[#allocation2 + $0x28] sm:$0xff] %v658
        %1285 = vst [vmem:[#allocation2 + $0x30] sm:$0xff] %v762
        %1286 = vst [vmem:[#allocation2 + $0x38] sm:$0xff] %v866
        %1287 = vst [vmem:[#allocation2 + $0x40] sm:$0xff] %v970
        %1288 = vst [vmem:[#allocation2 + $0x48] sm:$0xff] %v1074
        %1289 = vst [vmem:[#allocation2 + $0x50] sm:$0xff] %v1178
        %1290 = vst [vmem:[#allocation2 + $0x58] sm:$0xff] %v1282
        %v1291 = vand.u32 2147483647, %v360
        %vm1292 = vcmp.le.f32.partialorder %v1291, 0.7853982
        %vm1293 = vcmp.lt.s32.totalorder %v360, 0
        %v1294 = vand.u32 %v360, 2139095040
        %v1295 = vshrl.u32 %v1294, 23
        %v1296 = vsub.s32 %v1295, 127
        %v1297 = vand.u32 2147483647, %v360
        %v1298 = vand.u32 %v1297, 8388607
        %v1299 = vor.u32 %v1298, 8388608
        %v1300 = vsub.s32 0, %v1299
        %v1301 = vadd.s32 %v1296, 1
        %vm1302 = vcmp.gt.s32.totalorder %v1301, 0
        %v1303 = vsel %vm1302, %v1301, 0
        %v1304 = vshrl.u32 %v1303, 5
        %v1305 = vand.u32 %v1303, 31
        %v1306 = vsub.s32 32, %v1305
        %v1307 = vshrl.u32 683565275, %v1306
        %v1308 = vshll.u32 683565275, %v1305
        %v1309 = vshrl.u32 2475754826, %v1306
        %v1310 = vor.u32 %v1308, %v1309
        %v1311 = vshll.u32 2475754826, %v1305
        %v1312 = vshrl.u32 2131351028, %v1306
        %v1313 = vor.u32 %v1311, %v1312
        %v1314 = vshll.u32 2131351028, %v1305
        %v1315 = vshrl.u32 2102212464, %v1306
        %v1316 = vor.u32 %v1314, %v1315
        %v1317 = vshll.u32 2102212464, %v1305
        %v1318 = vshrl.u32 920167782, %v1306
        %v1319 = vor.u32 %v1317, %v1318
        %v1320 = vshll.u32 920167782, %v1305
        %v1321 = vshrl.u32 1326507024, %v1306
        %v1322 = vor.u32 %v1320, %v1321
        %vm1323 = vcmp.lt.s32.totalorder %v1304, 1
        %vm1324 = vcmp.lt.s32.totalorder %v1304, 2
        %vm1325 = vcmp.lt.s32.totalorder %v1304, 3
        %vm1326 = vcmp.lt.s32.totalorder %v1304, 4
        %v1327 = vsel %vm1323, %v1307, %v1310
        %v1328 = vsel %vm1326, %v1316, 2102212464
        %v1329 = vsel %vm1325, %v1313, %v1328
        %v1330 = vsel %vm1324, %v1327, %v1329
        %v1331 = vsel %vm1323, %v1310, %v1313
        %v1332 = vsel %vm1326, %v1319, 920167782
        %v1333 = vsel %vm1325, %v1316, %v1332
        %v1334 = vsel %vm1324, %v1331, %v1333
        %v1335 = vsel %vm1323, %v1313, %v1316
        %v1336 = vsel %vm1326, %v1322, 1326507024
        %v1337 = vsel %vm1325, %v1319, %v1336
        %v1338 = vsel %vm1324, %v1335, %v1337
        %v1339 = vshll.u32 %v1299, 8
        %v1340 = vmul.u32.u64.compose %v1339, %v1338
        %v1341 = vextract.low.u32 %v1340
        %v1342 = vextract.high.u32 %v1340
        %v1343 = vmul.u32.u64.compose %v1339, %v1334
        %v1344 = vextract.low.u32 %v1343
        %v1345 = vextract.high.u32 %v1343
        %v1346 = vmul.u32 %v1339, %v1330
        %v1347 = vadd.s32 %v1342, %v1344
        %vm1348 = vc.u32 %v1342, %v1344
        %v1349 = vadd.s32 %v1345, 1
        %v1350 = vsel %vm1348, %v1349, %v1345
        %v1351 = vadd.s32 %v1346, %v1350
        %v1352 = vadd.s32 %v1351, 536870912
        %v1353 = vshrl.u32 %v1352, 30
        %v1354 = vshll.u32 %v1353, 30
        %v1355 = vsub.s32 %v1351, %v1354
        %vm1356 = vcmp.lt.s32.totalorder %v1355, 0
        %v1357 = vsub.s32 0, %v1355
        %v1358 = vsel %vm1356, %v1357, %v1355
        %v1359 = vclz %v1358
        %v1360 = vsub.s32 %v1359, 2
        %vm1361 = vcmp.gt.s32.totalorder 0, %v1360
        %v1362 = vsel %vm1361, 0, %v1360
        %v1363 = vsub.s32 32, %v1362
        %v1364 = vshll.u32 %v1355, %v1362
        %v1365 = vshrl.u32 %v1347, %v1363
        %v1366 = vor.u32 %v1364, %v1365
        %v1367 = vsub.s32 4294967266, %v1362
        %v1368 = vadd.s32 %v1367, 127
        %v1369 = vshll.u32 %v1368, 23
        %v1370 = vor.u32 4788187, %v1369
        %v1371 = vand.u32 2147483647, %v1370
        %v1373 = vcvt.s32.f32 %v1366
        %v1374 = vmul.f32 %v1373, %v1371
        %v1375 = vxor.u32 %v1374, 2147483648
        %v1376 = vsel %vm1293, %v1375, %v1374
        %v1377 = vsub.s32 4, %v1353
        %v1378 = vsel %vm1293, %v1377, %v1353
        %v1379 = vsel %vm1292, %v360, %v1376
        %v1380 = vsel %vm1292, 0, %v1378
        %v1381 = vcosq.f32.pop %v1379
        %v1382 = vsinq.f32.pop %v1379
        %vm1383 = vweird.f32 %v360
        %v1384 = vand.u32 %v1380, 3
        %vm1385 = vcmp.lt.s32.totalorder %v1384, 2
        %vm1386 = vcmp.eq.s32.totalorder %v1384, 0
        %v1387 = vxor.u32 %v1382, 2147483648
        %v1388 = vsel %vm1386, %v1381, %v1387
        %vm1389 = vcmp.eq.s32.totalorder %v1384, 2
        %v1390 = vxor.u32 %v1381, 2147483648
        %v1391 = vsel %vm1389, %v1390, %v1382
        %v1392 = vsel %vm1385, %v1388, %v1391
        %v1393 = vsel %vm1383, nan, %v1392
        %v1394 = vand.u32 2147483647, %v362
        %vm1395 = vcmp.le.f32.partialorder %v1394, 0.7853982
        %vm1396 = vcmp.lt.s32.totalorder %v362, 0
        %v1397 = vand.u32 %v362, 2139095040
        %v1398 = vshrl.u32 %v1397, 23
        %v1399 = vsub.s32 %v1398, 127
        %v1400 = vand.u32 2147483647, %v362
        %v1401 = vand.u32 %v1400, 8388607
        %v1402 = vor.u32 %v1401, 8388608
        %v1403 = vsub.s32 0, %v1402
        %v1404 = vadd.s32 %v1399, 1
        %vm1405 = vcmp.gt.s32.totalorder %v1404, 0
        %v1406 = vsel %vm1405, %v1404, 0
        %v1407 = vshrl.u32 %v1406, 5
        %v1408 = vand.u32 %v1406, 31
        %v1409 = vsub.s32 32, %v1408
        %v1410 = vshrl.u32 683565275, %v1409
        %v1411 = vshll.u32 683565275, %v1408
        %v1412 = vshrl.u32 2475754826, %v1409
        %v1413 = vor.u32 %v1411, %v1412
        %v1414 = vshll.u32 2475754826, %v1408
        %v1415 = vshrl.u32 2131351028, %v1409
        %v1416 = vor.u32 %v1414, %v1415
        %v1417 = vshll.u32 2131351028, %v1408
        %v1418 = vshrl.u32 2102212464, %v1409
        %v1419 = vor.u32 %v1417, %v1418
        %v1420 = vshll.u32 2102212464, %v1408
        %v1421 = vshrl.u32 920167782, %v1409
        %v1422 = vor.u32 %v1420, %v1421
        %v1423 = vshll.u32 920167782, %v1408
        %v1424 = vshrl.u32 1326507024, %v1409
        %v1425 = vor.u32 %v1423, %v1424
        %vm1426 = vcmp.lt.s32.totalorder %v1407, 1
        %vm1427 = vcmp.lt.s32.totalorder %v1407, 2
        %vm1428 = vcmp.lt.s32.totalorder %v1407, 3
        %vm1429 = vcmp.lt.s32.totalorder %v1407, 4
        %v1430 = vsel %vm1426, %v1410, %v1413
        %v1431 = vsel %vm1429, %v1419, 2102212464
        %v1432 = vsel %vm1428, %v1416, %v1431
        %v1433 = vsel %vm1427, %v1430, %v1432
        %v1434 = vsel %vm1426, %v1413, %v1416
        %v1435 = vsel %vm1429, %v1422, 920167782
        %v1436 = vsel %vm1428, %v1419, %v1435
        %v1437 = vsel %vm1427, %v1434, %v1436
        %v1438 = vsel %vm1426, %v1416, %v1419
        %v1439 = vsel %vm1429, %v1425, 1326507024
        %v1440 = vsel %vm1428, %v1422, %v1439
        %v1441 = vsel %vm1427, %v1438, %v1440
        %v1442 = vshll.u32 %v1402, 8
        %v1443 = vmul.u32.u64.compose %v1442, %v1441
        %v1444 = vextract.low.u32 %v1443
        %v1445 = vextract.high.u32 %v1443
        %v1446 = vmul.u32.u64.compose %v1442, %v1437
        %v1447 = vextract.low.u32 %v1446
        %v1448 = vextract.high.u32 %v1446
        %v1449 = vmul.u32 %v1442, %v1433
        %v1450 = vadd.s32 %v1445, %v1447
        %vm1451 = vc.u32 %v1445, %v1447
        %v1452 = vadd.s32 %v1448, 1
        %v1453 = vsel %vm1451, %v1452, %v1448
        %v1454 = vadd.s32 %v1449, %v1453
        %v1455 = vadd.s32 %v1454, 536870912
        %v1456 = vshrl.u32 %v1455, 30
        %v1457 = vshll.u32 %v1456, 30
        %v1458 = vsub.s32 %v1454, %v1457
        %vm1459 = vcmp.lt.s32.totalorder %v1458, 0
        %v1460 = vsub.s32 0, %v1458
        %v1461 = vsel %vm1459, %v1460, %v1458
        %v1462 = vclz %v1461
        %v1463 = vsub.s32 %v1462, 2
        %vm1464 = vcmp.gt.s32.totalorder 0, %v1463
        %v1465 = vsel %vm1464, 0, %v1463
        %v1466 = vsub.s32 32, %v1465
        %v1467 = vshll.u32 %v1458, %v1465
        %v1468 = vshrl.u32 %v1450, %v1466
        %v1469 = vor.u32 %v1467, %v1468
        %v1470 = vsub.s32 4294967266, %v1465
        %v1471 = vadd.s32 %v1470, 127
        %v1472 = vshll.u32 %v1471, 23
        %v1473 = vor.u32 4788187, %v1472
        %v1474 = vand.u32 2147483647, %v1473
        %v1476 = vcvt.s32.f32 %v1469
        %v1477 = vmul.f32 %v1476, %v1474
        %v1478 = vxor.u32 %v1477, 2147483648
        %v1479 = vsel %vm1396, %v1478, %v1477
        %v1480 = vsub.s32 4, %v1456
        %v1481 = vsel %vm1396, %v1480, %v1456
        %v1482 = vsel %vm1395, %v362, %v1479
        %v1483 = vsel %vm1395, 0, %v1481
        %v1484 = vcosq.f32.pop %v1482
        %v1485 = vsinq.f32.pop %v1482
        %vm1486 = vweird.f32 %v362
        %v1487 = vand.u32 %v1483, 3
        %vm1488 = vcmp.lt.s32.totalorder %v1487, 2
        %vm1489 = vcmp.eq.s32.totalorder %v1487, 0
        %v1490 = vxor.u32 %v1485, 2147483648
        %v1491 = vsel %vm1489, %v1484, %v1490
        %vm1492 = vcmp.eq.s32.totalorder %v1487, 2
        %v1493 = vxor.u32 %v1484, 2147483648
        %v1494 = vsel %vm1492, %v1493, %v1485
        %v1495 = vsel %vm1488, %v1491, %v1494
        %v1496 = vsel %vm1486, nan, %v1495
        %v1497 = vand.u32 2147483647, %v437
        %vm1498 = vcmp.le.f32.partialorder %v1497, 0.7853982
        %vm1499 = vcmp.lt.s32.totalorder %v437, 0
        %v1500 = vand.u32 %v437, 2139095040
        %v1501 = vshrl.u32 %v1500, 23
        %v1502 = vsub.s32 %v1501, 127
        %v1503 = vand.u32 2147483647, %v437
        %v1504 = vand.u32 %v1503, 8388607
        %v1505 = vor.u32 %v1504, 8388608
        %v1506 = vsub.s32 0, %v1505
        %v1507 = vadd.s32 %v1502, 1
        %vm1508 = vcmp.gt.s32.totalorder %v1507, 0
        %v1509 = vsel %vm1508, %v1507, 0
        %v1510 = vshrl.u32 %v1509, 5
        %v1511 = vand.u32 %v1509, 31
        %v1512 = vsub.s32 32, %v1511
        %v1513 = vshrl.u32 683565275, %v1512
        %v1514 = vshll.u32 683565275, %v1511
        %v1515 = vshrl.u32 2475754826, %v1512
        %v1516 = vor.u32 %v1514, %v1515
        %v1517 = vshll.u32 2475754826, %v1511
        %v1518 = vshrl.u32 2131351028, %v1512
        %v1519 = vor.u32 %v1517, %v1518
        %v1520 = vshll.u32 2131351028, %v1511
        %v1521 = vshrl.u32 2102212464, %v1512
        %v1522 = vor.u32 %v1520, %v1521
        %v1523 = vshll.u32 2102212464, %v1511
        %v1524 = vshrl.u32 920167782, %v1512
        %v1525 = vor.u32 %v1523, %v1524
        %v1526 = vshll.u32 920167782, %v1511
        %v1527 = vshrl.u32 1326507024, %v1512
        %v1528 = vor.u32 %v1526, %v1527
        %vm1529 = vcmp.lt.s32.totalorder %v1510, 1
        %vm1530 = vcmp.lt.s32.totalorder %v1510, 2
        %vm1531 = vcmp.lt.s32.totalorder %v1510, 3
        %vm1532 = vcmp.lt.s32.totalorder %v1510, 4
        %v1533 = vsel %vm1529, %v1513, %v1516
        %v1534 = vsel %vm1532, %v1522, 2102212464
        %v1535 = vsel %vm1531, %v1519, %v1534
        %v1536 = vsel %vm1530, %v1533, %v1535
        %v1537 = vsel %vm1529, %v1516, %v1519
        %v1538 = vsel %vm1532, %v1525, 920167782
        %v1539 = vsel %vm1531, %v1522, %v1538
        %v1540 = vsel %vm1530, %v1537, %v1539
        %v1541 = vsel %vm1529, %v1519, %v1522
        %v1542 = vsel %vm1532, %v1528, 1326507024
        %v1543 = vsel %vm1531, %v1525, %v1542
        %v1544 = vsel %vm1530, %v1541, %v1543
        %v1545 = vshll.u32 %v1505, 8
        %v1546 = vmul.u32.u64.compose %v1545, %v1544
        %v1547 = vextract.low.u32 %v1546
        %v1548 = vextract.high.u32 %v1546
        %v1549 = vmul.u32.u64.compose %v1545, %v1540
        %v1550 = vextract.low.u32 %v1549
        %v1551 = vextract.high.u32 %v1549
        %v1552 = vmul.u32 %v1545, %v1536
        %v1553 = vadd.s32 %v1548, %v1550
        %vm1554 = vc.u32 %v1548, %v1550
        %v1555 = vadd.s32 %v1551, 1
        %v1556 = vsel %vm1554, %v1555, %v1551
        %v1557 = vadd.s32 %v1552, %v1556
        %v1558 = vadd.s32 %v1557, 536870912
        %v1559 = vshrl.u32 %v1558, 30
        %v1560 = vshll.u32 %v1559, 30
        %v1561 = vsub.s32 %v1557, %v1560
        %vm1562 = vcmp.lt.s32.totalorder %v1561, 0
        %v1563 = vsub.s32 0, %v1561
        %v1564 = vsel %vm1562, %v1563, %v1561
        %v1565 = vclz %v1564
        %v1566 = vsub.s32 %v1565, 2
        %vm1567 = vcmp.gt.s32.totalorder 0, %v1566
        %v1568 = vsel %vm1567, 0, %v1566
        %v1569 = vsub.s32 32, %v1568
        %v1570 = vshll.u32 %v1561, %v1568
        %v1571 = vshrl.u32 %v1553, %v1569
        %v1572 = vor.u32 %v1570, %v1571
        %v1573 = vsub.s32 4294967266, %v1568
        %v1574 = vadd.s32 %v1573, 127
        %v1575 = vshll.u32 %v1574, 23
        %v1576 = vor.u32 4788187, %v1575
        %v1577 = vand.u32 2147483647, %v1576
        %v1579 = vcvt.s32.f32 %v1572
        %v1580 = vmul.f32 %v1579, %v1577
        %v1581 = vxor.u32 %v1580, 2147483648
        %v1582 = vsel %vm1499, %v1581, %v1580
        %v1583 = vsub.s32 4, %v1559
        %v1584 = vsel %vm1499, %v1583, %v1559
        %v1585 = vsel %vm1498, %v437, %v1582
        %v1586 = vsel %vm1498, 0, %v1584
        %v1587 = vcosq.f32.pop %v1585
        %v1588 = vsinq.f32.pop %v1585
        %vm1589 = vweird.f32 %v437
        %v1590 = vand.u32 %v1586, 3
        %vm1591 = vcmp.lt.s32.totalorder %v1590, 2
        %vm1592 = vcmp.eq.s32.totalorder %v1590, 0
        %v1593 = vxor.u32 %v1588, 2147483648
        %v1594 = vsel %vm1592, %v1587, %v1593
        %vm1595 = vcmp.eq.s32.totalorder %v1590, 2
        %v1596 = vxor.u32 %v1587, 2147483648
        %v1597 = vsel %vm1595, %v1596, %v1588
        %v1598 = vsel %vm1591, %v1594, %v1597
        %v1599 = vsel %vm1589, nan, %v1598
        %v1600 = vand.u32 2147483647, %v439
        %vm1601 = vcmp.le.f32.partialorder %v1600, 0.7853982
        %vm1602 = vcmp.lt.s32.totalorder %v439, 0
        %v1603 = vand.u32 %v439, 2139095040
        %v1604 = vshrl.u32 %v1603, 23
        %v1605 = vsub.s32 %v1604, 127
        %v1606 = vand.u32 2147483647, %v439
        %v1607 = vand.u32 %v1606, 8388607
        %v1608 = vor.u32 %v1607, 8388608
        %v1609 = vsub.s32 0, %v1608
        %v1610 = vadd.s32 %v1605, 1
        %vm1611 = vcmp.gt.s32.totalorder %v1610, 0
        %v1612 = vsel %vm1611, %v1610, 0
        %v1613 = vshrl.u32 %v1612, 5
        %v1614 = vand.u32 %v1612, 31
        %v1615 = vsub.s32 32, %v1614
        %v1616 = vshrl.u32 683565275, %v1615
        %v1617 = vshll.u32 683565275, %v1614
        %v1618 = vshrl.u32 2475754826, %v1615
        %v1619 = vor.u32 %v1617, %v1618
        %v1620 = vshll.u32 2475754826, %v1614
        %v1621 = vshrl.u32 2131351028, %v1615
        %v1622 = vor.u32 %v1620, %v1621
        %v1623 = vshll.u32 2131351028, %v1614
        %v1624 = vshrl.u32 2102212464, %v1615
        %v1625 = vor.u32 %v1623, %v1624
        %v1626 = vshll.u32 2102212464, %v1614
        %v1627 = vshrl.u32 920167782, %v1615
        %v1628 = vor.u32 %v1626, %v1627
        %v1629 = vshll.u32 920167782, %v1614
        %v1630 = vshrl.u32 1326507024, %v1615
        %v1631 = vor.u32 %v1629, %v1630
        %vm1632 = vcmp.lt.s32.totalorder %v1613, 1
        %vm1633 = vcmp.lt.s32.totalorder %v1613, 2
        %vm1634 = vcmp.lt.s32.totalorder %v1613, 3
        %vm1635 = vcmp.lt.s32.totalorder %v1613, 4
        %v1636 = vsel %vm1632, %v1616, %v1619
        %v1637 = vsel %vm1635, %v1625, 2102212464
        %v1638 = vsel %vm1634, %v1622, %v1637
        %v1639 = vsel %vm1633, %v1636, %v1638
        %v1640 = vsel %vm1632, %v1619, %v1622
        %v1641 = vsel %vm1635, %v1628, 920167782
        %v1642 = vsel %vm1634, %v1625, %v1641
        %v1643 = vsel %vm1633, %v1640, %v1642
        %v1644 = vsel %vm1632, %v1622, %v1625
        %v1645 = vsel %vm1635, %v1631, 1326507024
        %v1646 = vsel %vm1634, %v1628, %v1645
        %v1647 = vsel %vm1633, %v1644, %v1646
        %v1648 = vshll.u32 %v1608, 8
        %v1649 = vmul.u32.u64.compose %v1648, %v1647
        %v1650 = vextract.low.u32 %v1649
        %v1651 = vextract.high.u32 %v1649
        %v1652 = vmul.u32.u64.compose %v1648, %v1643
        %v1653 = vextract.low.u32 %v1652
        %v1654 = vextract.high.u32 %v1652
        %v1655 = vmul.u32 %v1648, %v1639
        %v1656 = vadd.s32 %v1651, %v1653
        %vm1657 = vc.u32 %v1651, %v1653
        %v1658 = vadd.s32 %v1654, 1
        %v1659 = vsel %vm1657, %v1658, %v1654
        %v1660 = vadd.s32 %v1655, %v1659
        %v1661 = vadd.s32 %v1660, 536870912
        %v1662 = vshrl.u32 %v1661, 30
        %v1663 = vshll.u32 %v1662, 30
        %v1664 = vsub.s32 %v1660, %v1663
        %vm1665 = vcmp.lt.s32.totalorder %v1664, 0
        %v1666 = vsub.s32 0, %v1664
        %v1667 = vsel %vm1665, %v1666, %v1664
        %v1668 = vclz %v1667
        %v1669 = vsub.s32 %v1668, 2
        %vm1670 = vcmp.gt.s32.totalorder 0, %v1669
        %v1671 = vsel %vm1670, 0, %v1669
        %v1672 = vsub.s32 32, %v1671
        %v1673 = vshll.u32 %v1664, %v1671
        %v1674 = vshrl.u32 %v1656, %v1672
        %v1675 = vor.u32 %v1673, %v1674
        %v1676 = vsub.s32 4294967266, %v1671
        %v1677 = vadd.s32 %v1676, 127
        %v1678 = vshll.u32 %v1677, 23
        %v1679 = vor.u32 4788187, %v1678
        %v1680 = vand.u32 2147483647, %v1679
        %v1682 = vcvt.s32.f32 %v1675
        %v1683 = vmul.f32 %v1682, %v1680
        %v1684 = vxor.u32 %v1683, 2147483648
        %v1685 = vsel %vm1602, %v1684, %v1683
        %v1686 = vsub.s32 4, %v1662
        %v1687 = vsel %vm1602, %v1686, %v1662
        %v1688 = vsel %vm1601, %v439, %v1685
        %v1689 = vsel %vm1601, 0, %v1687
        %v1690 = vcosq.f32.pop %v1688
        %v1691 = vsinq.f32.pop %v1688
        %vm1692 = vweird.f32 %v439
        %v1693 = vand.u32 %v1689, 3
        %vm1694 = vcmp.lt.s32.totalorder %v1693, 2
        %vm1695 = vcmp.eq.s32.totalorder %v1693, 0
        %v1696 = vxor.u32 %v1691, 2147483648
        %v1697 = vsel %vm1695, %v1690, %v1696
        %vm1698 = vcmp.eq.s32.totalorder %v1693, 2
        %v1699 = vxor.u32 %v1690, 2147483648
        %v1700 = vsel %vm1698, %v1699, %v1691
        %v1701 = vsel %vm1694, %v1697, %v1700
        %v1702 = vsel %vm1692, nan, %v1701
        %v1703 = vand.u32 2147483647, %v366
        %vm1704 = vcmp.le.f32.partialorder %v1703, 0.7853982
        %vm1705 = vcmp.lt.s32.totalorder %v366, 0
        %v1706 = vand.u32 %v366, 2139095040
        %v1707 = vshrl.u32 %v1706, 23
        %v1708 = vsub.s32 %v1707, 127
        %v1709 = vand.u32 2147483647, %v366
        %v1710 = vand.u32 %v1709, 8388607
        %v1711 = vor.u32 %v1710, 8388608
        %v1712 = vsub.s32 0, %v1711
        %v1713 = vadd.s32 %v1708, 1
        %vm1714 = vcmp.gt.s32.totalorder %v1713, 0
        %v1715 = vsel %vm1714, %v1713, 0
        %v1716 = vshrl.u32 %v1715, 5
        %v1717 = vand.u32 %v1715, 31
        %v1718 = vsub.s32 32, %v1717
        %v1719 = vshrl.u32 683565275, %v1718
        %v1720 = vshll.u32 683565275, %v1717
        %v1721 = vshrl.u32 2475754826, %v1718
        %v1722 = vor.u32 %v1720, %v1721
        %v1723 = vshll.u32 2475754826, %v1717
        %v1724 = vshrl.u32 2131351028, %v1718
        %v1725 = vor.u32 %v1723, %v1724
        %v1726 = vshll.u32 2131351028, %v1717
        %v1727 = vshrl.u32 2102212464, %v1718
        %v1728 = vor.u32 %v1726, %v1727
        %v1729 = vshll.u32 2102212464, %v1717
        %v1730 = vshrl.u32 920167782, %v1718
        %v1731 = vor.u32 %v1729, %v1730
        %v1732 = vshll.u32 920167782, %v1717
        %v1733 = vshrl.u32 1326507024, %v1718
        %v1734 = vor.u32 %v1732, %v1733
        %vm1735 = vcmp.lt.s32.totalorder %v1716, 1
        %vm1736 = vcmp.lt.s32.totalorder %v1716, 2
        %vm1737 = vcmp.lt.s32.totalorder %v1716, 3
        %vm1738 = vcmp.lt.s32.totalorder %v1716, 4
        %v1739 = vsel %vm1735, %v1719, %v1722
        %v1740 = vsel %vm1738, %v1728, 2102212464
        %v1741 = vsel %vm1737, %v1725, %v1740
        %v1742 = vsel %vm1736, %v1739, %v1741
        %v1743 = vsel %vm1735, %v1722, %v1725
        %v1744 = vsel %vm1738, %v1731, 920167782
        %v1745 = vsel %vm1737, %v1728, %v1744
        %v1746 = vsel %vm1736, %v1743, %v1745
        %v1747 = vsel %vm1735, %v1725, %v1728
        %v1748 = vsel %vm1738, %v1734, 1326507024
        %v1749 = vsel %vm1737, %v1731, %v1748
        %v1750 = vsel %vm1736, %v1747, %v1749
        %v1751 = vshll.u32 %v1711, 8
        %v1752 = vmul.u32.u64.compose %v1751, %v1750
        %v1753 = vextract.low.u32 %v1752
        %v1754 = vextract.high.u32 %v1752
        %v1755 = vmul.u32.u64.compose %v1751, %v1746
        %v1756 = vextract.low.u32 %v1755
        %v1757 = vextract.high.u32 %v1755
        %v1758 = vmul.u32 %v1751, %v1742
        %v1759 = vadd.s32 %v1754, %v1756
        %vm1760 = vc.u32 %v1754, %v1756
        %v1761 = vadd.s32 %v1757, 1
        %v1762 = vsel %vm1760, %v1761, %v1757
        %v1763 = vadd.s32 %v1758, %v1762
        %v1764 = vadd.s32 %v1763, 536870912
        %v1765 = vshrl.u32 %v1764, 30
        %v1766 = vshll.u32 %v1765, 30
        %v1767 = vsub.s32 %v1763, %v1766
        %vm1768 = vcmp.lt.s32.totalorder %v1767, 0
        %v1769 = vsub.s32 0, %v1767
        %v1770 = vsel %vm1768, %v1769, %v1767
        %v1771 = vclz %v1770
        %v1772 = vsub.s32 %v1771, 2
        %vm1773 = vcmp.gt.s32.totalorder 0, %v1772
        %v1774 = vsel %vm1773, 0, %v1772
        %v1775 = vsub.s32 32, %v1774
        %v1776 = vshll.u32 %v1767, %v1774
        %v1777 = vshrl.u32 %v1759, %v1775
        %v1778 = vor.u32 %v1776, %v1777
        %v1779 = vsub.s32 4294967266, %v1774
        %v1780 = vadd.s32 %v1779, 127
        %v1781 = vshll.u32 %v1780, 23
        %v1782 = vor.u32 4788187, %v1781
        %v1783 = vand.u32 2147483647, %v1782
        %v1785 = vcvt.s32.f32 %v1778
        %v1786 = vmul.f32 %v1785, %v1783
        %v1787 = vxor.u32 %v1786, 2147483648
        %v1788 = vsel %vm1705, %v1787, %v1786
        %v1789 = vsub.s32 4, %v1765
        %v1790 = vsel %vm1705, %v1789, %v1765
        %v1791 = vsel %vm1704, %v366, %v1788
        %v1792 = vsel %vm1704, 0, %v1790
        %v1793 = vcosq.f32.pop %v1791
        %v1794 = vsinq.f32.pop %v1791
        %vm1795 = vweird.f32 %v366
        %v1796 = vand.u32 %v1792, 3
        %vm1797 = vcmp.lt.s32.totalorder %v1796, 2
        %vm1798 = vcmp.eq.s32.totalorder %v1796, 0
        %v1799 = vxor.u32 %v1794, 2147483648
        %v1800 = vsel %vm1798, %v1793, %v1799
        %vm1801 = vcmp.eq.s32.totalorder %v1796, 2
        %v1802 = vxor.u32 %v1793, 2147483648
        %v1803 = vsel %vm1801, %v1802, %v1794
        %v1804 = vsel %vm1797, %v1800, %v1803
        %v1805 = vsel %vm1795, nan, %v1804
        %v1806 = vand.u32 2147483647, %v368
        %vm1807 = vcmp.le.f32.partialorder %v1806, 0.7853982
        %vm1808 = vcmp.lt.s32.totalorder %v368, 0
        %v1809 = vand.u32 %v368, 2139095040
        %v1810 = vshrl.u32 %v1809, 23
        %v1811 = vsub.s32 %v1810, 127
        %v1812 = vand.u32 2147483647, %v368
        %v1813 = vand.u32 %v1812, 8388607
        %v1814 = vor.u32 %v1813, 8388608
        %v1815 = vsub.s32 0, %v1814
        %v1816 = vadd.s32 %v1811, 1
        %vm1817 = vcmp.gt.s32.totalorder %v1816, 0
        %v1818 = vsel %vm1817, %v1816, 0
        %v1819 = vshrl.u32 %v1818, 5
        %v1820 = vand.u32 %v1818, 31
        %v1821 = vsub.s32 32, %v1820
        %v1822 = vshrl.u32 683565275, %v1821
        %v1823 = vshll.u32 683565275, %v1820
        %v1824 = vshrl.u32 2475754826, %v1821
        %v1825 = vor.u32 %v1823, %v1824
        %v1826 = vshll.u32 2475754826, %v1820
        %v1827 = vshrl.u32 2131351028, %v1821
        %v1828 = vor.u32 %v1826, %v1827
        %v1829 = vshll.u32 2131351028, %v1820
        %v1830 = vshrl.u32 2102212464, %v1821
        %v1831 = vor.u32 %v1829, %v1830
        %v1832 = vshll.u32 2102212464, %v1820
        %v1833 = vshrl.u32 920167782, %v1821
        %v1834 = vor.u32 %v1832, %v1833
        %v1835 = vshll.u32 920167782, %v1820
        %v1836 = vshrl.u32 1326507024, %v1821
        %v1837 = vor.u32 %v1835, %v1836
        %vm1838 = vcmp.lt.s32.totalorder %v1819, 1
        %vm1839 = vcmp.lt.s32.totalorder %v1819, 2
        %vm1840 = vcmp.lt.s32.totalorder %v1819, 3
        %vm1841 = vcmp.lt.s32.totalorder %v1819, 4
        %v1842 = vsel %vm1838, %v1822, %v1825
        %v1843 = vsel %vm1841, %v1831, 2102212464
        %v1844 = vsel %vm1840, %v1828, %v1843
        %v1845 = vsel %vm1839, %v1842, %v1844
        %v1846 = vsel %vm1838, %v1825, %v1828
        %v1847 = vsel %vm1841, %v1834, 920167782
        %v1848 = vsel %vm1840, %v1831, %v1847
        %v1849 = vsel %vm1839, %v1846, %v1848
        %v1850 = vsel %vm1838, %v1828, %v1831
        %v1851 = vsel %vm1841, %v1837, 1326507024
        %v1852 = vsel %vm1840, %v1834, %v1851
        %v1853 = vsel %vm1839, %v1850, %v1852
        %v1854 = vshll.u32 %v1814, 8
        %v1855 = vmul.u32.u64.compose %v1854, %v1853
        %v1856 = vextract.low.u32 %v1855
        %v1857 = vextract.high.u32 %v1855
        %v1858 = vmul.u32.u64.compose %v1854, %v1849
        %v1859 = vextract.low.u32 %v1858
        %v1860 = vextract.high.u32 %v1858
        %v1861 = vmul.u32 %v1854, %v1845
        %v1862 = vadd.s32 %v1857, %v1859
        %vm1863 = vc.u32 %v1857, %v1859
        %v1864 = vadd.s32 %v1860, 1
        %v1865 = vsel %vm1863, %v1864, %v1860
        %v1866 = vadd.s32 %v1861, %v1865
        %v1867 = vadd.s32 %v1866, 536870912
        %v1868 = vshrl.u32 %v1867, 30
        %v1869 = vshll.u32 %v1868, 30
        %v1870 = vsub.s32 %v1866, %v1869
        %vm1871 = vcmp.lt.s32.totalorder %v1870, 0
        %v1872 = vsub.s32 0, %v1870
        %v1873 = vsel %vm1871, %v1872, %v1870
        %v1874 = vclz %v1873
        %v1875 = vsub.s32 %v1874, 2
        %vm1876 = vcmp.gt.s32.totalorder 0, %v1875
        %v1877 = vsel %vm1876, 0, %v1875
        %v1878 = vsub.s32 32, %v1877
        %v1879 = vshll.u32 %v1870, %v1877
        %v1880 = vshrl.u32 %v1862, %v1878
        %v1881 = vor.u32 %v1879, %v1880
        %v1882 = vsub.s32 4294967266, %v1877
        %v1883 = vadd.s32 %v1882, 127
        %v1884 = vshll.u32 %v1883, 23
        %v1885 = vor.u32 4788187, %v1884
        %v1886 = vand.u32 2147483647, %v1885
        %v1888 = vcvt.s32.f32 %v1881
        %v1889 = vmul.f32 %v1888, %v1886
        %v1890 = vxor.u32 %v1889, 2147483648
        %v1891 = vsel %vm1808, %v1890, %v1889
        %v1892 = vsub.s32 4, %v1868
        %v1893 = vsel %vm1808, %v1892, %v1868
        %v1894 = vsel %vm1807, %v368, %v1891
        %v1895 = vsel %vm1807, 0, %v1893
        %v1896 = vcosq.f32.pop %v1894
        %v1897 = vsinq.f32.pop %v1894
        %vm1898 = vweird.f32 %v368
        %v1899 = vand.u32 %v1895, 3
        %vm1900 = vcmp.lt.s32.totalorder %v1899, 2
        %vm1901 = vcmp.eq.s32.totalorder %v1899, 0
        %v1902 = vxor.u32 %v1897, 2147483648
        %v1903 = vsel %vm1901, %v1896, %v1902
        %vm1904 = vcmp.eq.s32.totalorder %v1899, 2
        %v1905 = vxor.u32 %v1896, 2147483648
        %v1906 = vsel %vm1904, %v1905, %v1897
        %v1907 = vsel %vm1900, %v1903, %v1906
        %v1908 = vsel %vm1898, nan, %v1907
        %v1909 = vand.u32 2147483647, %v443
        %vm1910 = vcmp.le.f32.partialorder %v1909, 0.7853982
        %vm1911 = vcmp.lt.s32.totalorder %v443, 0
        %v1912 = vand.u32 %v443, 2139095040
        %v1913 = vshrl.u32 %v1912, 23
        %v1914 = vsub.s32 %v1913, 127
        %v1915 = vand.u32 2147483647, %v443
        %v1916 = vand.u32 %v1915, 8388607
        %v1917 = vor.u32 %v1916, 8388608
        %v1918 = vsub.s32 0, %v1917
        %v1919 = vadd.s32 %v1914, 1
        %vm1920 = vcmp.gt.s32.totalorder %v1919, 0
        %v1921 = vsel %vm1920, %v1919, 0
        %v1922 = vshrl.u32 %v1921, 5
        %v1923 = vand.u32 %v1921, 31
        %v1924 = vsub.s32 32, %v1923
        %v1925 = vshrl.u32 683565275, %v1924
        %v1926 = vshll.u32 683565275, %v1923
        %v1927 = vshrl.u32 2475754826, %v1924
        %v1928 = vor.u32 %v1926, %v1927
        %v1929 = vshll.u32 2475754826, %v1923
        %v1930 = vshrl.u32 2131351028, %v1924
        %v1931 = vor.u32 %v1929, %v1930
        %v1932 = vshll.u32 2131351028, %v1923
        %v1933 = vshrl.u32 2102212464, %v1924
        %v1934 = vor.u32 %v1932, %v1933
        %v1935 = vshll.u32 2102212464, %v1923
        %v1936 = vshrl.u32 920167782, %v1924
        %v1937 = vor.u32 %v1935, %v1936
        %v1938 = vshll.u32 920167782, %v1923
        %v1939 = vshrl.u32 1326507024, %v1924
        %v1940 = vor.u32 %v1938, %v1939
        %vm1941 = vcmp.lt.s32.totalorder %v1922, 1
        %vm1942 = vcmp.lt.s32.totalorder %v1922, 2
        %vm1943 = vcmp.lt.s32.totalorder %v1922, 3
        %vm1944 = vcmp.lt.s32.totalorder %v1922, 4
        %v1945 = vsel %vm1941, %v1925, %v1928
        %v1946 = vsel %vm1944, %v1934, 2102212464
        %v1947 = vsel %vm1943, %v1931, %v1946
        %v1948 = vsel %vm1942, %v1945, %v1947
        %v1949 = vsel %vm1941, %v1928, %v1931
        %v1950 = vsel %vm1944, %v1937, 920167782
        %v1951 = vsel %vm1943, %v1934, %v1950
        %v1952 = vsel %vm1942, %v1949, %v1951
        %v1953 = vsel %vm1941, %v1931, %v1934
        %v1954 = vsel %vm1944, %v1940, 1326507024
        %v1955 = vsel %vm1943, %v1937, %v1954
        %v1956 = vsel %vm1942, %v1953, %v1955
        %v1957 = vshll.u32 %v1917, 8
        %v1958 = vmul.u32.u64.compose %v1957, %v1956
        %v1959 = vextract.low.u32 %v1958
        %v1960 = vextract.high.u32 %v1958
        %v1961 = vmul.u32.u64.compose %v1957, %v1952
        %v1962 = vextract.low.u32 %v1961
        %v1963 = vextract.high.u32 %v1961
        %v1964 = vmul.u32 %v1957, %v1948
        %v1965 = vadd.s32 %v1960, %v1962
        %vm1966 = vc.u32 %v1960, %v1962
        %v1967 = vadd.s32 %v1963, 1
        %v1968 = vsel %vm1966, %v1967, %v1963
        %v1969 = vadd.s32 %v1964, %v1968
        %v1970 = vadd.s32 %v1969, 536870912
        %v1971 = vshrl.u32 %v1970, 30
        %v1972 = vshll.u32 %v1971, 30
        %v1973 = vsub.s32 %v1969, %v1972
        %vm1974 = vcmp.lt.s32.totalorder %v1973, 0
        %v1975 = vsub.s32 0, %v1973
        %v1976 = vsel %vm1974, %v1975, %v1973
        %v1977 = vclz %v1976
        %v1978 = vsub.s32 %v1977, 2
        %vm1979 = vcmp.gt.s32.totalorder 0, %v1978
        %v1980 = vsel %vm1979, 0, %v1978
        %v1981 = vsub.s32 32, %v1980
        %v1982 = vshll.u32 %v1973, %v1980
        %v1983 = vshrl.u32 %v1965, %v1981
        %v1984 = vor.u32 %v1982, %v1983
        %v1985 = vsub.s32 4294967266, %v1980
        %v1986 = vadd.s32 %v1985, 127
        %v1987 = vshll.u32 %v1986, 23
        %v1988 = vor.u32 4788187, %v1987
        %v1989 = vand.u32 2147483647, %v1988
        %v1991 = vcvt.s32.f32 %v1984
        %v1992 = vmul.f32 %v1991, %v1989
        %v1993 = vxor.u32 %v1992, 2147483648
        %v1994 = vsel %vm1911, %v1993, %v1992
        %v1995 = vsub.s32 4, %v1971
        %v1996 = vsel %vm1911, %v1995, %v1971
        %v1997 = vsel %vm1910, %v443, %v1994
        %v1998 = vsel %vm1910, 0, %v1996
        %v1999 = vcosq.f32.pop %v1997
        %v2000 = vsinq.f32.pop %v1997
        %vm2001 = vweird.f32 %v443
        %v2002 = vand.u32 %v1998, 3
        %vm2003 = vcmp.lt.s32.totalorder %v2002, 2
        %vm2004 = vcmp.eq.s32.totalorder %v2002, 0
        %v2005 = vxor.u32 %v2000, 2147483648
        %v2006 = vsel %vm2004, %v1999, %v2005
        %vm2007 = vcmp.eq.s32.totalorder %v2002, 2
        %v2008 = vxor.u32 %v1999, 2147483648
        %v2009 = vsel %vm2007, %v2008, %v2000
        %v2010 = vsel %vm2003, %v2006, %v2009
        %v2011 = vsel %vm2001, nan, %v2010
        %v2012 = vand.u32 2147483647, %v445
        %vm2013 = vcmp.le.f32.partialorder %v2012, 0.7853982
        %vm2014 = vcmp.lt.s32.totalorder %v445, 0
        %v2015 = vand.u32 %v445, 2139095040
        %v2016 = vshrl.u32 %v2015, 23
        %v2017 = vsub.s32 %v2016, 127
        %v2018 = vand.u32 2147483647, %v445
        %v2019 = vand.u32 %v2018, 8388607
        %v2020 = vor.u32 %v2019, 8388608
        %v2021 = vsub.s32 0, %v2020
        %v2022 = vadd.s32 %v2017, 1
        %vm2023 = vcmp.gt.s32.totalorder %v2022, 0
        %v2024 = vsel %vm2023, %v2022, 0
        %v2025 = vshrl.u32 %v2024, 5
        %v2026 = vand.u32 %v2024, 31
        %v2027 = vsub.s32 32, %v2026
        %v2028 = vshrl.u32 683565275, %v2027
        %v2029 = vshll.u32 683565275, %v2026
        %v2030 = vshrl.u32 2475754826, %v2027
        %v2031 = vor.u32 %v2029, %v2030
        %v2032 = vshll.u32 2475754826, %v2026
        %v2033 = vshrl.u32 2131351028, %v2027
        %v2034 = vor.u32 %v2032, %v2033
        %v2035 = vshll.u32 2131351028, %v2026
        %v2036 = vshrl.u32 2102212464, %v2027
        %v2037 = vor.u32 %v2035, %v2036
        %v2038 = vshll.u32 2102212464, %v2026
        %v2039 = vshrl.u32 920167782, %v2027
        %v2040 = vor.u32 %v2038, %v2039
        %v2041 = vshll.u32 920167782, %v2026
        %v2042 = vshrl.u32 1326507024, %v2027
        %v2043 = vor.u32 %v2041, %v2042
        %vm2044 = vcmp.lt.s32.totalorder %v2025, 1
        %vm2045 = vcmp.lt.s32.totalorder %v2025, 2
        %vm2046 = vcmp.lt.s32.totalorder %v2025, 3
        %vm2047 = vcmp.lt.s32.totalorder %v2025, 4
        %v2048 = vsel %vm2044, %v2028, %v2031
        %v2049 = vsel %vm2047, %v2037, 2102212464
        %v2050 = vsel %vm2046, %v2034, %v2049
        %v2051 = vsel %vm2045, %v2048, %v2050
        %v2052 = vsel %vm2044, %v2031, %v2034
        %v2053 = vsel %vm2047, %v2040, 920167782
        %v2054 = vsel %vm2046, %v2037, %v2053
        %v2055 = vsel %vm2045, %v2052, %v2054
        %v2056 = vsel %vm2044, %v2034, %v2037
        %v2057 = vsel %vm2047, %v2043, 1326507024
        %v2058 = vsel %vm2046, %v2040, %v2057
        %v2059 = vsel %vm2045, %v2056, %v2058
        %v2060 = vshll.u32 %v2020, 8
        %v2061 = vmul.u32.u64.compose %v2060, %v2059
        %v2062 = vextract.low.u32 %v2061
        %v2063 = vextract.high.u32 %v2061
        %v2064 = vmul.u32.u64.compose %v2060, %v2055
        %v2065 = vextract.low.u32 %v2064
        %v2066 = vextract.high.u32 %v2064
        %v2067 = vmul.u32 %v2060, %v2051
        %v2068 = vadd.s32 %v2063, %v2065
        %vm2069 = vc.u32 %v2063, %v2065
        %v2070 = vadd.s32 %v2066, 1
        %v2071 = vsel %vm2069, %v2070, %v2066
        %v2072 = vadd.s32 %v2067, %v2071
        %v2073 = vadd.s32 %v2072, 536870912
        %v2074 = vshrl.u32 %v2073, 30
        %v2075 = vshll.u32 %v2074, 30
        %v2076 = vsub.s32 %v2072, %v2075
        %vm2077 = vcmp.lt.s32.totalorder %v2076, 0
        %v2078 = vsub.s32 0, %v2076
        %v2079 = vsel %vm2077, %v2078, %v2076
        %v2080 = vclz %v2079
        %v2081 = vsub.s32 %v2080, 2
        %vm2082 = vcmp.gt.s32.totalorder 0, %v2081
        %v2083 = vsel %vm2082, 0, %v2081
        %v2084 = vsub.s32 32, %v2083
        %v2085 = vshll.u32 %v2076, %v2083
        %v2086 = vshrl.u32 %v2068, %v2084
        %v2087 = vor.u32 %v2085, %v2086
        %v2088 = vsub.s32 4294967266, %v2083
        %v2089 = vadd.s32 %v2088, 127
        %v2090 = vshll.u32 %v2089, 23
        %v2091 = vor.u32 4788187, %v2090
        %v2092 = vand.u32 2147483647, %v2091
        %v2094 = vcvt.s32.f32 %v2087
        %v2095 = vmul.f32 %v2094, %v2092
        %v2096 = vxor.u32 %v2095, 2147483648
        %v2097 = vsel %vm2014, %v2096, %v2095
        %v2098 = vsub.s32 4, %v2074
        %v2099 = vsel %vm2014, %v2098, %v2074
        %v2100 = vsel %vm2013, %v445, %v2097
        %v2101 = vsel %vm2013, 0, %v2099
        %v2102 = vcosq.f32.pop %v2100
        %v2103 = vsinq.f32.pop %v2100
        %vm2104 = vweird.f32 %v445
        %v2105 = vand.u32 %v2101, 3
        %vm2106 = vcmp.lt.s32.totalorder %v2105, 2
        %vm2107 = vcmp.eq.s32.totalorder %v2105, 0
        %v2108 = vxor.u32 %v2103, 2147483648
        %v2109 = vsel %vm2107, %v2102, %v2108
        %vm2110 = vcmp.eq.s32.totalorder %v2105, 2
        %v2111 = vxor.u32 %v2102, 2147483648
        %v2112 = vsel %vm2110, %v2111, %v2103
        %v2113 = vsel %vm2106, %v2109, %v2112
        %v2114 = vsel %vm2104, nan, %v2113
        %2115 = vst [vmem:[#allocation2 + $0x60] sm:$0xff] %v1393
        %2116 = vst [vmem:[#allocation2 + $0x68] sm:$0xff] %v1496
        %2117 = vst [vmem:[#allocation2 + $0x70] sm:$0xff] %v1599
        %2118 = vst [vmem:[#allocation2 + $0x78] sm:$0xff] %v1702
        %2119 = vst [vmem:[#allocation2 + $0x80] sm:$0xff] %v1805
        %2120 = vst [vmem:[#allocation2 + $0x88] sm:$0xff] %v1908
        %2121 = vst [vmem:[#allocation2 + $0x90] sm:$0xff] %v2011
        %2122 = vst [vmem:[#allocation2 + $0x98] sm:$0xff] %v2114
        %v2123 = vld [vmem:[#allocation2] sm:$0xff]
        %v2124 = vld [vmem:[#allocation2 + $0x8] sm:$0xff]
        %v2125 = vld [vmem:[#allocation2 + $0x10] sm:$0xff]
        %v2126 = vld [vmem:[#allocation2 + $0x18] sm:$0xff]
        %v2127 = vld [vmem:[#allocation2 + $0x20] sm:$0xff]
        %v2128 = vld [vmem:[#allocation2 + $0x28] sm:$0xff]
        %v2129 = vld [vmem:[#allocation2 + $0x30] sm:$0xff]
        %v2130 = vld [vmem:[#allocation2 + $0x38] sm:$0xff]
        %v2131 = vld [vmem:[#allocation2 + $0x40] sm:$0xff]
        %v2132 = vld [vmem:[#allocation2 + $0x48] sm:$0xff]
        %v2133 = vld [vmem:[#allocation2 + $0x50] sm:$0xff]
        %v2134 = vld [vmem:[#allocation2 + $0x58] sm:$0xff]
        %v2135 = vld [vmem:[#allocation2 + $0x60] sm:$0xff]
        %v2136 = vld [vmem:[#allocation2 + $0x68] sm:$0xff]
        %v2137 = vld [vmem:[#allocation2 + $0x70] sm:$0xff]
        %v2138 = vld [vmem:[#allocation2 + $0x78] sm:$0xff]
        %v2139 = vld [vmem:[#allocation2 + $0x80] sm:$0xff]
        %v2140 = vld [vmem:[#allocation2 + $0x88] sm:$0xff]
        %v2141 = vld [vmem:[#allocation2 + $0x90] sm:$0xff]
        %v2142 = vld [vmem:[#allocation2 + $0x98] sm:$0xff]
        %v2143 = vld [vmem:[%s2] sm:$0xff]
        %v2144 = vld [vmem:[%s2 + $0x8] sm:$0xff]
        %v2145 = vld [vmem:[%s2 + $0x10] sm:$0xff]
        %v2146 = vld [vmem:[%s2 + $0x18] sm:$0xff]
        %s2147 = scalar_lea.vmem %s2, 32
        %v2148 = vld [vmem:[%s2147] sm:$0xff]
        %v2149 = vld [vmem:[%s2147 + $0x8] sm:$0xff]
        %v2150 = vld [vmem:[%s2147 + $0x10] sm:$0xff]
        %v2151 = vld [vmem:[%s2147 + $0x18] sm:$0xff]
        %vm2152 = vcmask 326656
        %v2154 = vsel %vm2152, %v2148, 0
        %v2157 = vsel %vm2152, %v2149, 0
        %v2160 = vsel %vm2152, %v2150, 0
        %v2163 = vsel %vm2152, %v2151, 0
        %2165 = vmatprep.subr.mxu0 %v2124
        %2166 = vmatpush1.msra.mxu0 %v2123
        %2167 = vmatprep.subr.mxu0 %v2128
        %2168 = vmatpush1.msra.mxu0 %v2127
        %2169 = vmatprep.subr.mxu0 %v2132
        %2170 = vmatpush1.msra.mxu0 %v2131
        %2171 = vmatprep.subr.mxu0 %v2136
        %2172 = vmatpush1.msra.mxu0 %v2135
        %2173 = vmatprep.subr.mxu0 %v2140
        %2174 = vmatpush1.msra.mxu0 %v2139
        %2175 = vmatprep.subr.mxu0 0.0
        %2176 = vmatpush1.msra.mxu0 0.0
        %2177 = vmatprep.subr.mxu0 0.0
        %2178 = vmatpush1.msra.mxu0 0.0
        %2179 = vmatprep.subr.mxu0 0.0
        %2180 = vmatpush1.msra.mxu0 0.0
        %2181 = vmatprep.subr.mxu0 0.0
        %2182 = vmatpush1.msra.mxu0 0.0
        %2183 = vmatprep.subr.mxu0 0.0
        %2184 = vmatpush1.msra.mxu0 0.0
        %2185 = vmatprep.subr.mxu0 0.0
        %2186 = vmatpush1.msra.mxu0 0.0
        %2187 = vmatprep.subr.mxu0 0.0
        %2188 = vmatpush1.msra.mxu0 0.0
        %2189 = vmatprep.subr.mxu0 0.0
        %2190 = vmatpush1.msra.mxu0 0.0
        %2191 = vmatprep.subr.mxu0 0.0
        %2192 = vmatpush1.msra.mxu0 0.0
        %2193 = vmatprep.subr.mxu0 0.0
        %2194 = vmatpush1.msra.mxu0 0.0
        %2195 = vmatprep.subr.mxu0 0.0
        %2196 = vmatpush1.msra.mxu0 0.0
        %2197 = vmatprep.subr.mxu0 0.0
        %2198 = vmatpush1.msra.mxu0 0.0
        %2199 = vmatprep.subr.mxu0 0.0
        %2200 = vmatpush1.msra.mxu0 0.0
        %2201 = vmatprep.subr.mxu0 0.0
        %2202 = vmatpush1.msra.mxu0 0.0
        %2203 = vmatprep.subr.mxu0 0.0
        %2204 = vmatpush1.msra.mxu0 0.0
        %2205 = vmatprep.subr.mxu0 0.0
        %2206 = vmatpush1.msra.mxu0 0.0
        %2207 = vmatprep.subr.mxu0 0.0
        %2208 = vmatpush1.msra.mxu0 0.0
        %2209 = vmatprep.subr.mxu0 0.0
        %2210 = vmatpush1.msra.mxu0 0.0
        %2211 = vmatprep.subr.mxu0 0.0
        %2212 = vmatpush1.msra.mxu0 0.0
        %2213 = vmatprep.subr.mxu0 0.0
        %2214 = vmatpush1.msra.mxu0 0.0
        %2215 = vmatprep.subr.mxu0 0.0
        %2216 = vmatpush1.msra.mxu0 0.0
        %2217 = vmatprep.subr.mxu0 0.0
        %2218 = vmatpush1.msra.mxu0 0.0
        %2219 = vmatprep.subr.mxu0 0.0
        %2220 = vmatpush1.msra.mxu0 0.0
        %2221 = vmatprep.subr.mxu0 0.0
        %2222 = vmatpush1.msra.mxu0 0.0
        %2223 = vmatprep.subr.mxu0 0.0
        %2224 = vmatpush1.msra.mxu0 0.0
        %2225 = vmatprep.subr.mxu0 0.0
        %2226 = vmatpush1.msra.mxu0 0.0
        %2227 = vmatprep.subr.mxu0 0.0
        %2228 = vmatpush1.msra.mxu0 0.0
        %2229 = vmatprep.mubr.f32.mxu0 0.0
        %2230 = vmatmul.mubr.f32.gmra.mrb[0].mxu0 %v2154
        %v2231 = vpop.f32.mrb[0].mxu0
        %v2232 = vadd.f32 0.0, %v2231
        %v2233 = vpop.f32.mrb[0].mxu0
        %v2234 = vadd.f32 0.0, %v2233
        %2235 = vmatprep.mubr.f32.mxu0 0.0
        %2236 = vmatmul.mubr.f32.gmra.mrb[0].mxu0 %v2157
        %v2237 = vpop.f32.mrb[0].mxu0
        %v2238 = vadd.f32 0.0, %v2237
        %v2239 = vpop.f32.mrb[0].mxu0
        %v2240 = vadd.f32 0.0, %v2239
        %2241 = vmatprep.mubr.f32.mxu0 0.0
        %2242 = vmatmul.mubr.f32.gmra.mrb[0].mxu0 %v2160
        %v2243 = vpop.f32.mrb[0].mxu0
        %v2244 = vadd.f32 0.0, %v2243
        %v2245 = vpop.f32.mrb[0].mxu0
        %v2246 = vadd.f32 0.0, %v2245
        %2247 = vmatprep.mubr.f32.mxu0 0.0
        %2248 = vmatmul.mubr.f32.gmra.mrb[0].mxu0 %v2163
        %v2249 = vpop.f32.mrb[0].mxu0
        %v2250 = vadd.f32 0.0, %v2249
        %v2251 = vpop.f32.mrb[0].mxu0
        %v2252 = vadd.f32 0.0, %v2251
        %2253 = vdwg.mxu0
        %2254 = vmatprep.subr.mxu0 %v2126
        %2255 = vmatpush1.msra.mxu0 %v2125
        %2256 = vmatprep.subr.mxu0 %v2130
        %2257 = vmatpush1.msra.mxu0 %v2129
        %2258 = vmatprep.subr.mxu0 %v2134
        %2259 = vmatpush1.msra.mxu0 %v2133
        %2260 = vmatprep.subr.mxu0 %v2138
        %2261 = vmatpush1.msra.mxu0 %v2137
        %2262 = vmatprep.subr.mxu0 %v2142
        %2263 = vmatpush1.msra.mxu0 %v2141
        %2264 = vmatprep.subr.mxu0 0.0
        %2265 = vmatpush1.msra.mxu0 0.0
        %2266 = vmatprep.subr.mxu0 0.0
        %2267 = vmatpush1.msra.mxu0 0.0
        %2268 = vmatprep.subr.mxu0 0.0
        %2269 = vmatpush1.msra.mxu0 0.0
        %2270 = vmatprep.subr.mxu0 0.0
        %2271 = vmatpush1.msra.mxu0 0.0
        %2272 = vmatprep.subr.mxu0 0.0
        %2273 = vmatpush1.msra.mxu0 0.0
        %2274 = vmatprep.subr.mxu0 0.0
        %2275 = vmatpush1.msra.mxu0 0.0
        %2276 = vmatprep.subr.mxu0 0.0
        %2277 = vmatpush1.msra.mxu0 0.0
        %2278 = vmatprep.subr.mxu0 0.0
        %2279 = vmatpush1.msra.mxu0 0.0
        %2280 = vmatprep.subr.mxu0 0.0
        %2281 = vmatpush1.msra.mxu0 0.0
        %2282 = vmatprep.subr.mxu0 0.0
        %2283 = vmatpush1.msra.mxu0 0.0
        %2284 = vmatprep.subr.mxu0 0.0
        %2285 = vmatpush1.msra.mxu0 0.0
        %2286 = vmatprep.subr.mxu0 0.0
        %2287 = vmatpush1.msra.mxu0 0.0
        %2288 = vmatprep.subr.mxu0 0.0
        %2289 = vmatpush1.msra.mxu0 0.0
        %2290 = vmatprep.subr.mxu0 0.0
        %2291 = vmatpush1.msra.mxu0 0.0
        %2292 = vmatprep.subr.mxu0 0.0
        %2293 = vmatpush1.msra.mxu0 0.0
        %2294 = vmatprep.subr.mxu0 0.0
        %2295 = vmatpush1.msra.mxu0 0.0
        %2296 = vmatprep.subr.mxu0 0.0
        %2297 = vmatpush1.msra.mxu0 0.0
        %2298 = vmatprep.subr.mxu0 0.0
        %2299 = vmatpush1.msra.mxu0 0.0
        %2300 = vmatprep.subr.mxu0 0.0
        %2301 = vmatpush1.msra.mxu0 0.0
        %2302 = vmatprep.subr.mxu0 0.0
        %2303 = vmatpush1.msra.mxu0 0.0
        %2304 = vmatprep.subr.mxu0 0.0
        %2305 = vmatpush1.msra.mxu0 0.0
        %2306 = vmatprep.subr.mxu0 0.0
        %2307 = vmatpush1.msra.mxu0 0.0
        %2308 = vmatprep.subr.mxu0 0.0
        %2309 = vmatpush1.msra.mxu0 0.0
        %2310 = vmatprep.subr.mxu0 0.0
        %2311 = vmatpush1.msra.mxu0 0.0
        %2312 = vmatprep.subr.mxu0 0.0
        %2313 = vmatpush1.msra.mxu0 0.0
        %2314 = vmatprep.subr.mxu0 0.0
        %2315 = vmatpush1.msra.mxu0 0.0
        %2316 = vmatprep.subr.mxu0 0.0
        %2317 = vmatpush1.msra.mxu0 0.0
        %2318 = vmatprep.mubr.f32.mxu0 0.0
        %2319 = vmatmul.mubr.f32.gmra.mrb[0].mxu0 %v2154
        %v2320 = vpop.f32.mrb[0].mxu0
        %v2321 = vadd.f32 0.0, %v2320
        %v2322 = vpop.f32.mrb[0].mxu0
        %v2323 = vadd.f32 0.0, %v2322
        %2324 = vmatprep.mubr.f32.mxu0 0.0
        %2325 = vmatmul.mubr.f32.gmra.mrb[0].mxu0 %v2157
        %v2326 = vpop.f32.mrb[0].mxu0
        %v2327 = vadd.f32 0.0, %v2326
        %v2328 = vpop.f32.mrb[0].mxu0
        %v2329 = vadd.f32 0.0, %v2328
        %2330 = vmatprep.mubr.f32.mxu0 0.0
        %2331 = vmatmul.mubr.f32.gmra.mrb[0].mxu0 %v2160
        %v2332 = vpop.f32.mrb[0].mxu0
        %v2333 = vadd.f32 0.0, %v2332
        %v2334 = vpop.f32.mrb[0].mxu0
        %v2335 = vadd.f32 0.0, %v2334
        %2336 = vmatprep.mubr.f32.mxu0 0.0
        %2337 = vmatmul.mubr.f32.gmra.mrb[0].mxu0 %v2163
        %v2338 = vpop.f32.mrb[0].mxu0
        %v2339 = vadd.f32 0.0, %v2338
        %v2340 = vpop.f32.mrb[0].mxu0
        %v2341 = vadd.f32 0.0, %v2340
        %2342 = vdwg.mxu0
        %v2343 = vld [vmem:[%s4] sm:$0xff]
        %v2344 = vld [vmem:[%s4 + $0x8] sm:$0xff]
        %v2345 = vld [vmem:[%s4 + $0x10] sm:$0xff]
        %v2346 = vld [vmem:[%s4 + $0x18] sm:$0xff]
        %2348 = vset.pattern.permute.xlu0 0
        %2349 = vperm.xlu0 %2348, %v2343
        %v2350 = vpop.permute.xlu0 %2349
        %2353 = vset.pattern.permute.xlu0 0
        %2354 = vperm.xlu0 %2353, %v2344
        %v2355 = vpop.permute.xlu0 %2354
        %2358 = vset.pattern.permute.xlu0 0
        %2359 = vperm.xlu0 %2358, %v2345
        %v2360 = vpop.permute.xlu0 %2359
        %2363 = vset.pattern.permute.xlu0 0
        %2364 = vperm.xlu0 %2363, %v2346
        %v2365 = vpop.permute.xlu0 %2364
        %v2368 = vsel %vm2152, %v2143, 0
        %v2371 = vsel %vm2152, %v2144, 0
        %v2374 = vsel %vm2152, %v2145, 0
        %v2377 = vsel %vm2152, %v2146, 0
        %2379 = vmatprep.subr.mxu0 %v2124
        %2380 = vmatpush1.msra.mxu0 %v2123
        %2381 = vmatprep.subr.mxu0 %v2128
        %2382 = vmatpush1.msra.mxu0 %v2127
        %2383 = vmatprep.subr.mxu0 %v2132
        %2384 = vmatpush1.msra.mxu0 %v2131
        %2385 = vmatprep.subr.mxu0 %v2136
        %2386 = vmatpush1.msra.mxu0 %v2135
        %2387 = vmatprep.subr.mxu0 %v2140
        %2388 = vmatpush1.msra.mxu0 %v2139
        %2389 = vmatprep.subr.mxu0 0.0
        %2390 = vmatpush1.msra.mxu0 0.0
        %2391 = vmatprep.subr.mxu0 0.0
        %2392 = vmatpush1.msra.mxu0 0.0
        %2393 = vmatprep.subr.mxu0 0.0
        %2394 = vmatpush1.msra.mxu0 0.0
        %2395 = vmatprep.subr.mxu0 0.0
        %2396 = vmatpush1.msra.mxu0 0.0
        %2397 = vmatprep.subr.mxu0 0.0
        %2398 = vmatpush1.msra.mxu0 0.0
        %2399 = vmatprep.subr.mxu0 0.0
        %2400 = vmatpush1.msra.mxu0 0.0
        %2401 = vmatprep.subr.mxu0 0.0
        %2402 = vmatpush1.msra.mxu0 0.0
        %2403 = vmatprep.subr.mxu0 0.0
        %2404 = vmatpush1.msra.mxu0 0.0
        %2405 = vmatprep.subr.mxu0 0.0
        %2406 = vmatpush1.msra.mxu0 0.0
        %2407 = vmatprep.subr.mxu0 0.0
        %2408 = vmatpush1.msra.mxu0 0.0
        %2409 = vmatprep.subr.mxu0 0.0
        %2410 = vmatpush1.msra.mxu0 0.0
        %2411 = vmatprep.subr.mxu0 0.0
        %2412 = vmatpush1.msra.mxu0 0.0
        %2413 = vmatprep.subr.mxu0 0.0
        %2414 = vmatpush1.msra.mxu0 0.0
        %2415 = vmatprep.subr.mxu0 0.0
        %2416 = vmatpush1.msra.mxu0 0.0
        %2417 = vmatprep.subr.mxu0 0.0
        %2418 = vmatpush1.msra.mxu0 0.0
        %2419 = vmatprep.subr.mxu0 0.0
        %2420 = vmatpush1.msra.mxu0 0.0
        %2421 = vmatprep.subr.mxu0 0.0
        %2422 = vmatpush1.msra.mxu0 0.0
        %2423 = vmatprep.subr.mxu0 0.0
        %2424 = vmatpush1.msra.mxu0 0.0
        %2425 = vmatprep.subr.mxu0 0.0
        %2426 = vmatpush1.msra.mxu0 0.0
        %2427 = vmatprep.subr.mxu0 0.0
        %2428 = vmatpush1.msra.mxu0 0.0
        %2429 = vmatprep.subr.mxu0 0.0
        %2430 = vmatpush1.msra.mxu0 0.0
        %2431 = vmatprep.subr.mxu0 0.0
        %2432 = vmatpush1.msra.mxu0 0.0
        %2433 = vmatprep.subr.mxu0 0.0
        %2434 = vmatpush1.msra.mxu0 0.0
        %2435 = vmatprep.subr.mxu0 0.0
        %2436 = vmatpush1.msra.mxu0 0.0
        %2437 = vmatprep.subr.mxu0 0.0
        %2438 = vmatpush1.msra.mxu0 0.0
        %2439 = vmatprep.subr.mxu0 0.0
        %2440 = vmatpush1.msra.mxu0 0.0
        %2441 = vmatprep.subr.mxu0 0.0
        %2442 = vmatpush1.msra.mxu0 0.0
        %2443 = vmatprep.mubr.f32.mxu0 0.0
        %2444 = vmatmul.mubr.f32.gmra.mrb[0].mxu0 %v2368
        %v2445 = vpop.f32.mrb[0].mxu0
        %v2446 = vadd.f32 %v2350, %v2445
        %v2447 = vpop.f32.mrb[0].mxu0
        %v2448 = vadd.f32 %v2350, %v2447
        %2449 = vmatprep.mubr.f32.mxu0 0.0
        %2450 = vmatmul.mubr.f32.gmra.mrb[0].mxu0 %v2371
        %v2451 = vpop.f32.mrb[0].mxu0
        %v2452 = vadd.f32 %v2355, %v2451
        %v2453 = vpop.f32.mrb[0].mxu0
        %v2454 = vadd.f32 %v2355, %v2453
        %2455 = vmatprep.mubr.f32.mxu0 0.0
        %2456 = vmatmul.mubr.f32.gmra.mrb[0].mxu0 %v2374
        %v2457 = vpop.f32.mrb[0].mxu0
        %v2458 = vadd.f32 %v2360, %v2457
        %v2459 = vpop.f32.mrb[0].mxu0
        %v2460 = vadd.f32 %v2360, %v2459
        %2461 = vmatprep.mubr.f32.mxu0 0.0
        %2462 = vmatmul.mubr.f32.gmra.mrb[0].mxu0 %v2377
        %v2463 = vpop.f32.mrb[0].mxu0
        %v2464 = vadd.f32 %v2365, %v2463
        %v2465 = vpop.f32.mrb[0].mxu0
        %v2466 = vadd.f32 %v2365, %v2465
        %2467 = vdwg.mxu0
        %2468 = vmatprep.subr.mxu0 %v2126
        %2469 = vmatpush1.msra.mxu0 %v2125
        %2470 = vmatprep.subr.mxu0 %v2130
        %2471 = vmatpush1.msra.mxu0 %v2129
        %2472 = vmatprep.subr.mxu0 %v2134
        %2473 = vmatpush1.msra.mxu0 %v2133
        %2474 = vmatprep.subr.mxu0 %v2138
        %2475 = vmatpush1.msra.mxu0 %v2137
        %2476 = vmatprep.subr.mxu0 %v2142
        %2477 = vmatpush1.msra.mxu0 %v2141
        %2478 = vmatprep.subr.mxu0 0.0
        %2479 = vmatpush1.msra.mxu0 0.0
        %2480 = vmatprep.subr.mxu0 0.0
        %2481 = vmatpush1.msra.mxu0 0.0
        %2482 = vmatprep.subr.mxu0 0.0
        %2483 = vmatpush1.msra.mxu0 0.0
        %2484 = vmatprep.subr.mxu0 0.0
        %2485 = vmatpush1.msra.mxu0 0.0
        %2486 = vmatprep.subr.mxu0 0.0
        %2487 = vmatpush1.msra.mxu0 0.0
        %2488 = vmatprep.subr.mxu0 0.0
        %2489 = vmatpush1.msra.mxu0 0.0
        %2490 = vmatprep.subr.mxu0 0.0
        %2491 = vmatpush1.msra.mxu0 0.0
        %2492 = vmatprep.subr.mxu0 0.0
        %2493 = vmatpush1.msra.mxu0 0.0
        %2494 = vmatprep.subr.mxu0 0.0
        %2495 = vmatpush1.msra.mxu0 0.0
        %2496 = vmatprep.subr.mxu0 0.0
        %2497 = vmatpush1.msra.mxu0 0.0
        %2498 = vmatprep.subr.mxu0 0.0
        %2499 = vmatpush1.msra.mxu0 0.0
        %2500 = vmatprep.subr.mxu0 0.0
        %2501 = vmatpush1.msra.mxu0 0.0
        %2502 = vmatprep.subr.mxu0 0.0
        %2503 = vmatpush1.msra.mxu0 0.0
        %2504 = vmatprep.subr.mxu0 0.0
        %2505 = vmatpush1.msra.mxu0 0.0
        %2506 = vmatprep.subr.mxu0 0.0
        %2507 = vmatpush1.msra.mxu0 0.0
        %2508 = vmatprep.subr.mxu0 0.0
        %2509 = vmatpush1.msra.mxu0 0.0
        %2510 = vmatprep.subr.mxu0 0.0
        %2511 = vmatpush1.msra.mxu0 0.0
        %2512 = vmatprep.subr.mxu0 0.0
        %2513 = vmatpush1.msra.mxu0 0.0
        %2514 = vmatprep.subr.mxu0 0.0
        %2515 = vmatpush1.msra.mxu0 0.0
        %2516 = vmatprep.subr.mxu0 0.0
        %2517 = vmatpush1.msra.mxu0 0.0
        %2518 = vmatprep.subr.mxu0 0.0
        %2519 = vmatpush1.msra.mxu0 0.0
        %2520 = vmatprep.subr.mxu0 0.0
        %2521 = vmatpush1.msra.mxu0 0.0
        %2522 = vmatprep.subr.mxu0 0.0
        %2523 = vmatpush1.msra.mxu0 0.0
        %2524 = vmatprep.subr.mxu0 0.0
        %2525 = vmatpush1.msra.mxu0 0.0
        %2526 = vmatprep.subr.mxu0 0.0
        %2527 = vmatpush1.msra.mxu0 0.0
        %2528 = vmatprep.subr.mxu0 0.0
        %2529 = vmatpush1.msra.mxu0 0.0
        %2530 = vmatprep.subr.mxu0 0.0
        %2531 = vmatpush1.msra.mxu0 0.0
        %2532 = vmatprep.mubr.f32.mxu0 0.0
        %2533 = vmatmul.mubr.f32.gmra.mrb[0].mxu0 %v2368
        %v2534 = vpop.f32.mrb[0].mxu0
        %v2535 = vadd.f32 %v2350, %v2534
        %v2536 = vpop.f32.mrb[0].mxu0
        %v2537 = vadd.f32 %v2350, %v2536
        %2538 = vmatprep.mubr.f32.mxu0 0.0
        %2539 = vmatmul.mubr.f32.gmra.mrb[0].mxu0 %v2371
        %v2540 = vpop.f32.mrb[0].mxu0
        %v2541 = vadd.f32 %v2355, %v2540
        %v2542 = vpop.f32.mrb[0].mxu0
        %v2543 = vadd.f32 %v2355, %v2542
        %2544 = vmatprep.mubr.f32.mxu0 0.0
        %2545 = vmatmul.mubr.f32.gmra.mrb[0].mxu0 %v2374
        %v2546 = vpop.f32.mrb[0].mxu0
        %v2547 = vadd.f32 %v2360, %v2546
        %v2548 = vpop.f32.mrb[0].mxu0
        %v2549 = vadd.f32 %v2360, %v2548
        %2550 = vmatprep.mubr.f32.mxu0 0.0
        %2551 = vmatmul.mubr.f32.gmra.mrb[0].mxu0 %v2377
        %v2552 = vpop.f32.mrb[0].mxu0
        %v2553 = vadd.f32 %v2365, %v2552
        %v2554 = vpop.f32.mrb[0].mxu0
        %v2555 = vadd.f32 %v2365, %v2554
        %2556 = vdwg.mxu0
        %v2557 = vmax.f32 %v2446, 0.0
        %v2558 = vmax.f32 %v2448, 0.0
        %v2559 = vmax.f32 %v2535, 0.0
        %v2560 = vmax.f32 %v2537, 0.0
        %v2561 = vmax.f32 %v2452, 0.0
        %v2562 = vmax.f32 %v2454, 0.0
        %v2563 = vmax.f32 %v2541, 0.0
        %v2564 = vmax.f32 %v2543, 0.0
        %v2565 = vmax.f32 %v2458, 0.0
        %v2566 = vmax.f32 %v2460, 0.0
        %v2567 = vmax.f32 %v2547, 0.0
        %v2568 = vmax.f32 %v2549, 0.0
        %v2569 = vmax.f32 %v2464, 0.0
        %v2570 = vmax.f32 %v2466, 0.0
        %v2571 = vmax.f32 %v2553, 0.0
        %v2572 = vmax.f32 %v2555, 0.0
        %v2573 = vld [vmem:[%s3] sm:$0xff]
        %v2574 = vld [vmem:[%s3 + $0x8] sm:$0xff]
        %v2575 = vld [vmem:[%s3 + $0x10] sm:$0xff]
        %v2576 = vld [vmem:[%s3 + $0x18] sm:$0xff]
        %2577 = vset.pattern.permute.xlu0 1
        %2578 = vperm.xlu0 %2577, %v2343
        %v2579 = vpop.permute.xlu0 %2578
        %2581 = vset.pattern.permute.xlu0 1
        %2582 = vperm.xlu0 %2581, %v2344
        %v2583 = vpop.permute.xlu0 %2582
        %2585 = vset.pattern.permute.xlu0 1
        %2586 = vperm.xlu0 %2585, %v2345
        %v2587 = vpop.permute.xlu0 %2586
        %2589 = vset.pattern.permute.xlu0 1
        %2590 = vperm.xlu0 %2589, %v2346
        %v2591 = vpop.permute.xlu0 %2590
        %vm2593 = vcmask 261120
        %v2595 = vsel %vm2593, %v2573, 0
        %v2598 = vsel %vm2593, %v2574, 0
        %v2601 = vsel %vm2593, %v2575, 0
        %v2604 = vsel %vm2593, %v2576, 0
        %2606 = vmatprep.subr.mxu0 %v2558
        %2607 = vmatpush1.msra.mxu0 %v2557
        %2608 = vmatprep.subr.mxu0 %v2562
        %2609 = vmatpush1.msra.mxu0 %v2561
        %2610 = vmatprep.subr.mxu0 %v2566
        %2611 = vmatpush1.msra.mxu0 %v2565
        %2612 = vmatprep.subr.mxu0 %v2570
        %2613 = vmatpush1.msra.mxu0 %v2569
        %2614 = vmatprep.subr.mxu0 0.0
        %2615 = vmatpush1.msra.mxu0 0.0
        %2616 = vmatprep.subr.mxu0 0.0
        %2617 = vmatpush1.msra.mxu0 0.0
        %2618 = vmatprep.subr.mxu0 0.0
        %2619 = vmatpush1.msra.mxu0 0.0
        %2620 = vmatprep.subr.mxu0 0.0
        %2621 = vmatpush1.msra.mxu0 0.0
        %2622 = vmatprep.subr.mxu0 0.0
        %2623 = vmatpush1.msra.mxu0 0.0
        %2624 = vmatprep.subr.mxu0 0.0
        %2625 = vmatpush1.msra.mxu0 0.0
        %2626 = vmatprep.subr.mxu0 0.0
        %2627 = vmatpush1.msra.mxu0 0.0
        %2628 = vmatprep.subr.mxu0 0.0
        %2629 = vmatpush1.msra.mxu0 0.0
        %2630 = vmatprep.subr.mxu0 0.0
        %2631 = vmatpush1.msra.mxu0 0.0
        %2632 = vmatprep.subr.mxu0 0.0
        %2633 = vmatpush1.msra.mxu0 0.0
        %2634 = vmatprep.subr.mxu0 0.0
        %2635 = vmatpush1.msra.mxu0 0.0
        %2636 = vmatprep.subr.mxu0 0.0
        %2637 = vmatpush1.msra.mxu0 0.0
        %2638 = vmatprep.subr.mxu0 0.0
        %2639 = vmatpush1.msra.mxu0 0.0
        %2640 = vmatprep.subr.mxu0 0.0
        %2641 = vmatpush1.msra.mxu0 0.0
        %2642 = vmatprep.subr.mxu0 0.0
        %2643 = vmatpush1.msra.mxu0 0.0
        %2644 = vmatprep.subr.mxu0 0.0
        %2645 = vmatpush1.msra.mxu0 0.0
        %2646 = vmatprep.subr.mxu0 0.0
        %2647 = vmatpush1.msra.mxu0 0.0
        %2648 = vmatprep.subr.mxu0 0.0
        %2649 = vmatpush1.msra.mxu0 0.0
        %2650 = vmatprep.subr.mxu0 0.0
        %2651 = vmatpush1.msra.mxu0 0.0
        %2652 = vmatprep.subr.mxu0 0.0
        %2653 = vmatpush1.msra.mxu0 0.0
        %2654 = vmatprep.subr.mxu0 0.0
        %2655 = vmatpush1.msra.mxu0 0.0
        %2656 = vmatprep.subr.mxu0 0.0
        %2657 = vmatpush1.msra.mxu0 0.0
        %2658 = vmatprep.subr.mxu0 0.0
        %2659 = vmatpush1.msra.mxu0 0.0
        %2660 = vmatprep.subr.mxu0 0.0
        %2661 = vmatpush1.msra.mxu0 0.0
        %2662 = vmatprep.subr.mxu0 0.0
        %2663 = vmatpush1.msra.mxu0 0.0
        %2664 = vmatprep.subr.mxu0 0.0
        %2665 = vmatpush1.msra.mxu0 0.0
        %2666 = vmatprep.subr.mxu0 0.0
        %2667 = vmatpush1.msra.mxu0 0.0
        %2668 = vmatprep.subr.mxu0 0.0
        %2669 = vmatpush1.msra.mxu0 0.0
        %2670 = vmatprep.mubr.f32.mxu0 0.0
        %2671 = vmatmul.mubr.f32.gmra.mrb[0].mxu0 %v2595
        %v2672 = vpop.f32.mrb[0].mxu0
        %v2673 = vadd.f32 %v2579, %v2672
        %v2674 = vpop.f32.mrb[0].mxu0
        %v2675 = vadd.f32 %v2579, %v2674
        %2676 = vmatprep.mubr.f32.mxu0 0.0
        %2677 = vmatmul.mubr.f32.gmra.mrb[0].mxu0 %v2598
        %v2678 = vpop.f32.mrb[0].mxu0
        %v2679 = vadd.f32 %v2583, %v2678
        %v2680 = vpop.f32.mrb[0].mxu0
        %v2681 = vadd.f32 %v2583, %v2680
        %2682 = vmatprep.mubr.f32.mxu0 0.0
        %2683 = vmatmul.mubr.f32.gmra.mrb[0].mxu0 %v2601
        %v2684 = vpop.f32.mrb[0].mxu0
        %v2685 = vadd.f32 %v2587, %v2684
        %v2686 = vpop.f32.mrb[0].mxu0
        %v2687 = vadd.f32 %v2587, %v2686
        %2688 = vmatprep.mubr.f32.mxu0 0.0
        %2689 = vmatmul.mubr.f32.gmra.mrb[0].mxu0 %v2604
        %v2690 = vpop.f32.mrb[0].mxu0
        %v2691 = vadd.f32 %v2591, %v2690
        %v2692 = vpop.f32.mrb[0].mxu0
        %v2693 = vadd.f32 %v2591, %v2692
        %2694 = vdwg.mxu0
        %2695 = vmatprep.subr.mxu0 %v2560
        %2696 = vmatpush1.msra.mxu0 %v2559
        %2697 = vmatprep.subr.mxu0 %v2564
        %2698 = vmatpush1.msra.mxu0 %v2563
        %2699 = vmatprep.subr.mxu0 %v2568
        %2700 = vmatpush1.msra.mxu0 %v2567
        %2701 = vmatprep.subr.mxu0 %v2572
        %2702 = vmatpush1.msra.mxu0 %v2571
        %2703 = vmatprep.subr.mxu0 0.0
        %2704 = vmatpush1.msra.mxu0 0.0
        %2705 = vmatprep.subr.mxu0 0.0
        %2706 = vmatpush1.msra.mxu0 0.0
        %2707 = vmatprep.subr.mxu0 0.0
        %2708 = vmatpush1.msra.mxu0 0.0
        %2709 = vmatprep.subr.mxu0 0.0
        %2710 = vmatpush1.msra.mxu0 0.0
        %2711 = vmatprep.subr.mxu0 0.0
        %2712 = vmatpush1.msra.mxu0 0.0
        %2713 = vmatprep.subr.mxu0 0.0
        %2714 = vmatpush1.msra.mxu0 0.0
        %2715 = vmatprep.subr.mxu0 0.0
        %2716 = vmatpush1.msra.mxu0 0.0
        %2717 = vmatprep.subr.mxu0 0.0
        %2718 = vmatpush1.msra.mxu0 0.0
        %2719 = vmatprep.subr.mxu0 0.0
        %2720 = vmatpush1.msra.mxu0 0.0
        %2721 = vmatprep.subr.mxu0 0.0
        %2722 = vmatpush1.msra.mxu0 0.0
        %2723 = vmatprep.subr.mxu0 0.0
        %2724 = vmatpush1.msra.mxu0 0.0
        %2725 = vmatprep.subr.mxu0 0.0
        %2726 = vmatpush1.msra.mxu0 0.0
        %2727 = vmatprep.subr.mxu0 0.0
        %2728 = vmatpush1.msra.mxu0 0.0
        %2729 = vmatprep.subr.mxu0 0.0
        %2730 = vmatpush1.msra.mxu0 0.0
        %2731 = vmatprep.subr.mxu0 0.0
        %2732 = vmatpush1.msra.mxu0 0.0
        %2733 = vmatprep.subr.mxu0 0.0
        %2734 = vmatpush1.msra.mxu0 0.0
        %2735 = vmatprep.subr.mxu0 0.0
        %2736 = vmatpush1.msra.mxu0 0.0
        %2737 = vmatprep.subr.mxu0 0.0
        %2738 = vmatpush1.msra.mxu0 0.0
        %2739 = vmatprep.subr.mxu0 0.0
        %2740 = vmatpush1.msra.mxu0 0.0
        %2741 = vmatprep.subr.mxu0 0.0
        %2742 = vmatpush1.msra.mxu0 0.0
        %2743 = vmatprep.subr.mxu0 0.0
        %2744 = vmatpush1.msra.mxu0 0.0
        %2745 = vmatprep.subr.mxu0 0.0
        %2746 = vmatpush1.msra.mxu0 0.0
        %2747 = vmatprep.subr.mxu0 0.0
        %2748 = vmatpush1.msra.mxu0 0.0
        %2749 = vmatprep.subr.mxu0 0.0
        %2750 = vmatpush1.msra.mxu0 0.0
        %2751 = vmatprep.subr.mxu0 0.0
        %2752 = vmatpush1.msra.mxu0 0.0
        %2753 = vmatprep.subr.mxu0 0.0
        %2754 = vmatpush1.msra.mxu0 0.0
        %2755 = vmatprep.subr.mxu0 0.0
        %2756 = vmatpush1.msra.mxu0 0.0
        %2757 = vmatprep.subr.mxu0 0.0
        %2758 = vmatpush1.msra.mxu0 0.0
        %2759 = vmatprep.mubr.f32.mxu0 0.0
        %2760 = vmatmul.mubr.f32.gmra.mrb[0].mxu0 %v2595
        %v2761 = vpop.f32.mrb[0].mxu0
        %v2762 = vadd.f32 %v2579, %v2761
        %v2763 = vpop.f32.mrb[0].mxu0
        %v2764 = vadd.f32 %v2579, %v2763
        %2765 = vmatprep.mubr.f32.mxu0 0.0
        %2766 = vmatmul.mubr.f32.gmra.mrb[0].mxu0 %v2598
        %v2767 = vpop.f32.mrb[0].mxu0
        %v2768 = vadd.f32 %v2583, %v2767
        %v2769 = vpop.f32.mrb[0].mxu0
        %v2770 = vadd.f32 %v2583, %v2769
        %2771 = vmatprep.mubr.f32.mxu0 0.0
        %2772 = vmatmul.mubr.f32.gmra.mrb[0].mxu0 %v2601
        %v2773 = vpop.f32.mrb[0].mxu0
        %v2774 = vadd.f32 %v2587, %v2773
        %v2775 = vpop.f32.mrb[0].mxu0
        %v2776 = vadd.f32 %v2587, %v2775
        %2777 = vmatprep.mubr.f32.mxu0 0.0
        %2778 = vmatmul.mubr.f32.gmra.mrb[0].mxu0 %v2604
        %v2779 = vpop.f32.mrb[0].mxu0
        %v2780 = vadd.f32 %v2591, %v2779
        %v2781 = vpop.f32.mrb[0].mxu0
        %v2782 = vadd.f32 %v2591, %v2781
        %2783 = vdwg.mxu0
        %v2784 = vmax.f32 %v2673, 0.0
        %v2785 = vmax.f32 %v2675, 0.0
        %v2786 = vmax.f32 %v2762, 0.0
        %v2787 = vmax.f32 %v2764, 0.0
        %v2788 = vmax.f32 %v2679, 0.0
        %v2789 = vmax.f32 %v2681, 0.0
        %v2790 = vmax.f32 %v2768, 0.0
        %v2791 = vmax.f32 %v2770, 0.0
        %v2792 = vmax.f32 %v2685, 0.0
        %v2793 = vmax.f32 %v2687, 0.0
        %v2794 = vmax.f32 %v2774, 0.0
        %v2795 = vmax.f32 %v2776, 0.0
        %v2796 = vmax.f32 %v2691, 0.0
        %v2797 = vmax.f32 %v2693, 0.0
        %v2798 = vmax.f32 %v2780, 0.0
        %v2799 = vmax.f32 %v2782, 0.0
        %s2800 = scalar_lea.vmem %s3, 32
        %v2801 = vld [vmem:[%s2800] sm:$0xff]
        %v2802 = vld [vmem:[%s2800 + $0x8] sm:$0xff]
        %v2803 = vld [vmem:[%s2800 + $0x10] sm:$0xff]
        %v2804 = vld [vmem:[%s2800 + $0x18] sm:$0xff]
        %2805 = vset.pattern.permute.xlu0 2
        %2806 = vperm.xlu0 %2805, %v2343
        %v2807 = vpop.permute.xlu0 %2806
        %2809 = vset.pattern.permute.xlu0 2
        %2810 = vperm.xlu0 %2809, %v2344
        %v2811 = vpop.permute.xlu0 %2810
        %2813 = vset.pattern.permute.xlu0 2
        %2814 = vperm.xlu0 %2813, %v2345
        %v2815 = vpop.permute.xlu0 %2814
        %2817 = vset.pattern.permute.xlu0 2
        %2818 = vperm.xlu0 %2817, %v2346
        %v2819 = vpop.permute.xlu0 %2818
        %v2822 = vsel %vm2593, %v2801, 0
        %v2825 = vsel %vm2593, %v2802, 0
        %v2828 = vsel %vm2593, %v2803, 0
        %v2831 = vsel %vm2593, %v2804, 0
        %2833 = vmatprep.subr.mxu0 %v2785
        %2834 = vmatpush1.msra.mxu0 %v2784
        %2835 = vmatprep.subr.mxu0 %v2789
        %2836 = vmatpush1.msra.mxu0 %v2788
        %2837 = vmatprep.subr.mxu0 %v2793
        %2838 = vmatpush1.msra.mxu0 %v2792
        %2839 = vmatprep.subr.mxu0 %v2797
        %2840 = vmatpush1.msra.mxu0 %v2796
        %2841 = vmatprep.subr.mxu0 0.0
        %2842 = vmatpush1.msra.mxu0 0.0
        %2843 = vmatprep.subr.mxu0 0.0
        %2844 = vmatpush1.msra.mxu0 0.0
        %2845 = vmatprep.subr.mxu0 0.0
        %2846 = vmatpush1.msra.mxu0 0.0
        %2847 = vmatprep.subr.mxu0 0.0
        %2848 = vmatpush1.msra.mxu0 0.0
        %2849 = vmatprep.subr.mxu0 0.0
        %2850 = vmatpush1.msra.mxu0 0.0
        %2851 = vmatprep.subr.mxu0 0.0
        %2852 = vmatpush1.msra.mxu0 0.0
        %2853 = vmatprep.subr.mxu0 0.0
        %2854 = vmatpush1.msra.mxu0 0.0
        %2855 = vmatprep.subr.mxu0 0.0
        %2856 = vmatpush1.msra.mxu0 0.0
        %2857 = vmatprep.subr.mxu0 0.0
        %2858 = vmatpush1.msra.mxu0 0.0
        %2859 = vmatprep.subr.mxu0 0.0
        %2860 = vmatpush1.msra.mxu0 0.0
        %2861 = vmatprep.subr.mxu0 0.0
        %2862 = vmatpush1.msra.mxu0 0.0
        %2863 = vmatprep.subr.mxu0 0.0
        %2864 = vmatpush1.msra.mxu0 0.0
        %2865 = vmatprep.subr.mxu0 0.0
        %2866 = vmatpush1.msra.mxu0 0.0
        %2867 = vmatprep.subr.mxu0 0.0
        %2868 = vmatpush1.msra.mxu0 0.0
        %2869 = vmatprep.subr.mxu0 0.0
        %2870 = vmatpush1.msra.mxu0 0.0
        %2871 = vmatprep.subr.mxu0 0.0
        %2872 = vmatpush1.msra.mxu0 0.0
        %2873 = vmatprep.subr.mxu0 0.0
        %2874 = vmatpush1.msra.mxu0 0.0
        %2875 = vmatprep.subr.mxu0 0.0
        %2876 = vmatpush1.msra.mxu0 0.0
        %2877 = vmatprep.subr.mxu0 0.0
        %2878 = vmatpush1.msra.mxu0 0.0
        %2879 = vmatprep.subr.mxu0 0.0
        %2880 = vmatpush1.msra.mxu0 0.0
        %2881 = vmatprep.subr.mxu0 0.0
        %2882 = vmatpush1.msra.mxu0 0.0
        %2883 = vmatprep.subr.mxu0 0.0
        %2884 = vmatpush1.msra.mxu0 0.0
        %2885 = vmatprep.subr.mxu0 0.0
        %2886 = vmatpush1.msra.mxu0 0.0
        %2887 = vmatprep.subr.mxu0 0.0
        %2888 = vmatpush1.msra.mxu0 0.0
        %2889 = vmatprep.subr.mxu0 0.0
        %2890 = vmatpush1.msra.mxu0 0.0
        %2891 = vmatprep.subr.mxu0 0.0
        %2892 = vmatpush1.msra.mxu0 0.0
        %2893 = vmatprep.subr.mxu0 0.0
        %2894 = vmatpush1.msra.mxu0 0.0
        %2895 = vmatprep.subr.mxu0 0.0
        %2896 = vmatpush1.msra.mxu0 0.0
        %2897 = vmatprep.mubr.f32.mxu0 0.0
        %2898 = vmatmul.mubr.f32.gmra.mrb[0].mxu0 %v2822
        %v2899 = vpop.f32.mrb[0].mxu0
        %v2900 = vadd.f32 %v2807, %v2899
        %v2901 = vpop.f32.mrb[0].mxu0
        %v2902 = vadd.f32 %v2807, %v2901
        %2903 = vmatprep.mubr.f32.mxu0 0.0
        %2904 = vmatmul.mubr.f32.gmra.mrb[0].mxu0 %v2825
        %v2905 = vpop.f32.mrb[0].mxu0
        %v2906 = vadd.f32 %v2811, %v2905
        %v2907 = vpop.f32.mrb[0].mxu0
        %v2908 = vadd.f32 %v2811, %v2907
        %2909 = vmatprep.mubr.f32.mxu0 0.0
        %2910 = vmatmul.mubr.f32.gmra.mrb[0].mxu0 %v2828
        %v2911 = vpop.f32.mrb[0].mxu0
        %v2912 = vadd.f32 %v2815, %v2911
        %v2913 = vpop.f32.mrb[0].mxu0
        %v2914 = vadd.f32 %v2815, %v2913
        %2915 = vmatprep.mubr.f32.mxu0 0.0
        %2916 = vmatmul.mubr.f32.gmra.mrb[0].mxu0 %v2831
        %v2917 = vpop.f32.mrb[0].mxu0
        %v2918 = vadd.f32 %v2819, %v2917
        %v2919 = vpop.f32.mrb[0].mxu0
        %v2920 = vadd.f32 %v2819, %v2919
        %2921 = vdwg.mxu0
        %2922 = vmatprep.subr.mxu0 %v2787
        %2923 = vmatpush1.msra.mxu0 %v2786
        %2924 = vmatprep.subr.mxu0 %v2791
        %2925 = vmatpush1.msra.mxu0 %v2790
        %2926 = vmatprep.subr.mxu0 %v2795
        %2927 = vmatpush1.msra.mxu0 %v2794
        %2928 = vmatprep.subr.mxu0 %v2799
        %2929 = vmatpush1.msra.mxu0 %v2798
        %2930 = vmatprep.subr.mxu0 0.0
        %2931 = vmatpush1.msra.mxu0 0.0
        %2932 = vmatprep.subr.mxu0 0.0
        %2933 = vmatpush1.msra.mxu0 0.0
        %2934 = vmatprep.subr.mxu0 0.0
        %2935 = vmatpush1.msra.mxu0 0.0
        %2936 = vmatprep.subr.mxu0 0.0
        %2937 = vmatpush1.msra.mxu0 0.0
        %2938 = vmatprep.subr.mxu0 0.0
        %2939 = vmatpush1.msra.mxu0 0.0
        %2940 = vmatprep.subr.mxu0 0.0
        %2941 = vmatpush1.msra.mxu0 0.0
        %2942 = vmatprep.subr.mxu0 0.0
        %2943 = vmatpush1.msra.mxu0 0.0
        %2944 = vmatprep.subr.mxu0 0.0
        %2945 = vmatpush1.msra.mxu0 0.0
        %2946 = vmatprep.subr.mxu0 0.0
        %2947 = vmatpush1.msra.mxu0 0.0
        %2948 = vmatprep.subr.mxu0 0.0
        %2949 = vmatpush1.msra.mxu0 0.0
        %2950 = vmatprep.subr.mxu0 0.0
        %2951 = vmatpush1.msra.mxu0 0.0
        %2952 = vmatprep.subr.mxu0 0.0
        %2953 = vmatpush1.msra.mxu0 0.0
        %2954 = vmatprep.subr.mxu0 0.0
        %2955 = vmatpush1.msra.mxu0 0.0
        %2956 = vmatprep.subr.mxu0 0.0
        %2957 = vmatpush1.msra.mxu0 0.0
        %2958 = vmatprep.subr.mxu0 0.0
        %2959 = vmatpush1.msra.mxu0 0.0
        %2960 = vmatprep.subr.mxu0 0.0
        %2961 = vmatpush1.msra.mxu0 0.0
        %2962 = vmatprep.subr.mxu0 0.0
        %2963 = vmatpush1.msra.mxu0 0.0
        %2964 = vmatprep.subr.mxu0 0.0
        %2965 = vmatpush1.msra.mxu0 0.0
        %2966 = vmatprep.subr.mxu0 0.0
        %2967 = vmatpush1.msra.mxu0 0.0
        %2968 = vmatprep.subr.mxu0 0.0
        %2969 = vmatpush1.msra.mxu0 0.0
        %2970 = vmatprep.subr.mxu0 0.0
        %2971 = vmatpush1.msra.mxu0 0.0
        %2972 = vmatprep.subr.mxu0 0.0
        %2973 = vmatpush1.msra.mxu0 0.0
        %2974 = vmatprep.subr.mxu0 0.0
        %2975 = vmatpush1.msra.mxu0 0.0
        %2976 = vmatprep.subr.mxu0 0.0
        %2977 = vmatpush1.msra.mxu0 0.0
        %2978 = vmatprep.subr.mxu0 0.0
        %2979 = vmatpush1.msra.mxu0 0.0
        %2980 = vmatprep.subr.mxu0 0.0
        %2981 = vmatpush1.msra.mxu0 0.0
        %2982 = vmatprep.subr.mxu0 0.0
        %2983 = vmatpush1.msra.mxu0 0.0
        %2984 = vmatprep.subr.mxu0 0.0
        %2985 = vmatpush1.msra.mxu0 0.0
        %2986 = vmatprep.mubr.f32.mxu0 0.0
        %2987 = vmatmul.mubr.f32.gmra.mrb[0].mxu0 %v2822
        %v2988 = vpop.f32.mrb[0].mxu0
        %v2989 = vadd.f32 %v2807, %v2988
        %v2990 = vpop.f32.mrb[0].mxu0
        %v2991 = vadd.f32 %v2807, %v2990
        %2992 = vmatprep.mubr.f32.mxu0 0.0
        %2993 = vmatmul.mubr.f32.gmra.mrb[0].mxu0 %v2825
        %v2994 = vpop.f32.mrb[0].mxu0
        %v2995 = vadd.f32 %v2811, %v2994
        %v2996 = vpop.f32.mrb[0].mxu0
        %v2997 = vadd.f32 %v2811, %v2996
        %2998 = vmatprep.mubr.f32.mxu0 0.0
        %2999 = vmatmul.mubr.f32.gmra.mrb[0].mxu0 %v2828
        %v3000 = vpop.f32.mrb[0].mxu0
        %v3001 = vadd.f32 %v2815, %v3000
        %v3002 = vpop.f32.mrb[0].mxu0
        %v3003 = vadd.f32 %v2815, %v3002
        %3004 = vmatprep.mubr.f32.mxu0 0.0
        %3005 = vmatmul.mubr.f32.gmra.mrb[0].mxu0 %v2831
        %v3006 = vpop.f32.mrb[0].mxu0
        %v3007 = vadd.f32 %v2819, %v3006
        %v3008 = vpop.f32.mrb[0].mxu0
        %v3009 = vadd.f32 %v2819, %v3008
        %3010 = vdwg.mxu0
        %v3011 = vmax.f32 %v2900, 0.0
        %v3012 = vmax.f32 %v2902, 0.0
        %v3013 = vmax.f32 %v2989, 0.0
        %v3014 = vmax.f32 %v2991, 0.0
        %v3015 = vmax.f32 %v2906, 0.0
        %v3016 = vmax.f32 %v2908, 0.0
        %v3017 = vmax.f32 %v2995, 0.0
        %v3018 = vmax.f32 %v2997, 0.0
        %v3019 = vmax.f32 %v2912, 0.0
        %v3020 = vmax.f32 %v2914, 0.0
        %v3021 = vmax.f32 %v3001, 0.0
        %v3022 = vmax.f32 %v3003, 0.0
        %v3023 = vmax.f32 %v2918, 0.0
        %v3024 = vmax.f32 %v2920, 0.0
        %v3025 = vmax.f32 %v3007, 0.0
        %v3026 = vmax.f32 %v3009, 0.0
        %s3027 = scalar_lea.vmem %s3, 64
        %v3028 = vld [vmem:[%s3027] sm:$0xff]
        %v3029 = vld [vmem:[%s3027 + $0x8] sm:$0xff]
        %v3030 = vld [vmem:[%s3027 + $0x10] sm:$0xff]
        %v3031 = vld [vmem:[%s3027 + $0x18] sm:$0xff]
        %3032 = vset.pattern.permute.xlu0 3
        %3033 = vperm.xlu0 %3032, %v2343
        %v3034 = vpop.permute.xlu0 %3033
        %3036 = vset.pattern.permute.xlu0 3
        %3037 = vperm.xlu0 %3036, %v2344
        %v3038 = vpop.permute.xlu0 %3037
        %3040 = vset.pattern.permute.xlu0 3
        %3041 = vperm.xlu0 %3040, %v2345
        %v3042 = vpop.permute.xlu0 %3041
        %3044 = vset.pattern.permute.xlu0 3
        %3045 = vperm.xlu0 %3044, %v2346
        %v3046 = vpop.permute.xlu0 %3045
        %v3049 = vsel %vm2593, %v3028, 0
        %v3052 = vsel %vm2593, %v3029, 0
        %v3055 = vsel %vm2593, %v3030, 0
        %v3058 = vsel %vm2593, %v3031, 0
        %3060 = vmatprep.subr.mxu0 %v3012
        %3061 = vmatpush1.msra.mxu0 %v3011
        %3062 = vmatprep.subr.mxu0 %v3016
        %3063 = vmatpush1.msra.mxu0 %v3015
        %3064 = vmatprep.subr.mxu0 %v3020
        %3065 = vmatpush1.msra.mxu0 %v3019
        %3066 = vmatprep.subr.mxu0 %v3024
        %3067 = vmatpush1.msra.mxu0 %v3023
        %3068 = vmatprep.subr.mxu0 0.0
        %3069 = vmatpush1.msra.mxu0 0.0
        %3070 = vmatprep.subr.mxu0 0.0
        %3071 = vmatpush1.msra.mxu0 0.0
        %3072 = vmatprep.subr.mxu0 0.0
        %3073 = vmatpush1.msra.mxu0 0.0
        %3074 = vmatprep.subr.mxu0 0.0
        %3075 = vmatpush1.msra.mxu0 0.0
        %3076 = vmatprep.subr.mxu0 0.0
        %3077 = vmatpush1.msra.mxu0 0.0
        %3078 = vmatprep.subr.mxu0 0.0
        %3079 = vmatpush1.msra.mxu0 0.0
        %3080 = vmatprep.subr.mxu0 0.0
        %3081 = vmatpush1.msra.mxu0 0.0
        %3082 = vmatprep.subr.mxu0 0.0
        %3083 = vmatpush1.msra.mxu0 0.0
        %3084 = vmatprep.subr.mxu0 0.0
        %3085 = vmatpush1.msra.mxu0 0.0
        %3086 = vmatprep.subr.mxu0 0.0
        %3087 = vmatpush1.msra.mxu0 0.0
        %3088 = vmatprep.subr.mxu0 0.0
        %3089 = vmatpush1.msra.mxu0 0.0
        %3090 = vmatprep.subr.mxu0 0.0
        %3091 = vmatpush1.msra.mxu0 0.0
        %3092 = vmatprep.subr.mxu0 0.0
        %3093 = vmatpush1.msra.mxu0 0.0
        %3094 = vmatprep.subr.mxu0 0.0
        %3095 = vmatpush1.msra.mxu0 0.0
        %3096 = vmatprep.subr.mxu0 0.0
        %3097 = vmatpush1.msra.mxu0 0.0
        %3098 = vmatprep.subr.mxu0 0.0
        %3099 = vmatpush1.msra.mxu0 0.0
        %3100 = vmatprep.subr.mxu0 0.0
        %3101 = vmatpush1.msra.mxu0 0.0
        %3102 = vmatprep.subr.mxu0 0.0
        %3103 = vmatpush1.msra.mxu0 0.0
        %3104 = vmatprep.subr.mxu0 0.0
        %3105 = vmatpush1.msra.mxu0 0.0
        %3106 = vmatprep.subr.mxu0 0.0
        %3107 = vmatpush1.msra.mxu0 0.0
        %3108 = vmatprep.subr.mxu0 0.0
        %3109 = vmatpush1.msra.mxu0 0.0
        %3110 = vmatprep.subr.mxu0 0.0
        %3111 = vmatpush1.msra.mxu0 0.0
        %3112 = vmatprep.subr.mxu0 0.0
        %3113 = vmatpush1.msra.mxu0 0.0
        %3114 = vmatprep.subr.mxu0 0.0
        %3115 = vmatpush1.msra.mxu0 0.0
        %3116 = vmatprep.subr.mxu0 0.0
        %3117 = vmatpush1.msra.mxu0 0.0
        %3118 = vmatprep.subr.mxu0 0.0
        %3119 = vmatpush1.msra.mxu0 0.0
        %3120 = vmatprep.subr.mxu0 0.0
        %3121 = vmatpush1.msra.mxu0 0.0
        %3122 = vmatprep.subr.mxu0 0.0
        %3123 = vmatpush1.msra.mxu0 0.0
        %3124 = vmatprep.mubr.f32.mxu0 0.0
        %3125 = vmatmul.mubr.f32.gmra.mrb[0].mxu0 %v3049
        %v3126 = vpop.f32.mrb[0].mxu0
        %v3127 = vadd.f32 %v3034, %v3126
        %v3128 = vpop.f32.mrb[0].mxu0
        %v3129 = vadd.f32 %v3034, %v3128
        %3130 = vmatprep.mubr.f32.mxu0 0.0
        %3131 = vmatmul.mubr.f32.gmra.mrb[0].mxu0 %v3052
        %v3132 = vpop.f32.mrb[0].mxu0
        %v3133 = vadd.f32 %v3038, %v3132
        %v3134 = vpop.f32.mrb[0].mxu0
        %v3135 = vadd.f32 %v3038, %v3134
        %3136 = vmatprep.mubr.f32.mxu0 0.0
        %3137 = vmatmul.mubr.f32.gmra.mrb[0].mxu0 %v3055
        %v3138 = vpop.f32.mrb[0].mxu0
        %v3139 = vadd.f32 %v3042, %v3138
        %v3140 = vpop.f32.mrb[0].mxu0
        %v3141 = vadd.f32 %v3042, %v3140
        %3142 = vmatprep.mubr.f32.mxu0 0.0
        %3143 = vmatmul.mubr.f32.gmra.mrb[0].mxu0 %v3058
        %v3144 = vpop.f32.mrb[0].mxu0
        %v3145 = vadd.f32 %v3046, %v3144
        %v3146 = vpop.f32.mrb[0].mxu0
        %v3147 = vadd.f32 %v3046, %v3146
        %3148 = vdwg.mxu0
        %3149 = vmatprep.subr.mxu0 %v3014
        %3150 = vmatpush1.msra.mxu0 %v3013
        %3151 = vmatprep.subr.mxu0 %v3018
        %3152 = vmatpush1.msra.mxu0 %v3017
        %3153 = vmatprep.subr.mxu0 %v3022
        %3154 = vmatpush1.msra.mxu0 %v3021
        %3155 = vmatprep.subr.mxu0 %v3026
        %3156 = vmatpush1.msra.mxu0 %v3025
        %3157 = vmatprep.subr.mxu0 0.0
        %3158 = vmatpush1.msra.mxu0 0.0
        %3159 = vmatprep.subr.mxu0 0.0
        %3160 = vmatpush1.msra.mxu0 0.0
        %3161 = vmatprep.subr.mxu0 0.0
        %3162 = vmatpush1.msra.mxu0 0.0
        %3163 = vmatprep.subr.mxu0 0.0
        %3164 = vmatpush1.msra.mxu0 0.0
        %3165 = vmatprep.subr.mxu0 0.0
        %3166 = vmatpush1.msra.mxu0 0.0
        %3167 = vmatprep.subr.mxu0 0.0
        %3168 = vmatpush1.msra.mxu0 0.0
        %3169 = vmatprep.subr.mxu0 0.0
        %3170 = vmatpush1.msra.mxu0 0.0
        %3171 = vmatprep.subr.mxu0 0.0
        %3172 = vmatpush1.msra.mxu0 0.0
        %3173 = vmatprep.subr.mxu0 0.0
        %3174 = vmatpush1.msra.mxu0 0.0
        %3175 = vmatprep.subr.mxu0 0.0
        %3176 = vmatpush1.msra.mxu0 0.0
        %3177 = vmatprep.subr.mxu0 0.0
        %3178 = vmatpush1.msra.mxu0 0.0
        %3179 = vmatprep.subr.mxu0 0.0
        %3180 = vmatpush1.msra.mxu0 0.0
        %3181 = vmatprep.subr.mxu0 0.0
        %3182 = vmatpush1.msra.mxu0 0.0
        %3183 = vmatprep.subr.mxu0 0.0
        %3184 = vmatpush1.msra.mxu0 0.0
        %3185 = vmatprep.subr.mxu0 0.0
        %3186 = vmatpush1.msra.mxu0 0.0
        %3187 = vmatprep.subr.mxu0 0.0
        %3188 = vmatpush1.msra.mxu0 0.0
        %3189 = vmatprep.subr.mxu0 0.0
        %3190 = vmatpush1.msra.mxu0 0.0
        %3191 = vmatprep.subr.mxu0 0.0
        %3192 = vmatpush1.msra.mxu0 0.0
        %3193 = vmatprep.subr.mxu0 0.0
        %3194 = vmatpush1.msra.mxu0 0.0
        %3195 = vmatprep.subr.mxu0 0.0
        %3196 = vmatpush1.msra.mxu0 0.0
        %3197 = vmatprep.subr.mxu0 0.0
        %3198 = vmatpush1.msra.mxu0 0.0
        %3199 = vmatprep.subr.mxu0 0.0
        %3200 = vmatpush1.msra.mxu0 0.0
        %3201 = vmatprep.subr.mxu0 0.0
        %3202 = vmatpush1.msra.mxu0 0.0
        %3203 = vmatprep.subr.mxu0 0.0
        %3204 = vmatpush1.msra.mxu0 0.0
        %3205 = vmatprep.subr.mxu0 0.0
        %3206 = vmatpush1.msra.mxu0 0.0
        %3207 = vmatprep.subr.mxu0 0.0
        %3208 = vmatpush1.msra.mxu0 0.0
        %3209 = vmatprep.subr.mxu0 0.0
        %3210 = vmatpush1.msra.mxu0 0.0
        %3211 = vmatprep.subr.mxu0 0.0
        %3212 = vmatpush1.msra.mxu0 0.0
        %3213 = vmatprep.mubr.f32.mxu0 0.0
        %3214 = vmatmul.mubr.f32.gmra.mrb[0].mxu0 %v3049
        %v3215 = vpop.f32.mrb[0].mxu0
        %v3216 = vadd.f32 %v3034, %v3215
        %v3217 = vpop.f32.mrb[0].mxu0
        %v3218 = vadd.f32 %v3034, %v3217
        %3219 = vmatprep.mubr.f32.mxu0 0.0
        %3220 = vmatmul.mubr.f32.gmra.mrb[0].mxu0 %v3052
        %v3221 = vpop.f32.mrb[0].mxu0
        %v3222 = vadd.f32 %v3038, %v3221
        %v3223 = vpop.f32.mrb[0].mxu0
        %v3224 = vadd.f32 %v3038, %v3223
        %3225 = vmatprep.mubr.f32.mxu0 0.0
        %3226 = vmatmul.mubr.f32.gmra.mrb[0].mxu0 %v3055
        %v3227 = vpop.f32.mrb[0].mxu0
        %v3228 = vadd.f32 %v3042, %v3227
        %v3229 = vpop.f32.mrb[0].mxu0
        %v3230 = vadd.f32 %v3042, %v3229
        %3231 = vmatprep.mubr.f32.mxu0 0.0
        %3232 = vmatmul.mubr.f32.gmra.mrb[0].mxu0 %v3058
        %v3233 = vpop.f32.mrb[0].mxu0
        %v3234 = vadd.f32 %v3046, %v3233
        %v3235 = vpop.f32.mrb[0].mxu0
        %v3236 = vadd.f32 %v3046, %v3235
        %3237 = vdwg.mxu0
        %v3238 = vmax.f32 %v3127, 0.0
        %v3239 = vmax.f32 %v3129, 0.0
        %v3240 = vmax.f32 %v3216, 0.0
        %v3241 = vmax.f32 %v3218, 0.0
        %v3242 = vmax.f32 %v3133, 0.0
        %v3243 = vmax.f32 %v3135, 0.0
        %v3244 = vmax.f32 %v3222, 0.0
        %v3245 = vmax.f32 %v3224, 0.0
        %v3246 = vmax.f32 %v3139, 0.0
        %v3247 = vmax.f32 %v3141, 0.0
        %v3248 = vmax.f32 %v3228, 0.0
        %v3249 = vmax.f32 %v3230, 0.0
        %v3250 = vmax.f32 %v3145, 0.0
        %v3251 = vmax.f32 %v3147, 0.0
        %v3252 = vmax.f32 %v3234, 0.0
        %v3253 = vmax.f32 %v3236, 0.0
        %s3254 = scalar_lea.vmem %s3, 96
        %v3255 = vld [vmem:[%s3254] sm:$0xff]
        %v3256 = vld [vmem:[%s3254 + $0x8] sm:$0xff]
        %v3257 = vld [vmem:[%s3254 + $0x10] sm:$0xff]
        %v3258 = vld [vmem:[%s3254 + $0x18] sm:$0xff]
        %3259 = vset.pattern.permute.xlu0 4
        %3260 = vperm.xlu0 %3259, %v2343
        %v3261 = vpop.permute.xlu0 %3260
        %3263 = vset.pattern.permute.xlu0 4
        %3264 = vperm.xlu0 %3263, %v2344
        %v3265 = vpop.permute.xlu0 %3264
        %3267 = vset.pattern.permute.xlu0 4
        %3268 = vperm.xlu0 %3267, %v2345
        %v3269 = vpop.permute.xlu0 %3268
        %3271 = vset.pattern.permute.xlu0 4
        %3272 = vperm.xlu0 %3271, %v2346
        %v3273 = vpop.permute.xlu0 %3272
        %v3276 = vsel %vm2593, %v3255, 0
        %v3279 = vsel %vm2593, %v3256, 0
        %v3282 = vsel %vm2593, %v3257, 0
        %v3285 = vsel %vm2593, %v3258, 0
        %3287 = vmatprep.subr.mxu0 %v3239
        %3288 = vmatpush1.msra.mxu0 %v3238
        %3289 = vmatprep.subr.mxu0 %v3243
        %3290 = vmatpush1.msra.mxu0 %v3242
        %3291 = vmatprep.subr.mxu0 %v3247
        %3292 = vmatpush1.msra.mxu0 %v3246
        %3293 = vmatprep.subr.mxu0 %v3251
        %3294 = vmatpush1.msra.mxu0 %v3250
        %3295 = vmatprep.subr.mxu0 0.0
        %3296 = vmatpush1.msra.mxu0 0.0
        %3297 = vmatprep.subr.mxu0 0.0
        %3298 = vmatpush1.msra.mxu0 0.0
        %3299 = vmatprep.subr.mxu0 0.0
        %3300 = vmatpush1.msra.mxu0 0.0
        %3301 = vmatprep.subr.mxu0 0.0
        %3302 = vmatpush1.msra.mxu0 0.0
        %3303 = vmatprep.subr.mxu0 0.0
        %3304 = vmatpush1.msra.mxu0 0.0
        %3305 = vmatprep.subr.mxu0 0.0
        %3306 = vmatpush1.msra.mxu0 0.0
        %3307 = vmatprep.subr.mxu0 0.0
        %3308 = vmatpush1.msra.mxu0 0.0
        %3309 = vmatprep.subr.mxu0 0.0
        %3310 = vmatpush1.msra.mxu0 0.0
        %3311 = vmatprep.subr.mxu0 0.0
        %3312 = vmatpush1.msra.mxu0 0.0
        %3313 = vmatprep.subr.mxu0 0.0
        %3314 = vmatpush1.msra.mxu0 0.0
        %3315 = vmatprep.subr.mxu0 0.0
        %3316 = vmatpush1.msra.mxu0 0.0
        %3317 = vmatprep.subr.mxu0 0.0
        %3318 = vmatpush1.msra.mxu0 0.0
        %3319 = vmatprep.subr.mxu0 0.0
        %3320 = vmatpush1.msra.mxu0 0.0
        %3321 = vmatprep.subr.mxu0 0.0
        %3322 = vmatpush1.msra.mxu0 0.0
        %3323 = vmatprep.subr.mxu0 0.0
        %3324 = vmatpush1.msra.mxu0 0.0
        %3325 = vmatprep.subr.mxu0 0.0
        %3326 = vmatpush1.msra.mxu0 0.0
        %3327 = vmatprep.subr.mxu0 0.0
        %3328 = vmatpush1.msra.mxu0 0.0
        %3329 = vmatprep.subr.mxu0 0.0
        %3330 = vmatpush1.msra.mxu0 0.0
        %3331 = vmatprep.subr.mxu0 0.0
        %3332 = vmatpush1.msra.mxu0 0.0
        %3333 = vmatprep.subr.mxu0 0.0
        %3334 = vmatpush1.msra.mxu0 0.0
        %3335 = vmatprep.subr.mxu0 0.0
        %3336 = vmatpush1.msra.mxu0 0.0
        %3337 = vmatprep.subr.mxu0 0.0
        %3338 = vmatpush1.msra.mxu0 0.0
        %3339 = vmatprep.subr.mxu0 0.0
        %3340 = vmatpush1.msra.mxu0 0.0
        %3341 = vmatprep.subr.mxu0 0.0
        %3342 = vmatpush1.msra.mxu0 0.0
        %3343 = vmatprep.subr.mxu0 0.0
        %3344 = vmatpush1.msra.mxu0 0.0
        %3345 = vmatprep.subr.mxu0 0.0
        %3346 = vmatpush1.msra.mxu0 0.0
        %3347 = vmatprep.subr.mxu0 0.0
        %3348 = vmatpush1.msra.mxu0 0.0
        %3349 = vmatprep.subr.mxu0 0.0
        %3350 = vmatpush1.msra.mxu0 0.0
        %3351 = vmatprep.mubr.f32.mxu0 0.0
        %3352 = vmatmul.mubr.f32.gmra.mrb[0].mxu0 %v3276
        %v3353 = vpop.f32.mrb[0].mxu0
        %v3354 = vadd.f32 %v3261, %v3353
        %v3355 = vpop.f32.mrb[0].mxu0
        %v3356 = vadd.f32 %v3261, %v3355
        %3357 = vmatprep.mubr.f32.mxu0 0.0
        %3358 = vmatmul.mubr.f32.gmra.mrb[0].mxu0 %v3279
        %v3359 = vpop.f32.mrb[0].mxu0
        %v3360 = vadd.f32 %v3265, %v3359
        %v3361 = vpop.f32.mrb[0].mxu0
        %v3362 = vadd.f32 %v3265, %v3361
        %3363 = vmatprep.mubr.f32.mxu0 0.0
        %3364 = vmatmul.mubr.f32.gmra.mrb[0].mxu0 %v3282
        %v3365 = vpop.f32.mrb[0].mxu0
        %v3366 = vadd.f32 %v3269, %v3365
        %v3367 = vpop.f32.mrb[0].mxu0
        %v3368 = vadd.f32 %v3269, %v3367
        %3369 = vmatprep.mubr.f32.mxu0 0.0
        %3370 = vmatmul.mubr.f32.gmra.mrb[0].mxu0 %v3285
        %v3371 = vpop.f32.mrb[0].mxu0
        %v3372 = vadd.f32 %v3273, %v3371
        %v3373 = vpop.f32.mrb[0].mxu0
        %v3374 = vadd.f32 %v3273, %v3373
        %3375 = vdwg.mxu0
        %3376 = vmatprep.subr.mxu0 %v3241
        %3377 = vmatpush1.msra.mxu0 %v3240
        %3378 = vmatprep.subr.mxu0 %v3245
        %3379 = vmatpush1.msra.mxu0 %v3244
        %3380 = vmatprep.subr.mxu0 %v3249
        %3381 = vmatpush1.msra.mxu0 %v3248
        %3382 = vmatprep.subr.mxu0 %v3253
        %3383 = vmatpush1.msra.mxu0 %v3252
        %3384 = vmatprep.subr.mxu0 0.0
        %3385 = vmatpush1.msra.mxu0 0.0
        %3386 = vmatprep.subr.mxu0 0.0
        %3387 = vmatpush1.msra.mxu0 0.0
        %3388 = vmatprep.subr.mxu0 0.0
        %3389 = vmatpush1.msra.mxu0 0.0
        %3390 = vmatprep.subr.mxu0 0.0
        %3391 = vmatpush1.msra.mxu0 0.0
        %3392 = vmatprep.subr.mxu0 0.0
        %3393 = vmatpush1.msra.mxu0 0.0
        %3394 = vmatprep.subr.mxu0 0.0
        %3395 = vmatpush1.msra.mxu0 0.0
        %3396 = vmatprep.subr.mxu0 0.0
        %3397 = vmatpush1.msra.mxu0 0.0
        %3398 = vmatprep.subr.mxu0 0.0
        %3399 = vmatpush1.msra.mxu0 0.0
        %3400 = vmatprep.subr.mxu0 0.0
        %3401 = vmatpush1.msra.mxu0 0.0
        %3402 = vmatprep.subr.mxu0 0.0
        %3403 = vmatpush1.msra.mxu0 0.0
        %3404 = vmatprep.subr.mxu0 0.0
        %3405 = vmatpush1.msra.mxu0 0.0
        %3406 = vmatprep.subr.mxu0 0.0
        %3407 = vmatpush1.msra.mxu0 0.0
        %3408 = vmatprep.subr.mxu0 0.0
        %3409 = vmatpush1.msra.mxu0 0.0
        %3410 = vmatprep.subr.mxu0 0.0
        %3411 = vmatpush1.msra.mxu0 0.0
        %3412 = vmatprep.subr.mxu0 0.0
        %3413 = vmatpush1.msra.mxu0 0.0
        %3414 = vmatprep.subr.mxu0 0.0
        %3415 = vmatpush1.msra.mxu0 0.0
        %3416 = vmatprep.subr.mxu0 0.0
        %3417 = vmatpush1.msra.mxu0 0.0
        %3418 = vmatprep.subr.mxu0 0.0
        %3419 = vmatpush1.msra.mxu0 0.0
        %3420 = vmatprep.subr.mxu0 0.0
        %3421 = vmatpush1.msra.mxu0 0.0
        %3422 = vmatprep.subr.mxu0 0.0
        %3423 = vmatpush1.msra.mxu0 0.0
        %3424 = vmatprep.subr.mxu0 0.0
        %3425 = vmatpush1.msra.mxu0 0.0
        %3426 = vmatprep.subr.mxu0 0.0
        %3427 = vmatpush1.msra.mxu0 0.0
        %3428 = vmatprep.subr.mxu0 0.0
        %3429 = vmatpush1.msra.mxu0 0.0
        %3430 = vmatprep.subr.mxu0 0.0
        %3431 = vmatpush1.msra.mxu0 0.0
        %3432 = vmatprep.subr.mxu0 0.0
        %3433 = vmatpush1.msra.mxu0 0.0
        %3434 = vmatprep.subr.mxu0 0.0
        %3435 = vmatpush1.msra.mxu0 0.0
        %3436 = vmatprep.subr.mxu0 0.0
        %3437 = vmatpush1.msra.mxu0 0.0
        %3438 = vmatprep.subr.mxu0 0.0
        %3439 = vmatpush1.msra.mxu0 0.0
        %3440 = vmatprep.mubr.f32.mxu0 0.0
        %3441 = vmatmul.mubr.f32.gmra.mrb[0].mxu0 %v3276
        %v3442 = vpop.f32.mrb[0].mxu0
        %v3443 = vadd.f32 %v3261, %v3442
        %v3444 = vpop.f32.mrb[0].mxu0
        %v3445 = vadd.f32 %v3261, %v3444
        %3446 = vmatprep.mubr.f32.mxu0 0.0
        %3447 = vmatmul.mubr.f32.gmra.mrb[0].mxu0 %v3279
        %v3448 = vpop.f32.mrb[0].mxu0
        %v3449 = vadd.f32 %v3265, %v3448
        %v3450 = vpop.f32.mrb[0].mxu0
        %v3451 = vadd.f32 %v3265, %v3450
        %3452 = vmatprep.mubr.f32.mxu0 0.0
        %3453 = vmatmul.mubr.f32.gmra.mrb[0].mxu0 %v3282
        %v3454 = vpop.f32.mrb[0].mxu0
        %v3455 = vadd.f32 %v3269, %v3454
        %v3456 = vpop.f32.mrb[0].mxu0
        %v3457 = vadd.f32 %v3269, %v3456
        %3458 = vmatprep.mubr.f32.mxu0 0.0
        %3459 = vmatmul.mubr.f32.gmra.mrb[0].mxu0 %v3285
        %v3460 = vpop.f32.mrb[0].mxu0
        %v3461 = vadd.f32 %v3273, %v3460
        %v3462 = vpop.f32.mrb[0].mxu0
        %v3463 = vadd.f32 %v3273, %v3462
        %3464 = vdwg.mxu0
        %v3465 = vmax.f32 %v3354, 0.0
        %v3466 = vmax.f32 %v3356, 0.0
        %v3467 = vmax.f32 %v3443, 0.0
        %v3468 = vmax.f32 %v3445, 0.0
        %v3469 = vmax.f32 %v3360, 0.0
        %v3470 = vmax.f32 %v3362, 0.0
        %v3471 = vmax.f32 %v3449, 0.0
        %v3472 = vmax.f32 %v3451, 0.0
        %v3473 = vmax.f32 %v3366, 0.0
        %v3474 = vmax.f32 %v3368, 0.0
        %v3475 = vmax.f32 %v3455, 0.0
        %v3476 = vmax.f32 %v3457, 0.0
        %v3477 = vmax.f32 %v3372, 0.0
        %v3478 = vmax.f32 %v3374, 0.0
        %v3479 = vmax.f32 %v3461, 0.0
        %v3480 = vmax.f32 %v3463, 0.0
        %s3481 = scalar_lea.vmem %s3, 128
        %v3482 = vld [vmem:[%s3481] sm:$0xff]
        %v3483 = vld [vmem:[%s3481 + $0x8] sm:$0xff]
        %v3484 = vld [vmem:[%s3481 + $0x10] sm:$0xff]
        %v3485 = vld [vmem:[%s3481 + $0x18] sm:$0xff]
        %v3487 = vsel %vm2593, %v3482, 0
        %v3490 = vsel %vm2593, %v3483, 0
        %v3493 = vsel %vm2593, %v3484, 0
        %v3496 = vsel %vm2593, %v3485, 0
        %3498 = vmatprep.subr.mxu0 %v3466
        %3499 = vmatpush1.msra.mxu0 %v3465
        %3500 = vmatprep.subr.mxu0 %v3470
        %3501 = vmatpush1.msra.mxu0 %v3469
        %3502 = vmatprep.subr.mxu0 %v3474
        %3503 = vmatpush1.msra.mxu0 %v3473
        %3504 = vmatprep.subr.mxu0 %v3478
        %3505 = vmatpush1.msra.mxu0 %v3477
        %3506 = vmatprep.subr.mxu0 0.0
        %3507 = vmatpush1.msra.mxu0 0.0
        %3508 = vmatprep.subr.mxu0 0.0
        %3509 = vmatpush1.msra.mxu0 0.0
        %3510 = vmatprep.subr.mxu0 0.0
        %3511 = vmatpush1.msra.mxu0 0.0
        %3512 = vmatprep.subr.mxu0 0.0
        %3513 = vmatpush1.msra.mxu0 0.0
        %3514 = vmatprep.subr.mxu0 0.0
        %3515 = vmatpush1.msra.mxu0 0.0
        %3516 = vmatprep.subr.mxu0 0.0
        %3517 = vmatpush1.msra.mxu0 0.0
        %3518 = vmatprep.subr.mxu0 0.0
        %3519 = vmatpush1.msra.mxu0 0.0
        %3520 = vmatprep.subr.mxu0 0.0
        %3521 = vmatpush1.msra.mxu0 0.0
        %3522 = vmatprep.subr.mxu0 0.0
        %3523 = vmatpush1.msra.mxu0 0.0
        %3524 = vmatprep.subr.mxu0 0.0
        %3525 = vmatpush1.msra.mxu0 0.0
        %3526 = vmatprep.subr.mxu0 0.0
        %3527 = vmatpush1.msra.mxu0 0.0
        %3528 = vmatprep.subr.mxu0 0.0
        %3529 = vmatpush1.msra.mxu0 0.0
        %3530 = vmatprep.subr.mxu0 0.0
        %3531 = vmatpush1.msra.mxu0 0.0
        %3532 = vmatprep.subr.mxu0 0.0
        %3533 = vmatpush1.msra.mxu0 0.0
        %3534 = vmatprep.subr.mxu0 0.0
        %3535 = vmatpush1.msra.mxu0 0.0
        %3536 = vmatprep.subr.mxu0 0.0
        %3537 = vmatpush1.msra.mxu0 0.0
        %3538 = vmatprep.subr.mxu0 0.0
        %3539 = vmatpush1.msra.mxu0 0.0
        %3540 = vmatprep.subr.mxu0 0.0
        %3541 = vmatpush1.msra.mxu0 0.0
        %3542 = vmatprep.subr.mxu0 0.0
        %3543 = vmatpush1.msra.mxu0 0.0
        %3544 = vmatprep.subr.mxu0 0.0
        %3545 = vmatpush1.msra.mxu0 0.0
        %3546 = vmatprep.subr.mxu0 0.0
        %3547 = vmatpush1.msra.mxu0 0.0
        %3548 = vmatprep.subr.mxu0 0.0
        %3549 = vmatpush1.msra.mxu0 0.0
        %3550 = vmatprep.subr.mxu0 0.0
        %3551 = vmatpush1.msra.mxu0 0.0
        %3552 = vmatprep.subr.mxu0 0.0
        %3553 = vmatpush1.msra.mxu0 0.0
        %3554 = vmatprep.subr.mxu0 0.0
        %3555 = vmatpush1.msra.mxu0 0.0
        %3556 = vmatprep.subr.mxu0 0.0
        %3557 = vmatpush1.msra.mxu0 0.0
        %3558 = vmatprep.subr.mxu0 0.0
        %3559 = vmatpush1.msra.mxu0 0.0
        %3560 = vmatprep.subr.mxu0 0.0
        %3561 = vmatpush1.msra.mxu0 0.0
        %3562 = vmatprep.mubr.f32.mxu0 0.0
        %3563 = vmatmul.mubr.f32.gmra.mrb[0].mxu0 %v3487
        %v3564 = vpop.f32.mrb[0].mxu0
        %v3565 = vadd.f32 %v2232, %v3564
        %v3566 = vpop.f32.mrb[0].mxu0
        %v3567 = vadd.f32 %v2234, %v3566
        %3568 = vmatprep.mubr.f32.mxu0 0.0
        %3569 = vmatmul.mubr.f32.gmra.mrb[0].mxu0 %v3490
        %v3570 = vpop.f32.mrb[0].mxu0
        %v3571 = vadd.f32 %v2238, %v3570
        %v3572 = vpop.f32.mrb[0].mxu0
        %v3573 = vadd.f32 %v2240, %v3572
        %3574 = vmatprep.mubr.f32.mxu0 0.0
        %3575 = vmatmul.mubr.f32.gmra.mrb[0].mxu0 %v3493
        %v3576 = vpop.f32.mrb[0].mxu0
        %v3577 = vadd.f32 %v2244, %v3576
        %v3578 = vpop.f32.mrb[0].mxu0
        %v3579 = vadd.f32 %v2246, %v3578
        %3580 = vmatprep.mubr.f32.mxu0 0.0
        %3581 = vmatmul.mubr.f32.gmra.mrb[0].mxu0 %v3496
        %v3582 = vpop.f32.mrb[0].mxu0
        %v3583 = vadd.f32 %v2250, %v3582
        %v3584 = vpop.f32.mrb[0].mxu0
        %v3585 = vadd.f32 %v2252, %v3584
        %3586 = vdwg.mxu0
        %3587 = vmatprep.subr.mxu0 %v3468
        %3588 = vmatpush1.msra.mxu0 %v3467
        %3589 = vmatprep.subr.mxu0 %v3472
        %3590 = vmatpush1.msra.mxu0 %v3471
        %3591 = vmatprep.subr.mxu0 %v3476
        %3592 = vmatpush1.msra.mxu0 %v3475
        %3593 = vmatprep.subr.mxu0 %v3480
        %3594 = vmatpush1.msra.mxu0 %v3479
        %3595 = vmatprep.subr.mxu0 0.0
        %3596 = vmatpush1.msra.mxu0 0.0
        %3597 = vmatprep.subr.mxu0 0.0
        %3598 = vmatpush1.msra.mxu0 0.0
        %3599 = vmatprep.subr.mxu0 0.0
        %3600 = vmatpush1.msra.mxu0 0.0
        %3601 = vmatprep.subr.mxu0 0.0
        %3602 = vmatpush1.msra.mxu0 0.0
        %3603 = vmatprep.subr.mxu0 0.0
        %3604 = vmatpush1.msra.mxu0 0.0
        %3605 = vmatprep.subr.mxu0 0.0
        %3606 = vmatpush1.msra.mxu0 0.0
        %3607 = vmatprep.subr.mxu0 0.0
        %3608 = vmatpush1.msra.mxu0 0.0
        %3609 = vmatprep.subr.mxu0 0.0
        %3610 = vmatpush1.msra.mxu0 0.0
        %3611 = vmatprep.subr.mxu0 0.0
        %3612 = vmatpush1.msra.mxu0 0.0
        %3613 = vmatprep.subr.mxu0 0.0
        %3614 = vmatpush1.msra.mxu0 0.0
        %3615 = vmatprep.subr.mxu0 0.0
        %3616 = vmatpush1.msra.mxu0 0.0
        %3617 = vmatprep.subr.mxu0 0.0
        %3618 = vmatpush1.msra.mxu0 0.0
        %3619 = vmatprep.subr.mxu0 0.0
        %3620 = vmatpush1.msra.mxu0 0.0
        %3621 = vmatprep.subr.mxu0 0.0
        %3622 = vmatpush1.msra.mxu0 0.0
        %3623 = vmatprep.subr.mxu0 0.0
        %3624 = vmatpush1.msra.mxu0 0.0
        %3625 = vmatprep.subr.mxu0 0.0
        %3626 = vmatpush1.msra.mxu0 0.0
        %3627 = vmatprep.subr.mxu0 0.0
        %3628 = vmatpush1.msra.mxu0 0.0
        %3629 = vmatprep.subr.mxu0 0.0
        %3630 = vmatpush1.msra.mxu0 0.0
        %3631 = vmatprep.subr.mxu0 0.0
        %3632 = vmatpush1.msra.mxu0 0.0
        %3633 = vmatprep.subr.mxu0 0.0
        %3634 = vmatpush1.msra.mxu0 0.0
        %3635 = vmatprep.subr.mxu0 0.0
        %3636 = vmatpush1.msra.mxu0 0.0
        %3637 = vmatprep.subr.mxu0 0.0
        %3638 = vmatpush1.msra.mxu0 0.0
        %3639 = vmatprep.subr.mxu0 0.0
        %3640 = vmatpush1.msra.mxu0 0.0
        %3641 = vmatprep.subr.mxu0 0.0
        %3642 = vmatpush1.msra.mxu0 0.0
        %3643 = vmatprep.subr.mxu0 0.0
        %3644 = vmatpush1.msra.mxu0 0.0
        %3645 = vmatprep.subr.mxu0 0.0
        %3646 = vmatpush1.msra.mxu0 0.0
        %3647 = vmatprep.subr.mxu0 0.0
        %3648 = vmatpush1.msra.mxu0 0.0
        %3649 = vmatprep.subr.mxu0 0.0
        %3650 = vmatpush1.msra.mxu0 0.0
        %3651 = vmatprep.mubr.f32.mxu0 0.0
        %3652 = vmatmul.mubr.f32.gmra.mrb[0].mxu0 %v3487
        %v3653 = vpop.f32.mrb[0].mxu0
        %v3654 = vadd.f32 %v2321, %v3653
        %v3655 = vpop.f32.mrb[0].mxu0
        %v3656 = vadd.f32 %v2323, %v3655
        %3657 = vmatprep.mubr.f32.mxu0 0.0
        %3658 = vmatmul.mubr.f32.gmra.mrb[0].mxu0 %v3490
        %v3659 = vpop.f32.mrb[0].mxu0
        %v3660 = vadd.f32 %v2327, %v3659
        %v3661 = vpop.f32.mrb[0].mxu0
        %v3662 = vadd.f32 %v2329, %v3661
        %3663 = vmatprep.mubr.f32.mxu0 0.0
        %3664 = vmatmul.mubr.f32.gmra.mrb[0].mxu0 %v3493
        %v3665 = vpop.f32.mrb[0].mxu0
        %v3666 = vadd.f32 %v2333, %v3665
        %v3667 = vpop.f32.mrb[0].mxu0
        %v3668 = vadd.f32 %v2335, %v3667
        %3669 = vmatprep.mubr.f32.mxu0 0.0
        %3670 = vmatmul.mubr.f32.gmra.mrb[0].mxu0 %v3496
        %v3671 = vpop.f32.mrb[0].mxu0
        %v3672 = vadd.f32 %v2339, %v3671
        %v3673 = vpop.f32.mrb[0].mxu0
        %v3674 = vadd.f32 %v2341, %v3673
        %3675 = vdwg.mxu0
        %3676 = vset.pattern.permute.xlu0 5
        %3677 = vperm.xlu0 %3676, %v2343
        %v3678 = vpop.permute.xlu0 %3677
        %3680 = vset.pattern.permute.xlu0 5
        %3681 = vperm.xlu0 %3680, %v2344
        %v3682 = vpop.permute.xlu0 %3681
        %3684 = vset.pattern.permute.xlu0 5
        %3685 = vperm.xlu0 %3684, %v2345
        %v3686 = vpop.permute.xlu0 %3685
        %3688 = vset.pattern.permute.xlu0 5
        %3689 = vperm.xlu0 %3688, %v2346
        %v3690 = vpop.permute.xlu0 %3689
        %v3692 = vadd.f32 %v3565, %v3678
        %v3693 = vadd.f32 %v3567, %v3678
        %v3694 = vadd.f32 %v3654, %v3678
        %v3695 = vadd.f32 %v3656, %v3678
        %v3696 = vadd.f32 %v3571, %v3682
        %v3697 = vadd.f32 %v3573, %v3682
        %v3698 = vadd.f32 %v3660, %v3682
        %v3699 = vadd.f32 %v3662, %v3682
        %v3700 = vadd.f32 %v3577, %v3686
        %v3701 = vadd.f32 %v3579, %v3686
        %v3702 = vadd.f32 %v3666, %v3686
        %v3703 = vadd.f32 %v3668, %v3686
        %v3704 = vadd.f32 %v3583, %v3690
        %v3705 = vadd.f32 %v3585, %v3690
        %v3706 = vadd.f32 %v3672, %v3690
        %v3707 = vadd.f32 %v3674, %v3690
        %v3708 = vmax.f32 %v3692, 0.0
        %v3709 = vmax.f32 %v3693, 0.0
        %v3710 = vmax.f32 %v3694, 0.0
        %v3711 = vmax.f32 %v3695, 0.0
        %v3712 = vmax.f32 %v3696, 0.0
        %v3713 = vmax.f32 %v3697, 0.0
        %v3714 = vmax.f32 %v3698, 0.0
        %v3715 = vmax.f32 %v3699, 0.0
        %v3716 = vmax.f32 %v3700, 0.0
        %v3717 = vmax.f32 %v3701, 0.0
        %v3718 = vmax.f32 %v3702, 0.0
        %v3719 = vmax.f32 %v3703, 0.0
        %v3720 = vmax.f32 %v3704, 0.0
        %v3721 = vmax.f32 %v3705, 0.0
        %v3722 = vmax.f32 %v3706, 0.0
        %v3723 = vmax.f32 %v3707, 0.0
        %s3724 = scalar_lea.vmem %s3, 160
        %v3725 = vld [vmem:[%s3724] sm:$0xff]
        %v3726 = vld [vmem:[%s3724 + $0x8] sm:$0xff]
        %v3727 = vld [vmem:[%s3724 + $0x10] sm:$0xff]
        %v3728 = vld [vmem:[%s3724 + $0x18] sm:$0xff]
        %3729 = vset.pattern.permute.xlu0 6
        %3730 = vperm.xlu0 %3729, %v2343
        %v3731 = vpop.permute.xlu0 %3730
        %3733 = vset.pattern.permute.xlu0 6
        %3734 = vperm.xlu0 %3733, %v2344
        %v3735 = vpop.permute.xlu0 %3734
        %3737 = vset.pattern.permute.xlu0 6
        %3738 = vperm.xlu0 %3737, %v2345
        %v3739 = vpop.permute.xlu0 %3738
        %3741 = vset.pattern.permute.xlu0 6
        %3742 = vperm.xlu0 %3741, %v2346
        %v3743 = vpop.permute.xlu0 %3742
        %v3746 = vsel %vm2593, %v3725, 0
        %v3749 = vsel %vm2593, %v3726, 0
        %v3752 = vsel %vm2593, %v3727, 0
        %v3755 = vsel %vm2593, %v3728, 0
        %3757 = vmatprep.subr.mxu0 %v3709
        %3758 = vmatpush1.msra.mxu0 %v3708
        %3759 = vmatprep.subr.mxu0 %v3713
        %3760 = vmatpush1.msra.mxu0 %v3712
        %3761 = vmatprep.subr.mxu0 %v3717
        %3762 = vmatpush1.msra.mxu0 %v3716
        %3763 = vmatprep.subr.mxu0 %v3721
        %3764 = vmatpush1.msra.mxu0 %v3720
        %3765 = vmatprep.subr.mxu0 0.0
        %3766 = vmatpush1.msra.mxu0 0.0
        %3767 = vmatprep.subr.mxu0 0.0
        %3768 = vmatpush1.msra.mxu0 0.0
        %3769 = vmatprep.subr.mxu0 0.0
        %3770 = vmatpush1.msra.mxu0 0.0
        %3771 = vmatprep.subr.mxu0 0.0
        %3772 = vmatpush1.msra.mxu0 0.0
        %3773 = vmatprep.subr.mxu0 0.0
        %3774 = vmatpush1.msra.mxu0 0.0
        %3775 = vmatprep.subr.mxu0 0.0
        %3776 = vmatpush1.msra.mxu0 0.0
        %3777 = vmatprep.subr.mxu0 0.0
        %3778 = vmatpush1.msra.mxu0 0.0
        %3779 = vmatprep.subr.mxu0 0.0
        %3780 = vmatpush1.msra.mxu0 0.0
        %3781 = vmatprep.subr.mxu0 0.0
        %3782 = vmatpush1.msra.mxu0 0.0
        %3783 = vmatprep.subr.mxu0 0.0
        %3784 = vmatpush1.msra.mxu0 0.0
        %3785 = vmatprep.subr.mxu0 0.0
        %3786 = vmatpush1.msra.mxu0 0.0
        %3787 = vmatprep.subr.mxu0 0.0
        %3788 = vmatpush1.msra.mxu0 0.0
        %3789 = vmatprep.subr.mxu0 0.0
        %3790 = vmatpush1.msra.mxu0 0.0
        %3791 = vmatprep.subr.mxu0 0.0
        %3792 = vmatpush1.msra.mxu0 0.0
        %3793 = vmatprep.subr.mxu0 0.0
        %3794 = vmatpush1.msra.mxu0 0.0
        %3795 = vmatprep.subr.mxu0 0.0
        %3796 = vmatpush1.msra.mxu0 0.0
        %3797 = vmatprep.subr.mxu0 0.0
        %3798 = vmatpush1.msra.mxu0 0.0
        %3799 = vmatprep.subr.mxu0 0.0
        %3800 = vmatpush1.msra.mxu0 0.0
        %3801 = vmatprep.subr.mxu0 0.0
        %3802 = vmatpush1.msra.mxu0 0.0
        %3803 = vmatprep.subr.mxu0 0.0
        %3804 = vmatpush1.msra.mxu0 0.0
        %3805 = vmatprep.subr.mxu0 0.0
        %3806 = vmatpush1.msra.mxu0 0.0
        %3807 = vmatprep.subr.mxu0 0.0
        %3808 = vmatpush1.msra.mxu0 0.0
        %3809 = vmatprep.subr.mxu0 0.0
        %3810 = vmatpush1.msra.mxu0 0.0
        %3811 = vmatprep.subr.mxu0 0.0
        %3812 = vmatpush1.msra.mxu0 0.0
        %3813 = vmatprep.subr.mxu0 0.0
        %3814 = vmatpush1.msra.mxu0 0.0
        %3815 = vmatprep.subr.mxu0 0.0
        %3816 = vmatpush1.msra.mxu0 0.0
        %3817 = vmatprep.subr.mxu0 0.0
        %3818 = vmatpush1.msra.mxu0 0.0
        %3819 = vmatprep.subr.mxu0 0.0
        %3820 = vmatpush1.msra.mxu0 0.0
        %3821 = vmatprep.mubr.f32.mxu0 0.0
        %3822 = vmatmul.mubr.f32.gmra.mrb[0].mxu0 %v3746
        %v3823 = vpop.f32.mrb[0].mxu0
        %v3824 = vadd.f32 %v3731, %v3823
        %v3825 = vpop.f32.mrb[0].mxu0
        %v3826 = vadd.f32 %v3731, %v3825
        %3827 = vmatprep.mubr.f32.mxu0 0.0
        %3828 = vmatmul.mubr.f32.gmra.mrb[0].mxu0 %v3749
        %v3829 = vpop.f32.mrb[0].mxu0
        %v3830 = vadd.f32 %v3735, %v3829
        %v3831 = vpop.f32.mrb[0].mxu0
        %v3832 = vadd.f32 %v3735, %v3831
        %3833 = vmatprep.mubr.f32.mxu0 0.0
        %3834 = vmatmul.mubr.f32.gmra.mrb[0].mxu0 %v3752
        %v3835 = vpop.f32.mrb[0].mxu0
        %v3836 = vadd.f32 %v3739, %v3835
        %v3837 = vpop.f32.mrb[0].mxu0
        %v3838 = vadd.f32 %v3739, %v3837
        %3839 = vmatprep.mubr.f32.mxu0 0.0
        %3840 = vmatmul.mubr.f32.gmra.mrb[0].mxu0 %v3755
        %v3841 = vpop.f32.mrb[0].mxu0
        %v3842 = vadd.f32 %v3743, %v3841
        %v3843 = vpop.f32.mrb[0].mxu0
        %v3844 = vadd.f32 %v3743, %v3843
        %3845 = vdwg.mxu0
        %3846 = vmatprep.subr.mxu0 %v3711
        %3847 = vmatpush1.msra.mxu0 %v3710
        %3848 = vmatprep.subr.mxu0 %v3715
        %3849 = vmatpush1.msra.mxu0 %v3714
        %3850 = vmatprep.subr.mxu0 %v3719
        %3851 = vmatpush1.msra.mxu0 %v3718
        %3852 = vmatprep.subr.mxu0 %v3723
        %3853 = vmatpush1.msra.mxu0 %v3722
        %3854 = vmatprep.subr.mxu0 0.0
        %3855 = vmatpush1.msra.mxu0 0.0
        %3856 = vmatprep.subr.mxu0 0.0
        %3857 = vmatpush1.msra.mxu0 0.0
        %3858 = vmatprep.subr.mxu0 0.0
        %3859 = vmatpush1.msra.mxu0 0.0
        %3860 = vmatprep.subr.mxu0 0.0
        %3861 = vmatpush1.msra.mxu0 0.0
        %3862 = vmatprep.subr.mxu0 0.0
        %3863 = vmatpush1.msra.mxu0 0.0
        %3864 = vmatprep.subr.mxu0 0.0
        %3865 = vmatpush1.msra.mxu0 0.0
        %3866 = vmatprep.subr.mxu0 0.0
        %3867 = vmatpush1.msra.mxu0 0.0
        %3868 = vmatprep.subr.mxu0 0.0
        %3869 = vmatpush1.msra.mxu0 0.0
        %3870 = vmatprep.subr.mxu0 0.0
        %3871 = vmatpush1.msra.mxu0 0.0
        %3872 = vmatprep.subr.mxu0 0.0
        %3873 = vmatpush1.msra.mxu0 0.0
        %3874 = vmatprep.subr.mxu0 0.0
        %3875 = vmatpush1.msra.mxu0 0.0
        %3876 = vmatprep.subr.mxu0 0.0
        %3877 = vmatpush1.msra.mxu0 0.0
        %3878 = vmatprep.subr.mxu0 0.0
        %3879 = vmatpush1.msra.mxu0 0.0
        %3880 = vmatprep.subr.mxu0 0.0
        %3881 = vmatpush1.msra.mxu0 0.0
        %3882 = vmatprep.subr.mxu0 0.0
        %3883 = vmatpush1.msra.mxu0 0.0
        %3884 = vmatprep.subr.mxu0 0.0
        %3885 = vmatpush1.msra.mxu0 0.0
        %3886 = vmatprep.subr.mxu0 0.0
        %3887 = vmatpush1.msra.mxu0 0.0
        %3888 = vmatprep.subr.mxu0 0.0
        %3889 = vmatpush1.msra.mxu0 0.0
        %3890 = vmatprep.subr.mxu0 0.0
        %3891 = vmatpush1.msra.mxu0 0.0
        %3892 = vmatprep.subr.mxu0 0.0
        %3893 = vmatpush1.msra.mxu0 0.0
        %3894 = vmatprep.subr.mxu0 0.0
        %3895 = vmatpush1.msra.mxu0 0.0
        %3896 = vmatprep.subr.mxu0 0.0
        %3897 = vmatpush1.msra.mxu0 0.0
        %3898 = vmatprep.subr.mxu0 0.0
        %3899 = vmatpush1.msra.mxu0 0.0
        %3900 = vmatprep.subr.mxu0 0.0
        %3901 = vmatpush1.msra.mxu0 0.0
        %3902 = vmatprep.subr.mxu0 0.0
        %3903 = vmatpush1.msra.mxu0 0.0
        %3904 = vmatprep.subr.mxu0 0.0
        %3905 = vmatpush1.msra.mxu0 0.0
        %3906 = vmatprep.subr.mxu0 0.0
        %3907 = vmatpush1.msra.mxu0 0.0
        %3908 = vmatprep.subr.mxu0 0.0
        %3909 = vmatpush1.msra.mxu0 0.0
        %3910 = vmatprep.mubr.f32.mxu0 0.0
        %3911 = vmatmul.mubr.f32.gmra.mrb[0].mxu0 %v3746
        %v3912 = vpop.f32.mrb[0].mxu0
        %v3913 = vadd.f32 %v3731, %v3912
        %v3914 = vpop.f32.mrb[0].mxu0
        %v3915 = vadd.f32 %v3731, %v3914
        %3916 = vmatprep.mubr.f32.mxu0 0.0
        %3917 = vmatmul.mubr.f32.gmra.mrb[0].mxu0 %v3749
        %v3918 = vpop.f32.mrb[0].mxu0
        %v3919 = vadd.f32 %v3735, %v3918
        %v3920 = vpop.f32.mrb[0].mxu0
        %v3921 = vadd.f32 %v3735, %v3920
        %3922 = vmatprep.mubr.f32.mxu0 0.0
        %3923 = vmatmul.mubr.f32.gmra.mrb[0].mxu0 %v3752
        %v3924 = vpop.f32.mrb[0].mxu0
        %v3925 = vadd.f32 %v3739, %v3924
        %v3926 = vpop.f32.mrb[0].mxu0
        %v3927 = vadd.f32 %v3739, %v3926
        %3928 = vmatprep.mubr.f32.mxu0 0.0
        %3929 = vmatmul.mubr.f32.gmra.mrb[0].mxu0 %v3755
        %v3930 = vpop.f32.mrb[0].mxu0
        %v3931 = vadd.f32 %v3743, %v3930
        %v3932 = vpop.f32.mrb[0].mxu0
        %v3933 = vadd.f32 %v3743, %v3932
        %3934 = vdwg.mxu0
        %v3935 = vmax.f32 %v3824, 0.0
        %v3936 = vmax.f32 %v3826, 0.0
        %v3937 = vmax.f32 %v3913, 0.0
        %v3938 = vmax.f32 %v3915, 0.0
        %v3939 = vmax.f32 %v3830, 0.0
        %v3940 = vmax.f32 %v3832, 0.0
        %v3941 = vmax.f32 %v3919, 0.0
        %v3942 = vmax.f32 %v3921, 0.0
        %v3943 = vmax.f32 %v3836, 0.0
        %v3944 = vmax.f32 %v3838, 0.0
        %v3945 = vmax.f32 %v3925, 0.0
        %v3946 = vmax.f32 %v3927, 0.0
        %v3947 = vmax.f32 %v3842, 0.0
        %v3948 = vmax.f32 %v3844, 0.0
        %v3949 = vmax.f32 %v3931, 0.0
        %v3950 = vmax.f32 %v3933, 0.0
        %s3951 = scalar_lea.vmem %s3, 192
        %v3952 = vld [vmem:[%s3951] sm:$0xff]
        %v3953 = vld [vmem:[%s3951 + $0x8] sm:$0xff]
        %v3954 = vld [vmem:[%s3951 + $0x10] sm:$0xff]
        %v3955 = vld [vmem:[%s3951 + $0x18] sm:$0xff]
        %3956 = vset.pattern.permute.xlu0 7
        %3957 = vperm.xlu0 %3956, %v2343
        %v3958 = vpop.permute.xlu0 %3957
        %3960 = vset.pattern.permute.xlu0 7
        %3961 = vperm.xlu0 %3960, %v2344
        %v3962 = vpop.permute.xlu0 %3961
        %3964 = vset.pattern.permute.xlu0 7
        %3965 = vperm.xlu0 %3964, %v2345
        %v3966 = vpop.permute.xlu0 %3965
        %3968 = vset.pattern.permute.xlu0 7
        %3969 = vperm.xlu0 %3968, %v2346
        %v3970 = vpop.permute.xlu0 %3969
        %v3973 = vsel %vm2593, %v3952, 0
        %v3976 = vsel %vm2593, %v3953, 0
        %v3979 = vsel %vm2593, %v3954, 0
        %v3982 = vsel %vm2593, %v3955, 0
        %3984 = vmatprep.subr.mxu0 %v3936
        %3985 = vmatpush1.msra.mxu0 %v3935
        %3986 = vmatprep.subr.mxu0 %v3940
        %3987 = vmatpush1.msra.mxu0 %v3939
        %3988 = vmatprep.subr.mxu0 %v3944
        %3989 = vmatpush1.msra.mxu0 %v3943
        %3990 = vmatprep.subr.mxu0 %v3948
        %3991 = vmatpush1.msra.mxu0 %v3947
        %3992 = vmatprep.subr.mxu0 0.0
        %3993 = vmatpush1.msra.mxu0 0.0
        %3994 = vmatprep.subr.mxu0 0.0
        %3995 = vmatpush1.msra.mxu0 0.0
        %3996 = vmatprep.subr.mxu0 0.0
        %3997 = vmatpush1.msra.mxu0 0.0
        %3998 = vmatprep.subr.mxu0 0.0
        %3999 = vmatpush1.msra.mxu0 0.0
        %4000 = vmatprep.subr.mxu0 0.0
        %4001 = vmatpush1.msra.mxu0 0.0
        %4002 = vmatprep.subr.mxu0 0.0
        %4003 = vmatpush1.msra.mxu0 0.0
        %4004 = vmatprep.subr.mxu0 0.0
        %4005 = vmatpush1.msra.mxu0 0.0
        %4006 = vmatprep.subr.mxu0 0.0
        %4007 = vmatpush1.msra.mxu0 0.0
        %4008 = vmatprep.subr.mxu0 0.0
        %4009 = vmatpush1.msra.mxu0 0.0
        %4010 = vmatprep.subr.mxu0 0.0
        %4011 = vmatpush1.msra.mxu0 0.0
        %4012 = vmatprep.subr.mxu0 0.0
        %4013 = vmatpush1.msra.mxu0 0.0
        %4014 = vmatprep.subr.mxu0 0.0
        %4015 = vmatpush1.msra.mxu0 0.0
        %4016 = vmatprep.subr.mxu0 0.0
        %4017 = vmatpush1.msra.mxu0 0.0
        %4018 = vmatprep.subr.mxu0 0.0
        %4019 = vmatpush1.msra.mxu0 0.0
        %4020 = vmatprep.subr.mxu0 0.0
        %4021 = vmatpush1.msra.mxu0 0.0
        %4022 = vmatprep.subr.mxu0 0.0
        %4023 = vmatpush1.msra.mxu0 0.0
        %4024 = vmatprep.subr.mxu0 0.0
        %4025 = vmatpush1.msra.mxu0 0.0
        %4026 = vmatprep.subr.mxu0 0.0
        %4027 = vmatpush1.msra.mxu0 0.0
        %4028 = vmatprep.subr.mxu0 0.0
        %4029 = vmatpush1.msra.mxu0 0.0
        %4030 = vmatprep.subr.mxu0 0.0
        %4031 = vmatpush1.msra.mxu0 0.0
        %4032 = vmatprep.subr.mxu0 0.0
        %4033 = vmatpush1.msra.mxu0 0.0
        %4034 = vmatprep.subr.mxu0 0.0
        %4035 = vmatpush1.msra.mxu0 0.0
        %4036 = vmatprep.subr.mxu0 0.0
        %4037 = vmatpush1.msra.mxu0 0.0
        %4038 = vmatprep.subr.mxu0 0.0
        %4039 = vmatpush1.msra.mxu0 0.0
        %4040 = vmatprep.subr.mxu0 0.0
        %4041 = vmatpush1.msra.mxu0 0.0
        %4042 = vmatprep.subr.mxu0 0.0
        %4043 = vmatpush1.msra.mxu0 0.0
        %4044 = vmatprep.subr.mxu0 0.0
        %4045 = vmatpush1.msra.mxu0 0.0
        %4046 = vmatprep.subr.mxu0 0.0
        %4047 = vmatpush1.msra.mxu0 0.0
        %4048 = vmatprep.mubr.f32.mxu0 0.0
        %4049 = vmatmul.mubr.f32.gmra.mrb[0].mxu0 %v3973
        %v4050 = vpop.f32.mrb[0].mxu0
        %v4051 = vadd.f32 %v3958, %v4050
        %v4052 = vpop.f32.mrb[0].mxu0
        %v4053 = vadd.f32 %v3958, %v4052
        %4054 = vmatprep.mubr.f32.mxu0 0.0
        %4055 = vmatmul.mubr.f32.gmra.mrb[0].mxu0 %v3976
        %v4056 = vpop.f32.mrb[0].mxu0
        %v4057 = vadd.f32 %v3962, %v4056
        %v4058 = vpop.f32.mrb[0].mxu0
        %v4059 = vadd.f32 %v3962, %v4058
        %4060 = vmatprep.mubr.f32.mxu0 0.0
        %4061 = vmatmul.mubr.f32.gmra.mrb[0].mxu0 %v3979
        %v4062 = vpop.f32.mrb[0].mxu0
        %v4063 = vadd.f32 %v3966, %v4062
        %v4064 = vpop.f32.mrb[0].mxu0
        %v4065 = vadd.f32 %v3966, %v4064
        %4066 = vmatprep.mubr.f32.mxu0 0.0
        %4067 = vmatmul.mubr.f32.gmra.mrb[0].mxu0 %v3982
        %v4068 = vpop.f32.mrb[0].mxu0
        %v4069 = vadd.f32 %v3970, %v4068
        %v4070 = vpop.f32.mrb[0].mxu0
        %v4071 = vadd.f32 %v3970, %v4070
        %4072 = vdwg.mxu0
        %4073 = vmatprep.subr.mxu0 %v3938
        %4074 = vmatpush1.msra.mxu0 %v3937
        %4075 = vmatprep.subr.mxu0 %v3942
        %4076 = vmatpush1.msra.mxu0 %v3941
        %4077 = vmatprep.subr.mxu0 %v3946
        %4078 = vmatpush1.msra.mxu0 %v3945
        %4079 = vmatprep.subr.mxu0 %v3950
        %4080 = vmatpush1.msra.mxu0 %v3949
        %4081 = vmatprep.subr.mxu0 0.0
        %4082 = vmatpush1.msra.mxu0 0.0
        %4083 = vmatprep.subr.mxu0 0.0
        %4084 = vmatpush1.msra.mxu0 0.0
        %4085 = vmatprep.subr.mxu0 0.0
        %4086 = vmatpush1.msra.mxu0 0.0
        %4087 = vmatprep.subr.mxu0 0.0
        %4088 = vmatpush1.msra.mxu0 0.0
        %4089 = vmatprep.subr.mxu0 0.0
        %4090 = vmatpush1.msra.mxu0 0.0
        %4091 = vmatprep.subr.mxu0 0.0
        %4092 = vmatpush1.msra.mxu0 0.0
        %4093 = vmatprep.subr.mxu0 0.0
        %4094 = vmatpush1.msra.mxu0 0.0
        %4095 = vmatprep.subr.mxu0 0.0
        %4096 = vmatpush1.msra.mxu0 0.0
        %4097 = vmatprep.subr.mxu0 0.0
        %4098 = vmatpush1.msra.mxu0 0.0
        %4099 = vmatprep.subr.mxu0 0.0
        %4100 = vmatpush1.msra.mxu0 0.0
        %4101 = vmatprep.subr.mxu0 0.0
        %4102 = vmatpush1.msra.mxu0 0.0
        %4103 = vmatprep.subr.mxu0 0.0
        %4104 = vmatpush1.msra.mxu0 0.0
        %4105 = vmatprep.subr.mxu0 0.0
        %4106 = vmatpush1.msra.mxu0 0.0
        %4107 = vmatprep.subr.mxu0 0.0
        %4108 = vmatpush1.msra.mxu0 0.0
        %4109 = vmatprep.subr.mxu0 0.0
        %4110 = vmatpush1.msra.mxu0 0.0
        %4111 = vmatprep.subr.mxu0 0.0
        %4112 = vmatpush1.msra.mxu0 0.0
        %4113 = vmatprep.subr.mxu0 0.0
        %4114 = vmatpush1.msra.mxu0 0.0
        %4115 = vmatprep.subr.mxu0 0.0
        %4116 = vmatpush1.msra.mxu0 0.0
        %4117 = vmatprep.subr.mxu0 0.0
        %4118 = vmatpush1.msra.mxu0 0.0
        %4119 = vmatprep.subr.mxu0 0.0
        %4120 = vmatpush1.msra.mxu0 0.0
        %4121 = vmatprep.subr.mxu0 0.0
        %4122 = vmatpush1.msra.mxu0 0.0
        %4123 = vmatprep.subr.mxu0 0.0
        %4124 = vmatpush1.msra.mxu0 0.0
        %4125 = vmatprep.subr.mxu0 0.0
        %4126 = vmatpush1.msra.mxu0 0.0
        %4127 = vmatprep.subr.mxu0 0.0
        %4128 = vmatpush1.msra.mxu0 0.0
        %4129 = vmatprep.subr.mxu0 0.0
        %4130 = vmatpush1.msra.mxu0 0.0
        %4131 = vmatprep.subr.mxu0 0.0
        %4132 = vmatpush1.msra.mxu0 0.0
        %4133 = vmatprep.subr.mxu0 0.0
        %4134 = vmatpush1.msra.mxu0 0.0
        %4135 = vmatprep.subr.mxu0 0.0
        %4136 = vmatpush1.msra.mxu0 0.0
        %4137 = vmatprep.mubr.f32.mxu0 0.0
        %4138 = vmatmul.mubr.f32.gmra.mrb[0].mxu0 %v3973
        %v4139 = vpop.f32.mrb[0].mxu0
        %v4140 = vadd.f32 %v3958, %v4139
        %v4141 = vpop.f32.mrb[0].mxu0
        %v4142 = vadd.f32 %v3958, %v4141
        %4143 = vmatprep.mubr.f32.mxu0 0.0
        %4144 = vmatmul.mubr.f32.gmra.mrb[0].mxu0 %v3976
        %v4145 = vpop.f32.mrb[0].mxu0
        %v4146 = vadd.f32 %v3962, %v4145
        %v4147 = vpop.f32.mrb[0].mxu0
        %v4148 = vadd.f32 %v3962, %v4147
        %4149 = vmatprep.mubr.f32.mxu0 0.0
        %4150 = vmatmul.mubr.f32.gmra.mrb[0].mxu0 %v3979
        %v4151 = vpop.f32.mrb[0].mxu0
        %v4152 = vadd.f32 %v3966, %v4151
        %v4153 = vpop.f32.mrb[0].mxu0
        %v4154 = vadd.f32 %v3966, %v4153
        %4155 = vmatprep.mubr.f32.mxu0 0.0
        %4156 = vmatmul.mubr.f32.gmra.mrb[0].mxu0 %v3982
        %v4157 = vpop.f32.mrb[0].mxu0
        %v4158 = vadd.f32 %v3970, %v4157
        %v4159 = vpop.f32.mrb[0].mxu0
        %v4160 = vadd.f32 %v3970, %v4159
        %4161 = vdwg.mxu0
        %v4162 = vmax.f32 %v4051, 0.0
        %v4163 = vmax.f32 %v4053, 0.0
        %v4164 = vmax.f32 %v4140, 0.0
        %v4165 = vmax.f32 %v4142, 0.0
        %v4166 = vmax.f32 %v4057, 0.0
        %v4167 = vmax.f32 %v4059, 0.0
        %v4168 = vmax.f32 %v4146, 0.0
        %v4169 = vmax.f32 %v4148, 0.0
        %v4170 = vmax.f32 %v4063, 0.0
        %v4171 = vmax.f32 %v4065, 0.0
        %v4172 = vmax.f32 %v4152, 0.0
        %v4173 = vmax.f32 %v4154, 0.0
        %v4174 = vmax.f32 %v4069, 0.0
        %v4175 = vmax.f32 %v4071, 0.0
        %v4176 = vmax.f32 %v4158, 0.0
        %v4177 = vmax.f32 %v4160, 0.0
        %v4178 = vld [vmem:[%s5] sm:$0x7]
        %v4179 = vld [vmem:[%s6] sm:$0x7]
        %4181 = vset.pattern.permute.xlu0 0
        %4182 = vperm.xlu0 %4181, %v4179
        %v4183 = vpop.permute.xlu0 %4182
        %v4186 = vsel %vm2593, %v4178, 0
        %4188 = vmatprep.subr.mxu0 %v4163
        %4189 = vmatpush1.msra.mxu0 %v4162
        %4190 = vmatprep.subr.mxu0 %v4167
        %4191 = vmatpush1.msra.mxu0 %v4166
        %4192 = vmatprep.subr.mxu0 %v4171
        %4193 = vmatpush1.msra.mxu0 %v4170
        %4194 = vmatprep.subr.mxu0 %v4175
        %4195 = vmatpush1.msra.mxu0 %v4174
        %4196 = vmatprep.subr.mxu0 0.0
        %4197 = vmatpush1.msra.mxu0 0.0
        %4198 = vmatprep.subr.mxu0 0.0
        %4199 = vmatpush1.msra.mxu0 0.0
        %4200 = vmatprep.subr.mxu0 0.0
        %4201 = vmatpush1.msra.mxu0 0.0
        %4202 = vmatprep.subr.mxu0 0.0
        %4203 = vmatpush1.msra.mxu0 0.0
        %4204 = vmatprep.subr.mxu0 0.0
        %4205 = vmatpush1.msra.mxu0 0.0
        %4206 = vmatprep.subr.mxu0 0.0
        %4207 = vmatpush1.msra.mxu0 0.0
        %4208 = vmatprep.subr.mxu0 0.0
        %4209 = vmatpush1.msra.mxu0 0.0
        %4210 = vmatprep.subr.mxu0 0.0
        %4211 = vmatpush1.msra.mxu0 0.0
        %4212 = vmatprep.subr.mxu0 0.0
        %4213 = vmatpush1.msra.mxu0 0.0
        %4214 = vmatprep.subr.mxu0 0.0
        %4215 = vmatpush1.msra.mxu0 0.0
        %4216 = vmatprep.subr.mxu0 0.0
        %4217 = vmatpush1.msra.mxu0 0.0
        %4218 = vmatprep.subr.mxu0 0.0
        %4219 = vmatpush1.msra.mxu0 0.0
        %4220 = vmatprep.subr.mxu0 0.0
        %4221 = vmatpush1.msra.mxu0 0.0
        %4222 = vmatprep.subr.mxu0 0.0
        %4223 = vmatpush1.msra.mxu0 0.0
        %4224 = vmatprep.subr.mxu0 0.0
        %4225 = vmatpush1.msra.mxu0 0.0
        %4226 = vmatprep.subr.mxu0 0.0
        %4227 = vmatpush1.msra.mxu0 0.0
        %4228 = vmatprep.subr.mxu0 0.0
        %4229 = vmatpush1.msra.mxu0 0.0
        %4230 = vmatprep.subr.mxu0 0.0
        %4231 = vmatpush1.msra.mxu0 0.0
        %4232 = vmatprep.subr.mxu0 0.0
        %4233 = vmatpush1.msra.mxu0 0.0
        %4234 = vmatprep.subr.mxu0 0.0
        %4235 = vmatpush1.msra.mxu0 0.0
        %4236 = vmatprep.subr.mxu0 0.0
        %4237 = vmatpush1.msra.mxu0 0.0
        %4238 = vmatprep.subr.mxu0 0.0
        %4239 = vmatpush1.msra.mxu0 0.0
        %4240 = vmatprep.subr.mxu0 0.0
        %4241 = vmatpush1.msra.mxu0 0.0
        %4242 = vmatprep.subr.mxu0 0.0
        %4243 = vmatpush1.msra.mxu0 0.0
        %4244 = vmatprep.subr.mxu0 0.0
        %4245 = vmatpush1.msra.mxu0 0.0
        %4246 = vmatprep.subr.mxu0 0.0
        %4247 = vmatpush1.msra.mxu0 0.0
        %4248 = vmatprep.subr.mxu0 0.0
        %4249 = vmatpush1.msra.mxu0 0.0
        %4250 = vmatprep.subr.mxu0 0.0
        %4251 = vmatpush1.msra.mxu0 0.0
        %4252 = vmatprep.mubr.f32.mxu0 0.0
        %4253 = vmatmul.mubr.f32.gmra.mrb[0].mxu0 %v4186
        %v4254 = vpop.f32.mrb[0].mxu0
        %v4255 = vadd.f32 %v4183, %v4254
        %v4256 = vpop.f32.mrb[0].mxu0
        %v4257 = vadd.f32 %v4183, %v4256
        %4258 = vdwg.mxu0
        %4259 = vmatprep.subr.mxu0 %v4165
        %4260 = vmatpush1.msra.mxu0 %v4164
        %4261 = vmatprep.subr.mxu0 %v4169
        %4262 = vmatpush1.msra.mxu0 %v4168
        %4263 = vmatprep.subr.mxu0 %v4173
        %4264 = vmatpush1.msra.mxu0 %v4172
        %4265 = vmatprep.subr.mxu0 %v4177
        %4266 = vmatpush1.msra.mxu0 %v4176
        %4267 = vmatprep.subr.mxu0 0.0
        %4268 = vmatpush1.msra.mxu0 0.0
        %4269 = vmatprep.subr.mxu0 0.0
        %4270 = vmatpush1.msra.mxu0 0.0
        %4271 = vmatprep.subr.mxu0 0.0
        %4272 = vmatpush1.msra.mxu0 0.0
        %4273 = vmatprep.subr.mxu0 0.0
        %4274 = vmatpush1.msra.mxu0 0.0
        %4275 = vmatprep.subr.mxu0 0.0
        %4276 = vmatpush1.msra.mxu0 0.0
        %4277 = vmatprep.subr.mxu0 0.0
        %4278 = vmatpush1.msra.mxu0 0.0
        %4279 = vmatprep.subr.mxu0 0.0
        %4280 = vmatpush1.msra.mxu0 0.0
        %4281 = vmatprep.subr.mxu0 0.0
        %4282 = vmatpush1.msra.mxu0 0.0
        %4283 = vmatprep.subr.mxu0 0.0
        %4284 = vmatpush1.msra.mxu0 0.0
        %4285 = vmatprep.subr.mxu0 0.0
        %4286 = vmatpush1.msra.mxu0 0.0
        %4287 = vmatprep.subr.mxu0 0.0
        %4288 = vmatpush1.msra.mxu0 0.0
        %4289 = vmatprep.subr.mxu0 0.0
        %4290 = vmatpush1.msra.mxu0 0.0
        %4291 = vmatprep.subr.mxu0 0.0
        %4292 = vmatpush1.msra.mxu0 0.0
        %4293 = vmatprep.subr.mxu0 0.0
        %4294 = vmatpush1.msra.mxu0 0.0
        %4295 = vmatprep.subr.mxu0 0.0
        %4296 = vmatpush1.msra.mxu0 0.0
        %4297 = vmatprep.subr.mxu0 0.0
        %4298 = vmatpush1.msra.mxu0 0.0
        %4299 = vmatprep.subr.mxu0 0.0
        %4300 = vmatpush1.msra.mxu0 0.0
        %4301 = vmatprep.subr.mxu0 0.0
        %4302 = vmatpush1.msra.mxu0 0.0
        %4303 = vmatprep.subr.mxu0 0.0
        %4304 = vmatpush1.msra.mxu0 0.0
        %4305 = vmatprep.subr.mxu0 0.0
        %4306 = vmatpush1.msra.mxu0 0.0
        %4307 = vmatprep.subr.mxu0 0.0
        %4308 = vmatpush1.msra.mxu0 0.0
        %4309 = vmatprep.subr.mxu0 0.0
        %4310 = vmatpush1.msra.mxu0 0.0
        %4311 = vmatprep.subr.mxu0 0.0
        %4312 = vmatpush1.msra.mxu0 0.0
        %4313 = vmatprep.subr.mxu0 0.0
        %4314 = vmatpush1.msra.mxu0 0.0
        %4315 = vmatprep.subr.mxu0 0.0
        %4316 = vmatpush1.msra.mxu0 0.0
        %4317 = vmatprep.subr.mxu0 0.0
        %4318 = vmatpush1.msra.mxu0 0.0
        %4319 = vmatprep.subr.mxu0 0.0
        %4320 = vmatpush1.msra.mxu0 0.0
        %4321 = vmatprep.subr.mxu0 0.0
        %4322 = vmatpush1.msra.mxu0 0.0
        %4323 = vmatprep.mubr.f32.mxu0 0.0
        %4324 = vmatmul.mubr.f32.gmra.mrb[0].mxu0 %v4186
        %v4325 = vpop.f32.mrb[0].mxu0
        %v4326 = vadd.f32 %v4183, %v4325
        %v4327 = vpop.f32.mrb[0].mxu0
        %v4328 = vadd.f32 %v4183, %v4327
        %4329 = vdwg.mxu0
        %v4330 = vxor.u32 %v4255, 2147483648
        %v4331 = vxor.u32 %v4257, 2147483648
        %v4332 = vxor.u32 %v4326, 2147483648
        %v4333 = vxor.u32 %v4328, 2147483648
        %v4334 = vmul.f32 %v4330, 1.442695
        %v4335 = vpow.pop %v4334
        %v4336 = vmul.f32 %v4331, 1.442695
        %v4337 = vpow.pop %v4336
        %v4338 = vmul.f32 %v4332, 1.442695
        %v4339 = vpow.pop %v4338
        %v4340 = vmul.f32 %v4333, 1.442695
        %v4341 = vpow.pop %v4340
        %v4342 = vadd.f32 %v4335, 1.0
        %v4343 = vadd.f32 %v4337, 1.0
        %v4344 = vadd.f32 %v4339, 1.0
        %v4345 = vadd.f32 %v4341, 1.0
        %v4346 = vrcp.pop %v4342
        %v4347 = vmul.f32 1.0, %v4346
        %v4348 = vrcp.pop %v4343
        %v4349 = vmul.f32 1.0, %v4348
        %v4350 = vrcp.pop %v4344
        %v4351 = vmul.f32 1.0, %v4350
        %v4352 = vrcp.pop %v4345
        %v4353 = vmul.f32 1.0, %v4352
        %v4358 = vcombine.low %v4347, %v4349
        %v4359 = vcombine.low %v4351, %v4353
        %4362 = vst [vmem:[%s272] sm:$0x77] %v4358
        %4363 = vst [vmem:[%s272 + $0x8] sm:$0x77] %v4359
        %s4364 = scalar_lea.vmem %s277, 32
        %v4365 = vld [vmem:[%s4364] sm:$0xff]
        %v4366 = vld [vmem:[%s4364 + $0x8] sm:$0xff]
        %v4367 = vld [vmem:[%s4364 + $0x10] sm:$0xff]
        %v4368 = vld [vmem:[%s4364 + $0x18] sm:$0xff]
        %v4369 = vld [vmem:[%s1] sm:$0xff]
        %v4370 = vld [vmem:[%s1 + $0x8] sm:$0xff]
        %v4372 = vsel %vm286, %v4369, 0
        %v4375 = vsel %vm286, %v4370, 0
        %4377 = vmatprep.subr.mxu0 %v4366
        %4378 = vmatpush1.msra.mxu0 %v4365
        %4379 = vmatprep.subr.mxu0 0.0
        %4380 = vmatpush1.msra.mxu0 0.0
        %4381 = vmatprep.subr.mxu0 0.0
        %4382 = vmatpush1.msra.mxu0 0.0
        %4383 = vmatprep.subr.mxu0 0.0
        %4384 = vmatpush1.msra.mxu0 0.0
        %4385 = vmatprep.subr.mxu0 0.0
        %4386 = vmatpush1.msra.mxu0 0.0
        %4387 = vmatprep.subr.mxu0 0.0
        %4388 = vmatpush1.msra.mxu0 0.0
        %4389 = vmatprep.subr.mxu0 0.0
        %4390 = vmatpush1.msra.mxu0 0.0
        %4391 = vmatprep.subr.mxu0 0.0
        %4392 = vmatpush1.msra.mxu0 0.0
        %4393 = vmatprep.subr.mxu0 0.0
        %4394 = vmatpush1.msra.mxu0 0.0
        %4395 = vmatprep.subr.mxu0 0.0
        %4396 = vmatpush1.msra.mxu0 0.0
        %4397 = vmatprep.subr.mxu0 0.0
        %4398 = vmatpush1.msra.mxu0 0.0
        %4399 = vmatprep.subr.mxu0 0.0
        %4400 = vmatpush1.msra.mxu0 0.0
        %4401 = vmatprep.subr.mxu0 0.0
        %4402 = vmatpush1.msra.mxu0 0.0
        %4403 = vmatprep.subr.mxu0 0.0
        %4404 = vmatpush1.msra.mxu0 0.0
        %4405 = vmatprep.subr.mxu0 0.0
        %4406 = vmatpush1.msra.mxu0 0.0
        %4407 = vmatprep.subr.mxu0 0.0
        %4408 = vmatpush1.msra.mxu0 0.0
        %4409 = vmatprep.subr.mxu0 0.0
        %4410 = vmatpush1.msra.mxu0 0.0
        %4411 = vmatprep.subr.mxu0 0.0
        %4412 = vmatpush1.msra.mxu0 0.0
        %4413 = vmatprep.subr.mxu0 0.0
        %4414 = vmatpush1.msra.mxu0 0.0
        %4415 = vmatprep.subr.mxu0 0.0
        %4416 = vmatpush1.msra.mxu0 0.0
        %4417 = vmatprep.subr.mxu0 0.0
        %4418 = vmatpush1.msra.mxu0 0.0
        %4419 = vmatprep.subr.mxu0 0.0
        %4420 = vmatpush1.msra.mxu0 0.0
        %4421 = vmatprep.subr.mxu0 0.0
        %4422 = vmatpush1.msra.mxu0 0.0
        %4423 = vmatprep.subr.mxu0 0.0
        %4424 = vmatpush1.msra.mxu0 0.0
        %4425 = vmatprep.subr.mxu0 0.0
        %4426 = vmatpush1.msra.mxu0 0.0
        %4427 = vmatprep.subr.mxu0 0.0
        %4428 = vmatpush1.msra.mxu0 0.0
        %4429 = vmatprep.subr.mxu0 0.0
        %4430 = vmatpush1.msra.mxu0 0.0
        %4431 = vmatprep.subr.mxu0 0.0
        %4432 = vmatpush1.msra.mxu0 0.0
        %4433 = vmatprep.subr.mxu0 0.0
        %4434 = vmatpush1.msra.mxu0 0.0
        %4435 = vmatprep.subr.mxu0 0.0
        %4436 = vmatpush1.msra.mxu0 0.0
        %4437 = vmatprep.subr.mxu0 0.0
        %4438 = vmatpush1.msra.mxu0 0.0
        %4439 = vmatprep.subr.mxu0 0.0
        %4440 = vmatpush1.msra.mxu0 0.0
        %4441 = vmatprep.mubr.f32.mxu0 0.0
        %4442 = vmatmul.mubr.f32.gmra.mrb[0].mxu0 %v4372
        %v4443 = vpop.f32.mrb[0].mxu0
        %v4444 = vadd.f32 0.0, %v4443
        %v4445 = vpop.f32.mrb[0].mxu0
        %v4446 = vadd.f32 0.0, %v4445
        %4447 = vmatprep.mubr.f32.mxu0 0.0
        %4448 = vmatmul.mubr.f32.gmra.mrb[0].mxu0 %v4375
        %v4449 = vpop.f32.mrb[0].mxu0
        %v4450 = vadd.f32 0.0, %v4449
        %v4451 = vpop.f32.mrb[0].mxu0
        %v4452 = vadd.f32 0.0, %v4451
        %4453 = vdwg.mxu0
        %4454 = vmatprep.subr.mxu0 %v4368
        %4455 = vmatpush1.msra.mxu0 %v4367
        %4456 = vmatprep.subr.mxu0 0.0
        %4457 = vmatpush1.msra.mxu0 0.0
        %4458 = vmatprep.subr.mxu0 0.0
        %4459 = vmatpush1.msra.mxu0 0.0
        %4460 = vmatprep.subr.mxu0 0.0
        %4461 = vmatpush1.msra.mxu0 0.0
        %4462 = vmatprep.subr.mxu0 0.0
        %4463 = vmatpush1.msra.mxu0 0.0
        %4464 = vmatprep.subr.mxu0 0.0
        %4465 = vmatpush1.msra.mxu0 0.0
        %4466 = vmatprep.subr.mxu0 0.0
        %4467 = vmatpush1.msra.mxu0 0.0
        %4468 = vmatprep.subr.mxu0 0.0
        %4469 = vmatpush1.msra.mxu0 0.0
        %4470 = vmatprep.subr.mxu0 0.0
        %4471 = vmatpush1.msra.mxu0 0.0
        %4472 = vmatprep.subr.mxu0 0.0
        %4473 = vmatpush1.msra.mxu0 0.0
        %4474 = vmatprep.subr.mxu0 0.0
        %4475 = vmatpush1.msra.mxu0 0.0
        %4476 = vmatprep.subr.mxu0 0.0
        %4477 = vmatpush1.msra.mxu0 0.0
        %4478 = vmatprep.subr.mxu0 0.0
        %4479 = vmatpush1.msra.mxu0 0.0
        %4480 = vmatprep.subr.mxu0 0.0
        %4481 = vmatpush1.msra.mxu0 0.0
        %4482 = vmatprep.subr.mxu0 0.0
        %4483 = vmatpush1.msra.mxu0 0.0
        %4484 = vmatprep.subr.mxu0 0.0
        %4485 = vmatpush1.msra.mxu0 0.0
        %4486 = vmatprep.subr.mxu0 0.0
        %4487 = vmatpush1.msra.mxu0 0.0
        %4488 = vmatprep.subr.mxu0 0.0
        %4489 = vmatpush1.msra.mxu0 0.0
        %4490 = vmatprep.subr.mxu0 0.0
        %4491 = vmatpush1.msra.mxu0 0.0
        %4492 = vmatprep.subr.mxu0 0.0
        %4493 = vmatpush1.msra.mxu0 0.0
        %4494 = vmatprep.subr.mxu0 0.0
        %4495 = vmatpush1.msra.mxu0 0.0
        %4496 = vmatprep.subr.mxu0 0.0
        %4497 = vmatpush1.msra.mxu0 0.0
        %4498 = vmatprep.subr.mxu0 0.0
        %4499 = vmatpush1.msra.mxu0 0.0
        %4500 = vmatprep.subr.mxu0 0.0
        %4501 = vmatpush1.msra.mxu0 0.0
        %4502 = vmatprep.subr.mxu0 0.0
        %4503 = vmatpush1.msra.mxu0 0.0
        %4504 = vmatprep.subr.mxu0 0.0
        %4505 = vmatpush1.msra.mxu0 0.0
        %4506 = vmatprep.subr.mxu0 0.0
        %4507 = vmatpush1.msra.mxu0 0.0
        %4508 = vmatprep.subr.mxu0 0.0
        %4509 = vmatpush1.msra.mxu0 0.0
        %4510 = vmatprep.subr.mxu0 0.0
        %4511 = vmatpush1.msra.mxu0 0.0
        %4512 = vmatprep.subr.mxu0 0.0
        %4513 = vmatpush1.msra.mxu0 0.0
        %4514 = vmatprep.subr.mxu0 0.0
        %4515 = vmatpush1.msra.mxu0 0.0
        %4516 = vmatprep.subr.mxu0 0.0
        %4517 = vmatpush1.msra.mxu0 0.0
        %4518 = vmatprep.mubr.f32.mxu0 0.0
        %4519 = vmatmul.mubr.f32.gmra.mrb[0].mxu0 %v4372
        %v4520 = vpop.f32.mrb[0].mxu0
        %v4521 = vadd.f32 0.0, %v4520
        %v4522 = vpop.f32.mrb[0].mxu0
        %v4523 = vadd.f32 0.0, %v4522
        %4524 = vmatprep.mubr.f32.mxu0 0.0
        %4525 = vmatmul.mubr.f32.gmra.mrb[0].mxu0 %v4375
        %v4526 = vpop.f32.mrb[0].mxu0
        %v4527 = vadd.f32 0.0, %v4526
        %v4528 = vpop.f32.mrb[0].mxu0
        %v4529 = vadd.f32 0.0, %v4528
        %4530 = vdwg.mxu0
        %4531 = vst [vmem:[#allocation2] sm:$0xff] %v4365
        %4532 = vst [vmem:[#allocation2 + $0x8] sm:$0xff] %v4366
        %4533 = vst [vmem:[#allocation2 + $0x10] sm:$0xff] %v4367
        %4534 = vst [vmem:[#allocation2 + $0x18] sm:$0xff] %v4368
        %v4535 = vand.u32 2147483647, %v4444
        %vm4536 = vcmp.le.f32.partialorder %v4535, 0.7853982
        %vm4537 = vcmp.lt.s32.totalorder %v4444, 0
        %v4538 = vand.u32 %v4444, 2139095040
        %v4539 = vshrl.u32 %v4538, 23
        %v4540 = vsub.s32 %v4539, 127
        %v4541 = vand.u32 2147483647, %v4444
        %v4542 = vand.u32 %v4541, 8388607
        %v4543 = vor.u32 %v4542, 8388608
        %v4544 = vsub.s32 0, %v4543
        %v4545 = vadd.s32 %v4540, 1
        %vm4546 = vcmp.gt.s32.totalorder %v4545, 0
        %v4547 = vsel %vm4546, %v4545, 0
        %v4548 = vshrl.u32 %v4547, 5
        %v4549 = vand.u32 %v4547, 31
        %v4550 = vsub.s32 32, %v4549
        %v4551 = vshrl.u32 683565275, %v4550
        %v4552 = vshll.u32 683565275, %v4549
        %v4553 = vshrl.u32 2475754826, %v4550
        %v4554 = vor.u32 %v4552, %v4553
        %v4555 = vshll.u32 2475754826, %v4549
        %v4556 = vshrl.u32 2131351028, %v4550
        %v4557 = vor.u32 %v4555, %v4556
        %v4558 = vshll.u32 2131351028, %v4549
        %v4559 = vshrl.u32 2102212464, %v4550
        %v4560 = vor.u32 %v4558, %v4559
        %v4561 = vshll.u32 2102212464, %v4549
        %v4562 = vshrl.u32 920167782, %v4550
        %v4563 = vor.u32 %v4561, %v4562
        %v4564 = vshll.u32 920167782, %v4549
        %v4565 = vshrl.u32 1326507024, %v4550
        %v4566 = vor.u32 %v4564, %v4565
        %vm4567 = vcmp.lt.s32.totalorder %v4548, 1
        %vm4568 = vcmp.lt.s32.totalorder %v4548, 2
        %vm4569 = vcmp.lt.s32.totalorder %v4548, 3
        %vm4570 = vcmp.lt.s32.totalorder %v4548, 4
        %v4571 = vsel %vm4567, %v4551, %v4554
        %v4572 = vsel %vm4570, %v4560, 2102212464
        %v4573 = vsel %vm4569, %v4557, %v4572
        %v4574 = vsel %vm4568, %v4571, %v4573
        %v4575 = vsel %vm4567, %v4554, %v4557
        %v4576 = vsel %vm4570, %v4563, 920167782
        %v4577 = vsel %vm4569, %v4560, %v4576
        %v4578 = vsel %vm4568, %v4575, %v4577
        %v4579 = vsel %vm4567, %v4557, %v4560
        %v4580 = vsel %vm4570, %v4566, 1326507024
        %v4581 = vsel %vm4569, %v4563, %v4580
        %v4582 = vsel %vm4568, %v4579, %v4581
        %v4583 = vshll.u32 %v4543, 8
        %v4584 = vmul.u32.u64.compose %v4583, %v4582
        %v4585 = vextract.low.u32 %v4584
        %v4586 = vextract.high.u32 %v4584
        %v4587 = vmul.u32.u64.compose %v4583, %v4578
        %v4588 = vextract.low.u32 %v4587
        %v4589 = vextract.high.u32 %v4587
        %v4590 = vmul.u32 %v4583, %v4574
        %v4591 = vadd.s32 %v4586, %v4588
        %vm4592 = vc.u32 %v4586, %v4588
        %v4593 = vadd.s32 %v4589, 1
        %v4594 = vsel %vm4592, %v4593, %v4589
        %v4595 = vadd.s32 %v4590, %v4594
        %v4596 = vadd.s32 %v4595, 536870912
        %v4597 = vshrl.u32 %v4596, 30
        %v4598 = vshll.u32 %v4597, 30
        %v4599 = vsub.s32 %v4595, %v4598
        %vm4600 = vcmp.lt.s32.totalorder %v4599, 0
        %v4601 = vsub.s32 0, %v4599
        %v4602 = vsel %vm4600, %v4601, %v4599
        %v4603 = vclz %v4602
        %v4604 = vsub.s32 %v4603, 2
        %vm4605 = vcmp.gt.s32.totalorder 0, %v4604
        %v4606 = vsel %vm4605, 0, %v4604
        %v4607 = vsub.s32 32, %v4606
        %v4608 = vshll.u32 %v4599, %v4606
        %v4609 = vshrl.u32 %v4591, %v4607
        %v4610 = vor.u32 %v4608, %v4609
        %v4611 = vsub.s32 4294967266, %v4606
        %v4612 = vadd.s32 %v4611, 127
        %v4613 = vshll.u32 %v4612, 23
        %v4614 = vor.u32 4788187, %v4613
        %v4615 = vand.u32 2147483647, %v4614
        %v4617 = vcvt.s32.f32 %v4610
        %v4618 = vmul.f32 %v4617, %v4615
        %v4619 = vxor.u32 %v4618, 2147483648
        %v4620 = vsel %vm4537, %v4619, %v4618
        %v4621 = vsub.s32 4, %v4597
        %v4622 = vsel %vm4537, %v4621, %v4597
        %v4623 = vsel %vm4536, %v4444, %v4620
        %v4624 = vsel %vm4536, 0, %v4622
        %v4625 = vcosq.f32.pop %v4623
        %v4626 = vsinq.f32.pop %v4623
        %vm4627 = vweird.f32 %v4444
        %v4628 = vadd.s32 %v4624, 3
        %v4629 = vand.u32 %v4628, 3
        %vm4630 = vcmp.lt.s32.totalorder %v4629, 2
        %vm4631 = vcmp.eq.s32.totalorder %v4629, 0
        %v4632 = vxor.u32 %v4626, 2147483648
        %v4633 = vsel %vm4631, %v4625, %v4632
        %vm4634 = vcmp.eq.s32.totalorder %v4629, 2
        %v4635 = vxor.u32 %v4625, 2147483648
        %v4636 = vsel %vm4634, %v4635, %v4626
        %v4637 = vsel %vm4630, %v4633, %v4636
        %v4638 = vsel %vm4627, nan, %v4637
        %v4639 = vand.u32 2147483647, %v4446
        %vm4640 = vcmp.le.f32.partialorder %v4639, 0.7853982
        %vm4641 = vcmp.lt.s32.totalorder %v4446, 0
        %v4642 = vand.u32 %v4446, 2139095040
        %v4643 = vshrl.u32 %v4642, 23
        %v4644 = vsub.s32 %v4643, 127
        %v4645 = vand.u32 2147483647, %v4446
        %v4646 = vand.u32 %v4645, 8388607
        %v4647 = vor.u32 %v4646, 8388608
        %v4648 = vsub.s32 0, %v4647
        %v4649 = vadd.s32 %v4644, 1
        %vm4650 = vcmp.gt.s32.totalorder %v4649, 0
        %v4651 = vsel %vm4650, %v4649, 0
        %v4652 = vshrl.u32 %v4651, 5
        %v4653 = vand.u32 %v4651, 31
        %v4654 = vsub.s32 32, %v4653
        %v4655 = vshrl.u32 683565275, %v4654
        %v4656 = vshll.u32 683565275, %v4653
        %v4657 = vshrl.u32 2475754826, %v4654
        %v4658 = vor.u32 %v4656, %v4657
        %v4659 = vshll.u32 2475754826, %v4653
        %v4660 = vshrl.u32 2131351028, %v4654
        %v4661 = vor.u32 %v4659, %v4660
        %v4662 = vshll.u32 2131351028, %v4653
        %v4663 = vshrl.u32 2102212464, %v4654
        %v4664 = vor.u32 %v4662, %v4663
        %v4665 = vshll.u32 2102212464, %v4653
        %v4666 = vshrl.u32 920167782, %v4654
        %v4667 = vor.u32 %v4665, %v4666
        %v4668 = vshll.u32 920167782, %v4653
        %v4669 = vshrl.u32 1326507024, %v4654
        %v4670 = vor.u32 %v4668, %v4669
        %vm4671 = vcmp.lt.s32.totalorder %v4652, 1
        %vm4672 = vcmp.lt.s32.totalorder %v4652, 2
        %vm4673 = vcmp.lt.s32.totalorder %v4652, 3
        %vm4674 = vcmp.lt.s32.totalorder %v4652, 4
        %v4675 = vsel %vm4671, %v4655, %v4658
        %v4676 = vsel %vm4674, %v4664, 2102212464
        %v4677 = vsel %vm4673, %v4661, %v4676
        %v4678 = vsel %vm4672, %v4675, %v4677
        %v4679 = vsel %vm4671, %v4658, %v4661
        %v4680 = vsel %vm4674, %v4667, 920167782
        %v4681 = vsel %vm4673, %v4664, %v4680
        %v4682 = vsel %vm4672, %v4679, %v4681
        %v4683 = vsel %vm4671, %v4661, %v4664
        %v4684 = vsel %vm4674, %v4670, 1326507024
        %v4685 = vsel %vm4673, %v4667, %v4684
        %v4686 = vsel %vm4672, %v4683, %v4685
        %v4687 = vshll.u32 %v4647, 8
        %v4688 = vmul.u32.u64.compose %v4687, %v4686
        %v4689 = vextract.low.u32 %v4688
        %v4690 = vextract.high.u32 %v4688
        %v4691 = vmul.u32.u64.compose %v4687, %v4682
        %v4692 = vextract.low.u32 %v4691
        %v4693 = vextract.high.u32 %v4691
        %v4694 = vmul.u32 %v4687, %v4678
        %v4695 = vadd.s32 %v4690, %v4692
        %vm4696 = vc.u32 %v4690, %v4692
        %v4697 = vadd.s32 %v4693, 1
        %v4698 = vsel %vm4696, %v4697, %v4693
        %v4699 = vadd.s32 %v4694, %v4698
        %v4700 = vadd.s32 %v4699, 536870912
        %v4701 = vshrl.u32 %v4700, 30
        %v4702 = vshll.u32 %v4701, 30
        %v4703 = vsub.s32 %v4699, %v4702
        %vm4704 = vcmp.lt.s32.totalorder %v4703, 0
        %v4705 = vsub.s32 0, %v4703
        %v4706 = vsel %vm4704, %v4705, %v4703
        %v4707 = vclz %v4706
        %v4708 = vsub.s32 %v4707, 2
        %vm4709 = vcmp.gt.s32.totalorder 0, %v4708
        %v4710 = vsel %vm4709, 0, %v4708
        %v4711 = vsub.s32 32, %v4710
        %v4712 = vshll.u32 %v4703, %v4710
        %v4713 = vshrl.u32 %v4695, %v4711
        %v4714 = vor.u32 %v4712, %v4713
        %v4715 = vsub.s32 4294967266, %v4710
        %v4716 = vadd.s32 %v4715, 127
        %v4717 = vshll.u32 %v4716, 23
        %v4718 = vor.u32 4788187, %v4717
        %v4719 = vand.u32 2147483647, %v4718
        %v4721 = vcvt.s32.f32 %v4714
        %v4722 = vmul.f32 %v4721, %v4719
        %v4723 = vxor.u32 %v4722, 2147483648
        %v4724 = vsel %vm4641, %v4723, %v4722
        %v4725 = vsub.s32 4, %v4701
        %v4726 = vsel %vm4641, %v4725, %v4701
        %v4727 = vsel %vm4640, %v4446, %v4724
        %v4728 = vsel %vm4640, 0, %v4726
        %v4729 = vcosq.f32.pop %v4727
        %v4730 = vsinq.f32.pop %v4727
        %vm4731 = vweird.f32 %v4446
        %v4732 = vadd.s32 %v4728, 3
        %v4733 = vand.u32 %v4732, 3
        %vm4734 = vcmp.lt.s32.totalorder %v4733, 2
        %vm4735 = vcmp.eq.s32.totalorder %v4733, 0
        %v4736 = vxor.u32 %v4730, 2147483648
        %v4737 = vsel %vm4735, %v4729, %v4736
        %vm4738 = vcmp.eq.s32.totalorder %v4733, 2
        %v4739 = vxor.u32 %v4729, 2147483648
        %v4740 = vsel %vm4738, %v4739, %v4730
        %v4741 = vsel %vm4734, %v4737, %v4740
        %v4742 = vsel %vm4731, nan, %v4741
        %v4743 = vand.u32 2147483647, %v4521
        %vm4744 = vcmp.le.f32.partialorder %v4743, 0.7853982
        %vm4745 = vcmp.lt.s32.totalorder %v4521, 0
        %v4746 = vand.u32 %v4521, 2139095040
        %v4747 = vshrl.u32 %v4746, 23
        %v4748 = vsub.s32 %v4747, 127
        %v4749 = vand.u32 2147483647, %v4521
        %v4750 = vand.u32 %v4749, 8388607
        %v4751 = vor.u32 %v4750, 8388608
        %v4752 = vsub.s32 0, %v4751
        %v4753 = vadd.s32 %v4748, 1
        %vm4754 = vcmp.gt.s32.totalorder %v4753, 0
        %v4755 = vsel %vm4754, %v4753, 0
        %v4756 = vshrl.u32 %v4755, 5
        %v4757 = vand.u32 %v4755, 31
        %v4758 = vsub.s32 32, %v4757
        %v4759 = vshrl.u32 683565275, %v4758
        %v4760 = vshll.u32 683565275, %v4757
        %v4761 = vshrl.u32 2475754826, %v4758
        %v4762 = vor.u32 %v4760, %v4761
        %v4763 = vshll.u32 2475754826, %v4757
        %v4764 = vshrl.u32 2131351028, %v4758
        %v4765 = vor.u32 %v4763, %v4764
        %v4766 = vshll.u32 2131351028, %v4757
        %v4767 = vshrl.u32 2102212464, %v4758
        %v4768 = vor.u32 %v4766, %v4767
        %v4769 = vshll.u32 2102212464, %v4757
        %v4770 = vshrl.u32 920167782, %v4758
        %v4771 = vor.u32 %v4769, %v4770
        %v4772 = vshll.u32 920167782, %v4757
        %v4773 = vshrl.u32 1326507024, %v4758
        %v4774 = vor.u32 %v4772, %v4773
        %vm4775 = vcmp.lt.s32.totalorder %v4756, 1
        %vm4776 = vcmp.lt.s32.totalorder %v4756, 2
        %vm4777 = vcmp.lt.s32.totalorder %v4756, 3
        %vm4778 = vcmp.lt.s32.totalorder %v4756, 4
        %v4779 = vsel %vm4775, %v4759, %v4762
        %v4780 = vsel %vm4778, %v4768, 2102212464
        %v4781 = vsel %vm4777, %v4765, %v4780
        %v4782 = vsel %vm4776, %v4779, %v4781
        %v4783 = vsel %vm4775, %v4762, %v4765
        %v4784 = vsel %vm4778, %v4771, 920167782
        %v4785 = vsel %vm4777, %v4768, %v4784
        %v4786 = vsel %vm4776, %v4783, %v4785
        %v4787 = vsel %vm4775, %v4765, %v4768
        %v4788 = vsel %vm4778, %v4774, 1326507024
        %v4789 = vsel %vm4777, %v4771, %v4788
        %v4790 = vsel %vm4776, %v4787, %v4789
        %v4791 = vshll.u32 %v4751, 8
        %v4792 = vmul.u32.u64.compose %v4791, %v4790
        %v4793 = vextract.low.u32 %v4792
        %v4794 = vextract.high.u32 %v4792
        %v4795 = vmul.u32.u64.compose %v4791, %v4786
        %v4796 = vextract.low.u32 %v4795
        %v4797 = vextract.high.u32 %v4795
        %v4798 = vmul.u32 %v4791, %v4782
        %v4799 = vadd.s32 %v4794, %v4796
        %vm4800 = vc.u32 %v4794, %v4796
        %v4801 = vadd.s32 %v4797, 1
        %v4802 = vsel %vm4800, %v4801, %v4797
        %v4803 = vadd.s32 %v4798, %v4802
        %v4804 = vadd.s32 %v4803, 536870912
        %v4805 = vshrl.u32 %v4804, 30
        %v4806 = vshll.u32 %v4805, 30
        %v4807 = vsub.s32 %v4803, %v4806
        %vm4808 = vcmp.lt.s32.totalorder %v4807, 0
        %v4809 = vsub.s32 0, %v4807
        %v4810 = vsel %vm4808, %v4809, %v4807
        %v4811 = vclz %v4810
        %v4812 = vsub.s32 %v4811, 2
        %vm4813 = vcmp.gt.s32.totalorder 0, %v4812
        %v4814 = vsel %vm4813, 0, %v4812
        %v4815 = vsub.s32 32, %v4814
        %v4816 = vshll.u32 %v4807, %v4814
        %v4817 = vshrl.u32 %v4799, %v4815
        %v4818 = vor.u32 %v4816, %v4817
        %v4819 = vsub.s32 4294967266, %v4814
        %v4820 = vadd.s32 %v4819, 127
        %v4821 = vshll.u32 %v4820, 23
        %v4822 = vor.u32 4788187, %v4821
        %v4823 = vand.u32 2147483647, %v4822
        %v4825 = vcvt.s32.f32 %v4818
        %v4826 = vmul.f32 %v4825, %v4823
        %v4827 = vxor.u32 %v4826, 2147483648
        %v4828 = vsel %vm4745, %v4827, %v4826
        %v4829 = vsub.s32 4, %v4805
        %v4830 = vsel %vm4745, %v4829, %v4805
        %v4831 = vsel %vm4744, %v4521, %v4828
        %v4832 = vsel %vm4744, 0, %v4830
        %v4833 = vcosq.f32.pop %v4831
        %v4834 = vsinq.f32.pop %v4831
        %vm4835 = vweird.f32 %v4521
        %v4836 = vadd.s32 %v4832, 3
        %v4837 = vand.u32 %v4836, 3
        %vm4838 = vcmp.lt.s32.totalorder %v4837, 2
        %vm4839 = vcmp.eq.s32.totalorder %v4837, 0
        %v4840 = vxor.u32 %v4834, 2147483648
        %v4841 = vsel %vm4839, %v4833, %v4840
        %vm4842 = vcmp.eq.s32.totalorder %v4837, 2
        %v4843 = vxor.u32 %v4833, 2147483648
        %v4844 = vsel %vm4842, %v4843, %v4834
        %v4845 = vsel %vm4838, %v4841, %v4844
        %v4846 = vsel %vm4835, nan, %v4845
        %v4847 = vand.u32 2147483647, %v4523
        %vm4848 = vcmp.le.f32.partialorder %v4847, 0.7853982
        %vm4849 = vcmp.lt.s32.totalorder %v4523, 0
        %v4850 = vand.u32 %v4523, 2139095040
        %v4851 = vshrl.u32 %v4850, 23
        %v4852 = vsub.s32 %v4851, 127
        %v4853 = vand.u32 2147483647, %v4523
        %v4854 = vand.u32 %v4853, 8388607
        %v4855 = vor.u32 %v4854, 8388608
        %v4856 = vsub.s32 0, %v4855
        %v4857 = vadd.s32 %v4852, 1
        %vm4858 = vcmp.gt.s32.totalorder %v4857, 0
        %v4859 = vsel %vm4858, %v4857, 0
        %v4860 = vshrl.u32 %v4859, 5
        %v4861 = vand.u32 %v4859, 31
        %v4862 = vsub.s32 32, %v4861
        %v4863 = vshrl.u32 683565275, %v4862
        %v4864 = vshll.u32 683565275, %v4861
        %v4865 = vshrl.u32 2475754826, %v4862
        %v4866 = vor.u32 %v4864, %v4865
        %v4867 = vshll.u32 2475754826, %v4861
        %v4868 = vshrl.u32 2131351028, %v4862
        %v4869 = vor.u32 %v4867, %v4868
        %v4870 = vshll.u32 2131351028, %v4861
        %v4871 = vshrl.u32 2102212464, %v4862
        %v4872 = vor.u32 %v4870, %v4871
        %v4873 = vshll.u32 2102212464, %v4861
        %v4874 = vshrl.u32 920167782, %v4862
        %v4875 = vor.u32 %v4873, %v4874
        %v4876 = vshll.u32 920167782, %v4861
        %v4877 = vshrl.u32 1326507024, %v4862
        %v4878 = vor.u32 %v4876, %v4877
        %vm4879 = vcmp.lt.s32.totalorder %v4860, 1
        %vm4880 = vcmp.lt.s32.totalorder %v4860, 2
        %vm4881 = vcmp.lt.s32.totalorder %v4860, 3
        %vm4882 = vcmp.lt.s32.totalorder %v4860, 4
        %v4883 = vsel %vm4879, %v4863, %v4866
        %v4884 = vsel %vm4882, %v4872, 2102212464
        %v4885 = vsel %vm4881, %v4869, %v4884
        %v4886 = vsel %vm4880, %v4883, %v4885
        %v4887 = vsel %vm4879, %v4866, %v4869
        %v4888 = vsel %vm4882, %v4875, 920167782
        %v4889 = vsel %vm4881, %v4872, %v4888
        %v4890 = vsel %vm4880, %v4887, %v4889
        %v4891 = vsel %vm4879, %v4869, %v4872
        %v4892 = vsel %vm4882, %v4878, 1326507024
        %v4893 = vsel %vm4881, %v4875, %v4892
        %v4894 = vsel %vm4880, %v4891, %v4893
        %v4895 = vshll.u32 %v4855, 8
        %v4896 = vmul.u32.u64.compose %v4895, %v4894
        %v4897 = vextract.low.u32 %v4896
        %v4898 = vextract.high.u32 %v4896
        %v4899 = vmul.u32.u64.compose %v4895, %v4890
        %v4900 = vextract.low.u32 %v4899
        %v4901 = vextract.high.u32 %v4899
        %v4902 = vmul.u32 %v4895, %v4886
        %v4903 = vadd.s32 %v4898, %v4900
        %vm4904 = vc.u32 %v4898, %v4900
        %v4905 = vadd.s32 %v4901, 1
        %v4906 = vsel %vm4904, %v4905, %v4901
        %v4907 = vadd.s32 %v4902, %v4906
        %v4908 = vadd.s32 %v4907, 536870912
        %v4909 = vshrl.u32 %v4908, 30
        %v4910 = vshll.u32 %v4909, 30
        %v4911 = vsub.s32 %v4907, %v4910
        %vm4912 = vcmp.lt.s32.totalorder %v4911, 0
        %v4913 = vsub.s32 0, %v4911
        %v4914 = vsel %vm4912, %v4913, %v4911
        %v4915 = vclz %v4914
        %v4916 = vsub.s32 %v4915, 2
        %vm4917 = vcmp.gt.s32.totalorder 0, %v4916
        %v4918 = vsel %vm4917, 0, %v4916
        %v4919 = vsub.s32 32, %v4918
        %v4920 = vshll.u32 %v4911, %v4918
        %v4921 = vshrl.u32 %v4903, %v4919
        %v4922 = vor.u32 %v4920, %v4921
        %v4923 = vsub.s32 4294967266, %v4918
        %v4924 = vadd.s32 %v4923, 127
        %v4925 = vshll.u32 %v4924, 23
        %v4926 = vor.u32 4788187, %v4925
        %v4927 = vand.u32 2147483647, %v4926
        %v4929 = vcvt.s32.f32 %v4922
        %v4930 = vmul.f32 %v4929, %v4927
        %v4931 = vxor.u32 %v4930, 2147483648
        %v4932 = vsel %vm4849, %v4931, %v4930
        %v4933 = vsub.s32 4, %v4909
        %v4934 = vsel %vm4849, %v4933, %v4909
        %v4935 = vsel %vm4848, %v4523, %v4932
        %v4936 = vsel %vm4848, 0, %v4934
        %v4937 = vcosq.f32.pop %v4935
        %v4938 = vsinq.f32.pop %v4935
        %vm4939 = vweird.f32 %v4523
        %v4940 = vadd.s32 %v4936, 3
        %v4941 = vand.u32 %v4940, 3
        %vm4942 = vcmp.lt.s32.totalorder %v4941, 2
        %vm4943 = vcmp.eq.s32.totalorder %v4941, 0
        %v4944 = vxor.u32 %v4938, 2147483648
        %v4945 = vsel %vm4943, %v4937, %v4944
        %vm4946 = vcmp.eq.s32.totalorder %v4941, 2
        %v4947 = vxor.u32 %v4937, 2147483648
        %v4948 = vsel %vm4946, %v4947, %v4938
        %v4949 = vsel %vm4942, %v4945, %v4948
        %v4950 = vsel %vm4939, nan, %v4949
        %v4951 = vand.u32 2147483647, %v4450
        %vm4952 = vcmp.le.f32.partialorder %v4951, 0.7853982
        %vm4953 = vcmp.lt.s32.totalorder %v4450, 0
        %v4954 = vand.u32 %v4450, 2139095040
        %v4955 = vshrl.u32 %v4954, 23
        %v4956 = vsub.s32 %v4955, 127
        %v4957 = vand.u32 2147483647, %v4450
        %v4958 = vand.u32 %v4957, 8388607
        %v4959 = vor.u32 %v4958, 8388608
        %v4960 = vsub.s32 0, %v4959
        %v4961 = vadd.s32 %v4956, 1
        %vm4962 = vcmp.gt.s32.totalorder %v4961, 0
        %v4963 = vsel %vm4962, %v4961, 0
        %v4964 = vshrl.u32 %v4963, 5
        %v4965 = vand.u32 %v4963, 31
        %v4966 = vsub.s32 32, %v4965
        %v4967 = vshrl.u32 683565275, %v4966
        %v4968 = vshll.u32 683565275, %v4965
        %v4969 = vshrl.u32 2475754826, %v4966
        %v4970 = vor.u32 %v4968, %v4969
        %v4971 = vshll.u32 2475754826, %v4965
        %v4972 = vshrl.u32 2131351028, %v4966
        %v4973 = vor.u32 %v4971, %v4972
        %v4974 = vshll.u32 2131351028, %v4965
        %v4975 = vshrl.u32 2102212464, %v4966
        %v4976 = vor.u32 %v4974, %v4975
        %v4977 = vshll.u32 2102212464, %v4965
        %v4978 = vshrl.u32 920167782, %v4966
        %v4979 = vor.u32 %v4977, %v4978
        %v4980 = vshll.u32 920167782, %v4965
        %v4981 = vshrl.u32 1326507024, %v4966
        %v4982 = vor.u32 %v4980, %v4981
        %vm4983 = vcmp.lt.s32.totalorder %v4964, 1
        %vm4984 = vcmp.lt.s32.totalorder %v4964, 2
        %vm4985 = vcmp.lt.s32.totalorder %v4964, 3
        %vm4986 = vcmp.lt.s32.totalorder %v4964, 4
        %v4987 = vsel %vm4983, %v4967, %v4970
        %v4988 = vsel %vm4986, %v4976, 2102212464
        %v4989 = vsel %vm4985, %v4973, %v4988
        %v4990 = vsel %vm4984, %v4987, %v4989
        %v4991 = vsel %vm4983, %v4970, %v4973
        %v4992 = vsel %vm4986, %v4979, 920167782
        %v4993 = vsel %vm4985, %v4976, %v4992
        %v4994 = vsel %vm4984, %v4991, %v4993
        %v4995 = vsel %vm4983, %v4973, %v4976
        %v4996 = vsel %vm4986, %v4982, 1326507024
        %v4997 = vsel %vm4985, %v4979, %v4996
        %v4998 = vsel %vm4984, %v4995, %v4997
        %v4999 = vshll.u32 %v4959, 8
        %v5000 = vmul.u32.u64.compose %v4999, %v4998
        %v5001 = vextract.low.u32 %v5000
        %v5002 = vextract.high.u32 %v5000
        %v5003 = vmul.u32.u64.compose %v4999, %v4994
        %v5004 = vextract.low.u32 %v5003
        %v5005 = vextract.high.u32 %v5003
        %v5006 = vmul.u32 %v4999, %v4990
        %v5007 = vadd.s32 %v5002, %v5004
        %vm5008 = vc.u32 %v5002, %v5004
        %v5009 = vadd.s32 %v5005, 1
        %v5010 = vsel %vm5008, %v5009, %v5005
        %v5011 = vadd.s32 %v5006, %v5010
        %v5012 = vadd.s32 %v5011, 536870912
        %v5013 = vshrl.u32 %v5012, 30
        %v5014 = vshll.u32 %v5013, 30
        %v5015 = vsub.s32 %v5011, %v5014
        %vm5016 = vcmp.lt.s32.totalorder %v5015, 0
        %v5017 = vsub.s32 0, %v5015
        %v5018 = vsel %vm5016, %v5017, %v5015
        %v5019 = vclz %v5018
        %v5020 = vsub.s32 %v5019, 2
        %vm5021 = vcmp.gt.s32.totalorder 0, %v5020
        %v5022 = vsel %vm5021, 0, %v5020
        %v5023 = vsub.s32 32, %v5022
        %v5024 = vshll.u32 %v5015, %v5022
        %v5025 = vshrl.u32 %v5007, %v5023
        %v5026 = vor.u32 %v5024, %v5025
        %v5027 = vsub.s32 4294967266, %v5022
        %v5028 = vadd.s32 %v5027, 127
        %v5029 = vshll.u32 %v5028, 23
        %v5030 = vor.u32 4788187, %v5029
        %v5031 = vand.u32 2147483647, %v5030
        %v5033 = vcvt.s32.f32 %v5026
        %v5034 = vmul.f32 %v5033, %v5031
        %v5035 = vxor.u32 %v5034, 2147483648
        %v5036 = vsel %vm4953, %v5035, %v5034
        %v5037 = vsub.s32 4, %v5013
        %v5038 = vsel %vm4953, %v5037, %v5013
        %v5039 = vsel %vm4952, %v4450, %v5036
        %v5040 = vsel %vm4952, 0, %v5038
        %v5041 = vcosq.f32.pop %v5039
        %v5042 = vsinq.f32.pop %v5039
        %vm5043 = vweird.f32 %v4450
        %v5044 = vadd.s32 %v5040, 3
        %v5045 = vand.u32 %v5044, 3
        %vm5046 = vcmp.lt.s32.totalorder %v5045, 2
        %vm5047 = vcmp.eq.s32.totalorder %v5045, 0
        %v5048 = vxor.u32 %v5042, 2147483648
        %v5049 = vsel %vm5047, %v5041, %v5048
        %vm5050 = vcmp.eq.s32.totalorder %v5045, 2
        %v5051 = vxor.u32 %v5041, 2147483648
        %v5052 = vsel %vm5050, %v5051, %v5042
        %v5053 = vsel %vm5046, %v5049, %v5052
        %v5054 = vsel %vm5043, nan, %v5053
        %v5055 = vand.u32 2147483647, %v4452
        %vm5056 = vcmp.le.f32.partialorder %v5055, 0.7853982
        %vm5057 = vcmp.lt.s32.totalorder %v4452, 0
        %v5058 = vand.u32 %v4452, 2139095040
        %v5059 = vshrl.u32 %v5058, 23
        %v5060 = vsub.s32 %v5059, 127
        %v5061 = vand.u32 2147483647, %v4452
        %v5062 = vand.u32 %v5061, 8388607
        %v5063 = vor.u32 %v5062, 8388608
        %v5064 = vsub.s32 0, %v5063
        %v5065 = vadd.s32 %v5060, 1
        %vm5066 = vcmp.gt.s32.totalorder %v5065, 0
        %v5067 = vsel %vm5066, %v5065, 0
        %v5068 = vshrl.u32 %v5067, 5
        %v5069 = vand.u32 %v5067, 31
        %v5070 = vsub.s32 32, %v5069
        %v5071 = vshrl.u32 683565275, %v5070
        %v5072 = vshll.u32 683565275, %v5069
        %v5073 = vshrl.u32 2475754826, %v5070
        %v5074 = vor.u32 %v5072, %v5073
        %v5075 = vshll.u32 2475754826, %v5069
        %v5076 = vshrl.u32 2131351028, %v5070
        %v5077 = vor.u32 %v5075, %v5076
        %v5078 = vshll.u32 2131351028, %v5069
        %v5079 = vshrl.u32 2102212464, %v5070
        %v5080 = vor.u32 %v5078, %v5079
        %v5081 = vshll.u32 2102212464, %v5069
        %v5082 = vshrl.u32 920167782, %v5070
        %v5083 = vor.u32 %v5081, %v5082
        %v5084 = vshll.u32 920167782, %v5069
        %v5085 = vshrl.u32 1326507024, %v5070
        %v5086 = vor.u32 %v5084, %v5085
        %vm5087 = vcmp.lt.s32.totalorder %v5068, 1
        %vm5088 = vcmp.lt.s32.totalorder %v5068, 2
        %vm5089 = vcmp.lt.s32.totalorder %v5068, 3
        %vm5090 = vcmp.lt.s32.totalorder %v5068, 4
        %v5091 = vsel %vm5087, %v5071, %v5074
        %v5092 = vsel %vm5090, %v5080, 2102212464
        %v5093 = vsel %vm5089, %v5077, %v5092
        %v5094 = vsel %vm5088, %v5091, %v5093
        %v5095 = vsel %vm5087, %v5074, %v5077
        %v5096 = vsel %vm5090, %v5083, 920167782
        %v5097 = vsel %vm5089, %v5080, %v5096
        %v5098 = vsel %vm5088, %v5095, %v5097
        %v5099 = vsel %vm5087, %v5077, %v5080
        %v5100 = vsel %vm5090, %v5086, 1326507024
        %v5101 = vsel %vm5089, %v5083, %v5100
        %v5102 = vsel %vm5088, %v5099, %v5101
        %v5103 = vshll.u32 %v5063, 8
        %v5104 = vmul.u32.u64.compose %v5103, %v5102
        %v5105 = vextract.low.u32 %v5104
        %v5106 = vextract.high.u32 %v5104
        %v5107 = vmul.u32.u64.compose %v5103, %v5098
        %v5108 = vextract.low.u32 %v5107
        %v5109 = vextract.high.u32 %v5107
        %v5110 = vmul.u32 %v5103, %v5094
        %v5111 = vadd.s32 %v5106, %v5108
        %vm5112 = vc.u32 %v5106, %v5108
        %v5113 = vadd.s32 %v5109, 1
        %v5114 = vsel %vm5112, %v5113, %v5109
        %v5115 = vadd.s32 %v5110, %v5114
        %v5116 = vadd.s32 %v5115, 536870912
        %v5117 = vshrl.u32 %v5116, 30
        %v5118 = vshll.u32 %v5117, 30
        %v5119 = vsub.s32 %v5115, %v5118
        %vm5120 = vcmp.lt.s32.totalorder %v5119, 0
        %v5121 = vsub.s32 0, %v5119
        %v5122 = vsel %vm5120, %v5121, %v5119
        %v5123 = vclz %v5122
        %v5124 = vsub.s32 %v5123, 2
        %vm5125 = vcmp.gt.s32.totalorder 0, %v5124
        %v5126 = vsel %vm5125, 0, %v5124
        %v5127 = vsub.s32 32, %v5126
        %v5128 = vshll.u32 %v5119, %v5126
        %v5129 = vshrl.u32 %v5111, %v5127
        %v5130 = vor.u32 %v5128, %v5129
        %v5131 = vsub.s32 4294967266, %v5126
        %v5132 = vadd.s32 %v5131, 127
        %v5133 = vshll.u32 %v5132, 23
        %v5134 = vor.u32 4788187, %v5133
        %v5135 = vand.u32 2147483647, %v5134
        %v5137 = vcvt.s32.f32 %v5130
        %v5138 = vmul.f32 %v5137, %v5135
        %v5139 = vxor.u32 %v5138, 2147483648
        %v5140 = vsel %vm5057, %v5139, %v5138
        %v5141 = vsub.s32 4, %v5117
        %v5142 = vsel %vm5057, %v5141, %v5117
        %v5143 = vsel %vm5056, %v4452, %v5140
        %v5144 = vsel %vm5056, 0, %v5142
        %v5145 = vcosq.f32.pop %v5143
        %v5146 = vsinq.f32.pop %v5143
        %vm5147 = vweird.f32 %v4452
        %v5148 = vadd.s32 %v5144, 3
        %v5149 = vand.u32 %v5148, 3
        %vm5150 = vcmp.lt.s32.totalorder %v5149, 2
        %vm5151 = vcmp.eq.s32.totalorder %v5149, 0
        %v5152 = vxor.u32 %v5146, 2147483648
        %v5153 = vsel %vm5151, %v5145, %v5152
        %vm5154 = vcmp.eq.s32.totalorder %v5149, 2
        %v5155 = vxor.u32 %v5145, 2147483648
        %v5156 = vsel %vm5154, %v5155, %v5146
        %v5157 = vsel %vm5150, %v5153, %v5156
        %v5158 = vsel %vm5147, nan, %v5157
        %v5159 = vand.u32 2147483647, %v4527
        %vm5160 = vcmp.le.f32.partialorder %v5159, 0.7853982
        %vm5161 = vcmp.lt.s32.totalorder %v4527, 0
        %v5162 = vand.u32 %v4527, 2139095040
        %v5163 = vshrl.u32 %v5162, 23
        %v5164 = vsub.s32 %v5163, 127
        %v5165 = vand.u32 2147483647, %v4527
        %v5166 = vand.u32 %v5165, 8388607
        %v5167 = vor.u32 %v5166, 8388608
        %v5168 = vsub.s32 0, %v5167
        %v5169 = vadd.s32 %v5164, 1
        %vm5170 = vcmp.gt.s32.totalorder %v5169, 0
        %v5171 = vsel %vm5170, %v5169, 0
        %v5172 = vshrl.u32 %v5171, 5
        %v5173 = vand.u32 %v5171, 31
        %v5174 = vsub.s32 32, %v5173
        %v5175 = vshrl.u32 683565275, %v5174
        %v5176 = vshll.u32 683565275, %v5173
        %v5177 = vshrl.u32 2475754826, %v5174
        %v5178 = vor.u32 %v5176, %v5177
        %v5179 = vshll.u32 2475754826, %v5173
        %v5180 = vshrl.u32 2131351028, %v5174
        %v5181 = vor.u32 %v5179, %v5180
        %v5182 = vshll.u32 2131351028, %v5173
        %v5183 = vshrl.u32 2102212464, %v5174
        %v5184 = vor.u32 %v5182, %v5183
        %v5185 = vshll.u32 2102212464, %v5173
        %v5186 = vshrl.u32 920167782, %v5174
        %v5187 = vor.u32 %v5185, %v5186
        %v5188 = vshll.u32 920167782, %v5173
        %v5189 = vshrl.u32 1326507024, %v5174
        %v5190 = vor.u32 %v5188, %v5189
        %vm5191 = vcmp.lt.s32.totalorder %v5172, 1
        %vm5192 = vcmp.lt.s32.totalorder %v5172, 2
        %vm5193 = vcmp.lt.s32.totalorder %v5172, 3
        %vm5194 = vcmp.lt.s32.totalorder %v5172, 4
        %v5195 = vsel %vm5191, %v5175, %v5178
        %v5196 = vsel %vm5194, %v5184, 2102212464
        %v5197 = vsel %vm5193, %v5181, %v5196
        %v5198 = vsel %vm5192, %v5195, %v5197
        %v5199 = vsel %vm5191, %v5178, %v5181
        %v5200 = vsel %vm5194, %v5187, 920167782
        %v5201 = vsel %vm5193, %v5184, %v5200
        %v5202 = vsel %vm5192, %v5199, %v5201
        %v5203 = vsel %vm5191, %v5181, %v5184
        %v5204 = vsel %vm5194, %v5190, 1326507024
        %v5205 = vsel %vm5193, %v5187, %v5204
        %v5206 = vsel %vm5192, %v5203, %v5205
        %v5207 = vshll.u32 %v5167, 8
        %v5208 = vmul.u32.u64.compose %v5207, %v5206
        %v5209 = vextract.low.u32 %v5208
        %v5210 = vextract.high.u32 %v5208
        %v5211 = vmul.u32.u64.compose %v5207, %v5202
        %v5212 = vextract.low.u32 %v5211
        %v5213 = vextract.high.u32 %v5211
        %v5214 = vmul.u32 %v5207, %v5198
        %v5215 = vadd.s32 %v5210, %v5212
        %vm5216 = vc.u32 %v5210, %v5212
        %v5217 = vadd.s32 %v5213, 1
        %v5218 = vsel %vm5216, %v5217, %v5213
        %v5219 = vadd.s32 %v5214, %v5218
        %v5220 = vadd.s32 %v5219, 536870912
        %v5221 = vshrl.u32 %v5220, 30
        %v5222 = vshll.u32 %v5221, 30
        %v5223 = vsub.s32 %v5219, %v5222
        %vm5224 = vcmp.lt.s32.totalorder %v5223, 0
        %v5225 = vsub.s32 0, %v5223
        %v5226 = vsel %vm5224, %v5225, %v5223
        %v5227 = vclz %v5226
        %v5228 = vsub.s32 %v5227, 2
        %vm5229 = vcmp.gt.s32.totalorder 0, %v5228
        %v5230 = vsel %vm5229, 0, %v5228
        %v5231 = vsub.s32 32, %v5230
        %v5232 = vshll.u32 %v5223, %v5230
        %v5233 = vshrl.u32 %v5215, %v5231
        %v5234 = vor.u32 %v5232, %v5233
        %v5235 = vsub.s32 4294967266, %v5230
        %v5236 = vadd.s32 %v5235, 127
        %v5237 = vshll.u32 %v5236, 23
        %v5238 = vor.u32 4788187, %v5237
        %v5239 = vand.u32 2147483647, %v5238
        %v5241 = vcvt.s32.f32 %v5234
        %v5242 = vmul.f32 %v5241, %v5239
        %v5243 = vxor.u32 %v5242, 2147483648
        %v5244 = vsel %vm5161, %v5243, %v5242
        %v5245 = vsub.s32 4, %v5221
        %v5246 = vsel %vm5161, %v5245, %v5221
        %v5247 = vsel %vm5160, %v4527, %v5244
        %v5248 = vsel %vm5160, 0, %v5246
        %v5249 = vcosq.f32.pop %v5247
        %v5250 = vsinq.f32.pop %v5247
        %vm5251 = vweird.f32 %v4527
        %v5252 = vadd.s32 %v5248, 3
        %v5253 = vand.u32 %v5252, 3
        %vm5254 = vcmp.lt.s32.totalorder %v5253, 2
        %vm5255 = vcmp.eq.s32.totalorder %v5253, 0
        %v5256 = vxor.u32 %v5250, 2147483648
        %v5257 = vsel %vm5255, %v5249, %v5256
        %vm5258 = vcmp.eq.s32.totalorder %v5253, 2
        %v5259 = vxor.u32 %v5249, 2147483648
        %v5260 = vsel %vm5258, %v5259, %v5250
        %v5261 = vsel %vm5254, %v5257, %v5260
        %v5262 = vsel %vm5251, nan, %v5261
        %v5263 = vand.u32 2147483647, %v4529
        %vm5264 = vcmp.le.f32.partialorder %v5263, 0.7853982
        %vm5265 = vcmp.lt.s32.totalorder %v4529, 0
        %v5266 = vand.u32 %v4529, 2139095040
        %v5267 = vshrl.u32 %v5266, 23
        %v5268 = vsub.s32 %v5267, 127
        %v5269 = vand.u32 2147483647, %v4529
        %v5270 = vand.u32 %v5269, 8388607
        %v5271 = vor.u32 %v5270, 8388608
        %v5272 = vsub.s32 0, %v5271
        %v5273 = vadd.s32 %v5268, 1
        %vm5274 = vcmp.gt.s32.totalorder %v5273, 0
        %v5275 = vsel %vm5274, %v5273, 0
        %v5276 = vshrl.u32 %v5275, 5
        %v5277 = vand.u32 %v5275, 31
        %v5278 = vsub.s32 32, %v5277
        %v5279 = vshrl.u32 683565275, %v5278
        %v5280 = vshll.u32 683565275, %v5277
        %v5281 = vshrl.u32 2475754826, %v5278
        %v5282 = vor.u32 %v5280, %v5281
        %v5283 = vshll.u32 2475754826, %v5277
        %v5284 = vshrl.u32 2131351028, %v5278
        %v5285 = vor.u32 %v5283, %v5284
        %v5286 = vshll.u32 2131351028, %v5277
        %v5287 = vshrl.u32 2102212464, %v5278
        %v5288 = vor.u32 %v5286, %v5287
        %v5289 = vshll.u32 2102212464, %v5277
        %v5290 = vshrl.u32 920167782, %v5278
        %v5291 = vor.u32 %v5289, %v5290
        %v5292 = vshll.u32 920167782, %v5277
        %v5293 = vshrl.u32 1326507024, %v5278
        %v5294 = vor.u32 %v5292, %v5293
        %vm5295 = vcmp.lt.s32.totalorder %v5276, 1
        %vm5296 = vcmp.lt.s32.totalorder %v5276, 2
        %vm5297 = vcmp.lt.s32.totalorder %v5276, 3
        %vm5298 = vcmp.lt.s32.totalorder %v5276, 4
        %v5299 = vsel %vm5295, %v5279, %v5282
        %v5300 = vsel %vm5298, %v5288, 2102212464
        %v5301 = vsel %vm5297, %v5285, %v5300
        %v5302 = vsel %vm5296, %v5299, %v5301
        %v5303 = vsel %vm5295, %v5282, %v5285
        %v5304 = vsel %vm5298, %v5291, 920167782
        %v5305 = vsel %vm5297, %v5288, %v5304
        %v5306 = vsel %vm5296, %v5303, %v5305
        %v5307 = vsel %vm5295, %v5285, %v5288
        %v5308 = vsel %vm5298, %v5294, 1326507024
        %v5309 = vsel %vm5297, %v5291, %v5308
        %v5310 = vsel %vm5296, %v5307, %v5309
        %v5311 = vshll.u32 %v5271, 8
        %v5312 = vmul.u32.u64.compose %v5311, %v5310
        %v5313 = vextract.low.u32 %v5312
        %v5314 = vextract.high.u32 %v5312
        %v5315 = vmul.u32.u64.compose %v5311, %v5306
        %v5316 = vextract.low.u32 %v5315
        %v5317 = vextract.high.u32 %v5315
        %v5318 = vmul.u32 %v5311, %v5302
        %v5319 = vadd.s32 %v5314, %v5316
        %vm5320 = vc.u32 %v5314, %v5316
        %v5321 = vadd.s32 %v5317, 1
        %v5322 = vsel %vm5320, %v5321, %v5317
        %v5323 = vadd.s32 %v5318, %v5322
        %v5324 = vadd.s32 %v5323, 536870912
        %v5325 = vshrl.u32 %v5324, 30
        %v5326 = vshll.u32 %v5325, 30
        %v5327 = vsub.s32 %v5323, %v5326
        %vm5328 = vcmp.lt.s32.totalorder %v5327, 0
        %v5329 = vsub.s32 0, %v5327
        %v5330 = vsel %vm5328, %v5329, %v5327
        %v5331 = vclz %v5330
        %v5332 = vsub.s32 %v5331, 2
        %vm5333 = vcmp.gt.s32.totalorder 0, %v5332
        %v5334 = vsel %vm5333, 0, %v5332
        %v5335 = vsub.s32 32, %v5334
        %v5336 = vshll.u32 %v5327, %v5334
        %v5337 = vshrl.u32 %v5319, %v5335
        %v5338 = vor.u32 %v5336, %v5337
        %v5339 = vsub.s32 4294967266, %v5334
        %v5340 = vadd.s32 %v5339, 127
        %v5341 = vshll.u32 %v5340, 23
        %v5342 = vor.u32 4788187, %v5341
        %v5343 = vand.u32 2147483647, %v5342
        %v5345 = vcvt.s32.f32 %v5338
        %v5346 = vmul.f32 %v5345, %v5343
        %v5347 = vxor.u32 %v5346, 2147483648
        %v5348 = vsel %vm5265, %v5347, %v5346
        %v5349 = vsub.s32 4, %v5325
        %v5350 = vsel %vm5265, %v5349, %v5325
        %v5351 = vsel %vm5264, %v4529, %v5348
        %v5352 = vsel %vm5264, 0, %v5350
        %v5353 = vcosq.f32.pop %v5351
        %v5354 = vsinq.f32.pop %v5351
        %vm5355 = vweird.f32 %v4529
        %v5356 = vadd.s32 %v5352, 3
        %v5357 = vand.u32 %v5356, 3
        %vm5358 = vcmp.lt.s32.totalorder %v5357, 2
        %vm5359 = vcmp.eq.s32.totalorder %v5357, 0
        %v5360 = vxor.u32 %v5354, 2147483648
        %v5361 = vsel %vm5359, %v5353, %v5360
        %vm5362 = vcmp.eq.s32.totalorder %v5357, 2
        %v5363 = vxor.u32 %v5353, 2147483648
        %v5364 = vsel %vm5362, %v5363, %v5354
        %v5365 = vsel %vm5358, %v5361, %v5364
        %v5366 = vsel %vm5355, nan, %v5365
        %5367 = vst [vmem:[#allocation2 + $0x20] sm:$0xff] %v4638
        %5368 = vst [vmem:[#allocation2 + $0x28] sm:$0xff] %v4742
        %5369 = vst [vmem:[#allocation2 + $0x30] sm:$0xff] %v4846
        %5370 = vst [vmem:[#allocation2 + $0x38] sm:$0xff] %v4950
        %5371 = vst [vmem:[#allocation2 + $0x40] sm:$0xff] %v5054
        %5372 = vst [vmem:[#allocation2 + $0x48] sm:$0xff] %v5158
        %5373 = vst [vmem:[#allocation2 + $0x50] sm:$0xff] %v5262
        %5374 = vst [vmem:[#allocation2 + $0x58] sm:$0xff] %v5366
        %v5375 = vand.u32 2147483647, %v4444
        %vm5376 = vcmp.le.f32.partialorder %v5375, 0.7853982
        %vm5377 = vcmp.lt.s32.totalorder %v4444, 0
        %v5378 = vand.u32 %v4444, 2139095040
        %v5379 = vshrl.u32 %v5378, 23
        %v5380 = vsub.s32 %v5379, 127
        %v5381 = vand.u32 2147483647, %v4444
        %v5382 = vand.u32 %v5381, 8388607
        %v5383 = vor.u32 %v5382, 8388608
        %v5384 = vsub.s32 0, %v5383
        %v5385 = vadd.s32 %v5380, 1
        %vm5386 = vcmp.gt.s32.totalorder %v5385, 0
        %v5387 = vsel %vm5386, %v5385, 0
        %v5388 = vshrl.u32 %v5387, 5
        %v5389 = vand.u32 %v5387, 31
        %v5390 = vsub.s32 32, %v5389
        %v5391 = vshrl.u32 683565275, %v5390
        %v5392 = vshll.u32 683565275, %v5389
        %v5393 = vshrl.u32 2475754826, %v5390
        %v5394 = vor.u32 %v5392, %v5393
        %v5395 = vshll.u32 2475754826, %v5389
        %v5396 = vshrl.u32 2131351028, %v5390
        %v5397 = vor.u32 %v5395, %v5396
        %v5398 = vshll.u32 2131351028, %v5389
        %v5399 = vshrl.u32 2102212464, %v5390
        %v5400 = vor.u32 %v5398, %v5399
        %v5401 = vshll.u32 2102212464, %v5389
        %v5402 = vshrl.u32 920167782, %v5390
        %v5403 = vor.u32 %v5401, %v5402
        %v5404 = vshll.u32 920167782, %v5389
        %v5405 = vshrl.u32 1326507024, %v5390
        %v5406 = vor.u32 %v5404, %v5405
        %vm5407 = vcmp.lt.s32.totalorder %v5388, 1
        %vm5408 = vcmp.lt.s32.totalorder %v5388, 2
        %vm5409 = vcmp.lt.s32.totalorder %v5388, 3
        %vm5410 = vcmp.lt.s32.totalorder %v5388, 4
        %v5411 = vsel %vm5407, %v5391, %v5394
        %v5412 = vsel %vm5410, %v5400, 2102212464
        %v5413 = vsel %vm5409, %v5397, %v5412
        %v5414 = vsel %vm5408, %v5411, %v5413
        %v5415 = vsel %vm5407, %v5394, %v5397
        %v5416 = vsel %vm5410, %v5403, 920167782
        %v5417 = vsel %vm5409, %v5400, %v5416
        %v5418 = vsel %vm5408, %v5415, %v5417
        %v5419 = vsel %vm5407, %v5397, %v5400
        %v5420 = vsel %vm5410, %v5406, 1326507024
        %v5421 = vsel %vm5409, %v5403, %v5420
        %v5422 = vsel %vm5408, %v5419, %v5421
        %v5423 = vshll.u32 %v5383, 8
        %v5424 = vmul.u32.u64.compose %v5423, %v5422
        %v5425 = vextract.low.u32 %v5424
        %v5426 = vextract.high.u32 %v5424
        %v5427 = vmul.u32.u64.compose %v5423, %v5418
        %v5428 = vextract.low.u32 %v5427
        %v5429 = vextract.high.u32 %v5427
        %v5430 = vmul.u32 %v5423, %v5414
        %v5431 = vadd.s32 %v5426, %v5428
        %vm5432 = vc.u32 %v5426, %v5428
        %v5433 = vadd.s32 %v5429, 1
        %v5434 = vsel %vm5432, %v5433, %v5429
        %v5435 = vadd.s32 %v5430, %v5434
        %v5436 = vadd.s32 %v5435, 536870912
        %v5437 = vshrl.u32 %v5436, 30
        %v5438 = vshll.u32 %v5437, 30
        %v5439 = vsub.s32 %v5435, %v5438
        %vm5440 = vcmp.lt.s32.totalorder %v5439, 0
        %v5441 = vsub.s32 0, %v5439
        %v5442 = vsel %vm5440, %v5441, %v5439
        %v5443 = vclz %v5442
        %v5444 = vsub.s32 %v5443, 2
        %vm5445 = vcmp.gt.s32.totalorder 0, %v5444
        %v5446 = vsel %vm5445, 0, %v5444
        %v5447 = vsub.s32 32, %v5446
        %v5448 = vshll.u32 %v5439, %v5446
        %v5449 = vshrl.u32 %v5431, %v5447
        %v5450 = vor.u32 %v5448, %v5449
        %v5451 = vsub.s32 4294967266, %v5446
        %v5452 = vadd.s32 %v5451, 127
        %v5453 = vshll.u32 %v5452, 23
        %v5454 = vor.u32 4788187, %v5453
        %v5455 = vand.u32 2147483647, %v5454
        %v5457 = vcvt.s32.f32 %v5450
        %v5458 = vmul.f32 %v5457, %v5455
        %v5459 = vxor.u32 %v5458, 2147483648
        %v5460 = vsel %vm5377, %v5459, %v5458
        %v5461 = vsub.s32 4, %v5437
        %v5462 = vsel %vm5377, %v5461, %v5437
        %v5463 = vsel %vm5376, %v4444, %v5460
        %v5464 = vsel %vm5376, 0, %v5462
        %v5465 = vcosq.f32.pop %v5463
        %v5466 = vsinq.f32.pop %v5463
        %vm5467 = vweird.f32 %v4444
        %v5468 = vand.u32 %v5464, 3
        %vm5469 = vcmp.lt.s32.totalorder %v5468, 2
        %vm5470 = vcmp.eq.s32.totalorder %v5468, 0
        %v5471 = vxor.u32 %v5466, 2147483648
        %v5472 = vsel %vm5470, %v5465, %v5471
        %vm5473 = vcmp.eq.s32.totalorder %v5468, 2
        %v5474 = vxor.u32 %v5465, 2147483648
        %v5475 = vsel %vm5473, %v5474, %v5466
        %v5476 = vsel %vm5469, %v5472, %v5475
        %v5477 = vsel %vm5467, nan, %v5476
        %v5478 = vand.u32 2147483647, %v4446
        %vm5479 = vcmp.le.f32.partialorder %v5478, 0.7853982
        %vm5480 = vcmp.lt.s32.totalorder %v4446, 0
        %v5481 = vand.u32 %v4446, 2139095040
        %v5482 = vshrl.u32 %v5481, 23
        %v5483 = vsub.s32 %v5482, 127
        %v5484 = vand.u32 2147483647, %v4446
        %v5485 = vand.u32 %v5484, 8388607
        %v5486 = vor.u32 %v5485, 8388608
        %v5487 = vsub.s32 0, %v5486
        %v5488 = vadd.s32 %v5483, 1
        %vm5489 = vcmp.gt.s32.totalorder %v5488, 0
        %v5490 = vsel %vm5489, %v5488, 0
        %v5491 = vshrl.u32 %v5490, 5
        %v5492 = vand.u32 %v5490, 31
        %v5493 = vsub.s32 32, %v5492
        %v5494 = vshrl.u32 683565275, %v5493
        %v5495 = vshll.u32 683565275, %v5492
        %v5496 = vshrl.u32 2475754826, %v5493
        %v5497 = vor.u32 %v5495, %v5496
        %v5498 = vshll.u32 2475754826, %v5492
        %v5499 = vshrl.u32 2131351028, %v5493
        %v5500 = vor.u32 %v5498, %v5499
        %v5501 = vshll.u32 2131351028, %v5492
        %v5502 = vshrl.u32 2102212464, %v5493
        %v5503 = vor.u32 %v5501, %v5502
        %v5504 = vshll.u32 2102212464, %v5492
        %v5505 = vshrl.u32 920167782, %v5493
        %v5506 = vor.u32 %v5504, %v5505
        %v5507 = vshll.u32 920167782, %v5492
        %v5508 = vshrl.u32 1326507024, %v5493
        %v5509 = vor.u32 %v5507, %v5508
        %vm5510 = vcmp.lt.s32.totalorder %v5491, 1
        %vm5511 = vcmp.lt.s32.totalorder %v5491, 2
        %vm5512 = vcmp.lt.s32.totalorder %v5491, 3
        %vm5513 = vcmp.lt.s32.totalorder %v5491, 4
        %v5514 = vsel %vm5510, %v5494, %v5497
        %v5515 = vsel %vm5513, %v5503, 2102212464
        %v5516 = vsel %vm5512, %v5500, %v5515
        %v5517 = vsel %vm5511, %v5514, %v5516
        %v5518 = vsel %vm5510, %v5497, %v5500
        %v5519 = vsel %vm5513, %v5506, 920167782
        %v5520 = vsel %vm5512, %v5503, %v5519
        %v5521 = vsel %vm5511, %v5518, %v5520
        %v5522 = vsel %vm5510, %v5500, %v5503
        %v5523 = vsel %vm5513, %v5509, 1326507024
        %v5524 = vsel %vm5512, %v5506, %v5523
        %v5525 = vsel %vm5511, %v5522, %v5524
        %v5526 = vshll.u32 %v5486, 8
        %v5527 = vmul.u32.u64.compose %v5526, %v5525
        %v5528 = vextract.low.u32 %v5527
        %v5529 = vextract.high.u32 %v5527
        %v5530 = vmul.u32.u64.compose %v5526, %v5521
        %v5531 = vextract.low.u32 %v5530
        %v5532 = vextract.high.u32 %v5530
        %v5533 = vmul.u32 %v5526, %v5517
        %v5534 = vadd.s32 %v5529, %v5531
        %vm5535 = vc.u32 %v5529, %v5531
        %v5536 = vadd.s32 %v5532, 1
        %v5537 = vsel %vm5535, %v5536, %v5532
        %v5538 = vadd.s32 %v5533, %v5537
        %v5539 = vadd.s32 %v5538, 536870912
        %v5540 = vshrl.u32 %v5539, 30
        %v5541 = vshll.u32 %v5540, 30
        %v5542 = vsub.s32 %v5538, %v5541
        %vm5543 = vcmp.lt.s32.totalorder %v5542, 0
        %v5544 = vsub.s32 0, %v5542
        %v5545 = vsel %vm5543, %v5544, %v5542
        %v5546 = vclz %v5545
        %v5547 = vsub.s32 %v5546, 2
        %vm5548 = vcmp.gt.s32.totalorder 0, %v5547
        %v5549 = vsel %vm5548, 0, %v5547
        %v5550 = vsub.s32 32, %v5549
        %v5551 = vshll.u32 %v5542, %v5549
        %v5552 = vshrl.u32 %v5534, %v5550
        %v5553 = vor.u32 %v5551, %v5552
        %v5554 = vsub.s32 4294967266, %v5549
        %v5555 = vadd.s32 %v5554, 127
        %v5556 = vshll.u32 %v5555, 23
        %v5557 = vor.u32 4788187, %v5556
        %v5558 = vand.u32 2147483647, %v5557
        %v5560 = vcvt.s32.f32 %v5553
        %v5561 = vmul.f32 %v5560, %v5558
        %v5562 = vxor.u32 %v5561, 2147483648
        %v5563 = vsel %vm5480, %v5562, %v5561
        %v5564 = vsub.s32 4, %v5540
        %v5565 = vsel %vm5480, %v5564, %v5540
        %v5566 = vsel %vm5479, %v4446, %v5563
        %v5567 = vsel %vm5479, 0, %v5565
        %v5568 = vcosq.f32.pop %v5566
        %v5569 = vsinq.f32.pop %v5566
        %vm5570 = vweird.f32 %v4446
        %v5571 = vand.u32 %v5567, 3
        %vm5572 = vcmp.lt.s32.totalorder %v5571, 2
        %vm5573 = vcmp.eq.s32.totalorder %v5571, 0
        %v5574 = vxor.u32 %v5569, 2147483648
        %v5575 = vsel %vm5573, %v5568, %v5574
        %vm5576 = vcmp.eq.s32.totalorder %v5571, 2
        %v5577 = vxor.u32 %v5568, 2147483648
        %v5578 = vsel %vm5576, %v5577, %v5569
        %v5579 = vsel %vm5572, %v5575, %v5578
        %v5580 = vsel %vm5570, nan, %v5579
        %v5581 = vand.u32 2147483647, %v4521
        %vm5582 = vcmp.le.f32.partialorder %v5581, 0.7853982
        %vm5583 = vcmp.lt.s32.totalorder %v4521, 0
        %v5584 = vand.u32 %v4521, 2139095040
        %v5585 = vshrl.u32 %v5584, 23
        %v5586 = vsub.s32 %v5585, 127
        %v5587 = vand.u32 2147483647, %v4521
        %v5588 = vand.u32 %v5587, 8388607
        %v5589 = vor.u32 %v5588, 8388608
        %v5590 = vsub.s32 0, %v5589
        %v5591 = vadd.s32 %v5586, 1
        %vm5592 = vcmp.gt.s32.totalorder %v5591, 0
        %v5593 = vsel %vm5592, %v5591, 0
        %v5594 = vshrl.u32 %v5593, 5
        %v5595 = vand.u32 %v5593, 31
        %v5596 = vsub.s32 32, %v5595
        %v5597 = vshrl.u32 683565275, %v5596
        %v5598 = vshll.u32 683565275, %v5595
        %v5599 = vshrl.u32 2475754826, %v5596
        %v5600 = vor.u32 %v5598, %v5599
        %v5601 = vshll.u32 2475754826, %v5595
        %v5602 = vshrl.u32 2131351028, %v5596
        %v5603 = vor.u32 %v5601, %v5602
        %v5604 = vshll.u32 2131351028, %v5595
        %v5605 = vshrl.u32 2102212464, %v5596
        %v5606 = vor.u32 %v5604, %v5605
        %v5607 = vshll.u32 2102212464, %v5595
        %v5608 = vshrl.u32 920167782, %v5596
        %v5609 = vor.u32 %v5607, %v5608
        %v5610 = vshll.u32 920167782, %v5595
        %v5611 = vshrl.u32 1326507024, %v5596
        %v5612 = vor.u32 %v5610, %v5611
        %vm5613 = vcmp.lt.s32.totalorder %v5594, 1
        %vm5614 = vcmp.lt.s32.totalorder %v5594, 2
        %vm5615 = vcmp.lt.s32.totalorder %v5594, 3
        %vm5616 = vcmp.lt.s32.totalorder %v5594, 4
        %v5617 = vsel %vm5613, %v5597, %v5600
        %v5618 = vsel %vm5616, %v5606, 2102212464
        %v5619 = vsel %vm5615, %v5603, %v5618
        %v5620 = vsel %vm5614, %v5617, %v5619
        %v5621 = vsel %vm5613, %v5600, %v5603
        %v5622 = vsel %vm5616, %v5609, 920167782
        %v5623 = vsel %vm5615, %v5606, %v5622
        %v5624 = vsel %vm5614, %v5621, %v5623
        %v5625 = vsel %vm5613, %v5603, %v5606
        %v5626 = vsel %vm5616, %v5612, 1326507024
        %v5627 = vsel %vm5615, %v5609, %v5626
        %v5628 = vsel %vm5614, %v5625, %v5627
        %v5629 = vshll.u32 %v5589, 8
        %v5630 = vmul.u32.u64.compose %v5629, %v5628
        %v5631 = vextract.low.u32 %v5630
        %v5632 = vextract.high.u32 %v5630
        %v5633 = vmul.u32.u64.compose %v5629, %v5624
        %v5634 = vextract.low.u32 %v5633
        %v5635 = vextract.high.u32 %v5633
        %v5636 = vmul.u32 %v5629, %v5620
        %v5637 = vadd.s32 %v5632, %v5634
        %vm5638 = vc.u32 %v5632, %v5634
        %v5639 = vadd.s32 %v5635, 1
        %v5640 = vsel %vm5638, %v5639, %v5635
        %v5641 = vadd.s32 %v5636, %v5640
        %v5642 = vadd.s32 %v5641, 536870912
        %v5643 = vshrl.u32 %v5642, 30
        %v5644 = vshll.u32 %v5643, 30
        %v5645 = vsub.s32 %v5641, %v5644
        %vm5646 = vcmp.lt.s32.totalorder %v5645, 0
        %v5647 = vsub.s32 0, %v5645
        %v5648 = vsel %vm5646, %v5647, %v5645
        %v5649 = vclz %v5648
        %v5650 = vsub.s32 %v5649, 2
        %vm5651 = vcmp.gt.s32.totalorder 0, %v5650
        %v5652 = vsel %vm5651, 0, %v5650
        %v5653 = vsub.s32 32, %v5652
        %v5654 = vshll.u32 %v5645, %v5652
        %v5655 = vshrl.u32 %v5637, %v5653
        %v5656 = vor.u32 %v5654, %v5655
        %v5657 = vsub.s32 4294967266, %v5652
        %v5658 = vadd.s32 %v5657, 127
        %v5659 = vshll.u32 %v5658, 23
        %v5660 = vor.u32 4788187, %v5659
        %v5661 = vand.u32 2147483647, %v5660
        %v5663 = vcvt.s32.f32 %v5656
        %v5664 = vmul.f32 %v5663, %v5661
        %v5665 = vxor.u32 %v5664, 2147483648
        %v5666 = vsel %vm5583, %v5665, %v5664
        %v5667 = vsub.s32 4, %v5643
        %v5668 = vsel %vm5583, %v5667, %v5643
        %v5669 = vsel %vm5582, %v4521, %v5666
        %v5670 = vsel %vm5582, 0, %v5668
        %v5671 = vcosq.f32.pop %v5669
        %v5672 = vsinq.f32.pop %v5669
        %vm5673 = vweird.f32 %v4521
        %v5674 = vand.u32 %v5670, 3
        %vm5675 = vcmp.lt.s32.totalorder %v5674, 2
        %vm5676 = vcmp.eq.s32.totalorder %v5674, 0
        %v5677 = vxor.u32 %v5672, 2147483648
        %v5678 = vsel %vm5676, %v5671, %v5677
        %vm5679 = vcmp.eq.s32.totalorder %v5674, 2
        %v5680 = vxor.u32 %v5671, 2147483648
        %v5681 = vsel %vm5679, %v5680, %v5672
        %v5682 = vsel %vm5675, %v5678, %v5681
        %v5683 = vsel %vm5673, nan, %v5682
        %v5684 = vand.u32 2147483647, %v4523
        %vm5685 = vcmp.le.f32.partialorder %v5684, 0.7853982
        %vm5686 = vcmp.lt.s32.totalorder %v4523, 0
        %v5687 = vand.u32 %v4523, 2139095040
        %v5688 = vshrl.u32 %v5687, 23
        %v5689 = vsub.s32 %v5688, 127
        %v5690 = vand.u32 2147483647, %v4523
        %v5691 = vand.u32 %v5690, 8388607
        %v5692 = vor.u32 %v5691, 8388608
        %v5693 = vsub.s32 0, %v5692
        %v5694 = vadd.s32 %v5689, 1
        %vm5695 = vcmp.gt.s32.totalorder %v5694, 0
        %v5696 = vsel %vm5695, %v5694, 0
        %v5697 = vshrl.u32 %v5696, 5
        %v5698 = vand.u32 %v5696, 31
        %v5699 = vsub.s32 32, %v5698
        %v5700 = vshrl.u32 683565275, %v5699
        %v5701 = vshll.u32 683565275, %v5698
        %v5702 = vshrl.u32 2475754826, %v5699
        %v5703 = vor.u32 %v5701, %v5702
        %v5704 = vshll.u32 2475754826, %v5698
        %v5705 = vshrl.u32 2131351028, %v5699
        %v5706 = vor.u32 %v5704, %v5705
        %v5707 = vshll.u32 2131351028, %v5698
        %v5708 = vshrl.u32 2102212464, %v5699
        %v5709 = vor.u32 %v5707, %v5708
        %v5710 = vshll.u32 2102212464, %v5698
        %v5711 = vshrl.u32 920167782, %v5699
        %v5712 = vor.u32 %v5710, %v5711
        %v5713 = vshll.u32 920167782, %v5698
        %v5714 = vshrl.u32 1326507024, %v5699
        %v5715 = vor.u32 %v5713, %v5714
        %vm5716 = vcmp.lt.s32.totalorder %v5697, 1
        %vm5717 = vcmp.lt.s32.totalorder %v5697, 2
        %vm5718 = vcmp.lt.s32.totalorder %v5697, 3
        %vm5719 = vcmp.lt.s32.totalorder %v5697, 4
        %v5720 = vsel %vm5716, %v5700, %v5703
        %v5721 = vsel %vm5719, %v5709, 2102212464
        %v5722 = vsel %vm5718, %v5706, %v5721
        %v5723 = vsel %vm5717, %v5720, %v5722
        %v5724 = vsel %vm5716, %v5703, %v5706
        %v5725 = vsel %vm5719, %v5712, 920167782
        %v5726 = vsel %vm5718, %v5709, %v5725
        %v5727 = vsel %vm5717, %v5724, %v5726
        %v5728 = vsel %vm5716, %v5706, %v5709
        %v5729 = vsel %vm5719, %v5715, 1326507024
        %v5730 = vsel %vm5718, %v5712, %v5729
        %v5731 = vsel %vm5717, %v5728, %v5730
        %v5732 = vshll.u32 %v5692, 8
        %v5733 = vmul.u32.u64.compose %v5732, %v5731
        %v5734 = vextract.low.u32 %v5733
        %v5735 = vextract.high.u32 %v5733
        %v5736 = vmul.u32.u64.compose %v5732, %v5727
        %v5737 = vextract.low.u32 %v5736
        %v5738 = vextract.high.u32 %v5736
        %v5739 = vmul.u32 %v5732, %v5723
        %v5740 = vadd.s32 %v5735, %v5737
        %vm5741 = vc.u32 %v5735, %v5737
        %v5742 = vadd.s32 %v5738, 1
        %v5743 = vsel %vm5741, %v5742, %v5738
        %v5744 = vadd.s32 %v5739, %v5743
        %v5745 = vadd.s32 %v5744, 536870912
        %v5746 = vshrl.u32 %v5745, 30
        %v5747 = vshll.u32 %v5746, 30
        %v5748 = vsub.s32 %v5744, %v5747
        %vm5749 = vcmp.lt.s32.totalorder %v5748, 0
        %v5750 = vsub.s32 0, %v5748
        %v5751 = vsel %vm5749, %v5750, %v5748
        %v5752 = vclz %v5751
        %v5753 = vsub.s32 %v5752, 2
        %vm5754 = vcmp.gt.s32.totalorder 0, %v5753
        %v5755 = vsel %vm5754, 0, %v5753
        %v5756 = vsub.s32 32, %v5755
        %v5757 = vshll.u32 %v5748, %v5755
        %v5758 = vshrl.u32 %v5740, %v5756
        %v5759 = vor.u32 %v5757, %v5758
        %v5760 = vsub.s32 4294967266, %v5755
        %v5761 = vadd.s32 %v5760, 127
        %v5762 = vshll.u32 %v5761, 23
        %v5763 = vor.u32 4788187, %v5762
        %v5764 = vand.u32 2147483647, %v5763
        %v5766 = vcvt.s32.f32 %v5759
        %v5767 = vmul.f32 %v5766, %v5764
        %v5768 = vxor.u32 %v5767, 2147483648
        %v5769 = vsel %vm5686, %v5768, %v5767
        %v5770 = vsub.s32 4, %v5746
        %v5771 = vsel %vm5686, %v5770, %v5746
        %v5772 = vsel %vm5685, %v4523, %v5769
        %v5773 = vsel %vm5685, 0, %v5771
        %v5774 = vcosq.f32.pop %v5772
        %v5775 = vsinq.f32.pop %v5772
        %vm5776 = vweird.f32 %v4523
        %v5777 = vand.u32 %v5773, 3
        %vm5778 = vcmp.lt.s32.totalorder %v5777, 2
        %vm5779 = vcmp.eq.s32.totalorder %v5777, 0
        %v5780 = vxor.u32 %v5775, 2147483648
        %v5781 = vsel %vm5779, %v5774, %v5780
        %vm5782 = vcmp.eq.s32.totalorder %v5777, 2
        %v5783 = vxor.u32 %v5774, 2147483648
        %v5784 = vsel %vm5782, %v5783, %v5775
        %v5785 = vsel %vm5778, %v5781, %v5784
        %v5786 = vsel %vm5776, nan, %v5785
        %v5787 = vand.u32 2147483647, %v4450
        %vm5788 = vcmp.le.f32.partialorder %v5787, 0.7853982
        %vm5789 = vcmp.lt.s32.totalorder %v4450, 0
        %v5790 = vand.u32 %v4450, 2139095040
        %v5791 = vshrl.u32 %v5790, 23
        %v5792 = vsub.s32 %v5791, 127
        %v5793 = vand.u32 2147483647, %v4450
        %v5794 = vand.u32 %v5793, 8388607
        %v5795 = vor.u32 %v5794, 8388608
        %v5796 = vsub.s32 0, %v5795
        %v5797 = vadd.s32 %v5792, 1
        %vm5798 = vcmp.gt.s32.totalorder %v5797, 0
        %v5799 = vsel %vm5798, %v5797, 0
        %v5800 = vshrl.u32 %v5799, 5
        %v5801 = vand.u32 %v5799, 31
        %v5802 = vsub.s32 32, %v5801
        %v5803 = vshrl.u32 683565275, %v5802
        %v5804 = vshll.u32 683565275, %v5801
        %v5805 = vshrl.u32 2475754826, %v5802
        %v5806 = vor.u32 %v5804, %v5805
        %v5807 = vshll.u32 2475754826, %v5801
        %v5808 = vshrl.u32 2131351028, %v5802
        %v5809 = vor.u32 %v5807, %v5808
        %v5810 = vshll.u32 2131351028, %v5801
        %v5811 = vshrl.u32 2102212464, %v5802
        %v5812 = vor.u32 %v5810, %v5811
        %v5813 = vshll.u32 2102212464, %v5801
        %v5814 = vshrl.u32 920167782, %v5802
        %v5815 = vor.u32 %v5813, %v5814
        %v5816 = vshll.u32 920167782, %v5801
        %v5817 = vshrl.u32 1326507024, %v5802
        %v5818 = vor.u32 %v5816, %v5817
        %vm5819 = vcmp.lt.s32.totalorder %v5800, 1
        %vm5820 = vcmp.lt.s32.totalorder %v5800, 2
        %vm5821 = vcmp.lt.s32.totalorder %v5800, 3
        %vm5822 = vcmp.lt.s32.totalorder %v5800, 4
        %v5823 = vsel %vm5819, %v5803, %v5806
        %v5824 = vsel %vm5822, %v5812, 2102212464
        %v5825 = vsel %vm5821, %v5809, %v5824
        %v5826 = vsel %vm5820, %v5823, %v5825
        %v5827 = vsel %vm5819, %v5806, %v5809
        %v5828 = vsel %vm5822, %v5815, 920167782
        %v5829 = vsel %vm5821, %v5812, %v5828
        %v5830 = vsel %vm5820, %v5827, %v5829
        %v5831 = vsel %vm5819, %v5809, %v5812
        %v5832 = vsel %vm5822, %v5818, 1326507024
        %v5833 = vsel %vm5821, %v5815, %v5832
        %v5834 = vsel %vm5820, %v5831, %v5833
        %v5835 = vshll.u32 %v5795, 8
        %v5836 = vmul.u32.u64.compose %v5835, %v5834
        %v5837 = vextract.low.u32 %v5836
        %v5838 = vextract.high.u32 %v5836
        %v5839 = vmul.u32.u64.compose %v5835, %v5830
        %v5840 = vextract.low.u32 %v5839
        %v5841 = vextract.high.u32 %v5839
        %v5842 = vmul.u32 %v5835, %v5826
        %v5843 = vadd.s32 %v5838, %v5840
        %vm5844 = vc.u32 %v5838, %v5840
        %v5845 = vadd.s32 %v5841, 1
        %v5846 = vsel %vm5844, %v5845, %v5841
        %v5847 = vadd.s32 %v5842, %v5846
        %v5848 = vadd.s32 %v5847, 536870912
        %v5849 = vshrl.u32 %v5848, 30
        %v5850 = vshll.u32 %v5849, 30
        %v5851 = vsub.s32 %v5847, %v5850
        %vm5852 = vcmp.lt.s32.totalorder %v5851, 0
        %v5853 = vsub.s32 0, %v5851
        %v5854 = vsel %vm5852, %v5853, %v5851
        %v5855 = vclz %v5854
        %v5856 = vsub.s32 %v5855, 2
        %vm5857 = vcmp.gt.s32.totalorder 0, %v5856
        %v5858 = vsel %vm5857, 0, %v5856
        %v5859 = vsub.s32 32, %v5858
        %v5860 = vshll.u32 %v5851, %v5858
        %v5861 = vshrl.u32 %v5843, %v5859
        %v5862 = vor.u32 %v5860, %v5861
        %v5863 = vsub.s32 4294967266, %v5858
        %v5864 = vadd.s32 %v5863, 127
        %v5865 = vshll.u32 %v5864, 23
        %v5866 = vor.u32 4788187, %v5865
        %v5867 = vand.u32 2147483647, %v5866
        %v5869 = vcvt.s32.f32 %v5862
        %v5870 = vmul.f32 %v5869, %v5867
        %v5871 = vxor.u32 %v5870, 2147483648
        %v5872 = vsel %vm5789, %v5871, %v5870
        %v5873 = vsub.s32 4, %v5849
        %v5874 = vsel %vm5789, %v5873, %v5849
        %v5875 = vsel %vm5788, %v4450, %v5872
        %v5876 = vsel %vm5788, 0, %v5874
        %v5877 = vcosq.f32.pop %v5875
        %v5878 = vsinq.f32.pop %v5875
        %vm5879 = vweird.f32 %v4450
        %v5880 = vand.u32 %v5876, 3
        %vm5881 = vcmp.lt.s32.totalorder %v5880, 2
        %vm5882 = vcmp.eq.s32.totalorder %v5880, 0
        %v5883 = vxor.u32 %v5878, 2147483648
        %v5884 = vsel %vm5882, %v5877, %v5883
        %vm5885 = vcmp.eq.s32.totalorder %v5880, 2
        %v5886 = vxor.u32 %v5877, 2147483648
        %v5887 = vsel %vm5885, %v5886, %v5878
        %v5888 = vsel %vm5881, %v5884, %v5887
        %v5889 = vsel %vm5879, nan, %v5888
        %v5890 = vand.u32 2147483647, %v4452
        %vm5891 = vcmp.le.f32.partialorder %v5890, 0.7853982
        %vm5892 = vcmp.lt.s32.totalorder %v4452, 0
        %v5893 = vand.u32 %v4452, 2139095040
        %v5894 = vshrl.u32 %v5893, 23
        %v5895 = vsub.s32 %v5894, 127
        %v5896 = vand.u32 2147483647, %v4452
        %v5897 = vand.u32 %v5896, 8388607
        %v5898 = vor.u32 %v5897, 8388608
        %v5899 = vsub.s32 0, %v5898
        %v5900 = vadd.s32 %v5895, 1
        %vm5901 = vcmp.gt.s32.totalorder %v5900, 0
        %v5902 = vsel %vm5901, %v5900, 0
        %v5903 = vshrl.u32 %v5902, 5
        %v5904 = vand.u32 %v5902, 31
        %v5905 = vsub.s32 32, %v5904
        %v5906 = vshrl.u32 683565275, %v5905
        %v5907 = vshll.u32 683565275, %v5904
        %v5908 = vshrl.u32 2475754826, %v5905
        %v5909 = vor.u32 %v5907, %v5908
        %v5910 = vshll.u32 2475754826, %v5904
        %v5911 = vshrl.u32 2131351028, %v5905
        %v5912 = vor.u32 %v5910, %v5911
        %v5913 = vshll.u32 2131351028, %v5904
        %v5914 = vshrl.u32 2102212464, %v5905
        %v5915 = vor.u32 %v5913, %v5914
        %v5916 = vshll.u32 2102212464, %v5904
        %v5917 = vshrl.u32 920167782, %v5905
        %v5918 = vor.u32 %v5916, %v5917
        %v5919 = vshll.u32 920167782, %v5904
        %v5920 = vshrl.u32 1326507024, %v5905
        %v5921 = vor.u32 %v5919, %v5920
        %vm5922 = vcmp.lt.s32.totalorder %v5903, 1
        %vm5923 = vcmp.lt.s32.totalorder %v5903, 2
        %vm5924 = vcmp.lt.s32.totalorder %v5903, 3
        %vm5925 = vcmp.lt.s32.totalorder %v5903, 4
        %v5926 = vsel %vm5922, %v5906, %v5909
        %v5927 = vsel %vm5925, %v5915, 2102212464
        %v5928 = vsel %vm5924, %v5912, %v5927
        %v5929 = vsel %vm5923, %v5926, %v5928
        %v5930 = vsel %vm5922, %v5909, %v5912
        %v5931 = vsel %vm5925, %v5918, 920167782
        %v5932 = vsel %vm5924, %v5915, %v5931
        %v5933 = vsel %vm5923, %v5930, %v5932
        %v5934 = vsel %vm5922, %v5912, %v5915
        %v5935 = vsel %vm5925, %v5921, 1326507024
        %v5936 = vsel %vm5924, %v5918, %v5935
        %v5937 = vsel %vm5923, %v5934, %v5936
        %v5938 = vshll.u32 %v5898, 8
        %v5939 = vmul.u32.u64.compose %v5938, %v5937
        %v5940 = vextract.low.u32 %v5939
        %v5941 = vextract.high.u32 %v5939
        %v5942 = vmul.u32.u64.compose %v5938, %v5933
        %v5943 = vextract.low.u32 %v5942
        %v5944 = vextract.high.u32 %v5942
        %v5945 = vmul.u32 %v5938, %v5929
        %v5946 = vadd.s32 %v5941, %v5943
        %vm5947 = vc.u32 %v5941, %v5943
        %v5948 = vadd.s32 %v5944, 1
        %v5949 = vsel %vm5947, %v5948, %v5944
        %v5950 = vadd.s32 %v5945, %v5949
        %v5951 = vadd.s32 %v5950, 536870912
        %v5952 = vshrl.u32 %v5951, 30
        %v5953 = vshll.u32 %v5952, 30
        %v5954 = vsub.s32 %v5950, %v5953
        %vm5955 = vcmp.lt.s32.totalorder %v5954, 0
        %v5956 = vsub.s32 0, %v5954
        %v5957 = vsel %vm5955, %v5956, %v5954
        %v5958 = vclz %v5957
        %v5959 = vsub.s32 %v5958, 2
        %vm5960 = vcmp.gt.s32.totalorder 0, %v5959
        %v5961 = vsel %vm5960, 0, %v5959
        %v5962 = vsub.s32 32, %v5961
        %v5963 = vshll.u32 %v5954, %v5961
        %v5964 = vshrl.u32 %v5946, %v5962
        %v5965 = vor.u32 %v5963, %v5964
        %v5966 = vsub.s32 4294967266, %v5961
        %v5967 = vadd.s32 %v5966, 127
        %v5968 = vshll.u32 %v5967, 23
        %v5969 = vor.u32 4788187, %v5968
        %v5970 = vand.u32 2147483647, %v5969
        %v5972 = vcvt.s32.f32 %v5965
        %v5973 = vmul.f32 %v5972, %v5970
        %v5974 = vxor.u32 %v5973, 2147483648
        %v5975 = vsel %vm5892, %v5974, %v5973
        %v5976 = vsub.s32 4, %v5952
        %v5977 = vsel %vm5892, %v5976, %v5952
        %v5978 = vsel %vm5891, %v4452, %v5975
        %v5979 = vsel %vm5891, 0, %v5977
        %v5980 = vcosq.f32.pop %v5978
        %v5981 = vsinq.f32.pop %v5978
        %vm5982 = vweird.f32 %v4452
        %v5983 = vand.u32 %v5979, 3
        %vm5984 = vcmp.lt.s32.totalorder %v5983, 2
        %vm5985 = vcmp.eq.s32.totalorder %v5983, 0
        %v5986 = vxor.u32 %v5981, 2147483648
        %v5987 = vsel %vm5985, %v5980, %v5986
        %vm5988 = vcmp.eq.s32.totalorder %v5983, 2
        %v5989 = vxor.u32 %v5980, 2147483648
        %v5990 = vsel %vm5988, %v5989, %v5981
        %v5991 = vsel %vm5984, %v5987, %v5990
        %v5992 = vsel %vm5982, nan, %v5991
        %v5993 = vand.u32 2147483647, %v4527
        %vm5994 = vcmp.le.f32.partialorder %v5993, 0.7853982
        %vm5995 = vcmp.lt.s32.totalorder %v4527, 0
        %v5996 = vand.u32 %v4527, 2139095040
        %v5997 = vshrl.u32 %v5996, 23
        %v5998 = vsub.s32 %v5997, 127
        %v5999 = vand.u32 2147483647, %v4527
        %v6000 = vand.u32 %v5999, 8388607
        %v6001 = vor.u32 %v6000, 8388608
        %v6002 = vsub.s32 0, %v6001
        %v6003 = vadd.s32 %v5998, 1
        %vm6004 = vcmp.gt.s32.totalorder %v6003, 0
        %v6005 = vsel %vm6004, %v6003, 0
        %v6006 = vshrl.u32 %v6005, 5
        %v6007 = vand.u32 %v6005, 31
        %v6008 = vsub.s32 32, %v6007
        %v6009 = vshrl.u32 683565275, %v6008
        %v6010 = vshll.u32 683565275, %v6007
        %v6011 = vshrl.u32 2475754826, %v6008
        %v6012 = vor.u32 %v6010, %v6011
        %v6013 = vshll.u32 2475754826, %v6007
        %v6014 = vshrl.u32 2131351028, %v6008
        %v6015 = vor.u32 %v6013, %v6014
        %v6016 = vshll.u32 2131351028, %v6007
        %v6017 = vshrl.u32 2102212464, %v6008
        %v6018 = vor.u32 %v6016, %v6017
        %v6019 = vshll.u32 2102212464, %v6007
        %v6020 = vshrl.u32 920167782, %v6008
        %v6021 = vor.u32 %v6019, %v6020
        %v6022 = vshll.u32 920167782, %v6007
        %v6023 = vshrl.u32 1326507024, %v6008
        %v6024 = vor.u32 %v6022, %v6023
        %vm6025 = vcmp.lt.s32.totalorder %v6006, 1
        %vm6026 = vcmp.lt.s32.totalorder %v6006, 2
        %vm6027 = vcmp.lt.s32.totalorder %v6006, 3
        %vm6028 = vcmp.lt.s32.totalorder %v6006, 4
        %v6029 = vsel %vm6025, %v6009, %v6012
        %v6030 = vsel %vm6028, %v6018, 2102212464
        %v6031 = vsel %vm6027, %v6015, %v6030
        %v6032 = vsel %vm6026, %v6029, %v6031
        %v6033 = vsel %vm6025, %v6012, %v6015
        %v6034 = vsel %vm6028, %v6021, 920167782
        %v6035 = vsel %vm6027, %v6018, %v6034
        %v6036 = vsel %vm6026, %v6033, %v6035
        %v6037 = vsel %vm6025, %v6015, %v6018
        %v6038 = vsel %vm6028, %v6024, 1326507024
        %v6039 = vsel %vm6027, %v6021, %v6038
        %v6040 = vsel %vm6026, %v6037, %v6039
        %v6041 = vshll.u32 %v6001, 8
        %v6042 = vmul.u32.u64.compose %v6041, %v6040
        %v6043 = vextract.low.u32 %v6042
        %v6044 = vextract.high.u32 %v6042
        %v6045 = vmul.u32.u64.compose %v6041, %v6036
        %v6046 = vextract.low.u32 %v6045
        %v6047 = vextract.high.u32 %v6045
        %v6048 = vmul.u32 %v6041, %v6032
        %v6049 = vadd.s32 %v6044, %v6046
        %vm6050 = vc.u32 %v6044, %v6046
        %v6051 = vadd.s32 %v6047, 1
        %v6052 = vsel %vm6050, %v6051, %v6047
        %v6053 = vadd.s32 %v6048, %v6052
        %v6054 = vadd.s32 %v6053, 536870912
        %v6055 = vshrl.u32 %v6054, 30
        %v6056 = vshll.u32 %v6055, 30
        %v6057 = vsub.s32 %v6053, %v6056
        %vm6058 = vcmp.lt.s32.totalorder %v6057, 0
        %v6059 = vsub.s32 0, %v6057
        %v6060 = vsel %vm6058, %v6059, %v6057
        %v6061 = vclz %v6060
        %v6062 = vsub.s32 %v6061, 2
        %vm6063 = vcmp.gt.s32.totalorder 0, %v6062
        %v6064 = vsel %vm6063, 0, %v6062
        %v6065 = vsub.s32 32, %v6064
        %v6066 = vshll.u32 %v6057, %v6064
        %v6067 = vshrl.u32 %v6049, %v6065
        %v6068 = vor.u32 %v6066, %v6067
        %v6069 = vsub.s32 4294967266, %v6064
        %v6070 = vadd.s32 %v6069, 127
        %v6071 = vshll.u32 %v6070, 23
        %v6072 = vor.u32 4788187, %v6071
        %v6073 = vand.u32 2147483647, %v6072
        %v6075 = vcvt.s32.f32 %v6068
        %v6076 = vmul.f32 %v6075, %v6073
        %v6077 = vxor.u32 %v6076, 2147483648
        %v6078 = vsel %vm5995, %v6077, %v6076
        %v6079 = vsub.s32 4, %v6055
        %v6080 = vsel %vm5995, %v6079, %v6055
        %v6081 = vsel %vm5994, %v4527, %v6078
        %v6082 = vsel %vm5994, 0, %v6080
        %v6083 = vcosq.f32.pop %v6081
        %v6084 = vsinq.f32.pop %v6081
        %vm6085 = vweird.f32 %v4527
        %v6086 = vand.u32 %v6082, 3
        %vm6087 = vcmp.lt.s32.totalorder %v6086, 2
        %vm6088 = vcmp.eq.s32.totalorder %v6086, 0
        %v6089 = vxor.u32 %v6084, 2147483648
        %v6090 = vsel %vm6088, %v6083, %v6089
        %vm6091 = vcmp.eq.s32.totalorder %v6086, 2
        %v6092 = vxor.u32 %v6083, 2147483648
        %v6093 = vsel %vm6091, %v6092, %v6084
        %v6094 = vsel %vm6087, %v6090, %v6093
        %v6095 = vsel %vm6085, nan, %v6094
        %v6096 = vand.u32 2147483647, %v4529
        %vm6097 = vcmp.le.f32.partialorder %v6096, 0.7853982
        %vm6098 = vcmp.lt.s32.totalorder %v4529, 0
        %v6099 = vand.u32 %v4529, 2139095040
        %v6100 = vshrl.u32 %v6099, 23
        %v6101 = vsub.s32 %v6100, 127
        %v6102 = vand.u32 2147483647, %v4529
        %v6103 = vand.u32 %v6102, 8388607
        %v6104 = vor.u32 %v6103, 8388608
        %v6105 = vsub.s32 0, %v6104
        %v6106 = vadd.s32 %v6101, 1
        %vm6107 = vcmp.gt.s32.totalorder %v6106, 0
        %v6108 = vsel %vm6107, %v6106, 0
        %v6109 = vshrl.u32 %v6108, 5
        %v6110 = vand.u32 %v6108, 31
        %v6111 = vsub.s32 32, %v6110
        %v6112 = vshrl.u32 683565275, %v6111
        %v6113 = vshll.u32 683565275, %v6110
        %v6114 = vshrl.u32 2475754826, %v6111
        %v6115 = vor.u32 %v6113, %v6114
        %v6116 = vshll.u32 2475754826, %v6110
        %v6117 = vshrl.u32 2131351028, %v6111
        %v6118 = vor.u32 %v6116, %v6117
        %v6119 = vshll.u32 2131351028, %v6110
        %v6120 = vshrl.u32 2102212464, %v6111
        %v6121 = vor.u32 %v6119, %v6120
        %v6122 = vshll.u32 2102212464, %v6110
        %v6123 = vshrl.u32 920167782, %v6111
        %v6124 = vor.u32 %v6122, %v6123
        %v6125 = vshll.u32 920167782, %v6110
        %v6126 = vshrl.u32 1326507024, %v6111
        %v6127 = vor.u32 %v6125, %v6126
        %vm6128 = vcmp.lt.s32.totalorder %v6109, 1
        %vm6129 = vcmp.lt.s32.totalorder %v6109, 2
        %vm6130 = vcmp.lt.s32.totalorder %v6109, 3
        %vm6131 = vcmp.lt.s32.totalorder %v6109, 4
        %v6132 = vsel %vm6128, %v6112, %v6115
        %v6133 = vsel %vm6131, %v6121, 2102212464
        %v6134 = vsel %vm6130, %v6118, %v6133
        %v6135 = vsel %vm6129, %v6132, %v6134
        %v6136 = vsel %vm6128, %v6115, %v6118
        %v6137 = vsel %vm6131, %v6124, 920167782
        %v6138 = vsel %vm6130, %v6121, %v6137
        %v6139 = vsel %vm6129, %v6136, %v6138
        %v6140 = vsel %vm6128, %v6118, %v6121
        %v6141 = vsel %vm6131, %v6127, 1326507024
        %v6142 = vsel %vm6130, %v6124, %v6141
        %v6143 = vsel %vm6129, %v6140, %v6142
        %v6144 = vshll.u32 %v6104, 8
        %v6145 = vmul.u32.u64.compose %v6144, %v6143
        %v6146 = vextract.low.u32 %v6145
        %v6147 = vextract.high.u32 %v6145
        %v6148 = vmul.u32.u64.compose %v6144, %v6139
        %v6149 = vextract.low.u32 %v6148
        %v6150 = vextract.high.u32 %v6148
        %v6151 = vmul.u32 %v6144, %v6135
        %v6152 = vadd.s32 %v6147, %v6149
        %vm6153 = vc.u32 %v6147, %v6149
        %v6154 = vadd.s32 %v6150, 1
        %v6155 = vsel %vm6153, %v6154, %v6150
        %v6156 = vadd.s32 %v6151, %v6155
        %v6157 = vadd.s32 %v6156, 536870912
        %v6158 = vshrl.u32 %v6157, 30
        %v6159 = vshll.u32 %v6158, 30
        %v6160 = vsub.s32 %v6156, %v6159
        %vm6161 = vcmp.lt.s32.totalorder %v6160, 0
        %v6162 = vsub.s32 0, %v6160
        %v6163 = vsel %vm6161, %v6162, %v6160
        %v6164 = vclz %v6163
        %v6165 = vsub.s32 %v6164, 2
        %vm6166 = vcmp.gt.s32.totalorder 0, %v6165
        %v6167 = vsel %vm6166, 0, %v6165
        %v6168 = vsub.s32 32, %v6167
        %v6169 = vshll.u32 %v6160, %v6167
        %v6170 = vshrl.u32 %v6152, %v6168
        %v6171 = vor.u32 %v6169, %v6170
        %v6172 = vsub.s32 4294967266, %v6167
        %v6173 = vadd.s32 %v6172, 127
        %v6174 = vshll.u32 %v6173, 23
        %v6175 = vor.u32 4788187, %v6174
        %v6176 = vand.u32 2147483647, %v6175
        %v6178 = vcvt.s32.f32 %v6171
        %v6179 = vmul.f32 %v6178, %v6176
        %v6180 = vxor.u32 %v6179, 2147483648
        %v6181 = vsel %vm6098, %v6180, %v6179
        %v6182 = vsub.s32 4, %v6158
        %v6183 = vsel %vm6098, %v6182, %v6158
        %v6184 = vsel %vm6097, %v4529, %v6181
        %v6185 = vsel %vm6097, 0, %v6183
        %v6186 = vcosq.f32.pop %v6184
        %v6187 = vsinq.f32.pop %v6184
        %vm6188 = vweird.f32 %v4529
        %v6189 = vand.u32 %v6185, 3
        %vm6190 = vcmp.lt.s32.totalorder %v6189, 2
        %vm6191 = vcmp.eq.s32.totalorder %v6189, 0
        %v6192 = vxor.u32 %v6187, 2147483648
        %v6193 = vsel %vm6191, %v6186, %v6192
        %vm6194 = vcmp.eq.s32.totalorder %v6189, 2
        %v6195 = vxor.u32 %v6186, 2147483648
        %v6196 = vsel %vm6194, %v6195, %v6187
        %v6197 = vsel %vm6190, %v6193, %v6196
        %v6198 = vsel %vm6188, nan, %v6197
        %6199 = vst [vmem:[#allocation2 + $0x60] sm:$0xff] %v5477
        %6200 = vst [vmem:[#allocation2 + $0x68] sm:$0xff] %v5580
        %6201 = vst [vmem:[#allocation2 + $0x70] sm:$0xff] %v5683
        %6202 = vst [vmem:[#allocation2 + $0x78] sm:$0xff] %v5786
        %6203 = vst [vmem:[#allocation2 + $0x80] sm:$0xff] %v5889
        %6204 = vst [vmem:[#allocation2 + $0x88] sm:$0xff] %v5992
        %6205 = vst [vmem:[#allocation2 + $0x90] sm:$0xff] %v6095
        %6206 = vst [vmem:[#allocation2 + $0x98] sm:$0xff] %v6198
        %v6207 = vld [vmem:[#allocation2] sm:$0xff]
        %v6208 = vld [vmem:[#allocation2 + $0x8] sm:$0xff]
        %v6209 = vld [vmem:[#allocation2 + $0x10] sm:$0xff]
        %v6210 = vld [vmem:[#allocation2 + $0x18] sm:$0xff]
        %v6211 = vld [vmem:[#allocation2 + $0x20] sm:$0xff]
        %v6212 = vld [vmem:[#allocation2 + $0x28] sm:$0xff]
        %v6213 = vld [vmem:[#allocation2 + $0x30] sm:$0xff]
        %v6214 = vld [vmem:[#allocation2 + $0x38] sm:$0xff]
        %v6215 = vld [vmem:[#allocation2 + $0x40] sm:$0xff]
        %v6216 = vld [vmem:[#allocation2 + $0x48] sm:$0xff]
        %v6217 = vld [vmem:[#allocation2 + $0x50] sm:$0xff]
        %v6218 = vld [vmem:[#allocation2 + $0x58] sm:$0xff]
        %v6219 = vld [vmem:[#allocation2 + $0x60] sm:$0xff]
        %v6220 = vld [vmem:[#allocation2 + $0x68] sm:$0xff]
        %v6221 = vld [vmem:[#allocation2 + $0x70] sm:$0xff]
        %v6222 = vld [vmem:[#allocation2 + $0x78] sm:$0xff]
        %v6223 = vld [vmem:[#allocation2 + $0x80] sm:$0xff]
        %v6224 = vld [vmem:[#allocation2 + $0x88] sm:$0xff]
        %v6225 = vld [vmem:[#allocation2 + $0x90] sm:$0xff]
        %v6226 = vld [vmem:[#allocation2 + $0x98] sm:$0xff]
        %v6227 = vld [vmem:[%s2] sm:$0xff]
        %v6228 = vld [vmem:[%s2 + $0x8] sm:$0xff]
        %v6229 = vld [vmem:[%s2 + $0x10] sm:$0xff]
        %v6230 = vld [vmem:[%s2 + $0x18] sm:$0xff]
        %v6231 = vld [vmem:[%s2147] sm:$0xff]
        %v6232 = vld [vmem:[%s2147 + $0x8] sm:$0xff]
        %v6233 = vld [vmem:[%s2147 + $0x10] sm:$0xff]
        %v6234 = vld [vmem:[%s2147 + $0x18] sm:$0xff]
        %v6236 = vsel %vm2152, %v6231, 0
        %v6239 = vsel %vm2152, %v6232, 0
        %v6242 = vsel %vm2152, %v6233, 0
        %v6245 = vsel %vm2152, %v6234, 0
        %6247 = vmatprep.subr.mxu0 %v6208
        %6248 = vmatpush1.msra.mxu0 %v6207
        %6249 = vmatprep.subr.mxu0 %v6212
        %6250 = vmatpush1.msra.mxu0 %v6211
        %6251 = vmatprep.subr.mxu0 %v6216
        %6252 = vmatpush1.msra.mxu0 %v6215
        %6253 = vmatprep.subr.mxu0 %v6220
        %6254 = vmatpush1.msra.mxu0 %v6219
        %6255 = vmatprep.subr.mxu0 %v6224
        %6256 = vmatpush1.msra.mxu0 %v6223
        %6257 = vmatprep.subr.mxu0 0.0
        %6258 = vmatpush1.msra.mxu0 0.0
        %6259 = vmatprep.subr.mxu0 0.0
        %6260 = vmatpush1.msra.mxu0 0.0
        %6261 = vmatprep.subr.mxu0 0.0
        %6262 = vmatpush1.msra.mxu0 0.0
        %6263 = vmatprep.subr.mxu0 0.0
        %6264 = vmatpush1.msra.mxu0 0.0
        %6265 = vmatprep.subr.mxu0 0.0
        %6266 = vmatpush1.msra.mxu0 0.0
        %6267 = vmatprep.subr.mxu0 0.0
        %6268 = vmatpush1.msra.mxu0 0.0
        %6269 = vmatprep.subr.mxu0 0.0
        %6270 = vmatpush1.msra.mxu0 0.0
        %6271 = vmatprep.subr.mxu0 0.0
        %6272 = vmatpush1.msra.mxu0 0.0
        %6273 = vmatprep.subr.mxu0 0.0
        %6274 = vmatpush1.msra.mxu0 0.0
        %6275 = vmatprep.subr.mxu0 0.0
        %6276 = vmatpush1.msra.mxu0 0.0
        %6277 = vmatprep.subr.mxu0 0.0
        %6278 = vmatpush1.msra.mxu0 0.0
        %6279 = vmatprep.subr.mxu0 0.0
        %6280 = vmatpush1.msra.mxu0 0.0
        %6281 = vmatprep.subr.mxu0 0.0
        %6282 = vmatpush1.msra.mxu0 0.0
        %6283 = vmatprep.subr.mxu0 0.0
        %6284 = vmatpush1.msra.mxu0 0.0
        %6285 = vmatprep.subr.mxu0 0.0
        %6286 = vmatpush1.msra.mxu0 0.0
        %6287 = vmatprep.subr.mxu0 0.0
        %6288 = vmatpush1.msra.mxu0 0.0
        %6289 = vmatprep.subr.mxu0 0.0
        %6290 = vmatpush1.msra.mxu0 0.0
        %6291 = vmatprep.subr.mxu0 0.0
        %6292 = vmatpush1.msra.mxu0 0.0
        %6293 = vmatprep.subr.mxu0 0.0
        %6294 = vmatpush1.msra.mxu0 0.0
        %6295 = vmatprep.subr.mxu0 0.0
        %6296 = vmatpush1.msra.mxu0 0.0
        %6297 = vmatprep.subr.mxu0 0.0
        %6298 = vmatpush1.msra.mxu0 0.0
        %6299 = vmatprep.subr.mxu0 0.0
        %6300 = vmatpush1.msra.mxu0 0.0
        %6301 = vmatprep.subr.mxu0 0.0
        %6302 = vmatpush1.msra.mxu0 0.0
        %6303 = vmatprep.subr.mxu0 0.0
        %6304 = vmatpush1.msra.mxu0 0.0
        %6305 = vmatprep.subr.mxu0 0.0
        %6306 = vmatpush1.msra.mxu0 0.0
        %6307 = vmatprep.subr.mxu0 0.0
        %6308 = vmatpush1.msra.mxu0 0.0
        %6309 = vmatprep.subr.mxu0 0.0
        %6310 = vmatpush1.msra.mxu0 0.0
        %6311 = vmatprep.mubr.f32.mxu0 0.0
        %6312 = vmatmul.mubr.f32.gmra.mrb[0].mxu0 %v6236
        %v6313 = vpop.f32.mrb[0].mxu0
        %v6314 = vadd.f32 0.0, %v6313
        %v6315 = vpop.f32.mrb[0].mxu0
        %v6316 = vadd.f32 0.0, %v6315
        %6317 = vmatprep.mubr.f32.mxu0 0.0
        %6318 = vmatmul.mubr.f32.gmra.mrb[0].mxu0 %v6239
        %v6319 = vpop.f32.mrb[0].mxu0
        %v6320 = vadd.f32 0.0, %v6319
        %v6321 = vpop.f32.mrb[0].mxu0
        %v6322 = vadd.f32 0.0, %v6321
        %6323 = vmatprep.mubr.f32.mxu0 0.0
        %6324 = vmatmul.mubr.f32.gmra.mrb[0].mxu0 %v6242
        %v6325 = vpop.f32.mrb[0].mxu0
        %v6326 = vadd.f32 0.0, %v6325
        %v6327 = vpop.f32.mrb[0].mxu0
        %v6328 = vadd.f32 0.0, %v6327
        %6329 = vmatprep.mubr.f32.mxu0 0.0
        %6330 = vmatmul.mubr.f32.gmra.mrb[0].mxu0 %v6245
        %v6331 = vpop.f32.mrb[0].mxu0
        %v6332 = vadd.f32 0.0, %v6331
        %v6333 = vpop.f32.mrb[0].mxu0
        %v6334 = vadd.f32 0.0, %v6333
        %6335 = vdwg.mxu0
        %6336 = vmatprep.subr.mxu0 %v6210
        %6337 = vmatpush1.msra.mxu0 %v6209
        %6338 = vmatprep.subr.mxu0 %v6214
        %6339 = vmatpush1.msra.mxu0 %v6213
        %6340 = vmatprep.subr.mxu0 %v6218
        %6341 = vmatpush1.msra.mxu0 %v6217
        %6342 = vmatprep.subr.mxu0 %v6222
        %6343 = vmatpush1.msra.mxu0 %v6221
        %6344 = vmatprep.subr.mxu0 %v6226
        %6345 = vmatpush1.msra.mxu0 %v6225
        %6346 = vmatprep.subr.mxu0 0.0
        %6347 = vmatpush1.msra.mxu0 0.0
        %6348 = vmatprep.subr.mxu0 0.0
        %6349 = vmatpush1.msra.mxu0 0.0
        %6350 = vmatprep.subr.mxu0 0.0
        %6351 = vmatpush1.msra.mxu0 0.0
        %6352 = vmatprep.subr.mxu0 0.0
        %6353 = vmatpush1.msra.mxu0 0.0
        %6354 = vmatprep.subr.mxu0 0.0
        %6355 = vmatpush1.msra.mxu0 0.0
        %6356 = vmatprep.subr.mxu0 0.0
        %6357 = vmatpush1.msra.mxu0 0.0
        %6358 = vmatprep.subr.mxu0 0.0
        %6359 = vmatpush1.msra.mxu0 0.0
        %6360 = vmatprep.subr.mxu0 0.0
        %6361 = vmatpush1.msra.mxu0 0.0
        %6362 = vmatprep.subr.mxu0 0.0
        %6363 = vmatpush1.msra.mxu0 0.0
        %6364 = vmatprep.subr.mxu0 0.0
        %6365 = vmatpush1.msra.mxu0 0.0
        %6366 = vmatprep.subr.mxu0 0.0
        %6367 = vmatpush1.msra.mxu0 0.0
        %6368 = vmatprep.subr.mxu0 0.0
        %6369 = vmatpush1.msra.mxu0 0.0
        %6370 = vmatprep.subr.mxu0 0.0
        %6371 = vmatpush1.msra.mxu0 0.0
        %6372 = vmatprep.subr.mxu0 0.0
        %6373 = vmatpush1.msra.mxu0 0.0
        %6374 = vmatprep.subr.mxu0 0.0
        %6375 = vmatpush1.msra.mxu0 0.0
        %6376 = vmatprep.subr.mxu0 0.0
        %6377 = vmatpush1.msra.mxu0 0.0
        %6378 = vmatprep.subr.mxu0 0.0
        %6379 = vmatpush1.msra.mxu0 0.0
        %6380 = vmatprep.subr.mxu0 0.0
        %6381 = vmatpush1.msra.mxu0 0.0
        %6382 = vmatprep.subr.mxu0 0.0
        %6383 = vmatpush1.msra.mxu0 0.0
        %6384 = vmatprep.subr.mxu0 0.0
        %6385 = vmatpush1.msra.mxu0 0.0
        %6386 = vmatprep.subr.mxu0 0.0
        %6387 = vmatpush1.msra.mxu0 0.0
        %6388 = vmatprep.subr.mxu0 0.0
        %6389 = vmatpush1.msra.mxu0 0.0
        %6390 = vmatprep.subr.mxu0 0.0
        %6391 = vmatpush1.msra.mxu0 0.0
        %6392 = vmatprep.subr.mxu0 0.0
        %6393 = vmatpush1.msra.mxu0 0.0
        %6394 = vmatprep.subr.mxu0 0.0
        %6395 = vmatpush1.msra.mxu0 0.0
        %6396 = vmatprep.subr.mxu0 0.0
        %6397 = vmatpush1.msra.mxu0 0.0
        %6398 = vmatprep.subr.mxu0 0.0
        %6399 = vmatpush1.msra.mxu0 0.0
        %6400 = vmatprep.mubr.f32.mxu0 0.0
        %6401 = vmatmul.mubr.f32.gmra.mrb[0].mxu0 %v6236
        %v6402 = vpop.f32.mrb[0].mxu0
        %v6403 = vadd.f32 0.0, %v6402
        %v6404 = vpop.f32.mrb[0].mxu0
        %v6405 = vadd.f32 0.0, %v6404
        %6406 = vmatprep.mubr.f32.mxu0 0.0
        %6407 = vmatmul.mubr.f32.gmra.mrb[0].mxu0 %v6239
        %v6408 = vpop.f32.mrb[0].mxu0
        %v6409 = vadd.f32 0.0, %v6408
        %v6410 = vpop.f32.mrb[0].mxu0
        %v6411 = vadd.f32 0.0, %v6410
        %6412 = vmatprep.mubr.f32.mxu0 0.0
        %6413 = vmatmul.mubr.f32.gmra.mrb[0].mxu0 %v6242
        %v6414 = vpop.f32.mrb[0].mxu0
        %v6415 = vadd.f32 0.0, %v6414
        %v6416 = vpop.f32.mrb[0].mxu0
        %v6417 = vadd.f32 0.0, %v6416
        %6418 = vmatprep.mubr.f32.mxu0 0.0
        %6419 = vmatmul.mubr.f32.gmra.mrb[0].mxu0 %v6245
        %v6420 = vpop.f32.mrb[0].mxu0
        %v6421 = vadd.f32 0.0, %v6420
        %v6422 = vpop.f32.mrb[0].mxu0
        %v6423 = vadd.f32 0.0, %v6422
        %6424 = vdwg.mxu0
        %v6425 = vld [vmem:[%s4] sm:$0xff]
        %v6426 = vld [vmem:[%s4 + $0x8] sm:$0xff]
        %v6427 = vld [vmem:[%s4 + $0x10] sm:$0xff]
        %v6428 = vld [vmem:[%s4 + $0x18] sm:$0xff]
        %6430 = vset.pattern.permute.xlu0 0
        %6431 = vperm.xlu0 %6430, %v6425
        %v6432 = vpop.permute.xlu0 %6431
        %6435 = vset.pattern.permute.xlu0 0
        %6436 = vperm.xlu0 %6435, %v6426
        %v6437 = vpop.permute.xlu0 %6436
        %6440 = vset.pattern.permute.xlu0 0
        %6441 = vperm.xlu0 %6440, %v6427
        %v6442 = vpop.permute.xlu0 %6441
        %6445 = vset.pattern.permute.xlu0 0
        %6446 = vperm.xlu0 %6445, %v6428
        %v6447 = vpop.permute.xlu0 %6446
        %v6450 = vsel %vm2152, %v6227, 0
        %v6453 = vsel %vm2152, %v6228, 0
        %v6456 = vsel %vm2152, %v6229, 0
        %v6459 = vsel %vm2152, %v6230, 0
        %6461 = vmatprep.subr.mxu0 %v6208
        %6462 = vmatpush1.msra.mxu0 %v6207
        %6463 = vmatprep.subr.mxu0 %v6212
        %6464 = vmatpush1.msra.mxu0 %v6211
        %6465 = vmatprep.subr.mxu0 %v6216
        %6466 = vmatpush1.msra.mxu0 %v6215
        %6467 = vmatprep.subr.mxu0 %v6220
        %6468 = vmatpush1.msra.mxu0 %v6219
        %6469 = vmatprep.subr.mxu0 %v6224
        %6470 = vmatpush1.msra.mxu0 %v6223
        %6471 = vmatprep.subr.mxu0 0.0
        %6472 = vmatpush1.msra.mxu0 0.0
        %6473 = vmatprep.subr.mxu0 0.0
        %6474 = vmatpush1.msra.mxu0 0.0
        %6475 = vmatprep.subr.mxu0 0.0
        %6476 = vmatpush1.msra.mxu0 0.0
        %6477 = vmatprep.subr.mxu0 0.0
        %6478 = vmatpush1.msra.mxu0 0.0
        %6479 = vmatprep.subr.mxu0 0.0
        %6480 = vmatpush1.msra.mxu0 0.0
        %6481 = vmatprep.subr.mxu0 0.0
        %6482 = vmatpush1.msra.mxu0 0.0
        %6483 = vmatprep.subr.mxu0 0.0
        %6484 = vmatpush1.msra.mxu0 0.0
        %6485 = vmatprep.subr.mxu0 0.0
        %6486 = vmatpush1.msra.mxu0 0.0
        %6487 = vmatprep.subr.mxu0 0.0
        %6488 = vmatpush1.msra.mxu0 0.0
        %6489 = vmatprep.subr.mxu0 0.0
        %6490 = vmatpush1.msra.mxu0 0.0
        %6491 = vmatprep.subr.mxu0 0.0
        %6492 = vmatpush1.msra.mxu0 0.0
        %6493 = vmatprep.subr.mxu0 0.0
        %6494 = vmatpush1.msra.mxu0 0.0
        %6495 = vmatprep.subr.mxu0 0.0
        %6496 = vmatpush1.msra.mxu0 0.0
        %6497 = vmatprep.subr.mxu0 0.0
        %6498 = vmatpush1.msra.mxu0 0.0
        %6499 = vmatprep.subr.mxu0 0.0
        %6500 = vmatpush1.msra.mxu0 0.0
        %6501 = vmatprep.subr.mxu0 0.0
        %6502 = vmatpush1.msra.mxu0 0.0
        %6503 = vmatprep.subr.mxu0 0.0
        %6504 = vmatpush1.msra.mxu0 0.0
        %6505 = vmatprep.subr.mxu0 0.0
        %6506 = vmatpush1.msra.mxu0 0.0
        %6507 = vmatprep.subr.mxu0 0.0
        %6508 = vmatpush1.msra.mxu0 0.0
        %6509 = vmatprep.subr.mxu0 0.0
        %6510 = vmatpush1.msra.mxu0 0.0
        %6511 = vmatprep.subr.mxu0 0.0
        %6512 = vmatpush1.msra.mxu0 0.0
        %6513 = vmatprep.subr.mxu0 0.0
        %6514 = vmatpush1.msra.mxu0 0.0
        %6515 = vmatprep.subr.mxu0 0.0
        %6516 = vmatpush1.msra.mxu0 0.0
        %6517 = vmatprep.subr.mxu0 0.0
        %6518 = vmatpush1.msra.mxu0 0.0
        %6519 = vmatprep.subr.mxu0 0.0
        %6520 = vmatpush1.msra.mxu0 0.0
        %6521 = vmatprep.subr.mxu0 0.0
        %6522 = vmatpush1.msra.mxu0 0.0
        %6523 = vmatprep.subr.mxu0 0.0
        %6524 = vmatpush1.msra.mxu0 0.0
        %6525 = vmatprep.mubr.f32.mxu0 0.0
        %6526 = vmatmul.mubr.f32.gmra.mrb[0].mxu0 %v6450
        %v6527 = vpop.f32.mrb[0].mxu0
        %v6528 = vadd.f32 %v6432, %v6527
        %v6529 = vpop.f32.mrb[0].mxu0
        %v6530 = vadd.f32 %v6432, %v6529
        %6531 = vmatprep.mubr.f32.mxu0 0.0
        %6532 = vmatmul.mubr.f32.gmra.mrb[0].mxu0 %v6453
        %v6533 = vpop.f32.mrb[0].mxu0
        %v6534 = vadd.f32 %v6437, %v6533
        %v6535 = vpop.f32.mrb[0].mxu0
        %v6536 = vadd.f32 %v6437, %v6535
        %6537 = vmatprep.mubr.f32.mxu0 0.0
        %6538 = vmatmul.mubr.f32.gmra.mrb[0].mxu0 %v6456
        %v6539 = vpop.f32.mrb[0].mxu0
        %v6540 = vadd.f32 %v6442, %v6539
        %v6541 = vpop.f32.mrb[0].mxu0
        %v6542 = vadd.f32 %v6442, %v6541
        %6543 = vmatprep.mubr.f32.mxu0 0.0
        %6544 = vmatmul.mubr.f32.gmra.mrb[0].mxu0 %v6459
        %v6545 = vpop.f32.mrb[0].mxu0
        %v6546 = vadd.f32 %v6447, %v6545
        %v6547 = vpop.f32.mrb[0].mxu0
        %v6548 = vadd.f32 %v6447, %v6547
        %6549 = vdwg.mxu0
        %6550 = vmatprep.subr.mxu0 %v6210
        %6551 = vmatpush1.msra.mxu0 %v6209
        %6552 = vmatprep.subr.mxu0 %v6214
        %6553 = vmatpush1.msra.mxu0 %v6213
        %6554 = vmatprep.subr.mxu0 %v6218
        %6555 = vmatpush1.msra.mxu0 %v6217
        %6556 = vmatprep.subr.mxu0 %v6222
        %6557 = vmatpush1.msra.mxu0 %v6221
        %6558 = vmatprep.subr.mxu0 %v6226
        %6559 = vmatpush1.msra.mxu0 %v6225
        %6560 = vmatprep.subr.mxu0 0.0
        %6561 = vmatpush1.msra.mxu0 0.0
        %6562 = vmatprep.subr.mxu0 0.0
        %6563 = vmatpush1.msra.mxu0 0.0
        %6564 = vmatprep.subr.mxu0 0.0
        %6565 = vmatpush1.msra.mxu0 0.0
        %6566 = vmatprep.subr.mxu0 0.0
        %6567 = vmatpush1.msra.mxu0 0.0
        %6568 = vmatprep.subr.mxu0 0.0
        %6569 = vmatpush1.msra.mxu0 0.0
        %6570 = vmatprep.subr.mxu0 0.0
        %6571 = vmatpush1.msra.mxu0 0.0
        %6572 = vmatprep.subr.mxu0 0.0
        %6573 = vmatpush1.msra.mxu0 0.0
        %6574 = vmatprep.subr.mxu0 0.0
        %6575 = vmatpush1.msra.mxu0 0.0
        %6576 = vmatprep.subr.mxu0 0.0
        %6577 = vmatpush1.msra.mxu0 0.0
        %6578 = vmatprep.subr.mxu0 0.0
        %6579 = vmatpush1.msra.mxu0 0.0
        %6580 = vmatprep.subr.mxu0 0.0
        %6581 = vmatpush1.msra.mxu0 0.0
        %6582 = vmatprep.subr.mxu0 0.0
        %6583 = vmatpush1.msra.mxu0 0.0
        %6584 = vmatprep.subr.mxu0 0.0
        %6585 = vmatpush1.msra.mxu0 0.0
        %6586 = vmatprep.subr.mxu0 0.0
        %6587 = vmatpush1.msra.mxu0 0.0
        %6588 = vmatprep.subr.mxu0 0.0
        %6589 = vmatpush1.msra.mxu0 0.0
        %6590 = vmatprep.subr.mxu0 0.0
        %6591 = vmatpush1.msra.mxu0 0.0
        %6592 = vmatprep.subr.mxu0 0.0
        %6593 = vmatpush1.msra.mxu0 0.0
        %6594 = vmatprep.subr.mxu0 0.0
        %6595 = vmatpush1.msra.mxu0 0.0
        %6596 = vmatprep.subr.mxu0 0.0
        %6597 = vmatpush1.msra.mxu0 0.0
        %6598 = vmatprep.subr.mxu0 0.0
        %6599 = vmatpush1.msra.mxu0 0.0
        %6600 = vmatprep.subr.mxu0 0.0
        %6601 = vmatpush1.msra.mxu0 0.0
        %6602 = vmatprep.subr.mxu0 0.0
        %6603 = vmatpush1.msra.mxu0 0.0
        %6604 = vmatprep.subr.mxu0 0.0
        %6605 = vmatpush1.msra.mxu0 0.0
        %6606 = vmatprep.subr.mxu0 0.0
        %6607 = vmatpush1.msra.mxu0 0.0
        %6608 = vmatprep.subr.mxu0 0.0
        %6609 = vmatpush1.msra.mxu0 0.0
        %6610 = vmatprep.subr.mxu0 0.0
        %6611 = vmatpush1.msra.mxu0 0.0
        %6612 = vmatprep.subr.mxu0 0.0
        %6613 = vmatpush1.msra.mxu0 0.0
        %6614 = vmatprep.mubr.f32.mxu0 0.0
        %6615 = vmatmul.mubr.f32.gmra.mrb[0].mxu0 %v6450
        %v6616 = vpop.f32.mrb[0].mxu0
        %v6617 = vadd.f32 %v6432, %v6616
        %v6618 = vpop.f32.mrb[0].mxu0
        %v6619 = vadd.f32 %v6432, %v6618
        %6620 = vmatprep.mubr.f32.mxu0 0.0
        %6621 = vmatmul.mubr.f32.gmra.mrb[0].mxu0 %v6453
        %v6622 = vpop.f32.mrb[0].mxu0
        %v6623 = vadd.f32 %v6437, %v6622
        %v6624 = vpop.f32.mrb[0].mxu0
        %v6625 = vadd.f32 %v6437, %v6624
        %6626 = vmatprep.mubr.f32.mxu0 0.0
        %6627 = vmatmul.mubr.f32.gmra.mrb[0].mxu0 %v6456
        %v6628 = vpop.f32.mrb[0].mxu0
        %v6629 = vadd.f32 %v6442, %v6628
        %v6630 = vpop.f32.mrb[0].mxu0
        %v6631 = vadd.f32 %v6442, %v6630
        %6632 = vmatprep.mubr.f32.mxu0 0.0
        %6633 = vmatmul.mubr.f32.gmra.mrb[0].mxu0 %v6459
        %v6634 = vpop.f32.mrb[0].mxu0
        %v6635 = vadd.f32 %v6447, %v6634
        %v6636 = vpop.f32.mrb[0].mxu0
        %v6637 = vadd.f32 %v6447, %v6636
        %6638 = vdwg.mxu0
        %v6639 = vmax.f32 %v6528, 0.0
        %v6640 = vmax.f32 %v6530, 0.0
        %v6641 = vmax.f32 %v6617, 0.0
        %v6642 = vmax.f32 %v6619, 0.0
        %v6643 = vmax.f32 %v6534, 0.0
        %v6644 = vmax.f32 %v6536, 0.0
        %v6645 = vmax.f32 %v6623, 0.0
        %v6646 = vmax.f32 %v6625, 0.0
        %v6647 = vmax.f32 %v6540, 0.0
        %v6648 = vmax.f32 %v6542, 0.0
        %v6649 = vmax.f32 %v6629, 0.0
        %v6650 = vmax.f32 %v6631, 0.0
        %v6651 = vmax.f32 %v6546, 0.0
        %v6652 = vmax.f32 %v6548, 0.0
        %v6653 = vmax.f32 %v6635, 0.0
        %v6654 = vmax.f32 %v6637, 0.0
        %v6655 = vld [vmem:[%s3] sm:$0xff]
        %v6656 = vld [vmem:[%s3 + $0x8] sm:$0xff]
        %v6657 = vld [vmem:[%s3 + $0x10] sm:$0xff]
        %v6658 = vld [vmem:[%s3 + $0x18] sm:$0xff]
        %6659 = vset.pattern.permute.xlu0 1
        %6660 = vperm.xlu0 %6659, %v6425
        %v6661 = vpop.permute.xlu0 %6660
        %6663 = vset.pattern.permute.xlu0 1
        %6664 = vperm.xlu0 %6663, %v6426
        %v6665 = vpop.permute.xlu0 %6664
        %6667 = vset.pattern.permute.xlu0 1
        %6668 = vperm.xlu0 %6667, %v6427
        %v6669 = vpop.permute.xlu0 %6668
        %6671 = vset.pattern.permute.xlu0 1
        %6672 = vperm.xlu0 %6671, %v6428
        %v6673 = vpop.permute.xlu0 %6672
        %v6676 = vsel %vm2593, %v6655, 0
        %v6679 = vsel %vm2593, %v6656, 0
        %v6682 = vsel %vm2593, %v6657, 0
        %v6685 = vsel %vm2593, %v6658, 0
        %6687 = vmatprep.subr.mxu0 %v6640
        %6688 = vmatpush1.msra.mxu0 %v6639
        %6689 = vmatprep.subr.mxu0 %v6644
        %6690 = vmatpush1.msra.mxu0 %v6643
        %6691 = vmatprep.subr.mxu0 %v6648
        %6692 = vmatpush1.msra.mxu0 %v6647
        %6693 = vmatprep.subr.mxu0 %v6652
        %6694 = vmatpush1.msra.mxu0 %v6651
        %6695 = vmatprep.subr.mxu0 0.0
        %6696 = vmatpush1.msra.mxu0 0.0
        %6697 = vmatprep.subr.mxu0 0.0
        %6698 = vmatpush1.msra.mxu0 0.0
        %6699 = vmatprep.subr.mxu0 0.0
        %6700 = vmatpush1.msra.mxu0 0.0
        %6701 = vmatprep.subr.mxu0 0.0
        %6702 = vmatpush1.msra.mxu0 0.0
        %6703 = vmatprep.subr.mxu0 0.0
        %6704 = vmatpush1.msra.mxu0 0.0
        %6705 = vmatprep.subr.mxu0 0.0
        %6706 = vmatpush1.msra.mxu0 0.0
        %6707 = vmatprep.subr.mxu0 0.0
        %6708 = vmatpush1.msra.mxu0 0.0
        %6709 = vmatprep.subr.mxu0 0.0
        %6710 = vmatpush1.msra.mxu0 0.0
        %6711 = vmatprep.subr.mxu0 0.0
        %6712 = vmatpush1.msra.mxu0 0.0
        %6713 = vmatprep.subr.mxu0 0.0
        %6714 = vmatpush1.msra.mxu0 0.0
        %6715 = vmatprep.subr.mxu0 0.0
        %6716 = vmatpush1.msra.mxu0 0.0
        %6717 = vmatprep.subr.mxu0 0.0
        %6718 = vmatpush1.msra.mxu0 0.0
        %6719 = vmatprep.subr.mxu0 0.0
        %6720 = vmatpush1.msra.mxu0 0.0
        %6721 = vmatprep.subr.mxu0 0.0
        %6722 = vmatpush1.msra.mxu0 0.0
        %6723 = vmatprep.subr.mxu0 0.0
        %6724 = vmatpush1.msra.mxu0 0.0
        %6725 = vmatprep.subr.mxu0 0.0
        %6726 = vmatpush1.msra.mxu0 0.0
        %6727 = vmatprep.subr.mxu0 0.0
        %6728 = vmatpush1.msra.mxu0 0.0
        %6729 = vmatprep.subr.mxu0 0.0
        %6730 = vmatpush1.msra.mxu0 0.0
        %6731 = vmatprep.subr.mxu0 0.0
        %6732 = vmatpush1.msra.mxu0 0.0
        %6733 = vmatprep.subr.mxu0 0.0
        %6734 = vmatpush1.msra.mxu0 0.0
        %6735 = vmatprep.subr.mxu0 0.0
        %6736 = vmatpush1.msra.mxu0 0.0
        %6737 = vmatprep.subr.mxu0 0.0
        %6738 = vmatpush1.msra.mxu0 0.0
        %6739 = vmatprep.subr.mxu0 0.0
        %6740 = vmatpush1.msra.mxu0 0.0
        %6741 = vmatprep.subr.mxu0 0.0
        %6742 = vmatpush1.msra.mxu0 0.0
        %6743 = vmatprep.subr.mxu0 0.0
        %6744 = vmatpush1.msra.mxu0 0.0
        %6745 = vmatprep.subr.mxu0 0.0
        %6746 = vmatpush1.msra.mxu0 0.0
        %6747 = vmatprep.subr.mxu0 0.0
        %6748 = vmatpush1.msra.mxu0 0.0
        %6749 = vmatprep.subr.mxu0 0.0
        %6750 = vmatpush1.msra.mxu0 0.0
        %6751 = vmatprep.mubr.f32.mxu0 0.0
        %6752 = vmatmul.mubr.f32.gmra.mrb[0].mxu0 %v6676
        %v6753 = vpop.f32.mrb[0].mxu0
        %v6754 = vadd.f32 %v6661, %v6753
        %v6755 = vpop.f32.mrb[0].mxu0
        %v6756 = vadd.f32 %v6661, %v6755
        %6757 = vmatprep.mubr.f32.mxu0 0.0
        %6758 = vmatmul.mubr.f32.gmra.mrb[0].mxu0 %v6679
        %v6759 = vpop.f32.mrb[0].mxu0
        %v6760 = vadd.f32 %v6665, %v6759
        %v6761 = vpop.f32.mrb[0].mxu0
        %v6762 = vadd.f32 %v6665, %v6761
        %6763 = vmatprep.mubr.f32.mxu0 0.0
        %6764 = vmatmul.mubr.f32.gmra.mrb[0].mxu0 %v6682
        %v6765 = vpop.f32.mrb[0].mxu0
        %v6766 = vadd.f32 %v6669, %v6765
        %v6767 = vpop.f32.mrb[0].mxu0
        %v6768 = vadd.f32 %v6669, %v6767
        %6769 = vmatprep.mubr.f32.mxu0 0.0
        %6770 = vmatmul.mubr.f32.gmra.mrb[0].mxu0 %v6685
        %v6771 = vpop.f32.mrb[0].mxu0
        %v6772 = vadd.f32 %v6673, %v6771
        %v6773 = vpop.f32.mrb[0].mxu0
        %v6774 = vadd.f32 %v6673, %v6773
        %6775 = vdwg.mxu0
        %6776 = vmatprep.subr.mxu0 %v6642
        %6777 = vmatpush1.msra.mxu0 %v6641
        %6778 = vmatprep.subr.mxu0 %v6646
        %6779 = vmatpush1.msra.mxu0 %v6645
        %6780 = vmatprep.subr.mxu0 %v6650
        %6781 = vmatpush1.msra.mxu0 %v6649
        %6782 = vmatprep.subr.mxu0 %v6654
        %6783 = vmatpush1.msra.mxu0 %v6653
        %6784 = vmatprep.subr.mxu0 0.0
        %6785 = vmatpush1.msra.mxu0 0.0
        %6786 = vmatprep.subr.mxu0 0.0
        %6787 = vmatpush1.msra.mxu0 0.0
        %6788 = vmatprep.subr.mxu0 0.0
        %6789 = vmatpush1.msra.mxu0 0.0
        %6790 = vmatprep.subr.mxu0 0.0
        %6791 = vmatpush1.msra.mxu0 0.0
        %6792 = vmatprep.subr.mxu0 0.0
        %6793 = vmatpush1.msra.mxu0 0.0
        %6794 = vmatprep.subr.mxu0 0.0
        %6795 = vmatpush1.msra.mxu0 0.0
        %6796 = vmatprep.subr.mxu0 0.0
        %6797 = vmatpush1.msra.mxu0 0.0
        %6798 = vmatprep.subr.mxu0 0.0
        %6799 = vmatpush1.msra.mxu0 0.0
        %6800 = vmatprep.subr.mxu0 0.0
        %6801 = vmatpush1.msra.mxu0 0.0
        %6802 = vmatprep.subr.mxu0 0.0
        %6803 = vmatpush1.msra.mxu0 0.0
        %6804 = vmatprep.subr.mxu0 0.0
        %6805 = vmatpush1.msra.mxu0 0.0
        %6806 = vmatprep.subr.mxu0 0.0
        %6807 = vmatpush1.msra.mxu0 0.0
        %6808 = vmatprep.subr.mxu0 0.0
        %6809 = vmatpush1.msra.mxu0 0.0
        %6810 = vmatprep.subr.mxu0 0.0
        %6811 = vmatpush1.msra.mxu0 0.0
        %6812 = vmatprep.subr.mxu0 0.0
        %6813 = vmatpush1.msra.mxu0 0.0
        %6814 = vmatprep.subr.mxu0 0.0
        %6815 = vmatpush1.msra.mxu0 0.0
        %6816 = vmatprep.subr.mxu0 0.0
        %6817 = vmatpush1.msra.mxu0 0.0
        %6818 = vmatprep.subr.mxu0 0.0
        %6819 = vmatpush1.msra.mxu0 0.0
        %6820 = vmatprep.subr.mxu0 0.0
        %6821 = vmatpush1.msra.mxu0 0.0
        %6822 = vmatprep.subr.mxu0 0.0
        %6823 = vmatpush1.msra.mxu0 0.0
        %6824 = vmatprep.subr.mxu0 0.0
        %6825 = vmatpush1.msra.mxu0 0.0
        %6826 = vmatprep.subr.mxu0 0.0
        %6827 = vmatpush1.msra.mxu0 0.0
        %6828 = vmatprep.subr.mxu0 0.0
        %6829 = vmatpush1.msra.mxu0 0.0
        %6830 = vmatprep.subr.mxu0 0.0
        %6831 = vmatpush1.msra.mxu0 0.0
        %6832 = vmatprep.subr.mxu0 0.0
        %6833 = vmatpush1.msra.mxu0 0.0
        %6834 = vmatprep.subr.mxu0 0.0
        %6835 = vmatpush1.msra.mxu0 0.0
        %6836 = vmatprep.subr.mxu0 0.0
        %6837 = vmatpush1.msra.mxu0 0.0
        %6838 = vmatprep.subr.mxu0 0.0
        %6839 = vmatpush1.msra.mxu0 0.0
        %6840 = vmatprep.mubr.f32.mxu0 0.0
        %6841 = vmatmul.mubr.f32.gmra.mrb[0].mxu0 %v6676
        %v6842 = vpop.f32.mrb[0].mxu0
        %v6843 = vadd.f32 %v6661, %v6842
        %v6844 = vpop.f32.mrb[0].mxu0
        %v6845 = vadd.f32 %v6661, %v6844
        %6846 = vmatprep.mubr.f32.mxu0 0.0
        %6847 = vmatmul.mubr.f32.gmra.mrb[0].mxu0 %v6679
        %v6848 = vpop.f32.mrb[0].mxu0
        %v6849 = vadd.f32 %v6665, %v6848
        %v6850 = vpop.f32.mrb[0].mxu0
        %v6851 = vadd.f32 %v6665, %v6850
        %6852 = vmatprep.mubr.f32.mxu0 0.0
        %6853 = vmatmul.mubr.f32.gmra.mrb[0].mxu0 %v6682
        %v6854 = vpop.f32.mrb[0].mxu0
        %v6855 = vadd.f32 %v6669, %v6854
        %v6856 = vpop.f32.mrb[0].mxu0
        %v6857 = vadd.f32 %v6669, %v6856
        %6858 = vmatprep.mubr.f32.mxu0 0.0
        %6859 = vmatmul.mubr.f32.gmra.mrb[0].mxu0 %v6685
        %v6860 = vpop.f32.mrb[0].mxu0
        %v6861 = vadd.f32 %v6673, %v6860
        %v6862 = vpop.f32.mrb[0].mxu0
        %v6863 = vadd.f32 %v6673, %v6862
        %6864 = vdwg.mxu0
        %v6865 = vmax.f32 %v6754, 0.0
        %v6866 = vmax.f32 %v6756, 0.0
        %v6867 = vmax.f32 %v6843, 0.0
        %v6868 = vmax.f32 %v6845, 0.0
        %v6869 = vmax.f32 %v6760, 0.0
        %v6870 = vmax.f32 %v6762, 0.0
        %v6871 = vmax.f32 %v6849, 0.0
        %v6872 = vmax.f32 %v6851, 0.0
        %v6873 = vmax.f32 %v6766, 0.0
        %v6874 = vmax.f32 %v6768, 0.0
        %v6875 = vmax.f32 %v6855, 0.0
        %v6876 = vmax.f32 %v6857, 0.0
        %v6877 = vmax.f32 %v6772, 0.0
        %v6878 = vmax.f32 %v6774, 0.0
        %v6879 = vmax.f32 %v6861, 0.0
        %v6880 = vmax.f32 %v6863, 0.0
        %v6881 = vld [vmem:[%s2800] sm:$0xff]
        %v6882 = vld [vmem:[%s2800 + $0x8] sm:$0xff]
        %v6883 = vld [vmem:[%s2800 + $0x10] sm:$0xff]
        %v6884 = vld [vmem:[%s2800 + $0x18] sm:$0xff]
        %6885 = vset.pattern.permute.xlu0 2
        %6886 = vperm.xlu0 %6885, %v6425
        %v6887 = vpop.permute.xlu0 %6886
        %6889 = vset.pattern.permute.xlu0 2
        %6890 = vperm.xlu0 %6889, %v6426
        %v6891 = vpop.permute.xlu0 %6890
        %6893 = vset.pattern.permute.xlu0 2
        %6894 = vperm.xlu0 %6893, %v6427
        %v6895 = vpop.permute.xlu0 %6894
        %6897 = vset.pattern.permute.xlu0 2
        %6898 = vperm.xlu0 %6897, %v6428
        %v6899 = vpop.permute.xlu0 %6898
        %v6902 = vsel %vm2593, %v6881, 0
        %v6905 = vsel %vm2593, %v6882, 0
        %v6908 = vsel %vm2593, %v6883, 0
        %v6911 = vsel %vm2593, %v6884, 0
        %6913 = vmatprep.subr.mxu0 %v6866
        %6914 = vmatpush1.msra.mxu0 %v6865
        %6915 = vmatprep.subr.mxu0 %v6870
        %6916 = vmatpush1.msra.mxu0 %v6869
        %6917 = vmatprep.subr.mxu0 %v6874
        %6918 = vmatpush1.msra.mxu0 %v6873
        %6919 = vmatprep.subr.mxu0 %v6878
        %6920 = vmatpush1.msra.mxu0 %v6877
        %6921 = vmatprep.subr.mxu0 0.0
        %6922 = vmatpush1.msra.mxu0 0.0
        %6923 = vmatprep.subr.mxu0 0.0
        %6924 = vmatpush1.msra.mxu0 0.0
        %6925 = vmatprep.subr.mxu0 0.0
        %6926 = vmatpush1.msra.mxu0 0.0
        %6927 = vmatprep.subr.mxu0 0.0
        %6928 = vmatpush1.msra.mxu0 0.0
        %6929 = vmatprep.subr.mxu0 0.0
        %6930 = vmatpush1.msra.mxu0 0.0
        %6931 = vmatprep.subr.mxu0 0.0
        %6932 = vmatpush1.msra.mxu0 0.0
        %6933 = vmatprep.subr.mxu0 0.0
        %6934 = vmatpush1.msra.mxu0 0.0
        %6935 = vmatprep.subr.mxu0 0.0
        %6936 = vmatpush1.msra.mxu0 0.0
        %6937 = vmatprep.subr.mxu0 0.0
        %6938 = vmatpush1.msra.mxu0 0.0
        %6939 = vmatprep.subr.mxu0 0.0
        %6940 = vmatpush1.msra.mxu0 0.0
        %6941 = vmatprep.subr.mxu0 0.0
        %6942 = vmatpush1.msra.mxu0 0.0
        %6943 = vmatprep.subr.mxu0 0.0
        %6944 = vmatpush1.msra.mxu0 0.0
        %6945 = vmatprep.subr.mxu0 0.0
        %6946 = vmatpush1.msra.mxu0 0.0
        %6947 = vmatprep.subr.mxu0 0.0
        %6948 = vmatpush1.msra.mxu0 0.0
        %6949 = vmatprep.subr.mxu0 0.0
        %6950 = vmatpush1.msra.mxu0 0.0
        %6951 = vmatprep.subr.mxu0 0.0
        %6952 = vmatpush1.msra.mxu0 0.0
        %6953 = vmatprep.subr.mxu0 0.0
        %6954 = vmatpush1.msra.mxu0 0.0
        %6955 = vmatprep.subr.mxu0 0.0
        %6956 = vmatpush1.msra.mxu0 0.0
        %6957 = vmatprep.subr.mxu0 0.0
        %6958 = vmatpush1.msra.mxu0 0.0
        %6959 = vmatprep.subr.mxu0 0.0
        %6960 = vmatpush1.msra.mxu0 0.0
        %6961 = vmatprep.subr.mxu0 0.0
        %6962 = vmatpush1.msra.mxu0 0.0
        %6963 = vmatprep.subr.mxu0 0.0
        %6964 = vmatpush1.msra.mxu0 0.0
        %6965 = vmatprep.subr.mxu0 0.0
        %6966 = vmatpush1.msra.mxu0 0.0
        %6967 = vmatprep.subr.mxu0 0.0
        %6968 = vmatpush1.msra.mxu0 0.0
        %6969 = vmatprep.subr.mxu0 0.0
        %6970 = vmatpush1.msra.mxu0 0.0
        %6971 = vmatprep.subr.mxu0 0.0
        %6972 = vmatpush1.msra.mxu0 0.0
        %6973 = vmatprep.subr.mxu0 0.0
        %6974 = vmatpush1.msra.mxu0 0.0
        %6975 = vmatprep.subr.mxu0 0.0
        %6976 = vmatpush1.msra.mxu0 0.0
        %6977 = vmatprep.mubr.f32.mxu0 0.0
        %6978 = vmatmul.mubr.f32.gmra.mrb[0].mxu0 %v6902
        %v6979 = vpop.f32.mrb[0].mxu0
        %v6980 = vadd.f32 %v6887, %v6979
        %v6981 = vpop.f32.mrb[0].mxu0
        %v6982 = vadd.f32 %v6887, %v6981
        %6983 = vmatprep.mubr.f32.mxu0 0.0
        %6984 = vmatmul.mubr.f32.gmra.mrb[0].mxu0 %v6905
        %v6985 = vpop.f32.mrb[0].mxu0
        %v6986 = vadd.f32 %v6891, %v6985
        %v6987 = vpop.f32.mrb[0].mxu0
        %v6988 = vadd.f32 %v6891, %v6987
        %6989 = vmatprep.mubr.f32.mxu0 0.0
        %6990 = vmatmul.mubr.f32.gmra.mrb[0].mxu0 %v6908
        %v6991 = vpop.f32.mrb[0].mxu0
        %v6992 = vadd.f32 %v6895, %v6991
        %v6993 = vpop.f32.mrb[0].mxu0
        %v6994 = vadd.f32 %v6895, %v6993
        %6995 = vmatprep.mubr.f32.mxu0 0.0
        %6996 = vmatmul.mubr.f32.gmra.mrb[0].mxu0 %v6911
        %v6997 = vpop.f32.mrb[0].mxu0
        %v6998 = vadd.f32 %v6899, %v6997
        %v6999 = vpop.f32.mrb[0].mxu0
        %v7000 = vadd.f32 %v6899, %v6999
        %7001 = vdwg.mxu0
        %7002 = vmatprep.subr.mxu0 %v6868
        %7003 = vmatpush1.msra.mxu0 %v6867
        %7004 = vmatprep.subr.mxu0 %v6872
        %7005 = vmatpush1.msra.mxu0 %v6871
        %7006 = vmatprep.subr.mxu0 %v6876
        %7007 = vmatpush1.msra.mxu0 %v6875
        %7008 = vmatprep.subr.mxu0 %v6880
        %7009 = vmatpush1.msra.mxu0 %v6879
        %7010 = vmatprep.subr.mxu0 0.0
        %7011 = vmatpush1.msra.mxu0 0.0
        %7012 = vmatprep.subr.mxu0 0.0
        %7013 = vmatpush1.msra.mxu0 0.0
        %7014 = vmatprep.subr.mxu0 0.0
        %7015 = vmatpush1.msra.mxu0 0.0
        %7016 = vmatprep.subr.mxu0 0.0
        %7017 = vmatpush1.msra.mxu0 0.0
        %7018 = vmatprep.subr.mxu0 0.0
        %7019 = vmatpush1.msra.mxu0 0.0
        %7020 = vmatprep.subr.mxu0 0.0
        %7021 = vmatpush1.msra.mxu0 0.0
        %7022 = vmatprep.subr.mxu0 0.0
        %7023 = vmatpush1.msra.mxu0 0.0
        %7024 = vmatprep.subr.mxu0 0.0
        %7025 = vmatpush1.msra.mxu0 0.0
        %7026 = vmatprep.subr.mxu0 0.0
        %7027 = vmatpush1.msra.mxu0 0.0
        %7028 = vmatprep.subr.mxu0 0.0
        %7029 = vmatpush1.msra.mxu0 0.0
        %7030 = vmatprep.subr.mxu0 0.0
        %7031 = vmatpush1.msra.mxu0 0.0
        %7032 = vmatprep.subr.mxu0 0.0
        %7033 = vmatpush1.msra.mxu0 0.0
        %7034 = vmatprep.subr.mxu0 0.0
        %7035 = vmatpush1.msra.mxu0 0.0
        %7036 = vmatprep.subr.mxu0 0.0
        %7037 = vmatpush1.msra.mxu0 0.0
        %7038 = vmatprep.subr.mxu0 0.0
        %7039 = vmatpush1.msra.mxu0 0.0
        %7040 = vmatprep.subr.mxu0 0.0
        %7041 = vmatpush1.msra.mxu0 0.0
        %7042 = vmatprep.subr.mxu0 0.0
        %7043 = vmatpush1.msra.mxu0 0.0
        %7044 = vmatprep.subr.mxu0 0.0
        %7045 = vmatpush1.msra.mxu0 0.0
        %7046 = vmatprep.subr.mxu0 0.0
        %7047 = vmatpush1.msra.mxu0 0.0
        %7048 = vmatprep.subr.mxu0 0.0
        %7049 = vmatpush1.msra.mxu0 0.0
        %7050 = vmatprep.subr.mxu0 0.0
        %7051 = vmatpush1.msra.mxu0 0.0
        %7052 = vmatprep.subr.mxu0 0.0
        %7053 = vmatpush1.msra.mxu0 0.0
        %7054 = vmatprep.subr.mxu0 0.0
        %7055 = vmatpush1.msra.mxu0 0.0
        %7056 = vmatprep.subr.mxu0 0.0
        %7057 = vmatpush1.msra.mxu0 0.0
        %7058 = vmatprep.subr.mxu0 0.0
        %7059 = vmatpush1.msra.mxu0 0.0
        %7060 = vmatprep.subr.mxu0 0.0
        %7061 = vmatpush1.msra.mxu0 0.0
        %7062 = vmatprep.subr.mxu0 0.0
        %7063 = vmatpush1.msra.mxu0 0.0
        %7064 = vmatprep.subr.mxu0 0.0
        %7065 = vmatpush1.msra.mxu0 0.0
        %7066 = vmatprep.mubr.f32.mxu0 0.0
        %7067 = vmatmul.mubr.f32.gmra.mrb[0].mxu0 %v6902
        %v7068 = vpop.f32.mrb[0].mxu0
        %v7069 = vadd.f32 %v6887, %v7068
        %v7070 = vpop.f32.mrb[0].mxu0
        %v7071 = vadd.f32 %v6887, %v7070
        %7072 = vmatprep.mubr.f32.mxu0 0.0
        %7073 = vmatmul.mubr.f32.gmra.mrb[0].mxu0 %v6905
        %v7074 = vpop.f32.mrb[0].mxu0
        %v7075 = vadd.f32 %v6891, %v7074
        %v7076 = vpop.f32.mrb[0].mxu0
        %v7077 = vadd.f32 %v6891, %v7076
        %7078 = vmatprep.mubr.f32.mxu0 0.0
        %7079 = vmatmul.mubr.f32.gmra.mrb[0].mxu0 %v6908
        %v7080 = vpop.f32.mrb[0].mxu0
        %v7081 = vadd.f32 %v6895, %v7080
        %v7082 = vpop.f32.mrb[0].mxu0
        %v7083 = vadd.f32 %v6895, %v7082
        %7084 = vmatprep.mubr.f32.mxu0 0.0
        %7085 = vmatmul.mubr.f32.gmra.mrb[0].mxu0 %v6911
        %v7086 = vpop.f32.mrb[0].mxu0
        %v7087 = vadd.f32 %v6899, %v7086
        %v7088 = vpop.f32.mrb[0].mxu0
        %v7089 = vadd.f32 %v6899, %v7088
        %7090 = vdwg.mxu0
        %v7091 = vmax.f32 %v6980, 0.0
        %v7092 = vmax.f32 %v6982, 0.0
        %v7093 = vmax.f32 %v7069, 0.0
        %v7094 = vmax.f32 %v7071, 0.0
        %v7095 = vmax.f32 %v6986, 0.0
        %v7096 = vmax.f32 %v6988, 0.0
        %v7097 = vmax.f32 %v7075, 0.0
        %v7098 = vmax.f32 %v7077, 0.0
        %v7099 = vmax.f32 %v6992, 0.0
        %v7100 = vmax.f32 %v6994, 0.0
        %v7101 = vmax.f32 %v7081, 0.0
        %v7102 = vmax.f32 %v7083, 0.0
        %v7103 = vmax.f32 %v6998, 0.0
        %v7104 = vmax.f32 %v7000, 0.0
        %v7105 = vmax.f32 %v7087, 0.0
        %v7106 = vmax.f32 %v7089, 0.0
        %v7107 = vld [vmem:[%s3027] sm:$0xff]
        %v7108 = vld [vmem:[%s3027 + $0x8] sm:$0xff]
        %v7109 = vld [vmem:[%s3027 + $0x10] sm:$0xff]
        %v7110 = vld [vmem:[%s3027 + $0x18] sm:$0xff]
        %7111 = vset.pattern.permute.xlu0 3
        %7112 = vperm.xlu0 %7111, %v6425
        %v7113 = vpop.permute.xlu0 %7112
        %7115 = vset.pattern.permute.xlu0 3
        %7116 = vperm.xlu0 %7115, %v6426
        %v7117 = vpop.permute.xlu0 %7116
        %7119 = vset.pattern.permute.xlu0 3
        %7120 = vperm.xlu0 %7119, %v6427
        %v7121 = vpop.permute.xlu0 %7120
        %7123 = vset.pattern.permute.xlu0 3
        %7124 = vperm.xlu0 %7123, %v6428
        %v7125 = vpop.permute.xlu0 %7124
        %v7128 = vsel %vm2593, %v7107, 0
        %v7131 = vsel %vm2593, %v7108, 0
        %v7134 = vsel %vm2593, %v7109, 0
        %v7137 = vsel %vm2593, %v7110, 0
        %7139 = vmatprep.subr.mxu0 %v7092
        %7140 = vmatpush1.msra.mxu0 %v7091
        %7141 = vmatprep.subr.mxu0 %v7096
        %7142 = vmatpush1.msra.mxu0 %v7095
        %7143 = vmatprep.subr.mxu0 %v7100
        %7144 = vmatpush1.msra.mxu0 %v7099
        %7145 = vmatprep.subr.mxu0 %v7104
        %7146 = vmatpush1.msra.mxu0 %v7103
        %7147 = vmatprep.subr.mxu0 0.0
        %7148 = vmatpush1.msra.mxu0 0.0
        %7149 = vmatprep.subr.mxu0 0.0
        %7150 = vmatpush1.msra.mxu0 0.0
        %7151 = vmatprep.subr.mxu0 0.0
        %7152 = vmatpush1.msra.mxu0 0.0
        %7153 = vmatprep.subr.mxu0 0.0
        %7154 = vmatpush1.msra.mxu0 0.0
        %7155 = vmatprep.subr.mxu0 0.0
        %7156 = vmatpush1.msra.mxu0 0.0
        %7157 = vmatprep.subr.mxu0 0.0
        %7158 = vmatpush1.msra.mxu0 0.0
        %7159 = vmatprep.subr.mxu0 0.0
        %7160 = vmatpush1.msra.mxu0 0.0
        %7161 = vmatprep.subr.mxu0 0.0
        %7162 = vmatpush1.msra.mxu0 0.0
        %7163 = vmatprep.subr.mxu0 0.0
        %7164 = vmatpush1.msra.mxu0 0.0
        %7165 = vmatprep.subr.mxu0 0.0
        %7166 = vmatpush1.msra.mxu0 0.0
        %7167 = vmatprep.subr.mxu0 0.0
        %7168 = vmatpush1.msra.mxu0 0.0
        %7169 = vmatprep.subr.mxu0 0.0
        %7170 = vmatpush1.msra.mxu0 0.0
        %7171 = vmatprep.subr.mxu0 0.0
        %7172 = vmatpush1.msra.mxu0 0.0
        %7173 = vmatprep.subr.mxu0 0.0
        %7174 = vmatpush1.msra.mxu0 0.0
        %7175 = vmatprep.subr.mxu0 0.0
        %7176 = vmatpush1.msra.mxu0 0.0
        %7177 = vmatprep.subr.mxu0 0.0
        %7178 = vmatpush1.msra.mxu0 0.0
        %7179 = vmatprep.subr.mxu0 0.0
        %7180 = vmatpush1.msra.mxu0 0.0
        %7181 = vmatprep.subr.mxu0 0.0
        %7182 = vmatpush1.msra.mxu0 0.0
        %7183 = vmatprep.subr.mxu0 0.0
        %7184 = vmatpush1.msra.mxu0 0.0
        %7185 = vmatprep.subr.mxu0 0.0
        %7186 = vmatpush1.msra.mxu0 0.0
        %7187 = vmatprep.subr.mxu0 0.0
        %7188 = vmatpush1.msra.mxu0 0.0
        %7189 = vmatprep.subr.mxu0 0.0
        %7190 = vmatpush1.msra.mxu0 0.0
        %7191 = vmatprep.subr.mxu0 0.0
        %7192 = vmatpush1.msra.mxu0 0.0
        %7193 = vmatprep.subr.mxu0 0.0
        %7194 = vmatpush1.msra.mxu0 0.0
        %7195 = vmatprep.subr.mxu0 0.0
        %7196 = vmatpush1.msra.mxu0 0.0
        %7197 = vmatprep.subr.mxu0 0.0
        %7198 = vmatpush1.msra.mxu0 0.0
        %7199 = vmatprep.subr.mxu0 0.0
        %7200 = vmatpush1.msra.mxu0 0.0
        %7201 = vmatprep.subr.mxu0 0.0
        %7202 = vmatpush1.msra.mxu0 0.0
        %7203 = vmatprep.mubr.f32.mxu0 0.0
        %7204 = vmatmul.mubr.f32.gmra.mrb[0].mxu0 %v7128
        %v7205 = vpop.f32.mrb[0].mxu0
        %v7206 = vadd.f32 %v7113, %v7205
        %v7207 = vpop.f32.mrb[0].mxu0
        %v7208 = vadd.f32 %v7113, %v7207
        %7209 = vmatprep.mubr.f32.mxu0 0.0
        %7210 = vmatmul.mubr.f32.gmra.mrb[0].mxu0 %v7131
        %v7211 = vpop.f32.mrb[0].mxu0
        %v7212 = vadd.f32 %v7117, %v7211
        %v7213 = vpop.f32.mrb[0].mxu0
        %v7214 = vadd.f32 %v7117, %v7213
        %7215 = vmatprep.mubr.f32.mxu0 0.0
        %7216 = vmatmul.mubr.f32.gmra.mrb[0].mxu0 %v7134
        %v7217 = vpop.f32.mrb[0].mxu0
        %v7218 = vadd.f32 %v7121, %v7217
        %v7219 = vpop.f32.mrb[0].mxu0
        %v7220 = vadd.f32 %v7121, %v7219
        %7221 = vmatprep.mubr.f32.mxu0 0.0
        %7222 = vmatmul.mubr.f32.gmra.mrb[0].mxu0 %v7137
        %v7223 = vpop.f32.mrb[0].mxu0
        %v7224 = vadd.f32 %v7125, %v7223
        %v7225 = vpop.f32.mrb[0].mxu0
        %v7226 = vadd.f32 %v7125, %v7225
        %7227 = vdwg.mxu0
        %7228 = vmatprep.subr.mxu0 %v7094
        %7229 = vmatpush1.msra.mxu0 %v7093
        %7230 = vmatprep.subr.mxu0 %v7098
        %7231 = vmatpush1.msra.mxu0 %v7097
        %7232 = vmatprep.subr.mxu0 %v7102
        %7233 = vmatpush1.msra.mxu0 %v7101
        %7234 = vmatprep.subr.mxu0 %v7106
        %7235 = vmatpush1.msra.mxu0 %v7105
        %7236 = vmatprep.subr.mxu0 0.0
        %7237 = vmatpush1.msra.mxu0 0.0
        %7238 = vmatprep.subr.mxu0 0.0
        %7239 = vmatpush1.msra.mxu0 0.0
        %7240 = vmatprep.subr.mxu0 0.0
        %7241 = vmatpush1.msra.mxu0 0.0
        %7242 = vmatprep.subr.mxu0 0.0
        %7243 = vmatpush1.msra.mxu0 0.0
        %7244 = vmatprep.subr.mxu0 0.0
        %7245 = vmatpush1.msra.mxu0 0.0
        %7246 = vmatprep.subr.mxu0 0.0
        %7247 = vmatpush1.msra.mxu0 0.0
        %7248 = vmatprep.subr.mxu0 0.0
        %7249 = vmatpush1.msra.mxu0 0.0
        %7250 = vmatprep.subr.mxu0 0.0
        %7251 = vmatpush1.msra.mxu0 0.0
        %7252 = vmatprep.subr.mxu0 0.0
        %7253 = vmatpush1.msra.mxu0 0.0
        %7254 = vmatprep.subr.mxu0 0.0
        %7255 = vmatpush1.msra.mxu0 0.0
        %7256 = vmatprep.subr.mxu0 0.0
        %7257 = vmatpush1.msra.mxu0 0.0
        %7258 = vmatprep.subr.mxu0 0.0
        %7259 = vmatpush1.msra.mxu0 0.0
        %7260 = vmatprep.subr.mxu0 0.0
        %7261 = vmatpush1.msra.mxu0 0.0
        %7262 = vmatprep.subr.mxu0 0.0
        %7263 = vmatpush1.msra.mxu0 0.0
        %7264 = vmatprep.subr.mxu0 0.0
        %7265 = vmatpush1.msra.mxu0 0.0
        %7266 = vmatprep.subr.mxu0 0.0
        %7267 = vmatpush1.msra.mxu0 0.0
        %7268 = vmatprep.subr.mxu0 0.0
        %7269 = vmatpush1.msra.mxu0 0.0
        %7270 = vmatprep.subr.mxu0 0.0
        %7271 = vmatpush1.msra.mxu0 0.0
        %7272 = vmatprep.subr.mxu0 0.0
        %7273 = vmatpush1.msra.mxu0 0.0
        %7274 = vmatprep.subr.mxu0 0.0
        %7275 = vmatpush1.msra.mxu0 0.0
        %7276 = vmatprep.subr.mxu0 0.0
        %7277 = vmatpush1.msra.mxu0 0.0
        %7278 = vmatprep.subr.mxu0 0.0
        %7279 = vmatpush1.msra.mxu0 0.0
        %7280 = vmatprep.subr.mxu0 0.0
        %7281 = vmatpush1.msra.mxu0 0.0
        %7282 = vmatprep.subr.mxu0 0.0
        %7283 = vmatpush1.msra.mxu0 0.0
        %7284 = vmatprep.subr.mxu0 0.0
        %7285 = vmatpush1.msra.mxu0 0.0
        %7286 = vmatprep.subr.mxu0 0.0
        %7287 = vmatpush1.msra.mxu0 0.0
        %7288 = vmatprep.subr.mxu0 0.0
        %7289 = vmatpush1.msra.mxu0 0.0
        %7290 = vmatprep.subr.mxu0 0.0
        %7291 = vmatpush1.msra.mxu0 0.0
        %7292 = vmatprep.mubr.f32.mxu0 0.0
        %7293 = vmatmul.mubr.f32.gmra.mrb[0].mxu0 %v7128
        %v7294 = vpop.f32.mrb[0].mxu0
        %v7295 = vadd.f32 %v7113, %v7294
        %v7296 = vpop.f32.mrb[0].mxu0
        %v7297 = vadd.f32 %v7113, %v7296
        %7298 = vmatprep.mubr.f32.mxu0 0.0
        %7299 = vmatmul.mubr.f32.gmra.mrb[0].mxu0 %v7131
        %v7300 = vpop.f32.mrb[0].mxu0
        %v7301 = vadd.f32 %v7117, %v7300
        %v7302 = vpop.f32.mrb[0].mxu0
        %v7303 = vadd.f32 %v7117, %v7302
        %7304 = vmatprep.mubr.f32.mxu0 0.0
        %7305 = vmatmul.mubr.f32.gmra.mrb[0].mxu0 %v7134
        %v7306 = vpop.f32.mrb[0].mxu0
        %v7307 = vadd.f32 %v7121, %v7306
        %v7308 = vpop.f32.mrb[0].mxu0
        %v7309 = vadd.f32 %v7121, %v7308
        %7310 = vmatprep.mubr.f32.mxu0 0.0
        %7311 = vmatmul.mubr.f32.gmra.mrb[0].mxu0 %v7137
        %v7312 = vpop.f32.mrb[0].mxu0
        %v7313 = vadd.f32 %v7125, %v7312
        %v7314 = vpop.f32.mrb[0].mxu0
        %v7315 = vadd.f32 %v7125, %v7314
        %7316 = vdwg.mxu0
        %v7317 = vmax.f32 %v7206, 0.0
        %v7318 = vmax.f32 %v7208, 0.0
        %v7319 = vmax.f32 %v7295, 0.0
        %v7320 = vmax.f32 %v7297, 0.0
        %v7321 = vmax.f32 %v7212, 0.0
        %v7322 = vmax.f32 %v7214, 0.0
        %v7323 = vmax.f32 %v7301, 0.0
        %v7324 = vmax.f32 %v7303, 0.0
        %v7325 = vmax.f32 %v7218, 0.0
        %v7326 = vmax.f32 %v7220, 0.0
        %v7327 = vmax.f32 %v7307, 0.0
        %v7328 = vmax.f32 %v7309, 0.0
        %v7329 = vmax.f32 %v7224, 0.0
        %v7330 = vmax.f32 %v7226, 0.0
        %v7331 = vmax.f32 %v7313, 0.0
        %v7332 = vmax.f32 %v7315, 0.0
        %v7333 = vld [vmem:[%s3254] sm:$0xff]
        %v7334 = vld [vmem:[%s3254 + $0x8] sm:$0xff]
        %v7335 = vld [vmem:[%s3254 + $0x10] sm:$0xff]
        %v7336 = vld [vmem:[%s3254 + $0x18] sm:$0xff]
        %7337 = vset.pattern.permute.xlu0 4
        %7338 = vperm.xlu0 %7337, %v6425
        %v7339 = vpop.permute.xlu0 %7338
        %7341 = vset.pattern.permute.xlu0 4
        %7342 = vperm.xlu0 %7341, %v6426
        %v7343 = vpop.permute.xlu0 %7342
        %7345 = vset.pattern.permute.xlu0 4
        %7346 = vperm.xlu0 %7345, %v6427
        %v7347 = vpop.permute.xlu0 %7346
        %7349 = vset.pattern.permute.xlu0 4
        %7350 = vperm.xlu0 %7349, %v6428
        %v7351 = vpop.permute.xlu0 %7350
        %v7354 = vsel %vm2593, %v7333, 0
        %v7357 = vsel %vm2593, %v7334, 0
        %v7360 = vsel %vm2593, %v7335, 0
        %v7363 = vsel %vm2593, %v7336, 0
        %7365 = vmatprep.subr.mxu0 %v7318
        %7366 = vmatpush1.msra.mxu0 %v7317
        %7367 = vmatprep.subr.mxu0 %v7322
        %7368 = vmatpush1.msra.mxu0 %v7321
        %7369 = vmatprep.subr.mxu0 %v7326
        %7370 = vmatpush1.msra.mxu0 %v7325
        %7371 = vmatprep.subr.mxu0 %v7330
        %7372 = vmatpush1.msra.mxu0 %v7329
        %7373 = vmatprep.subr.mxu0 0.0
        %7374 = vmatpush1.msra.mxu0 0.0
        %7375 = vmatprep.subr.mxu0 0.0
        %7376 = vmatpush1.msra.mxu0 0.0
        %7377 = vmatprep.subr.mxu0 0.0
        %7378 = vmatpush1.msra.mxu0 0.0
        %7379 = vmatprep.subr.mxu0 0.0
        %7380 = vmatpush1.msra.mxu0 0.0
        %7381 = vmatprep.subr.mxu0 0.0
        %7382 = vmatpush1.msra.mxu0 0.0
        %7383 = vmatprep.subr.mxu0 0.0
        %7384 = vmatpush1.msra.mxu0 0.0
        %7385 = vmatprep.subr.mxu0 0.0
        %7386 = vmatpush1.msra.mxu0 0.0
        %7387 = vmatprep.subr.mxu0 0.0
        %7388 = vmatpush1.msra.mxu0 0.0
        %7389 = vmatprep.subr.mxu0 0.0
        %7390 = vmatpush1.msra.mxu0 0.0
        %7391 = vmatprep.subr.mxu0 0.0
        %7392 = vmatpush1.msra.mxu0 0.0
        %7393 = vmatprep.subr.mxu0 0.0
        %7394 = vmatpush1.msra.mxu0 0.0
        %7395 = vmatprep.subr.mxu0 0.0
        %7396 = vmatpush1.msra.mxu0 0.0
        %7397 = vmatprep.subr.mxu0 0.0
        %7398 = vmatpush1.msra.mxu0 0.0
        %7399 = vmatprep.subr.mxu0 0.0
        %7400 = vmatpush1.msra.mxu0 0.0
        %7401 = vmatprep.subr.mxu0 0.0
        %7402 = vmatpush1.msra.mxu0 0.0
        %7403 = vmatprep.subr.mxu0 0.0
        %7404 = vmatpush1.msra.mxu0 0.0
        %7405 = vmatprep.subr.mxu0 0.0
        %7406 = vmatpush1.msra.mxu0 0.0
        %7407 = vmatprep.subr.mxu0 0.0
        %7408 = vmatpush1.msra.mxu0 0.0
        %7409 = vmatprep.subr.mxu0 0.0
        %7410 = vmatpush1.msra.mxu0 0.0
        %7411 = vmatprep.subr.mxu0 0.0
        %7412 = vmatpush1.msra.mxu0 0.0
        %7413 = vmatprep.subr.mxu0 0.0
        %7414 = vmatpush1.msra.mxu0 0.0
        %7415 = vmatprep.subr.mxu0 0.0
        %7416 = vmatpush1.msra.mxu0 0.0
        %7417 = vmatprep.subr.mxu0 0.0
        %7418 = vmatpush1.msra.mxu0 0.0
        %7419 = vmatprep.subr.mxu0 0.0
        %7420 = vmatpush1.msra.mxu0 0.0
        %7421 = vmatprep.subr.mxu0 0.0
        %7422 = vmatpush1.msra.mxu0 0.0
        %7423 = vmatprep.subr.mxu0 0.0
        %7424 = vmatpush1.msra.mxu0 0.0
        %7425 = vmatprep.subr.mxu0 0.0
        %7426 = vmatpush1.msra.mxu0 0.0
        %7427 = vmatprep.subr.mxu0 0.0
        %7428 = vmatpush1.msra.mxu0 0.0
        %7429 = vmatprep.mubr.f32.mxu0 0.0
        %7430 = vmatmul.mubr.f32.gmra.mrb[0].mxu0 %v7354
        %v7431 = vpop.f32.mrb[0].mxu0
        %v7432 = vadd.f32 %v7339, %v7431
        %v7433 = vpop.f32.mrb[0].mxu0
        %v7434 = vadd.f32 %v7339, %v7433
        %7435 = vmatprep.mubr.f32.mxu0 0.0
        %7436 = vmatmul.mubr.f32.gmra.mrb[0].mxu0 %v7357
        %v7437 = vpop.f32.mrb[0].mxu0
        %v7438 = vadd.f32 %v7343, %v7437
        %v7439 = vpop.f32.mrb[0].mxu0
        %v7440 = vadd.f32 %v7343, %v7439
        %7441 = vmatprep.mubr.f32.mxu0 0.0
        %7442 = vmatmul.mubr.f32.gmra.mrb[0].mxu0 %v7360
        %v7443 = vpop.f32.mrb[0].mxu0
        %v7444 = vadd.f32 %v7347, %v7443
        %v7445 = vpop.f32.mrb[0].mxu0
        %v7446 = vadd.f32 %v7347, %v7445
        %7447 = vmatprep.mubr.f32.mxu0 0.0
        %7448 = vmatmul.mubr.f32.gmra.mrb[0].mxu0 %v7363
        %v7449 = vpop.f32.mrb[0].mxu0
        %v7450 = vadd.f32 %v7351, %v7449
        %v7451 = vpop.f32.mrb[0].mxu0
        %v7452 = vadd.f32 %v7351, %v7451
        %7453 = vdwg.mxu0
        %7454 = vmatprep.subr.mxu0 %v7320
        %7455 = vmatpush1.msra.mxu0 %v7319
        %7456 = vmatprep.subr.mxu0 %v7324
        %7457 = vmatpush1.msra.mxu0 %v7323
        %7458 = vmatprep.subr.mxu0 %v7328
        %7459 = vmatpush1.msra.mxu0 %v7327
        %7460 = vmatprep.subr.mxu0 %v7332
        %7461 = vmatpush1.msra.mxu0 %v7331
        %7462 = vmatprep.subr.mxu0 0.0
        %7463 = vmatpush1.msra.mxu0 0.0
        %7464 = vmatprep.subr.mxu0 0.0
        %7465 = vmatpush1.msra.mxu0 0.0
        %7466 = vmatprep.subr.mxu0 0.0
        %7467 = vmatpush1.msra.mxu0 0.0
        %7468 = vmatprep.subr.mxu0 0.0
        %7469 = vmatpush1.msra.mxu0 0.0
        %7470 = vmatprep.subr.mxu0 0.0
        %7471 = vmatpush1.msra.mxu0 0.0
        %7472 = vmatprep.subr.mxu0 0.0
        %7473 = vmatpush1.msra.mxu0 0.0
        %7474 = vmatprep.subr.mxu0 0.0
        %7475 = vmatpush1.msra.mxu0 0.0
        %7476 = vmatprep.subr.mxu0 0.0
        %7477 = vmatpush1.msra.mxu0 0.0
        %7478 = vmatprep.subr.mxu0 0.0
        %7479 = vmatpush1.msra.mxu0 0.0
        %7480 = vmatprep.subr.mxu0 0.0
        %7481 = vmatpush1.msra.mxu0 0.0
        %7482 = vmatprep.subr.mxu0 0.0
        %7483 = vmatpush1.msra.mxu0 0.0
        %7484 = vmatprep.subr.mxu0 0.0
        %7485 = vmatpush1.msra.mxu0 0.0
        %7486 = vmatprep.subr.mxu0 0.0
        %7487 = vmatpush1.msra.mxu0 0.0
        %7488 = vmatprep.subr.mxu0 0.0
        %7489 = vmatpush1.msra.mxu0 0.0
        %7490 = vmatprep.subr.mxu0 0.0
        %7491 = vmatpush1.msra.mxu0 0.0
        %7492 = vmatprep.subr.mxu0 0.0
        %7493 = vmatpush1.msra.mxu0 0.0
        %7494 = vmatprep.subr.mxu0 0.0
        %7495 = vmatpush1.msra.mxu0 0.0
        %7496 = vmatprep.subr.mxu0 0.0
        %7497 = vmatpush1.msra.mxu0 0.0
        %7498 = vmatprep.subr.mxu0 0.0
        %7499 = vmatpush1.msra.mxu0 0.0
        %7500 = vmatprep.subr.mxu0 0.0
        %7501 = vmatpush1.msra.mxu0 0.0
        %7502 = vmatprep.subr.mxu0 0.0
        %7503 = vmatpush1.msra.mxu0 0.0
        %7504 = vmatprep.subr.mxu0 0.0
        %7505 = vmatpush1.msra.mxu0 0.0
        %7506 = vmatprep.subr.mxu0 0.0
        %7507 = vmatpush1.msra.mxu0 0.0
        %7508 = vmatprep.subr.mxu0 0.0
        %7509 = vmatpush1.msra.mxu0 0.0
        %7510 = vmatprep.subr.mxu0 0.0
        %7511 = vmatpush1.msra.mxu0 0.0
        %7512 = vmatprep.subr.mxu0 0.0
        %7513 = vmatpush1.msra.mxu0 0.0
        %7514 = vmatprep.subr.mxu0 0.0
        %7515 = vmatpush1.msra.mxu0 0.0
        %7516 = vmatprep.subr.mxu0 0.0
        %7517 = vmatpush1.msra.mxu0 0.0
        %7518 = vmatprep.mubr.f32.mxu0 0.0
        %7519 = vmatmul.mubr.f32.gmra.mrb[0].mxu0 %v7354
        %v7520 = vpop.f32.mrb[0].mxu0
        %v7521 = vadd.f32 %v7339, %v7520
        %v7522 = vpop.f32.mrb[0].mxu0
        %v7523 = vadd.f32 %v7339, %v7522
        %7524 = vmatprep.mubr.f32.mxu0 0.0
        %7525 = vmatmul.mubr.f32.gmra.mrb[0].mxu0 %v7357
        %v7526 = vpop.f32.mrb[0].mxu0
        %v7527 = vadd.f32 %v7343, %v7526
        %v7528 = vpop.f32.mrb[0].mxu0
        %v7529 = vadd.f32 %v7343, %v7528
        %7530 = vmatprep.mubr.f32.mxu0 0.0
        %7531 = vmatmul.mubr.f32.gmra.mrb[0].mxu0 %v7360
        %v7532 = vpop.f32.mrb[0].mxu0
        %v7533 = vadd.f32 %v7347, %v7532
        %v7534 = vpop.f32.mrb[0].mxu0
        %v7535 = vadd.f32 %v7347, %v7534
        %7536 = vmatprep.mubr.f32.mxu0 0.0
        %7537 = vmatmul.mubr.f32.gmra.mrb[0].mxu0 %v7363
        %v7538 = vpop.f32.mrb[0].mxu0
        %v7539 = vadd.f32 %v7351, %v7538
        %v7540 = vpop.f32.mrb[0].mxu0
        %v7541 = vadd.f32 %v7351, %v7540
        %7542 = vdwg.mxu0
        %v7543 = vmax.f32 %v7432, 0.0
        %v7544 = vmax.f32 %v7434, 0.0
        %v7545 = vmax.f32 %v7521, 0.0
        %v7546 = vmax.f32 %v7523, 0.0
        %v7547 = vmax.f32 %v7438, 0.0
        %v7548 = vmax.f32 %v7440, 0.0
        %v7549 = vmax.f32 %v7527, 0.0
        %v7550 = vmax.f32 %v7529, 0.0
        %v7551 = vmax.f32 %v7444, 0.0
        %v7552 = vmax.f32 %v7446, 0.0
        %v7553 = vmax.f32 %v7533, 0.0
        %v7554 = vmax.f32 %v7535, 0.0
        %v7555 = vmax.f32 %v7450, 0.0
        %v7556 = vmax.f32 %v7452, 0.0
        %v7557 = vmax.f32 %v7539, 0.0
        %v7558 = vmax.f32 %v7541, 0.0
        %v7559 = vld [vmem:[%s3481] sm:$0xff]
        %v7560 = vld [vmem:[%s3481 + $0x8] sm:$0xff]
        %v7561 = vld [vmem:[%s3481 + $0x10] sm:$0xff]
        %v7562 = vld [vmem:[%s3481 + $0x18] sm:$0xff]
        %v7564 = vsel %vm2593, %v7559, 0
        %v7567 = vsel %vm2593, %v7560, 0
        %v7570 = vsel %vm2593, %v7561, 0
        %v7573 = vsel %vm2593, %v7562, 0
        %7575 = vmatprep.subr.mxu0 %v7544
        %7576 = vmatpush1.msra.mxu0 %v7543
        %7577 = vmatprep.subr.mxu0 %v7548
        %7578 = vmatpush1.msra.mxu0 %v7547
        %7579 = vmatprep.subr.mxu0 %v7552
        %7580 = vmatpush1.msra.mxu0 %v7551
        %7581 = vmatprep.subr.mxu0 %v7556
        %7582 = vmatpush1.msra.mxu0 %v7555
        %7583 = vmatprep.subr.mxu0 0.0
        %7584 = vmatpush1.msra.mxu0 0.0
        %7585 = vmatprep.subr.mxu0 0.0
        %7586 = vmatpush1.msra.mxu0 0.0
        %7587 = vmatprep.subr.mxu0 0.0
        %7588 = vmatpush1.msra.mxu0 0.0
        %7589 = vmatprep.subr.mxu0 0.0
        %7590 = vmatpush1.msra.mxu0 0.0
        %7591 = vmatprep.subr.mxu0 0.0
        %7592 = vmatpush1.msra.mxu0 0.0
        %7593 = vmatprep.subr.mxu0 0.0
        %7594 = vmatpush1.msra.mxu0 0.0
        %7595 = vmatprep.subr.mxu0 0.0
        %7596 = vmatpush1.msra.mxu0 0.0
        %7597 = vmatprep.subr.mxu0 0.0
        %7598 = vmatpush1.msra.mxu0 0.0
        %7599 = vmatprep.subr.mxu0 0.0
        %7600 = vmatpush1.msra.mxu0 0.0
        %7601 = vmatprep.subr.mxu0 0.0
        %7602 = vmatpush1.msra.mxu0 0.0
        %7603 = vmatprep.subr.mxu0 0.0
        %7604 = vmatpush1.msra.mxu0 0.0
        %7605 = vmatprep.subr.mxu0 0.0
        %7606 = vmatpush1.msra.mxu0 0.0
        %7607 = vmatprep.subr.mxu0 0.0
        %7608 = vmatpush1.msra.mxu0 0.0
        %7609 = vmatprep.subr.mxu0 0.0
        %7610 = vmatpush1.msra.mxu0 0.0
        %7611 = vmatprep.subr.mxu0 0.0
        %7612 = vmatpush1.msra.mxu0 0.0
        %7613 = vmatprep.subr.mxu0 0.0
        %7614 = vmatpush1.msra.mxu0 0.0
        %7615 = vmatprep.subr.mxu0 0.0
        %7616 = vmatpush1.msra.mxu0 0.0
        %7617 = vmatprep.subr.mxu0 0.0
        %7618 = vmatpush1.msra.mxu0 0.0
        %7619 = vmatprep.subr.mxu0 0.0
        %7620 = vmatpush1.msra.mxu0 0.0
        %7621 = vmatprep.subr.mxu0 0.0
        %7622 = vmatpush1.msra.mxu0 0.0
        %7623 = vmatprep.subr.mxu0 0.0
        %7624 = vmatpush1.msra.mxu0 0.0
        %7625 = vmatprep.subr.mxu0 0.0
        %7626 = vmatpush1.msra.mxu0 0.0
        %7627 = vmatprep.subr.mxu0 0.0
        %7628 = vmatpush1.msra.mxu0 0.0
        %7629 = vmatprep.subr.mxu0 0.0
        %7630 = vmatpush1.msra.mxu0 0.0
        %7631 = vmatprep.subr.mxu0 0.0
        %7632 = vmatpush1.msra.mxu0 0.0
        %7633 = vmatprep.subr.mxu0 0.0
        %7634 = vmatpush1.msra.mxu0 0.0
        %7635 = vmatprep.subr.mxu0 0.0
        %7636 = vmatpush1.msra.mxu0 0.0
        %7637 = vmatprep.subr.mxu0 0.0
        %7638 = vmatpush1.msra.mxu0 0.0
        %7639 = vmatprep.mubr.f32.mxu0 0.0
        %7640 = vmatmul.mubr.f32.gmra.mrb[0].mxu0 %v7564
        %v7641 = vpop.f32.mrb[0].mxu0
        %v7642 = vadd.f32 %v6314, %v7641
        %v7643 = vpop.f32.mrb[0].mxu0
        %v7644 = vadd.f32 %v6316, %v7643
        %7645 = vmatprep.mubr.f32.mxu0 0.0
        %7646 = vmatmul.mubr.f32.gmra.mrb[0].mxu0 %v7567
        %v7647 = vpop.f32.mrb[0].mxu0
        %v7648 = vadd.f32 %v6320, %v7647
        %v7649 = vpop.f32.mrb[0].mxu0
        %v7650 = vadd.f32 %v6322, %v7649
        %7651 = vmatprep.mubr.f32.mxu0 0.0
        %7652 = vmatmul.mubr.f32.gmra.mrb[0].mxu0 %v7570
        %v7653 = vpop.f32.mrb[0].mxu0
        %v7654 = vadd.f32 %v6326, %v7653
        %v7655 = vpop.f32.mrb[0].mxu0
        %v7656 = vadd.f32 %v6328, %v7655
        %7657 = vmatprep.mubr.f32.mxu0 0.0
        %7658 = vmatmul.mubr.f32.gmra.mrb[0].mxu0 %v7573
        %v7659 = vpop.f32.mrb[0].mxu0
        %v7660 = vadd.f32 %v6332, %v7659
        %v7661 = vpop.f32.mrb[0].mxu0
        %v7662 = vadd.f32 %v6334, %v7661
        %7663 = vdwg.mxu0
        %7664 = vmatprep.subr.mxu0 %v7546
        %7665 = vmatpush1.msra.mxu0 %v7545
        %7666 = vmatprep.subr.mxu0 %v7550
        %7667 = vmatpush1.msra.mxu0 %v7549
        %7668 = vmatprep.subr.mxu0 %v7554
        %7669 = vmatpush1.msra.mxu0 %v7553
        %7670 = vmatprep.subr.mxu0 %v7558
        %7671 = vmatpush1.msra.mxu0 %v7557
        %7672 = vmatprep.subr.mxu0 0.0
        %7673 = vmatpush1.msra.mxu0 0.0
        %7674 = vmatprep.subr.mxu0 0.0
        %7675 = vmatpush1.msra.mxu0 0.0
        %7676 = vmatprep.subr.mxu0 0.0
        %7677 = vmatpush1.msra.mxu0 0.0
        %7678 = vmatprep.subr.mxu0 0.0
        %7679 = vmatpush1.msra.mxu0 0.0
        %7680 = vmatprep.subr.mxu0 0.0
        %7681 = vmatpush1.msra.mxu0 0.0
        %7682 = vmatprep.subr.mxu0 0.0
        %7683 = vmatpush1.msra.mxu0 0.0
        %7684 = vmatprep.subr.mxu0 0.0
        %7685 = vmatpush1.msra.mxu0 0.0
        %7686 = vmatprep.subr.mxu0 0.0
        %7687 = vmatpush1.msra.mxu0 0.0
        %7688 = vmatprep.subr.mxu0 0.0
        %7689 = vmatpush1.msra.mxu0 0.0
        %7690 = vmatprep.subr.mxu0 0.0
        %7691 = vmatpush1.msra.mxu0 0.0
        %7692 = vmatprep.subr.mxu0 0.0
        %7693 = vmatpush1.msra.mxu0 0.0
        %7694 = vmatprep.subr.mxu0 0.0
        %7695 = vmatpush1.msra.mxu0 0.0
        %7696 = vmatprep.subr.mxu0 0.0
        %7697 = vmatpush1.msra.mxu0 0.0
        %7698 = vmatprep.subr.mxu0 0.0
        %7699 = vmatpush1.msra.mxu0 0.0
        %7700 = vmatprep.subr.mxu0 0.0
        %7701 = vmatpush1.msra.mxu0 0.0
        %7702 = vmatprep.subr.mxu0 0.0
        %7703 = vmatpush1.msra.mxu0 0.0
        %7704 = vmatprep.subr.mxu0 0.0
        %7705 = vmatpush1.msra.mxu0 0.0
        %7706 = vmatprep.subr.mxu0 0.0
        %7707 = vmatpush1.msra.mxu0 0.0
        %7708 = vmatprep.subr.mxu0 0.0
        %7709 = vmatpush1.msra.mxu0 0.0
        %7710 = vmatprep.subr.mxu0 0.0
        %7711 = vmatpush1.msra.mxu0 0.0
        %7712 = vmatprep.subr.mxu0 0.0
        %7713 = vmatpush1.msra.mxu0 0.0
        %7714 = vmatprep.subr.mxu0 0.0
        %7715 = vmatpush1.msra.mxu0 0.0
        %7716 = vmatprep.subr.mxu0 0.0
        %7717 = vmatpush1.msra.mxu0 0.0
        %7718 = vmatprep.subr.mxu0 0.0
        %7719 = vmatpush1.msra.mxu0 0.0
        %7720 = vmatprep.subr.mxu0 0.0
        %7721 = vmatpush1.msra.mxu0 0.0
        %7722 = vmatprep.subr.mxu0 0.0
        %7723 = vmatpush1.msra.mxu0 0.0
        %7724 = vmatprep.subr.mxu0 0.0
        %7725 = vmatpush1.msra.mxu0 0.0
        %7726 = vmatprep.subr.mxu0 0.0
        %7727 = vmatpush1.msra.mxu0 0.0
        %7728 = vmatprep.mubr.f32.mxu0 0.0
        %7729 = vmatmul.mubr.f32.gmra.mrb[0].mxu0 %v7564
        %v7730 = vpop.f32.mrb[0].mxu0
        %v7731 = vadd.f32 %v6403, %v7730
        %v7732 = vpop.f32.mrb[0].mxu0
        %v7733 = vadd.f32 %v6405, %v7732
        %7734 = vmatprep.mubr.f32.mxu0 0.0
        %7735 = vmatmul.mubr.f32.gmra.mrb[0].mxu0 %v7567
        %v7736 = vpop.f32.mrb[0].mxu0
        %v7737 = vadd.f32 %v6409, %v7736
        %v7738 = vpop.f32.mrb[0].mxu0
        %v7739 = vadd.f32 %v6411, %v7738
        %7740 = vmatprep.mubr.f32.mxu0 0.0
        %7741 = vmatmul.mubr.f32.gmra.mrb[0].mxu0 %v7570
        %v7742 = vpop.f32.mrb[0].mxu0
        %v7743 = vadd.f32 %v6415, %v7742
        %v7744 = vpop.f32.mrb[0].mxu0
        %v7745 = vadd.f32 %v6417, %v7744
        %7746 = vmatprep.mubr.f32.mxu0 0.0
        %7747 = vmatmul.mubr.f32.gmra.mrb[0].mxu0 %v7573
        %v7748 = vpop.f32.mrb[0].mxu0
        %v7749 = vadd.f32 %v6421, %v7748
        %v7750 = vpop.f32.mrb[0].mxu0
        %v7751 = vadd.f32 %v6423, %v7750
        %7752 = vdwg.mxu0
        %7753 = vset.pattern.permute.xlu0 5
        %7754 = vperm.xlu0 %7753, %v6425
        %v7755 = vpop.permute.xlu0 %7754
        %7757 = vset.pattern.permute.xlu0 5
        %7758 = vperm.xlu0 %7757, %v6426
        %v7759 = vpop.permute.xlu0 %7758
        %7761 = vset.pattern.permute.xlu0 5
        %7762 = vperm.xlu0 %7761, %v6427
        %v7763 = vpop.permute.xlu0 %7762
        %7765 = vset.pattern.permute.xlu0 5
        %7766 = vperm.xlu0 %7765, %v6428
        %v7767 = vpop.permute.xlu0 %7766
        %v7769 = vadd.f32 %v7642, %v7755
        %v7770 = vadd.f32 %v7644, %v7755
        %v7771 = vadd.f32 %v7731, %v7755
        %v7772 = vadd.f32 %v7733, %v7755
        %v7773 = vadd.f32 %v7648, %v7759
        %v7774 = vadd.f32 %v7650, %v7759
        %v7775 = vadd.f32 %v7737, %v7759
        %v7776 = vadd.f32 %v7739, %v7759
        %v7777 = vadd.f32 %v7654, %v7763
        %v7778 = vadd.f32 %v7656, %v7763
        %v7779 = vadd.f32 %v7743, %v7763
        %v7780 = vadd.f32 %v7745, %v7763
        %v7781 = vadd.f32 %v7660, %v7767
        %v7782 = vadd.f32 %v7662, %v7767
        %v7783 = vadd.f32 %v7749, %v7767
        %v7784 = vadd.f32 %v7751, %v7767
        %v7785 = vmax.f32 %v7769, 0.0
        %v7786 = vmax.f32 %v7770, 0.0
        %v7787 = vmax.f32 %v7771, 0.0
        %v7788 = vmax.f32 %v7772, 0.0
        %v7789 = vmax.f32 %v7773, 0.0
        %v7790 = vmax.f32 %v7774, 0.0
        %v7791 = vmax.f32 %v7775, 0.0
        %v7792 = vmax.f32 %v7776, 0.0
        %v7793 = vmax.f32 %v7777, 0.0
        %v7794 = vmax.f32 %v7778, 0.0
        %v7795 = vmax.f32 %v7779, 0.0
        %v7796 = vmax.f32 %v7780, 0.0
        %v7797 = vmax.f32 %v7781, 0.0
        %v7798 = vmax.f32 %v7782, 0.0
        %v7799 = vmax.f32 %v7783, 0.0
        %v7800 = vmax.f32 %v7784, 0.0
        %v7801 = vld [vmem:[%s3724] sm:$0xff]
        %v7802 = vld [vmem:[%s3724 + $0x8] sm:$0xff]
        %v7803 = vld [vmem:[%s3724 + $0x10] sm:$0xff]
        %v7804 = vld [vmem:[%s3724 + $0x18] sm:$0xff]
        %7805 = vset.pattern.permute.xlu0 6
        %7806 = vperm.xlu0 %7805, %v6425
        %v7807 = vpop.permute.xlu0 %7806
        %7809 = vset.pattern.permute.xlu0 6
        %7810 = vperm.xlu0 %7809, %v6426
        %v7811 = vpop.permute.xlu0 %7810
        %7813 = vset.pattern.permute.xlu0 6
        %7814 = vperm.xlu0 %7813, %v6427
        %v7815 = vpop.permute.xlu0 %7814
        %7817 = vset.pattern.permute.xlu0 6
        %7818 = vperm.xlu0 %7817, %v6428
        %v7819 = vpop.permute.xlu0 %7818
        %v7822 = vsel %vm2593, %v7801, 0
        %v7825 = vsel %vm2593, %v7802, 0
        %v7828 = vsel %vm2593, %v7803, 0
        %v7831 = vsel %vm2593, %v7804, 0
        %7833 = vmatprep.subr.mxu0 %v7786
        %7834 = vmatpush1.msra.mxu0 %v7785
        %7835 = vmatprep.subr.mxu0 %v7790
        %7836 = vmatpush1.msra.mxu0 %v7789
        %7837 = vmatprep.subr.mxu0 %v7794
        %7838 = vmatpush1.msra.mxu0 %v7793
        %7839 = vmatprep.subr.mxu0 %v7798
        %7840 = vmatpush1.msra.mxu0 %v7797
        %7841 = vmatprep.subr.mxu0 0.0
        %7842 = vmatpush1.msra.mxu0 0.0
        %7843 = vmatprep.subr.mxu0 0.0
        %7844 = vmatpush1.msra.mxu0 0.0
        %7845 = vmatprep.subr.mxu0 0.0
        %7846 = vmatpush1.msra.mxu0 0.0
        %7847 = vmatprep.subr.mxu0 0.0
        %7848 = vmatpush1.msra.mxu0 0.0
        %7849 = vmatprep.subr.mxu0 0.0
        %7850 = vmatpush1.msra.mxu0 0.0
        %7851 = vmatprep.subr.mxu0 0.0
        %7852 = vmatpush1.msra.mxu0 0.0
        %7853 = vmatprep.subr.mxu0 0.0
        %7854 = vmatpush1.msra.mxu0 0.0
        %7855 = vmatprep.subr.mxu0 0.0
        %7856 = vmatpush1.msra.mxu0 0.0
        %7857 = vmatprep.subr.mxu0 0.0
        %7858 = vmatpush1.msra.mxu0 0.0
        %7859 = vmatprep.subr.mxu0 0.0
        %7860 = vmatpush1.msra.mxu0 0.0
        %7861 = vmatprep.subr.mxu0 0.0
        %7862 = vmatpush1.msra.mxu0 0.0
        %7863 = vmatprep.subr.mxu0 0.0
        %7864 = vmatpush1.msra.mxu0 0.0
        %7865 = vmatprep.subr.mxu0 0.0
        %7866 = vmatpush1.msra.mxu0 0.0
        %7867 = vmatprep.subr.mxu0 0.0
        %7868 = vmatpush1.msra.mxu0 0.0
        %7869 = vmatprep.subr.mxu0 0.0
        %7870 = vmatpush1.msra.mxu0 0.0
        %7871 = vmatprep.subr.mxu0 0.0
        %7872 = vmatpush1.msra.mxu0 0.0
        %7873 = vmatprep.subr.mxu0 0.0
        %7874 = vmatpush1.msra.mxu0 0.0
        %7875 = vmatprep.subr.mxu0 0.0
        %7876 = vmatpush1.msra.mxu0 0.0
        %7877 = vmatprep.subr.mxu0 0.0
        %7878 = vmatpush1.msra.mxu0 0.0
        %7879 = vmatprep.subr.mxu0 0.0
        %7880 = vmatpush1.msra.mxu0 0.0
        %7881 = vmatprep.subr.mxu0 0.0
        %7882 = vmatpush1.msra.mxu0 0.0
        %7883 = vmatprep.subr.mxu0 0.0
        %7884 = vmatpush1.msra.mxu0 0.0
        %7885 = vmatprep.subr.mxu0 0.0
        %7886 = vmatpush1.msra.mxu0 0.0
        %7887 = vmatprep.subr.mxu0 0.0
        %7888 = vmatpush1.msra.mxu0 0.0
        %7889 = vmatprep.subr.mxu0 0.0
        %7890 = vmatpush1.msra.mxu0 0.0
        %7891 = vmatprep.subr.mxu0 0.0
        %7892 = vmatpush1.msra.mxu0 0.0
        %7893 = vmatprep.subr.mxu0 0.0
        %7894 = vmatpush1.msra.mxu0 0.0
        %7895 = vmatprep.subr.mxu0 0.0
        %7896 = vmatpush1.msra.mxu0 0.0
        %7897 = vmatprep.mubr.f32.mxu0 0.0
        %7898 = vmatmul.mubr.f32.gmra.mrb[0].mxu0 %v7822
        %v7899 = vpop.f32.mrb[0].mxu0
        %v7900 = vadd.f32 %v7807, %v7899
        %v7901 = vpop.f32.mrb[0].mxu0
        %v7902 = vadd.f32 %v7807, %v7901
        %7903 = vmatprep.mubr.f32.mxu0 0.0
        %7904 = vmatmul.mubr.f32.gmra.mrb[0].mxu0 %v7825
        %v7905 = vpop.f32.mrb[0].mxu0
        %v7906 = vadd.f32 %v7811, %v7905
        %v7907 = vpop.f32.mrb[0].mxu0
        %v7908 = vadd.f32 %v7811, %v7907
        %7909 = vmatprep.mubr.f32.mxu0 0.0
        %7910 = vmatmul.mubr.f32.gmra.mrb[0].mxu0 %v7828
        %v7911 = vpop.f32.mrb[0].mxu0
        %v7912 = vadd.f32 %v7815, %v7911
        %v7913 = vpop.f32.mrb[0].mxu0
        %v7914 = vadd.f32 %v7815, %v7913
        %7915 = vmatprep.mubr.f32.mxu0 0.0
        %7916 = vmatmul.mubr.f32.gmra.mrb[0].mxu0 %v7831
        %v7917 = vpop.f32.mrb[0].mxu0
        %v7918 = vadd.f32 %v7819, %v7917
        %v7919 = vpop.f32.mrb[0].mxu0
        %v7920 = vadd.f32 %v7819, %v7919
        %7921 = vdwg.mxu0
        %7922 = vmatprep.subr.mxu0 %v7788
        %7923 = vmatpush1.msra.mxu0 %v7787
        %7924 = vmatprep.subr.mxu0 %v7792
        %7925 = vmatpush1.msra.mxu0 %v7791
        %7926 = vmatprep.subr.mxu0 %v7796
        %7927 = vmatpush1.msra.mxu0 %v7795
        %7928 = vmatprep.subr.mxu0 %v7800
        %7929 = vmatpush1.msra.mxu0 %v7799
        %7930 = vmatprep.subr.mxu0 0.0
        %7931 = vmatpush1.msra.mxu0 0.0
        %7932 = vmatprep.subr.mxu0 0.0
        %7933 = vmatpush1.msra.mxu0 0.0
        %7934 = vmatprep.subr.mxu0 0.0
        %7935 = vmatpush1.msra.mxu0 0.0
        %7936 = vmatprep.subr.mxu0 0.0
        %7937 = vmatpush1.msra.mxu0 0.0
        %7938 = vmatprep.subr.mxu0 0.0
        %7939 = vmatpush1.msra.mxu0 0.0
        %7940 = vmatprep.subr.mxu0 0.0
        %7941 = vmatpush1.msra.mxu0 0.0
        %7942 = vmatprep.subr.mxu0 0.0
        %7943 = vmatpush1.msra.mxu0 0.0
        %7944 = vmatprep.subr.mxu0 0.0
        %7945 = vmatpush1.msra.mxu0 0.0
        %7946 = vmatprep.subr.mxu0 0.0
        %7947 = vmatpush1.msra.mxu0 0.0
        %7948 = vmatprep.subr.mxu0 0.0
        %7949 = vmatpush1.msra.mxu0 0.0
        %7950 = vmatprep.subr.mxu0 0.0
        %7951 = vmatpush1.msra.mxu0 0.0
        %7952 = vmatprep.subr.mxu0 0.0
        %7953 = vmatpush1.msra.mxu0 0.0
        %7954 = vmatprep.subr.mxu0 0.0
        %7955 = vmatpush1.msra.mxu0 0.0
        %7956 = vmatprep.subr.mxu0 0.0
        %7957 = vmatpush1.msra.mxu0 0.0
        %7958 = vmatprep.subr.mxu0 0.0
        %7959 = vmatpush1.msra.mxu0 0.0
        %7960 = vmatprep.subr.mxu0 0.0
        %7961 = vmatpush1.msra.mxu0 0.0
        %7962 = vmatprep.subr.mxu0 0.0
        %7963 = vmatpush1.msra.mxu0 0.0
        %7964 = vmatprep.subr.mxu0 0.0
        %7965 = vmatpush1.msra.mxu0 0.0
        %7966 = vmatprep.subr.mxu0 0.0
        %7967 = vmatpush1.msra.mxu0 0.0
        %7968 = vmatprep.subr.mxu0 0.0
        %7969 = vmatpush1.msra.mxu0 0.0
        %7970 = vmatprep.subr.mxu0 0.0
        %7971 = vmatpush1.msra.mxu0 0.0
        %7972 = vmatprep.subr.mxu0 0.0
        %7973 = vmatpush1.msra.mxu0 0.0
        %7974 = vmatprep.subr.mxu0 0.0
        %7975 = vmatpush1.msra.mxu0 0.0
        %7976 = vmatprep.subr.mxu0 0.0
        %7977 = vmatpush1.msra.mxu0 0.0
        %7978 = vmatprep.subr.mxu0 0.0
        %7979 = vmatpush1.msra.mxu0 0.0
        %7980 = vmatprep.subr.mxu0 0.0
        %7981 = vmatpush1.msra.mxu0 0.0
        %7982 = vmatprep.subr.mxu0 0.0
        %7983 = vmatpush1.msra.mxu0 0.0
        %7984 = vmatprep.subr.mxu0 0.0
        %7985 = vmatpush1.msra.mxu0 0.0
        %7986 = vmatprep.mubr.f32.mxu0 0.0
        %7987 = vmatmul.mubr.f32.gmra.mrb[0].mxu0 %v7822
        %v7988 = vpop.f32.mrb[0].mxu0
        %v7989 = vadd.f32 %v7807, %v7988
        %v7990 = vpop.f32.mrb[0].mxu0
        %v7991 = vadd.f32 %v7807, %v7990
        %7992 = vmatprep.mubr.f32.mxu0 0.0
        %7993 = vmatmul.mubr.f32.gmra.mrb[0].mxu0 %v7825
        %v7994 = vpop.f32.mrb[0].mxu0
        %v7995 = vadd.f32 %v7811, %v7994
        %v7996 = vpop.f32.mrb[0].mxu0
        %v7997 = vadd.f32 %v7811, %v7996
        %7998 = vmatprep.mubr.f32.mxu0 0.0
        %7999 = vmatmul.mubr.f32.gmra.mrb[0].mxu0 %v7828
        %v8000 = vpop.f32.mrb[0].mxu0
        %v8001 = vadd.f32 %v7815, %v8000
        %v8002 = vpop.f32.mrb[0].mxu0
        %v8003 = vadd.f32 %v7815, %v8002
        %8004 = vmatprep.mubr.f32.mxu0 0.0
        %8005 = vmatmul.mubr.f32.gmra.mrb[0].mxu0 %v7831
        %v8006 = vpop.f32.mrb[0].mxu0
        %v8007 = vadd.f32 %v7819, %v8006
        %v8008 = vpop.f32.mrb[0].mxu0
        %v8009 = vadd.f32 %v7819, %v8008
        %8010 = vdwg.mxu0
        %v8011 = vmax.f32 %v7900, 0.0
        %v8012 = vmax.f32 %v7902, 0.0
        %v8013 = vmax.f32 %v7989, 0.0
        %v8014 = vmax.f32 %v7991, 0.0
        %v8015 = vmax.f32 %v7906, 0.0
        %v8016 = vmax.f32 %v7908, 0.0
        %v8017 = vmax.f32 %v7995, 0.0
        %v8018 = vmax.f32 %v7997, 0.0
        %v8019 = vmax.f32 %v7912, 0.0
        %v8020 = vmax.f32 %v7914, 0.0
        %v8021 = vmax.f32 %v8001, 0.0
        %v8022 = vmax.f32 %v8003, 0.0
        %v8023 = vmax.f32 %v7918, 0.0
        %v8024 = vmax.f32 %v7920, 0.0
        %v8025 = vmax.f32 %v8007, 0.0
        %v8026 = vmax.f32 %v8009, 0.0
        %v8027 = vld [vmem:[%s3951] sm:$0xff]
        %v8028 = vld [vmem:[%s3951 + $0x8] sm:$0xff]
        %v8029 = vld [vmem:[%s3951 + $0x10] sm:$0xff]
        %v8030 = vld [vmem:[%s3951 + $0x18] sm:$0xff]
        %8031 = vset.pattern.permute.xlu0 7
        %8032 = vperm.xlu0 %8031, %v6425
        %v8033 = vpop.permute.xlu0 %8032
        %8035 = vset.pattern.permute.xlu0 7
        %8036 = vperm.xlu0 %8035, %v6426
        %v8037 = vpop.permute.xlu0 %8036
        %8039 = vset.pattern.permute.xlu0 7
        %8040 = vperm.xlu0 %8039, %v6427
        %v8041 = vpop.permute.xlu0 %8040
        %8043 = vset.pattern.permute.xlu0 7
        %8044 = vperm.xlu0 %8043, %v6428
        %v8045 = vpop.permute.xlu0 %8044
        %v8048 = vsel %vm2593, %v8027, 0
        %v8051 = vsel %vm2593, %v8028, 0
        %v8054 = vsel %vm2593, %v8029, 0
        %v8057 = vsel %vm2593, %v8030, 0
        %8059 = vmatprep.subr.mxu0 %v8012
        %8060 = vmatpush1.msra.mxu0 %v8011
        %8061 = vmatprep.subr.mxu0 %v8016
        %8062 = vmatpush1.msra.mxu0 %v8015
        %8063 = vmatprep.subr.mxu0 %v8020
        %8064 = vmatpush1.msra.mxu0 %v8019
        %8065 = vmatprep.subr.mxu0 %v8024
        %8066 = vmatpush1.msra.mxu0 %v8023
        %8067 = vmatprep.subr.mxu0 0.0
        %8068 = vmatpush1.msra.mxu0 0.0
        %8069 = vmatprep.subr.mxu0 0.0
        %8070 = vmatpush1.msra.mxu0 0.0
        %8071 = vmatprep.subr.mxu0 0.0
        %8072 = vmatpush1.msra.mxu0 0.0
        %8073 = vmatprep.subr.mxu0 0.0
        %8074 = vmatpush1.msra.mxu0 0.0
        %8075 = vmatprep.subr.mxu0 0.0
        %8076 = vmatpush1.msra.mxu0 0.0
        %8077 = vmatprep.subr.mxu0 0.0
        %8078 = vmatpush1.msra.mxu0 0.0
        %8079 = vmatprep.subr.mxu0 0.0
        %8080 = vmatpush1.msra.mxu0 0.0
        %8081 = vmatprep.subr.mxu0 0.0
        %8082 = vmatpush1.msra.mxu0 0.0
        %8083 = vmatprep.subr.mxu0 0.0
        %8084 = vmatpush1.msra.mxu0 0.0
        %8085 = vmatprep.subr.mxu0 0.0
        %8086 = vmatpush1.msra.mxu0 0.0
        %8087 = vmatprep.subr.mxu0 0.0
        %8088 = vmatpush1.msra.mxu0 0.0
        %8089 = vmatprep.subr.mxu0 0.0
        %8090 = vmatpush1.msra.mxu0 0.0
        %8091 = vmatprep.subr.mxu0 0.0
        %8092 = vmatpush1.msra.mxu0 0.0
        %8093 = vmatprep.subr.mxu0 0.0
        %8094 = vmatpush1.msra.mxu0 0.0
        %8095 = vmatprep.subr.mxu0 0.0
        %8096 = vmatpush1.msra.mxu0 0.0
        %8097 = vmatprep.subr.mxu0 0.0
        %8098 = vmatpush1.msra.mxu0 0.0
        %8099 = vmatprep.subr.mxu0 0.0
        %8100 = vmatpush1.msra.mxu0 0.0
        %8101 = vmatprep.subr.mxu0 0.0
        %8102 = vmatpush1.msra.mxu0 0.0
        %8103 = vmatprep.subr.mxu0 0.0
        %8104 = vmatpush1.msra.mxu0 0.0
        %8105 = vmatprep.subr.mxu0 0.0
        %8106 = vmatpush1.msra.mxu0 0.0
        %8107 = vmatprep.subr.mxu0 0.0
        %8108 = vmatpush1.msra.mxu0 0.0
        %8109 = vmatprep.subr.mxu0 0.0
        %8110 = vmatpush1.msra.mxu0 0.0
        %8111 = vmatprep.subr.mxu0 0.0
        %8112 = vmatpush1.msra.mxu0 0.0
        %8113 = vmatprep.subr.mxu0 0.0
        %8114 = vmatpush1.msra.mxu0 0.0
        %8115 = vmatprep.subr.mxu0 0.0
        %8116 = vmatpush1.msra.mxu0 0.0
        %8117 = vmatprep.subr.mxu0 0.0
        %8118 = vmatpush1.msra.mxu0 0.0
        %8119 = vmatprep.subr.mxu0 0.0
        %8120 = vmatpush1.msra.mxu0 0.0
        %8121 = vmatprep.subr.mxu0 0.0
        %8122 = vmatpush1.msra.mxu0 0.0
        %8123 = vmatprep.mubr.f32.mxu0 0.0
        %8124 = vmatmul.mubr.f32.gmra.mrb[0].mxu0 %v8048
        %v8125 = vpop.f32.mrb[0].mxu0
        %v8126 = vadd.f32 %v8033, %v8125
        %v8127 = vpop.f32.mrb[0].mxu0
        %v8128 = vadd.f32 %v8033, %v8127
        %8129 = vmatprep.mubr.f32.mxu0 0.0
        %8130 = vmatmul.mubr.f32.gmra.mrb[0].mxu0 %v8051
        %v8131 = vpop.f32.mrb[0].mxu0
        %v8132 = vadd.f32 %v8037, %v8131
        %v8133 = vpop.f32.mrb[0].mxu0
        %v8134 = vadd.f32 %v8037, %v8133
        %8135 = vmatprep.mubr.f32.mxu0 0.0
        %8136 = vmatmul.mubr.f32.gmra.mrb[0].mxu0 %v8054
        %v8137 = vpop.f32.mrb[0].mxu0
        %v8138 = vadd.f32 %v8041, %v8137
        %v8139 = vpop.f32.mrb[0].mxu0
        %v8140 = vadd.f32 %v8041, %v8139
        %8141 = vmatprep.mubr.f32.mxu0 0.0
        %8142 = vmatmul.mubr.f32.gmra.mrb[0].mxu0 %v8057
        %v8143 = vpop.f32.mrb[0].mxu0
        %v8144 = vadd.f32 %v8045, %v8143
        %v8145 = vpop.f32.mrb[0].mxu0
        %v8146 = vadd.f32 %v8045, %v8145
        %8147 = vdwg.mxu0
        %8148 = vmatprep.subr.mxu0 %v8014
        %8149 = vmatpush1.msra.mxu0 %v8013
        %8150 = vmatprep.subr.mxu0 %v8018
        %8151 = vmatpush1.msra.mxu0 %v8017
        %8152 = vmatprep.subr.mxu0 %v8022
        %8153 = vmatpush1.msra.mxu0 %v8021
        %8154 = vmatprep.subr.mxu0 %v8026
        %8155 = vmatpush1.msra.mxu0 %v8025
        %8156 = vmatprep.subr.mxu0 0.0
        %8157 = vmatpush1.msra.mxu0 0.0
        %8158 = vmatprep.subr.mxu0 0.0
        %8159 = vmatpush1.msra.mxu0 0.0
        %8160 = vmatprep.subr.mxu0 0.0
        %8161 = vmatpush1.msra.mxu0 0.0
        %8162 = vmatprep.subr.mxu0 0.0
        %8163 = vmatpush1.msra.mxu0 0.0
        %8164 = vmatprep.subr.mxu0 0.0
        %8165 = vmatpush1.msra.mxu0 0.0
        %8166 = vmatprep.subr.mxu0 0.0
        %8167 = vmatpush1.msra.mxu0 0.0
        %8168 = vmatprep.subr.mxu0 0.0
        %8169 = vmatpush1.msra.mxu0 0.0
        %8170 = vmatprep.subr.mxu0 0.0
        %8171 = vmatpush1.msra.mxu0 0.0
        %8172 = vmatprep.subr.mxu0 0.0
        %8173 = vmatpush1.msra.mxu0 0.0
        %8174 = vmatprep.subr.mxu0 0.0
        %8175 = vmatpush1.msra.mxu0 0.0
        %8176 = vmatprep.subr.mxu0 0.0
        %8177 = vmatpush1.msra.mxu0 0.0
        %8178 = vmatprep.subr.mxu0 0.0
        %8179 = vmatpush1.msra.mxu0 0.0
        %8180 = vmatprep.subr.mxu0 0.0
        %8181 = vmatpush1.msra.mxu0 0.0
        %8182 = vmatprep.subr.mxu0 0.0
        %8183 = vmatpush1.msra.mxu0 0.0
        %8184 = vmatprep.subr.mxu0 0.0
        %8185 = vmatpush1.msra.mxu0 0.0
        %8186 = vmatprep.subr.mxu0 0.0
        %8187 = vmatpush1.msra.mxu0 0.0
        %8188 = vmatprep.subr.mxu0 0.0
        %8189 = vmatpush1.msra.mxu0 0.0
        %8190 = vmatprep.subr.mxu0 0.0
        %8191 = vmatpush1.msra.mxu0 0.0
        %8192 = vmatprep.subr.mxu0 0.0
        %8193 = vmatpush1.msra.mxu0 0.0
        %8194 = vmatprep.subr.mxu0 0.0
        %8195 = vmatpush1.msra.mxu0 0.0
        %8196 = vmatprep.subr.mxu0 0.0
        %8197 = vmatpush1.msra.mxu0 0.0
        %8198 = vmatprep.subr.mxu0 0.0
        %8199 = vmatpush1.msra.mxu0 0.0
        %8200 = vmatprep.subr.mxu0 0.0
        %8201 = vmatpush1.msra.mxu0 0.0
        %8202 = vmatprep.subr.mxu0 0.0
        %8203 = vmatpush1.msra.mxu0 0.0
        %8204 = vmatprep.subr.mxu0 0.0
        %8205 = vmatpush1.msra.mxu0 0.0
        %8206 = vmatprep.subr.mxu0 0.0
        %8207 = vmatpush1.msra.mxu0 0.0
        %8208 = vmatprep.subr.mxu0 0.0
        %8209 = vmatpush1.msra.mxu0 0.0
        %8210 = vmatprep.subr.mxu0 0.0
        %8211 = vmatpush1.msra.mxu0 0.0
        %8212 = vmatprep.mubr.f32.mxu0 0.0
        %8213 = vmatmul.mubr.f32.gmra.mrb[0].mxu0 %v8048
        %v8214 = vpop.f32.mrb[0].mxu0
        %v8215 = vadd.f32 %v8033, %v8214
        %v8216 = vpop.f32.mrb[0].mxu0
        %v8217 = vadd.f32 %v8033, %v8216
        %8218 = vmatprep.mubr.f32.mxu0 0.0
        %8219 = vmatmul.mubr.f32.gmra.mrb[0].mxu0 %v8051
        %v8220 = vpop.f32.mrb[0].mxu0
        %v8221 = vadd.f32 %v8037, %v8220
        %v8222 = vpop.f32.mrb[0].mxu0
        %v8223 = vadd.f32 %v8037, %v8222
        %8224 = vmatprep.mubr.f32.mxu0 0.0
        %8225 = vmatmul.mubr.f32.gmra.mrb[0].mxu0 %v8054
        %v8226 = vpop.f32.mrb[0].mxu0
        %v8227 = vadd.f32 %v8041, %v8226
        %v8228 = vpop.f32.mrb[0].mxu0
        %v8229 = vadd.f32 %v8041, %v8228
        %8230 = vmatprep.mubr.f32.mxu0 0.0
        %8231 = vmatmul.mubr.f32.gmra.mrb[0].mxu0 %v8057
        %v8232 = vpop.f32.mrb[0].mxu0
        %v8233 = vadd.f32 %v8045, %v8232
        %v8234 = vpop.f32.mrb[0].mxu0
        %v8235 = vadd.f32 %v8045, %v8234
        %8236 = vdwg.mxu0
        %v8237 = vmax.f32 %v8126, 0.0
        %v8238 = vmax.f32 %v8128, 0.0
        %v8239 = vmax.f32 %v8215, 0.0
        %v8240 = vmax.f32 %v8217, 0.0
        %v8241 = vmax.f32 %v8132, 0.0
        %v8242 = vmax.f32 %v8134, 0.0
        %v8243 = vmax.f32 %v8221, 0.0
        %v8244 = vmax.f32 %v8223, 0.0
        %v8245 = vmax.f32 %v8138, 0.0
        %v8246 = vmax.f32 %v8140, 0.0
        %v8247 = vmax.f32 %v8227, 0.0
        %v8248 = vmax.f32 %v8229, 0.0
        %v8249 = vmax.f32 %v8144, 0.0
        %v8250 = vmax.f32 %v8146, 0.0
        %v8251 = vmax.f32 %v8233, 0.0
        %v8252 = vmax.f32 %v8235, 0.0
        %v8253 = vld [vmem:[%s5] sm:$0x7]
        %v8254 = vld [vmem:[%s6] sm:$0x7]
        %8256 = vset.pattern.permute.xlu0 0
        %8257 = vperm.xlu0 %8256, %v8254
        %v8258 = vpop.permute.xlu0 %8257
        %v8261 = vsel %vm2593, %v8253, 0
        %8263 = vmatprep.subr.mxu0 %v8238
        %8264 = vmatpush1.msra.mxu0 %v8237
        %8265 = vmatprep.subr.mxu0 %v8242
        %8266 = vmatpush1.msra.mxu0 %v8241
        %8267 = vmatprep.subr.mxu0 %v8246
        %8268 = vmatpush1.msra.mxu0 %v8245
        %8269 = vmatprep.subr.mxu0 %v8250
        %8270 = vmatpush1.msra.mxu0 %v8249
        %8271 = vmatprep.subr.mxu0 0.0
        %8272 = vmatpush1.msra.mxu0 0.0
        %8273 = vmatprep.subr.mxu0 0.0
        %8274 = vmatpush1.msra.mxu0 0.0
        %8275 = vmatprep.subr.mxu0 0.0
        %8276 = vmatpush1.msra.mxu0 0.0
        %8277 = vmatprep.subr.mxu0 0.0
        %8278 = vmatpush1.msra.mxu0 0.0
        %8279 = vmatprep.subr.mxu0 0.0
        %8280 = vmatpush1.msra.mxu0 0.0
        %8281 = vmatprep.subr.mxu0 0.0
        %8282 = vmatpush1.msra.mxu0 0.0
        %8283 = vmatprep.subr.mxu0 0.0
        %8284 = vmatpush1.msra.mxu0 0.0
        %8285 = vmatprep.subr.mxu0 0.0
        %8286 = vmatpush1.msra.mxu0 0.0
        %8287 = vmatprep.subr.mxu0 0.0
        %8288 = vmatpush1.msra.mxu0 0.0
        %8289 = vmatprep.subr.mxu0 0.0
        %8290 = vmatpush1.msra.mxu0 0.0
        %8291 = vmatprep.subr.mxu0 0.0
        %8292 = vmatpush1.msra.mxu0 0.0
        %8293 = vmatprep.subr.mxu0 0.0
        %8294 = vmatpush1.msra.mxu0 0.0
        %8295 = vmatprep.subr.mxu0 0.0
        %8296 = vmatpush1.msra.mxu0 0.0
        %8297 = vmatprep.subr.mxu0 0.0
        %8298 = vmatpush1.msra.mxu0 0.0
        %8299 = vmatprep.subr.mxu0 0.0
        %8300 = vmatpush1.msra.mxu0 0.0
        %8301 = vmatprep.subr.mxu0 0.0
        %8302 = vmatpush1.msra.mxu0 0.0
        %8303 = vmatprep.subr.mxu0 0.0
        %8304 = vmatpush1.msra.mxu0 0.0
        %8305 = vmatprep.subr.mxu0 0.0
        %8306 = vmatpush1.msra.mxu0 0.0
        %8307 = vmatprep.subr.mxu0 0.0
        %8308 = vmatpush1.msra.mxu0 0.0
        %8309 = vmatprep.subr.mxu0 0.0
        %8310 = vmatpush1.msra.mxu0 0.0
        %8311 = vmatprep.subr.mxu0 0.0
        %8312 = vmatpush1.msra.mxu0 0.0
        %8313 = vmatprep.subr.mxu0 0.0
        %8314 = vmatpush1.msra.mxu0 0.0
        %8315 = vmatprep.subr.mxu0 0.0
        %8316 = vmatpush1.msra.mxu0 0.0
        %8317 = vmatprep.subr.mxu0 0.0
        %8318 = vmatpush1.msra.mxu0 0.0
        %8319 = vmatprep.subr.mxu0 0.0
        %8320 = vmatpush1.msra.mxu0 0.0
        %8321 = vmatprep.subr.mxu0 0.0
        %8322 = vmatpush1.msra.mxu0 0.0
        %8323 = vmatprep.subr.mxu0 0.0
        %8324 = vmatpush1.msra.mxu0 0.0
        %8325 = vmatprep.subr.mxu0 0.0
        %8326 = vmatpush1.msra.mxu0 0.0
        %8327 = vmatprep.mubr.f32.mxu0 0.0
        %8328 = vmatmul.mubr.f32.gmra.mrb[0].mxu0 %v8261
        %v8329 = vpop.f32.mrb[0].mxu0
        %v8330 = vadd.f32 %v8258, %v8329
        %v8331 = vpop.f32.mrb[0].mxu0
        %v8332 = vadd.f32 %v8258, %v8331
        %8333 = vdwg.mxu0
        %8334 = vmatprep.subr.mxu0 %v8240
        %8335 = vmatpush1.msra.mxu0 %v8239
        %8336 = vmatprep.subr.mxu0 %v8244
        %8337 = vmatpush1.msra.mxu0 %v8243
        %8338 = vmatprep.subr.mxu0 %v8248
        %8339 = vmatpush1.msra.mxu0 %v8247
        %8340 = vmatprep.subr.mxu0 %v8252
        %8341 = vmatpush1.msra.mxu0 %v8251
        %8342 = vmatprep.subr.mxu0 0.0
        %8343 = vmatpush1.msra.mxu0 0.0
        %8344 = vmatprep.subr.mxu0 0.0
        %8345 = vmatpush1.msra.mxu0 0.0
        %8346 = vmatprep.subr.mxu0 0.0
        %8347 = vmatpush1.msra.mxu0 0.0
        %8348 = vmatprep.subr.mxu0 0.0
        %8349 = vmatpush1.msra.mxu0 0.0
        %8350 = vmatprep.subr.mxu0 0.0
        %8351 = vmatpush1.msra.mxu0 0.0
        %8352 = vmatprep.subr.mxu0 0.0
        %8353 = vmatpush1.msra.mxu0 0.0
        %8354 = vmatprep.subr.mxu0 0.0
        %8355 = vmatpush1.msra.mxu0 0.0
        %8356 = vmatprep.subr.mxu0 0.0
        %8357 = vmatpush1.msra.mxu0 0.0
        %8358 = vmatprep.subr.mxu0 0.0
        %8359 = vmatpush1.msra.mxu0 0.0
        %8360 = vmatprep.subr.mxu0 0.0
        %8361 = vmatpush1.msra.mxu0 0.0
        %8362 = vmatprep.subr.mxu0 0.0
        %8363 = vmatpush1.msra.mxu0 0.0
        %8364 = vmatprep.subr.mxu0 0.0
        %8365 = vmatpush1.msra.mxu0 0.0
        %8366 = vmatprep.subr.mxu0 0.0
        %8367 = vmatpush1.msra.mxu0 0.0
        %8368 = vmatprep.subr.mxu0 0.0
        %8369 = vmatpush1.msra.mxu0 0.0
        %8370 = vmatprep.subr.mxu0 0.0
        %8371 = vmatpush1.msra.mxu0 0.0
        %8372 = vmatprep.subr.mxu0 0.0
        %8373 = vmatpush1.msra.mxu0 0.0
        %8374 = vmatprep.subr.mxu0 0.0
        %8375 = vmatpush1.msra.mxu0 0.0
        %8376 = vmatprep.subr.mxu0 0.0
        %8377 = vmatpush1.msra.mxu0 0.0
        %8378 = vmatprep.subr.mxu0 0.0
        %8379 = vmatpush1.msra.mxu0 0.0
        %8380 = vmatprep.subr.mxu0 0.0
        %8381 = vmatpush1.msra.mxu0 0.0
        %8382 = vmatprep.subr.mxu0 0.0
        %8383 = vmatpush1.msra.mxu0 0.0
        %8384 = vmatprep.subr.mxu0 0.0
        %8385 = vmatpush1.msra.mxu0 0.0
        %8386 = vmatprep.subr.mxu0 0.0
        %8387 = vmatpush1.msra.mxu0 0.0
        %8388 = vmatprep.subr.mxu0 0.0
        %8389 = vmatpush1.msra.mxu0 0.0
        %8390 = vmatprep.subr.mxu0 0.0
        %8391 = vmatpush1.msra.mxu0 0.0
        %8392 = vmatprep.subr.mxu0 0.0
        %8393 = vmatpush1.msra.mxu0 0.0
        %8394 = vmatprep.subr.mxu0 0.0
        %8395 = vmatpush1.msra.mxu0 0.0
        %8396 = vmatprep.subr.mxu0 0.0
        %8397 = vmatpush1.msra.mxu0 0.0
        %8398 = vmatprep.mubr.f32.mxu0 0.0
        %8399 = vmatmul.mubr.f32.gmra.mrb[0].mxu0 %v8261
        %v8400 = vpop.f32.mrb[0].mxu0
        %v8401 = vadd.f32 %v8258, %v8400
        %v8402 = vpop.f32.mrb[0].mxu0
        %v8403 = vadd.f32 %v8258, %v8402
        %8404 = vdwg.mxu0
        %v8405 = vxor.u32 %v8330, 2147483648
        %v8406 = vxor.u32 %v8332, 2147483648
        %v8407 = vxor.u32 %v8401, 2147483648
        %v8408 = vxor.u32 %v8403, 2147483648
        %v8409 = vmul.f32 %v8405, 1.442695
        %v8410 = vpow.pop %v8409
        %v8411 = vmul.f32 %v8406, 1.442695
        %v8412 = vpow.pop %v8411
        %v8413 = vmul.f32 %v8407, 1.442695
        %v8414 = vpow.pop %v8413
        %v8415 = vmul.f32 %v8408, 1.442695
        %v8416 = vpow.pop %v8415
        %v8417 = vadd.f32 %v8410, 1.0
        %v8418 = vadd.f32 %v8412, 1.0
        %v8419 = vadd.f32 %v8414, 1.0
        %v8420 = vadd.f32 %v8416, 1.0
        %v8421 = vrcp.pop %v8417
        %v8422 = vmul.f32 1.0, %v8421
        %v8423 = vrcp.pop %v8418
        %v8424 = vmul.f32 1.0, %v8423
        %v8425 = vrcp.pop %v8419
        %v8426 = vmul.f32 1.0, %v8425
        %v8427 = vrcp.pop %v8420
        %v8428 = vmul.f32 1.0, %v8427
        %v8433 = vcombine.low %v8422, %v8424
        %v8434 = vcombine.low %v8426, %v8428
        %s8437 = scalar_lea.vmem %s272, 16 [#allocation3]
        %8438 = vst [vmem:[%s8437] sm:$0x77] %v8433
        %8439 = vst [vmem:[%s8437 + $0x8] sm:$0x77] %v8434
        %s8440 = sand.u32 %s181, 1
        %s8441 = scalar_lea.sflag [#allocation4], %s8440
        %s8442 = sand.u32 %s181, 1
        %s8443 = smul.addr %s8442, 32
        %s8444 = scalar_lea.vmem [#allocation3], %s8443
        // Predicated region
        $region49: #{latent_mlp_forward.1} parent=47 // pred_check
          %p8445 = pneg %p191
        $region50: #{latent_mlp_forward.1} parent=47 // pred_check_branch
          %8447 = sbr.rel (%p8445) target = $region52
        $region51: #{latent_mlp_forward.1} parent=47 // pred_region
          %s8448 = smul.u32 8, %s21
          %s8450 = ssub.s32 512, 512
          %8451 = vsyncadd %s8441, %s8450
          %s8452 = smul.addr %s8448, 64
          %s8453 = scalar_lea.hbm %s7, %s8452
          %s8455 = sshll.u32 %s8444, 4
          %s8456 = int_to_ptr.vmem [resolvable:$true] %s8455
          %8458 = dma.vmem_to_hbm [thread:$0]  %s8456, 512, %s8453, %s8441
        $region52: #{latent_mlp_forward.1} parent=47 // pred_fallthru
          _
      $region48: #{latent_mlp_forward.1} parent=5 // pred_fallthru
        _
      %p8459 = scmp.le.s32.totalorder 2, %s16
      // Predicated region
      $region53: #{latent_mlp_forward.1} parent=5 // pred_check
        %p8460 = pneg %p8459
      $region54: #{latent_mlp_forward.1} parent=5 // pred_check_branch
        %8462 = sbr.rel (%p8460) target = $region56
      $region55: #{latent_mlp_forward.1} parent=5 // pred_region
        %s8463 = ssub.s32 %s16, 2
        // Predicated region
        $region57: #{latent_mlp_forward.1} parent=55 // pred_check
          %p8464 = pneg %p197
        $region58: #{latent_mlp_forward.1} parent=55 // pred_check_branch
          %8466 = sbr.rel (%p8464) target = $region60
        $region59: #{latent_mlp_forward.1} parent=55 // pred_region
          %s8467 = sand.u32 %s182, 1
          %s8468 = scalar_lea.sflag [#allocation4], %s8467
          %s8469 = sand.u32 %s182, 1
          %s8470 = smul.addr %s8469, 32
          %s8471 = scalar_lea.vmem [#allocation3], %s8470
          %8472 = dma.done %s8468, 512
        $region60: #{latent_mlp_forward.1} parent=55 // pred_fallthru
          _
      $region56: #{latent_mlp_forward.1} parent=5 // pred_fallthru
        _
    $region6: #{latent_mlp_forward.1} parent=1 // loop_footer
      %s20 = sadd.s32 1, %s16
    $region7: #{latent_mlp_forward.1} parent=1 // loop_footer_branch
      %15 = sbr.rel target = $region3
    $region8: #{latent_mlp_forward.1} parent=1 // loop_exit
      _
    %8473 = vsyncpa [#allocation4], 1
    %s8474 = scalar_lea.sflag [#allocation4], 1
    %8475 = vsyncpa %s8474, 1

</llo_original>
